<compile_context>
chip_gen: v7x
topology: tpu7x:2x2x1
jax: 0.10.0
libtpu: 0.0.40
codegen_flags: <defaults>
</compile_context>

<pallas_src>
import functools
import math

import jax
import jax.numpy as jnp
from jax.experimental import pallas as pl
from jax.experimental.pallas import tpu as pltpu


EMBEDDING_DIM = 256
IN_DIM = 2048
HIDDEN_DIM = 2048


# ----------------------------------------------------------------------------
# Pallas kernel: full-K matmul with fused bias (+ReLU) epilogue
# ----------------------------------------------------------------------------

def _linear_bn_kernel(x_ref, w_ref, b_ref, o_ref, *, relu):
    """o = [relu](x @ w + b); bf16 MXU inputs, f32 accumulation, one dot."""
    y = jnp.dot(x_ref[...], w_ref[...], preferred_element_type=jnp.float32)
    y = y + b_ref[...]
    if relu:
        y = jnp.maximum(y, 0.0)
    o_ref[...] = y.astype(o_ref.dtype)


def linear_bn(x, w, b, *, relu, out_dtype):
    """y = relu?(x @ w + b).   x:(M,K) bf16, w:(K,N) bf16, b:(1,N) f32."""
    M, K = x.shape
    K2, N = w.shape
    assert K == K2 and b.shape == (1, N)

    # Tile selection (bandwidth/overhead-bound at small batch):
    #  - K is never tiled: a full-K dot removes the reduction axis + accumulator.
    #  - tn = 512 where N allows (2 MiB weight DMAs, lane-dense stores, >=4
    #    parallel N blocks for v7x megacore); otherwise one full-N block.
    #  - the (small) batch dim stays a single block unless M is large.
    tn = 512 if (N % 512 == 0) else N
    tm = 256 if (M % 256 == 0 and M > 256) else M

    grid = (M // tm, N // tn)

    return pl.pallas_call(
        functools.partial(_linear_bn_kernel, relu=relu),
        out_shape=jax.ShapeDtypeStruct((M, N), out_dtype),
        grid_spec=pltpu.PrefetchScalarGridSpec(
            num_scalar_prefetch=0,
            grid=grid,
            in_specs=[
                pl.BlockSpec((tm, K), lambda i, j: (i, 0)),   # x: fetched once per i
                pl.BlockSpec((K, tn), lambda i, j: (0, j)),   # weight column slab
                pl.BlockSpec((1, tn), lambda i, j: (0, j)),   # folded BN bias
            ],
            out_specs=pl.BlockSpec((tm, tn), lambda i, j: (i, j)),
        ),
        compiler_params=pltpu.CompilerParams(
            dimension_semantics=("arbitrary", "parallel")),
    )(x, w, b)


# ----------------------------------------------------------------------------
# Parameters: PyTorch-like Linear init + synthetic BN running stats, folded once
# ----------------------------------------------------------------------------

_LAYER_DIMS = ((IN_DIM, HIDDEN_DIM), (HIDDEN_DIM, HIDDEN_DIM),
               (HIDDEN_DIM, EMBEDDING_DIM))


def init_params(key, eps=1e-5):
    params = []
    for fan_in, fan_out in _LAYER_DIMS:
        key, kw, kb, k1, k2, k3, k4 = jax.random.split(key, 7)
        bound = 1.0 / math.sqrt(fan_in)
        w = jax.random.uniform(kw, (fan_out, fan_in), jnp.float32, -bound, bound)
        b = jax.random.uniform(kb, (fan_out,), jnp.float32, -bound, bound)
        gamma = 1.0 + 0.05 * jax.random.normal(k1, (fan_out,), jnp.float32)
        beta = 0.05 * jax.random.normal(k2, (fan_out,), jnp.float32)
        mean = 0.05 * jax.random.normal(k3, (fan_out,), jnp.float32)
        var = 1.0 + 0.05 * jax.random.uniform(k4, (fan_out,), jnp.float32)
        s = gamma / jnp.sqrt(var + eps)
        w_eff = (w.T * s[None, :]).astype(jnp.bfloat16)   # (K, N), bf16 for MXU
        b_eff = ((b - mean) * s + beta).reshape(1, -1)     # (1, N), f32 epilogue
        params.append((w_eff, b_eff))
    return params


# ----------------------------------------------------------------------------
# Forward pass (matches nn.Sequential ordering: Lin->BN->ReLU x2, Lin->BN)
# ----------------------------------------------------------------------------

def forward(params, x):
    h = x.astype(jnp.bfloat16)
    n_layers = len(params)
    for i, (w, b) in enumerate(params):
        last = (i == n_layers - 1)
        h = linear_bn(h, w, b, relu=not last,
                      out_dtype=jnp.float32 if last else jnp.bfloat16)
    return h


def reference_forward(params, x):
    """Plain-JAX reference with identical numerics (bf16 matmul, f32 accum)."""
    h = x.astype(jnp.bfloat16)
    n_layers = len(params)
    for i, (w, b) in enumerate(params):
        y = jnp.dot(h, w, preferred_element_type=jnp.float32) + b
        if i < n_layers - 1:
            h = jnp.maximum(y, 0.0).astype(jnp.bfloat16)
        else:
            h = y
    return h


if __name__ == "__main__":
    root = jax.random.PRNGKey(0)
    kp, kx = jax.random.split(root)
    params = init_params(kp)

    batch = 8
    x = jax.random.normal(kx, (batch, IN_DIM), jnp.float32)

    fwd = jax.jit(forward)
    out = jax.block_until_ready(fwd(params, x))
    assert out.shape == (batch, EMBEDDING_DIM), out.shape
    assert bool(jnp.all(jnp.isfinite(out)))

    ref = reference_forward(params, x)
    err = float(jnp.max(jnp.abs(out - ref.astype(out.dtype))))
    tol = 1e-2 * (float(jnp.max(jnp.abs(ref))) + 1.0)
    assert err <= tol, (err, tol)

    print("KERNEL_OK")
</pallas_src>

<mosaic_0001>
module attributes {stable_mosaic.version = 11 : i64} {
  func.func @_linear_bn_kernel(%arg0: i32, %arg1: i32, %arg2: memref<8x2048xbf16, #tpu.memory_space<vmem>>, %arg3: memref<2048x512xbf16, #tpu.memory_space<vmem>>, %arg4: memref<1x512xf32, #tpu.memory_space<vmem>>, %arg5: memref<8x512xbf16, #tpu.memory_space<vmem>>) attributes {dimension_semantics = [#tpu.dimension_semantics<arbitrary>, #tpu.dimension_semantics<parallel>], iteration_bounds = array<i64: 1, 4>, scalar_prefetch = 0 : i64, scratch_operands = 0 : i64, tpu.core_type = #tpu.core_type<tc>, window_params = [{transform_indices = @transform_0, window_bounds = array<i64: 8, 2048>}, {transform_indices = @transform_1, window_bounds = array<i64: 2048, 512>}, {transform_indices = @transform_2, window_bounds = array<i64: 1, 512>}, {transform_indices = @transform_3, window_bounds = array<i64: 8, 512>}]} {
    %c0 = arith.constant 0 : index
    %c0_0 = arith.constant 0 : index
    %0 = vector.load %arg2[%c0, %c0_0] : memref<8x2048xbf16, #tpu.memory_space<vmem>>, vector<8x2048xbf16>
    %c0_1 = arith.constant 0 : index
    %c0_2 = arith.constant 0 : index
    %1 = vector.load %arg3[%c0_1, %c0_2] : memref<2048x512xbf16, #tpu.memory_space<vmem>>, vector<2048x512xbf16>
    %cst = arith.constant dense<0.000000e+00> : vector<8x512xf32>
    %2 = tpu.matmul %0, %1, %cst {dimension_numbers = #tpu.dot_dimension_numbers<[1], [0], [0], [1], [0, 0, 1, 1], [], []>} : vector<8x2048xbf16>, vector<2048x512xbf16>, vector<8x512xf32> -> vector<8x512xf32>
    %c0_3 = arith.constant 0 : index
    %c0_4 = arith.constant 0 : index
    %3 = vector.load %arg4[%c0_3, %c0_4] : memref<1x512xf32, #tpu.memory_space<vmem>>, vector<1x512xf32>
    %4 = vector.broadcast %3 : vector<1x512xf32> to vector<8x512xf32>
    %5 = arith.addf %2, %4 : vector<8x512xf32>
    %cst_5 = arith.constant 0.000000e+00 : f32
    %6 = vector.broadcast %cst_5 : f32 to vector<8x512xf32>
    %7 = arith.maximumf %5, %6 : vector<8x512xf32>
    %8 = arith.truncf %7 : vector<8x512xf32> to vector<8x512xbf16>
    %c0_6 = arith.constant 0 : index
    %c0_7 = arith.constant 0 : index
    %9 = vector.load %arg5[%c0_6, %c0_7] : memref<8x512xbf16, #tpu.memory_space<vmem>>, vector<8x512xbf16>
    tpu.vector_store %arg5[%c0_6, %c0_7], %8 {strides = array<i32>} : memref<8x512xbf16, #tpu.memory_space<vmem>>, vector<8x512xbf16>,
    return
  }
  func.func @transform_0(%arg0: i32, %arg1: i32) -> (i32, i32) {
    %c0_i32 = arith.constant 0 : i32
    %c0_i32_0 = arith.constant 0 : i32
    return %arg0, %c0_i32 : i32, i32
  }
  func.func @transform_1(%arg0: i32, %arg1: i32) -> (i32, i32) {
    %c0_i32 = arith.constant 0 : i32
    %c0_i32_0 = arith.constant 0 : i32
    return %c0_i32, %arg1 : i32, i32
  }
  func.func @transform_2(%arg0: i32, %arg1: i32) -> (i32, i32) {
    %c0_i32 = arith.constant 0 : i32
    %c0_i32_0 = arith.constant 0 : i32
    return %c0_i32, %arg1 : i32, i32
  }
  func.func @transform_3(%arg0: i32, %arg1: i32) -> (i32, i32) {
    %c0_i32 = arith.constant 0 : i32
    return %arg0, %arg1 : i32, i32
  }
}

module attributes {stable_mosaic.version = 11 : i64} {
  func.func @_linear_bn_kernel(%arg0: i32, %arg1: i32, %arg2: memref<8x2048xbf16, #tpu.memory_space<vmem>>, %arg3: memref<2048x256xbf16, #tpu.memory_space<vmem>>, %arg4: memref<1x256xf32, #tpu.memory_space<vmem>>, %arg5: memref<8x256xf32, #tpu.memory_space<vmem>>) attributes {dimension_semantics = [#tpu.dimension_semantics<arbitrary>, #tpu.dimension_semantics<parallel>], iteration_bounds = array<i64: 1, 1>, scalar_prefetch = 0 : i64, scratch_operands = 0 : i64, tpu.core_type = #tpu.core_type<tc>, window_params = [{transform_indices = @transform_0, window_bounds = array<i64: 8, 2048>}, {transform_indices = @transform_1, window_bounds = array<i64: 2048, 256>}, {transform_indices = @transform_2, window_bounds = array<i64: 1, 256>}, {transform_indices = @transform_3, window_bounds = array<i64: 8, 256>}]} {
    %c0 = arith.constant 0 : index
    %c0_0 = arith.constant 0 : index
    %0 = vector.load %arg2[%c0, %c0_0] : memref<8x2048xbf16, #tpu.memory_space<vmem>>, vector<8x2048xbf16>
    %c0_1 = arith.constant 0 : index
    %c0_2 = arith.constant 0 : index
    %1 = vector.load %arg3[%c0_1, %c0_2] : memref<2048x256xbf16, #tpu.memory_space<vmem>>, vector<2048x256xbf16>
    %cst = arith.constant dense<0.000000e+00> : vector<8x256xf32>
    %2 = tpu.matmul %0, %1, %cst {dimension_numbers = #tpu.dot_dimension_numbers<[1], [0], [0], [1], [0, 0, 1, 1], [], []>} : vector<8x2048xbf16>, vector<2048x256xbf16>, vector<8x256xf32> -> vector<8x256xf32>
    %c0_3 = arith.constant 0 : index
    %c0_4 = arith.constant 0 : index
    %3 = vector.load %arg4[%c0_3, %c0_4] : memref<1x256xf32, #tpu.memory_space<vmem>>, vector<1x256xf32>
    %4 = vector.broadcast %3 : vector<1x256xf32> to vector<8x256xf32>
    %5 = arith.addf %2, %4 : vector<8x256xf32>
    %c0_5 = arith.constant 0 : index
    %c0_6 = arith.constant 0 : index
    %6 = vector.load %arg5[%c0_5, %c0_6] : memref<8x256xf32, #tpu.memory_space<vmem>>, vector<8x256xf32>
    tpu.vector_store %arg5[%c0_5, %c0_6], %5 {strides = array<i32>} : memref<8x256xf32, #tpu.memory_space<vmem>>, vector<8x256xf32>,
    return
  }
  func.func @transform_0(%arg0: i32, %arg1: i32) -> (i32, i32) {
    %c0_i32 = arith.constant 0 : i32
    %c0_i32_0 = arith.constant 0 : i32
    return %arg0, %c0_i32 : i32, i32
  }
  func.func @transform_1(%arg0: i32, %arg1: i32) -> (i32, i32) {
    %c0_i32 = arith.constant 0 : i32
    %c0_i32_0 = arith.constant 0 : i32
    return %c0_i32, %arg1 : i32, i32
  }
  func.func @transform_2(%arg0: i32, %arg1: i32) -> (i32, i32) {
    %c0_i32 = arith.constant 0 : i32
    %c0_i32_0 = arith.constant 0 : i32
    return %c0_i32, %arg1 : i32, i32
  }
  func.func @transform_3(%arg0: i32, %arg1: i32) -> (i32, i32) {
    %c0_i32 = arith.constant 0 : i32
    return %arg0, %arg1 : i32, i32
  }
}

module attributes {stable_mosaic.version = 11 : i64} {
  func.func @_linear_bn_kernel(%arg0: i32, %arg1: i32, %arg2: memref<8x2048xbf16, #tpu.memory_space<vmem>>, %arg3: memref<2048x512xbf16, #tpu.memory_space<vmem>>, %arg4: memref<1x512xf32, #tpu.memory_space<vmem>>, %arg5: memref<8x512xbf16, #tpu.memory_space<vmem>>) attributes {dimension_semantics = [#tpu.dimension_semantics<arbitrary>, #tpu.dimension_semantics<parallel>], iteration_bounds = array<i64: 1, 4>, scalar_prefetch = 0 : i64, scratch_operands = 0 : i64, tpu.core_type = #tpu.core_type<tc>, window_params = [{transform_indices = @transform_0, window_bounds = array<i64: 8, 2048>}, {transform_indices = @transform_1, window_bounds = array<i64: 2048, 512>}, {transform_indices = @transform_2, window_bounds = array<i64: 1, 512>}, {transform_indices = @transform_3, window_bounds = array<i64: 8, 512>}]} {
    %c0 = arith.constant 0 : index
    %c0_0 = arith.constant 0 : index
    %0 = vector.load %arg2[%c0, %c0_0] : memref<8x2048xbf16, #tpu.memory_space<vmem>>, vector<8x2048xbf16>
    %c0_1 = arith.constant 0 : index
    %c0_2 = arith.constant 0 : index
    %1 = vector.load %arg3[%c0_1, %c0_2] : memref<2048x512xbf16, #tpu.memory_space<vmem>>, vector<2048x512xbf16>
    %cst = arith.constant dense<0.000000e+00> : vector<8x512xf32>
    %2 = tpu.matmul %0, %1, %cst {dimension_numbers = #tpu.dot_dimension_numbers<[1], [0], [0], [1], [0, 0, 1, 1], [], []>} : vector<8x2048xbf16>, vector<2048x512xbf16>, vector<8x512xf32> -> vector<8x512xf32>
    %c0_3 = arith.constant 0 : index
    %c0_4 = arith.constant 0 : index
    %3 = vector.load %arg4[%c0_3, %c0_4] : memref<1x512xf32, #tpu.memory_space<vmem>>, vector<1x512xf32>
    %4 = vector.broadcast %3 : vector<1x512xf32> to vector<8x512xf32>
    %5 = arith.addf %2, %4 : vector<8x512xf32>
    %cst_5 = arith.constant 0.000000e+00 : f32
    %6 = vector.broadcast %cst_5 : f32 to vector<8x512xf32>
    %7 = arith.maximumf %5, %6 : vector<8x512xf32>
    %8 = arith.truncf %7 : vector<8x512xf32> to vector<8x512xbf16>
    %c0_6 = arith.constant 0 : index
    %c0_7 = arith.constant 0 : index
    %9 = vector.load %arg5[%c0_6, %c0_7] : memref<8x512xbf16, #tpu.memory_space<vmem>>, vector<8x512xbf16>
    tpu.vector_store %arg5[%c0_6, %c0_7], %8 {strides = array<i32>} : memref<8x512xbf16, #tpu.memory_space<vmem>>, vector<8x512xbf16>,
    return
  }
  func.func @transform_0(%arg0: i32, %arg1: i32) -> (i32, i32) {
    %c0_i32 = arith.constant 0 : i32
    %c0_i32_0 = arith.constant 0 : i32
    return %arg0, %c0_i32 : i32, i32
  }
  func.func @transform_1(%arg0: i32, %arg1: i32) -> (i32, i32) {
    %c0_i32 = arith.constant 0 : i32
    %c0_i32_0 = arith.constant 0 : i32
    return %c0_i32, %arg1 : i32, i32
  }
  func.func @transform_2(%arg0: i32, %arg1: i32) -> (i32, i32) {
    %c0_i32 = arith.constant 0 : i32
    %c0_i32_0 = arith.constant 0 : i32
    return %c0_i32, %arg1 : i32, i32
  }
  func.func @transform_3(%arg0: i32, %arg1: i32) -> (i32, i32) {
    %c0_i32 = arith.constant 0 : i32
    return %arg0, %arg1 : i32, i32
  }
}

</mosaic_0001>

<llo_original>
// kernel: forward.5
$region0: #{forward.5}
  #allocation0 [shape = 'u32[]', space=smem, size = 0x4, offset = 0x4, fixed_abs, tag = 'smem constant byte address 0x4 - core index']
  #allocation1 [shape = 'u32[144,128]{1,0:T(1,128)}', space=vmem, size = 0x12000, scoped, tag = 'internal scratch']
  %s0 = inlined_call_operand.vmem [shape: bf16[8,2048], index: 0, kind: input, shape index: {}]
  %s1 = inlined_call_operand.vmem [shape: bf16[2048,256], index: 1, kind: input, shape index: {}]
  %s2 = inlined_call_operand.vmem [shape: f32[1,256], index: 2, kind: input, shape index: {}]
  %s3 = inlined_call_operand.hbm [shape: f32[8,256], index: 3, kind: output, shape index: {}]
  %s4 = sld [smem:[#allocation0]]
  $region22: #{forward.5} parent=0
    _
  %s6 = ssub.s32 1, %s4
  %s7 = scalar_select 0, %s6, %s4
  $region1: #{forward.5} parent=0
    #allocation2 [shape = 'u8[8192]{0}', space=vmem, size = 0x2000, scoped, tag = 'output window, operand 0, single buffered']
    #allocation3 [shape = 's32[1]{0}', space=sflag, size = 0x4, scoped, tag = 'scoped memory for forward.5']
    %8 = vsyncpa [#allocation3], 0
    // Predicated region
    $region2: #{forward.5} parent=1 // pred_check
      _
    $region3: #{forward.5} parent=1 // pred_check_branch
      %10 = sbr.rel (0) target = $region5
    $region4: #{forward.5} parent=1 // pred_region
      _
    $region5: #{forward.5} parent=1 // pred_fallthru
      _
    // Predicated region
    $region6: #{forward.5} parent=1 // pred_check
      _
    $region7: #{forward.5} parent=1 // pred_check_branch
      %12 = sbr.rel (0) target = $region9
    $region8: #{forward.5} parent=1 // pred_region
      _
    $region9: #{forward.5} parent=1 // pred_fallthru
      _
    // Predicated region
    $region10: #{forward.5} parent=1 // pred_check
      _
    $region11: #{forward.5} parent=1 // pred_check_branch
      %14 = sbr.rel (0) target = $region13
    $region12: #{forward.5} parent=1 // pred_region
      _
    $region13: #{forward.5} parent=1 // pred_fallthru
      _
    %v15 = vld [vmem:[%s0] sm:$0xff]
    %v16 = vld [vmem:[%s0 + $0x8] sm:$0xff]
    %v17 = vld [vmem:[%s0 + $0x10] sm:$0xff]
    %v18 = vld [vmem:[%s0 + $0x18] sm:$0xff]
    %v19 = vld [vmem:[%s0 + $0x20] sm:$0xff]
    %v20 = vld [vmem:[%s0 + $0x28] sm:$0xff]
    %v21 = vld [vmem:[%s0 + $0x30] sm:$0xff]
    %v22 = vld [vmem:[%s0 + $0x38] sm:$0xff]
    %v23 = vld [vmem:[%s1] sm:$0xff]
    %v24 = vld [vmem:[%s1 + $0x8] sm:$0xff]
    %v25 = vld [vmem:[%s1 + $0x10] sm:$0xff]
    %v26 = vld [vmem:[%s1 + $0x18] sm:$0xff]
    %v27 = vld [vmem:[%s1 + $0x20] sm:$0xff]
    %v28 = vld [vmem:[%s1 + $0x28] sm:$0xff]
    %v29 = vld [vmem:[%s1 + $0x30] sm:$0xff]
    %v30 = vld [vmem:[%s1 + $0x38] sm:$0xff]
    %v31 = vld [vmem:[%s1 + $0x40] sm:$0xff]
    %v32 = vld [vmem:[%s1 + $0x48] sm:$0xff]
    %v33 = vld [vmem:[%s1 + $0x50] sm:$0xff]
    %v34 = vld [vmem:[%s1 + $0x58] sm:$0xff]
    %v35 = vld [vmem:[%s1 + $0x60] sm:$0xff]
    %v36 = vld [vmem:[%s1 + $0x68] sm:$0xff]
    %v37 = vld [vmem:[%s1 + $0x70] sm:$0xff]
    %v38 = vld [vmem:[%s1 + $0x78] sm:$0xff]
    %v39 = vld [vmem:[%s1 + $0x80] sm:$0xff]
    %v40 = vld [vmem:[%s1 + $0x88] sm:$0xff]
    %v41 = vld [vmem:[%s1 + $0x90] sm:$0xff]
    %v42 = vld [vmem:[%s1 + $0x98] sm:$0xff]
    %v43 = vld [vmem:[%s1 + $0xa0] sm:$0xff]
    %v44 = vld [vmem:[%s1 + $0xa8] sm:$0xff]
    %v45 = vld [vmem:[%s1 + $0xb0] sm:$0xff]
    %v46 = vld [vmem:[%s1 + $0xb8] sm:$0xff]
    %v47 = vld [vmem:[%s1 + $0xc0] sm:$0xff]
    %v48 = vld [vmem:[%s1 + $0xc8] sm:$0xff]
    %v49 = vld [vmem:[%s1 + $0xd0] sm:$0xff]
    %v50 = vld [vmem:[%s1 + $0xd8] sm:$0xff]
    %v51 = vld [vmem:[%s1 + $0xe0] sm:$0xff]
    %v52 = vld [vmem:[%s1 + $0xe8] sm:$0xff]
    %v53 = vld [vmem:[%s1 + $0xf0] sm:$0xff]
    %v54 = vld [vmem:[%s1 + $0xf8] sm:$0xff]
    %v55 = vld [vmem:[%s1 + $0x100] sm:$0xff]
    %v56 = vld [vmem:[%s1 + $0x108] sm:$0xff]
    %v57 = vld [vmem:[%s1 + $0x110] sm:$0xff]
    %v58 = vld [vmem:[%s1 + $0x118] sm:$0xff]
    %v59 = vld [vmem:[%s1 + $0x120] sm:$0xff]
    %v60 = vld [vmem:[%s1 + $0x128] sm:$0xff]
    %v61 = vld [vmem:[%s1 + $0x130] sm:$0xff]
    %v62 = vld [vmem:[%s1 + $0x138] sm:$0xff]
    %v63 = vld [vmem:[%s1 + $0x140] sm:$0xff]
    %v64 = vld [vmem:[%s1 + $0x148] sm:$0xff]
    %v65 = vld [vmem:[%s1 + $0x150] sm:$0xff]
    %v66 = vld [vmem:[%s1 + $0x158] sm:$0xff]
    %v67 = vld [vmem:[%s1 + $0x160] sm:$0xff]
    %v68 = vld [vmem:[%s1 + $0x168] sm:$0xff]
    %v69 = vld [vmem:[%s1 + $0x170] sm:$0xff]
    %v70 = vld [vmem:[%s1 + $0x178] sm:$0xff]
    %v71 = vld [vmem:[%s1 + $0x180] sm:$0xff]
    %v72 = vld [vmem:[%s1 + $0x188] sm:$0xff]
    %v73 = vld [vmem:[%s1 + $0x190] sm:$0xff]
    %v74 = vld [vmem:[%s1 + $0x198] sm:$0xff]
    %v75 = vld [vmem:[%s1 + $0x1a0] sm:$0xff]
    %v76 = vld [vmem:[%s1 + $0x1a8] sm:$0xff]
    %v77 = vld [vmem:[%s1 + $0x1b0] sm:$0xff]
    %v78 = vld [vmem:[%s1 + $0x1b8] sm:$0xff]
    %v79 = vld [vmem:[%s1 + $0x1c0] sm:$0xff]
    %v80 = vld [vmem:[%s1 + $0x1c8] sm:$0xff]
    %v81 = vld [vmem:[%s1 + $0x1d0] sm:$0xff]
    %v82 = vld [vmem:[%s1 + $0x1d8] sm:$0xff]
    %v83 = vld [vmem:[%s1 + $0x1e0] sm:$0xff]
    %v84 = vld [vmem:[%s1 + $0x1e8] sm:$0xff]
    %v85 = vld [vmem:[%s1 + $0x1f0] sm:$0xff]
    %v86 = vld [vmem:[%s1 + $0x1f8] sm:$0xff]
    %v87 = vld [vmem:[%s1 + $0x200] sm:$0xff]
    %v88 = vld [vmem:[%s1 + $0x208] sm:$0xff]
    %v89 = vld [vmem:[%s1 + $0x210] sm:$0xff]
    %v90 = vld [vmem:[%s1 + $0x218] sm:$0xff]
    %v91 = vld [vmem:[%s1 + $0x220] sm:$0xff]
    %v92 = vld [vmem:[%s1 + $0x228] sm:$0xff]
    %v93 = vld [vmem:[%s1 + $0x230] sm:$0xff]
    %v94 = vld [vmem:[%s1 + $0x238] sm:$0xff]
    %v95 = vld [vmem:[%s1 + $0x240] sm:$0xff]
    %v96 = vld [vmem:[%s1 + $0x248] sm:$0xff]
    %v97 = vld [vmem:[%s1 + $0x250] sm:$0xff]
    %v98 = vld [vmem:[%s1 + $0x258] sm:$0xff]
    %v99 = vld [vmem:[%s1 + $0x260] sm:$0xff]
    %v100 = vld [vmem:[%s1 + $0x268] sm:$0xff]
    %v101 = vld [vmem:[%s1 + $0x270] sm:$0xff]
    %v102 = vld [vmem:[%s1 + $0x278] sm:$0xff]
    %v103 = vld [vmem:[%s1 + $0x280] sm:$0xff]
    %v104 = vld [vmem:[%s1 + $0x288] sm:$0xff]
    %v105 = vld [vmem:[%s1 + $0x290] sm:$0xff]
    %v106 = vld [vmem:[%s1 + $0x298] sm:$0xff]
    %v107 = vld [vmem:[%s1 + $0x2a0] sm:$0xff]
    %v108 = vld [vmem:[%s1 + $0x2a8] sm:$0xff]
    %v109 = vld [vmem:[%s1 + $0x2b0] sm:$0xff]
    %v110 = vld [vmem:[%s1 + $0x2b8] sm:$0xff]
    %v111 = vld [vmem:[%s1 + $0x2c0] sm:$0xff]
    %v112 = vld [vmem:[%s1 + $0x2c8] sm:$0xff]
    %v113 = vld [vmem:[%s1 + $0x2d0] sm:$0xff]
    %v114 = vld [vmem:[%s1 + $0x2d8] sm:$0xff]
    %v115 = vld [vmem:[%s1 + $0x2e0] sm:$0xff]
    %v116 = vld [vmem:[%s1 + $0x2e8] sm:$0xff]
    %v117 = vld [vmem:[%s1 + $0x2f0] sm:$0xff]
    %v118 = vld [vmem:[%s1 + $0x2f8] sm:$0xff]
    %v119 = vld [vmem:[%s1 + $0x300] sm:$0xff]
    %v120 = vld [vmem:[%s1 + $0x308] sm:$0xff]
    %v121 = vld [vmem:[%s1 + $0x310] sm:$0xff]
    %v122 = vld [vmem:[%s1 + $0x318] sm:$0xff]
    %v123 = vld [vmem:[%s1 + $0x320] sm:$0xff]
    %v124 = vld [vmem:[%s1 + $0x328] sm:$0xff]
    %v125 = vld [vmem:[%s1 + $0x330] sm:$0xff]
    %v126 = vld [vmem:[%s1 + $0x338] sm:$0xff]
    %v127 = vld [vmem:[%s1 + $0x340] sm:$0xff]
    %v128 = vld [vmem:[%s1 + $0x348] sm:$0xff]
    %v129 = vld [vmem:[%s1 + $0x350] sm:$0xff]
    %v130 = vld [vmem:[%s1 + $0x358] sm:$0xff]
    %v131 = vld [vmem:[%s1 + $0x360] sm:$0xff]
    %v132 = vld [vmem:[%s1 + $0x368] sm:$0xff]
    %v133 = vld [vmem:[%s1 + $0x370] sm:$0xff]
    %v134 = vld [vmem:[%s1 + $0x378] sm:$0xff]
    %v135 = vld [vmem:[%s1 + $0x380] sm:$0xff]
    %v136 = vld [vmem:[%s1 + $0x388] sm:$0xff]
    %v137 = vld [vmem:[%s1 + $0x390] sm:$0xff]
    %v138 = vld [vmem:[%s1 + $0x398] sm:$0xff]
    %v139 = vld [vmem:[%s1 + $0x3a0] sm:$0xff]
    %v140 = vld [vmem:[%s1 + $0x3a8] sm:$0xff]
    %v141 = vld [vmem:[%s1 + $0x3b0] sm:$0xff]
    %v142 = vld [vmem:[%s1 + $0x3b8] sm:$0xff]
    %v143 = vld [vmem:[%s1 + $0x3c0] sm:$0xff]
    %v144 = vld [vmem:[%s1 + $0x3c8] sm:$0xff]
    %v145 = vld [vmem:[%s1 + $0x3d0] sm:$0xff]
    %v146 = vld [vmem:[%s1 + $0x3d8] sm:$0xff]
    %v147 = vld [vmem:[%s1 + $0x3e0] sm:$0xff]
    %v148 = vld [vmem:[%s1 + $0x3e8] sm:$0xff]
    %v149 = vld [vmem:[%s1 + $0x3f0] sm:$0xff]
    %v150 = vld [vmem:[%s1 + $0x3f8] sm:$0xff]
    %v151 = vld [vmem:[%s1 + $0x400] sm:$0xff]
    %v152 = vld [vmem:[%s1 + $0x408] sm:$0xff]
    %v153 = vld [vmem:[%s1 + $0x410] sm:$0xff]
    %v154 = vld [vmem:[%s1 + $0x418] sm:$0xff]
    %v155 = vld [vmem:[%s1 + $0x420] sm:$0xff]
    %v156 = vld [vmem:[%s1 + $0x428] sm:$0xff]
    %v157 = vld [vmem:[%s1 + $0x430] sm:$0xff]
    %v158 = vld [vmem:[%s1 + $0x438] sm:$0xff]
    %v159 = vld [vmem:[%s1 + $0x440] sm:$0xff]
    %v160 = vld [vmem:[%s1 + $0x448] sm:$0xff]
    %v161 = vld [vmem:[%s1 + $0x450] sm:$0xff]
    %v162 = vld [vmem:[%s1 + $0x458] sm:$0xff]
    %v163 = vld [vmem:[%s1 + $0x460] sm:$0xff]
    %v164 = vld [vmem:[%s1 + $0x468] sm:$0xff]
    %v165 = vld [vmem:[%s1 + $0x470] sm:$0xff]
    %v166 = vld [vmem:[%s1 + $0x478] sm:$0xff]
    %v167 = vld [vmem:[%s1 + $0x480] sm:$0xff]
    %v168 = vld [vmem:[%s1 + $0x488] sm:$0xff]
    %v169 = vld [vmem:[%s1 + $0x490] sm:$0xff]
    %v170 = vld [vmem:[%s1 + $0x498] sm:$0xff]
    %v171 = vld [vmem:[%s1 + $0x4a0] sm:$0xff]
    %v172 = vld [vmem:[%s1 + $0x4a8] sm:$0xff]
    %v173 = vld [vmem:[%s1 + $0x4b0] sm:$0xff]
    %v174 = vld [vmem:[%s1 + $0x4b8] sm:$0xff]
    %v175 = vld [vmem:[%s1 + $0x4c0] sm:$0xff]
    %v176 = vld [vmem:[%s1 + $0x4c8] sm:$0xff]
    %v177 = vld [vmem:[%s1 + $0x4d0] sm:$0xff]
    %v178 = vld [vmem:[%s1 + $0x4d8] sm:$0xff]
    %v179 = vld [vmem:[%s1 + $0x4e0] sm:$0xff]
    %v180 = vld [vmem:[%s1 + $0x4e8] sm:$0xff]
    %v181 = vld [vmem:[%s1 + $0x4f0] sm:$0xff]
    %v182 = vld [vmem:[%s1 + $0x4f8] sm:$0xff]
    %v183 = vld [vmem:[%s1 + $0x500] sm:$0xff]
    %v184 = vld [vmem:[%s1 + $0x508] sm:$0xff]
    %v185 = vld [vmem:[%s1 + $0x510] sm:$0xff]
    %v186 = vld [vmem:[%s1 + $0x518] sm:$0xff]
    %v187 = vld [vmem:[%s1 + $0x520] sm:$0xff]
    %v188 = vld [vmem:[%s1 + $0x528] sm:$0xff]
    %v189 = vld [vmem:[%s1 + $0x530] sm:$0xff]
    %v190 = vld [vmem:[%s1 + $0x538] sm:$0xff]
    %v191 = vld [vmem:[%s1 + $0x540] sm:$0xff]
    %v192 = vld [vmem:[%s1 + $0x548] sm:$0xff]
    %v193 = vld [vmem:[%s1 + $0x550] sm:$0xff]
    %v194 = vld [vmem:[%s1 + $0x558] sm:$0xff]
    %v195 = vld [vmem:[%s1 + $0x560] sm:$0xff]
    %v196 = vld [vmem:[%s1 + $0x568] sm:$0xff]
    %v197 = vld [vmem:[%s1 + $0x570] sm:$0xff]
    %v198 = vld [vmem:[%s1 + $0x578] sm:$0xff]
    %v199 = vld [vmem:[%s1 + $0x580] sm:$0xff]
    %v200 = vld [vmem:[%s1 + $0x588] sm:$0xff]
    %v201 = vld [vmem:[%s1 + $0x590] sm:$0xff]
    %v202 = vld [vmem:[%s1 + $0x598] sm:$0xff]
    %v203 = vld [vmem:[%s1 + $0x5a0] sm:$0xff]
    %v204 = vld [vmem:[%s1 + $0x5a8] sm:$0xff]
    %v205 = vld [vmem:[%s1 + $0x5b0] sm:$0xff]
    %v206 = vld [vmem:[%s1 + $0x5b8] sm:$0xff]
    %v207 = vld [vmem:[%s1 + $0x5c0] sm:$0xff]
    %v208 = vld [vmem:[%s1 + $0x5c8] sm:$0xff]
    %v209 = vld [vmem:[%s1 + $0x5d0] sm:$0xff]
    %v210 = vld [vmem:[%s1 + $0x5d8] sm:$0xff]
    %v211 = vld [vmem:[%s1 + $0x5e0] sm:$0xff]
    %v212 = vld [vmem:[%s1 + $0x5e8] sm:$0xff]
    %v213 = vld [vmem:[%s1 + $0x5f0] sm:$0xff]
    %v214 = vld [vmem:[%s1 + $0x5f8] sm:$0xff]
    %v215 = vld [vmem:[%s1 + $0x600] sm:$0xff]
    %v216 = vld [vmem:[%s1 + $0x608] sm:$0xff]
    %v217 = vld [vmem:[%s1 + $0x610] sm:$0xff]
    %v218 = vld [vmem:[%s1 + $0x618] sm:$0xff]
    %v219 = vld [vmem:[%s1 + $0x620] sm:$0xff]
    %v220 = vld [vmem:[%s1 + $0x628] sm:$0xff]
    %v221 = vld [vmem:[%s1 + $0x630] sm:$0xff]
    %v222 = vld [vmem:[%s1 + $0x638] sm:$0xff]
    %v223 = vld [vmem:[%s1 + $0x640] sm:$0xff]
    %v224 = vld [vmem:[%s1 + $0x648] sm:$0xff]
    %v225 = vld [vmem:[%s1 + $0x650] sm:$0xff]
    %v226 = vld [vmem:[%s1 + $0x658] sm:$0xff]
    %v227 = vld [vmem:[%s1 + $0x660] sm:$0xff]
    %v228 = vld [vmem:[%s1 + $0x668] sm:$0xff]
    %v229 = vld [vmem:[%s1 + $0x670] sm:$0xff]
    %v230 = vld [vmem:[%s1 + $0x678] sm:$0xff]
    %v231 = vld [vmem:[%s1 + $0x680] sm:$0xff]
    %v232 = vld [vmem:[%s1 + $0x688] sm:$0xff]
    %v233 = vld [vmem:[%s1 + $0x690] sm:$0xff]
    %v234 = vld [vmem:[%s1 + $0x698] sm:$0xff]
    %v235 = vld [vmem:[%s1 + $0x6a0] sm:$0xff]
    %v236 = vld [vmem:[%s1 + $0x6a8] sm:$0xff]
    %v237 = vld [vmem:[%s1 + $0x6b0] sm:$0xff]
    %v238 = vld [vmem:[%s1 + $0x6b8] sm:$0xff]
    %v239 = vld [vmem:[%s1 + $0x6c0] sm:$0xff]
    %v240 = vld [vmem:[%s1 + $0x6c8] sm:$0xff]
    %v241 = vld [vmem:[%s1 + $0x6d0] sm:$0xff]
    %v242 = vld [vmem:[%s1 + $0x6d8] sm:$0xff]
    %v243 = vld [vmem:[%s1 + $0x6e0] sm:$0xff]
    %v244 = vld [vmem:[%s1 + $0x6e8] sm:$0xff]
    %v245 = vld [vmem:[%s1 + $0x6f0] sm:$0xff]
    %v246 = vld [vmem:[%s1 + $0x6f8] sm:$0xff]
    %v247 = vld [vmem:[%s1 + $0x700] sm:$0xff]
    %v248 = vld [vmem:[%s1 + $0x708] sm:$0xff]
    %v249 = vld [vmem:[%s1 + $0x710] sm:$0xff]
    %v250 = vld [vmem:[%s1 + $0x718] sm:$0xff]
    %v251 = vld [vmem:[%s1 + $0x720] sm:$0xff]
    %v252 = vld [vmem:[%s1 + $0x728] sm:$0xff]
    %v253 = vld [vmem:[%s1 + $0x730] sm:$0xff]
    %v254 = vld [vmem:[%s1 + $0x738] sm:$0xff]
    %v255 = vld [vmem:[%s1 + $0x740] sm:$0xff]
    %v256 = vld [vmem:[%s1 + $0x748] sm:$0xff]
    %v257 = vld [vmem:[%s1 + $0x750] sm:$0xff]
    %v258 = vld [vmem:[%s1 + $0x758] sm:$0xff]
    %v259 = vld [vmem:[%s1 + $0x760] sm:$0xff]
    %v260 = vld [vmem:[%s1 + $0x768] sm:$0xff]
    %v261 = vld [vmem:[%s1 + $0x770] sm:$0xff]
    %v262 = vld [vmem:[%s1 + $0x778] sm:$0xff]
    %v263 = vld [vmem:[%s1 + $0x780] sm:$0xff]
    %v264 = vld [vmem:[%s1 + $0x788] sm:$0xff]
    %v265 = vld [vmem:[%s1 + $0x790] sm:$0xff]
    %v266 = vld [vmem:[%s1 + $0x798] sm:$0xff]
    %v267 = vld [vmem:[%s1 + $0x7a0] sm:$0xff]
    %v268 = vld [vmem:[%s1 + $0x7a8] sm:$0xff]
    %v269 = vld [vmem:[%s1 + $0x7b0] sm:$0xff]
    %v270 = vld [vmem:[%s1 + $0x7b8] sm:$0xff]
    %v271 = vld [vmem:[%s1 + $0x7c0] sm:$0xff]
    %v272 = vld [vmem:[%s1 + $0x7c8] sm:$0xff]
    %v273 = vld [vmem:[%s1 + $0x7d0] sm:$0xff]
    %v274 = vld [vmem:[%s1 + $0x7d8] sm:$0xff]
    %v275 = vld [vmem:[%s1 + $0x7e0] sm:$0xff]
    %v276 = vld [vmem:[%s1 + $0x7e8] sm:$0xff]
    %v277 = vld [vmem:[%s1 + $0x7f0] sm:$0xff]
    %v278 = vld [vmem:[%s1 + $0x7f8] sm:$0xff]
    %v279 = vld [vmem:[%s2] sm:$0x3]
    %v281 = vlaneseq
    %v282 = vshrl.u32 %v281, 7
    %v283 = vsub.s32 0, %v282
    %v284 = vrot.slane %v279, %v283
    %v285 = vlaneseq
    %v286 = vshrl.u32 %v285, 7
    %v287 = vsub.s32 1, %v286
    %v288 = vrot.slane %v279, %v287
    %v299 = vunpack.c.l.b16 %v15
    %v300 = vunpack.c.h.b16 %v15
    %v301 = vunpack.c.l.b16 %v16
    %v302 = vunpack.c.h.b16 %v16
    %v303 = vunpack.c.l.b16 %v17
    %v304 = vunpack.c.h.b16 %v17
    %v305 = vunpack.c.l.b16 %v18
    %v306 = vunpack.c.h.b16 %v18
    %v307 = vunpack.c.l.b16 %v19
    %v308 = vunpack.c.h.b16 %v19
    %v309 = vunpack.c.l.b16 %v20
    %v310 = vunpack.c.h.b16 %v20
    %v311 = vunpack.c.l.b16 %v21
    %v312 = vunpack.c.h.b16 %v21
    %v313 = vunpack.c.l.b16 %v22
    %v314 = vunpack.c.h.b16 %v22
    %v315 = vpack.c.b16 %v299, %v299
    %v316 = vpack.c.b16 %v300, %v300
    %v317 = vpack.c.b16 %v301, %v301
    %v318 = vpack.c.b16 %v302, %v302
    %v319 = vpack.c.b16 %v303, %v303
    %v320 = vpack.c.b16 %v304, %v304
    %v321 = vpack.c.b16 %v305, %v305
    %v322 = vpack.c.b16 %v306, %v306
    %v323 = vpack.c.b16 %v307, %v307
    %v324 = vpack.c.b16 %v308, %v308
    %v325 = vpack.c.b16 %v309, %v309
    %v326 = vpack.c.b16 %v310, %v310
    %v327 = vpack.c.b16 %v311, %v311
    %v328 = vpack.c.b16 %v312, %v312
    %v329 = vpack.c.b16 %v313, %v313
    %v330 = vpack.c.b16 %v314, %v314
    %v603 = vunpack.c.l.b16 %v23
    %v604 = vunpack.c.h.b16 %v23
    %v605 = vunpack.c.l.b16 %v24
    %v606 = vunpack.c.h.b16 %v24
    %v607 = vunpack.c.l.b16 %v25
    %v608 = vunpack.c.h.b16 %v25
    %v609 = vunpack.c.l.b16 %v26
    %v610 = vunpack.c.h.b16 %v26
    %v611 = vunpack.c.l.b16 %v27
    %v612 = vunpack.c.h.b16 %v27
    %v613 = vunpack.c.l.b16 %v28
    %v614 = vunpack.c.h.b16 %v28
    %v615 = vunpack.c.l.b16 %v29
    %v616 = vunpack.c.h.b16 %v29
    %v617 = vunpack.c.l.b16 %v30
    %v618 = vunpack.c.h.b16 %v30
    %v619 = vunpack.c.l.b16 %v31
    %v620 = vunpack.c.h.b16 %v31
    %v621 = vunpack.c.l.b16 %v32
    %v622 = vunpack.c.h.b16 %v32
    %v623 = vunpack.c.l.b16 %v33
    %v624 = vunpack.c.h.b16 %v33
    %v625 = vunpack.c.l.b16 %v34
    %v626 = vunpack.c.h.b16 %v34
    %v627 = vunpack.c.l.b16 %v35
    %v628 = vunpack.c.h.b16 %v35
    %v629 = vunpack.c.l.b16 %v36
    %v630 = vunpack.c.h.b16 %v36
    %v631 = vunpack.c.l.b16 %v37
    %v632 = vunpack.c.h.b16 %v37
    %v633 = vunpack.c.l.b16 %v38
    %v634 = vunpack.c.h.b16 %v38
    %v635 = vunpack.c.l.b16 %v39
    %v636 = vunpack.c.h.b16 %v39
    %v637 = vunpack.c.l.b16 %v40
    %v638 = vunpack.c.h.b16 %v40
    %v639 = vunpack.c.l.b16 %v41
    %v640 = vunpack.c.h.b16 %v41
    %v641 = vunpack.c.l.b16 %v42
    %v642 = vunpack.c.h.b16 %v42
    %v643 = vunpack.c.l.b16 %v43
    %v644 = vunpack.c.h.b16 %v43
    %v645 = vunpack.c.l.b16 %v44
    %v646 = vunpack.c.h.b16 %v44
    %v647 = vunpack.c.l.b16 %v45
    %v648 = vunpack.c.h.b16 %v45
    %v649 = vunpack.c.l.b16 %v46
    %v650 = vunpack.c.h.b16 %v46
    %v651 = vunpack.c.l.b16 %v47
    %v652 = vunpack.c.h.b16 %v47
    %v653 = vunpack.c.l.b16 %v48
    %v654 = vunpack.c.h.b16 %v48
    %v655 = vunpack.c.l.b16 %v49
    %v656 = vunpack.c.h.b16 %v49
    %v657 = vunpack.c.l.b16 %v50
    %v658 = vunpack.c.h.b16 %v50
    %v659 = vunpack.c.l.b16 %v51
    %v660 = vunpack.c.h.b16 %v51
    %v661 = vunpack.c.l.b16 %v52
    %v662 = vunpack.c.h.b16 %v52
    %v663 = vunpack.c.l.b16 %v53
    %v664 = vunpack.c.h.b16 %v53
    %v665 = vunpack.c.l.b16 %v54
    %v666 = vunpack.c.h.b16 %v54
    %v667 = vunpack.c.l.b16 %v55
    %v668 = vunpack.c.h.b16 %v55
    %v669 = vunpack.c.l.b16 %v56
    %v670 = vunpack.c.h.b16 %v56
    %v671 = vunpack.c.l.b16 %v57
    %v672 = vunpack.c.h.b16 %v57
    %v673 = vunpack.c.l.b16 %v58
    %v674 = vunpack.c.h.b16 %v58
    %v675 = vunpack.c.l.b16 %v59
    %v676 = vunpack.c.h.b16 %v59
    %v677 = vunpack.c.l.b16 %v60
    %v678 = vunpack.c.h.b16 %v60
    %v679 = vunpack.c.l.b16 %v61
    %v680 = vunpack.c.h.b16 %v61
    %v681 = vunpack.c.l.b16 %v62
    %v682 = vunpack.c.h.b16 %v62
    %v683 = vunpack.c.l.b16 %v63
    %v684 = vunpack.c.h.b16 %v63
    %v685 = vunpack.c.l.b16 %v64
    %v686 = vunpack.c.h.b16 %v64
    %v687 = vunpack.c.l.b16 %v65
    %v688 = vunpack.c.h.b16 %v65
    %v689 = vunpack.c.l.b16 %v66
    %v690 = vunpack.c.h.b16 %v66
    %v691 = vunpack.c.l.b16 %v67
    %v692 = vunpack.c.h.b16 %v67
    %v693 = vunpack.c.l.b16 %v68
    %v694 = vunpack.c.h.b16 %v68
    %v695 = vunpack.c.l.b16 %v69
    %v696 = vunpack.c.h.b16 %v69
    %v697 = vunpack.c.l.b16 %v70
    %v698 = vunpack.c.h.b16 %v70
    %v699 = vunpack.c.l.b16 %v71
    %v700 = vunpack.c.h.b16 %v71
    %v701 = vunpack.c.l.b16 %v72
    %v702 = vunpack.c.h.b16 %v72
    %v703 = vunpack.c.l.b16 %v73
    %v704 = vunpack.c.h.b16 %v73
    %v705 = vunpack.c.l.b16 %v74
    %v706 = vunpack.c.h.b16 %v74
    %v707 = vunpack.c.l.b16 %v75
    %v708 = vunpack.c.h.b16 %v75
    %v709 = vunpack.c.l.b16 %v76
    %v710 = vunpack.c.h.b16 %v76
    %v711 = vunpack.c.l.b16 %v77
    %v712 = vunpack.c.h.b16 %v77
    %v713 = vunpack.c.l.b16 %v78
    %v714 = vunpack.c.h.b16 %v78
    %v715 = vunpack.c.l.b16 %v79
    %v716 = vunpack.c.h.b16 %v79
    %v717 = vunpack.c.l.b16 %v80
    %v718 = vunpack.c.h.b16 %v80
    %v719 = vunpack.c.l.b16 %v81
    %v720 = vunpack.c.h.b16 %v81
    %v721 = vunpack.c.l.b16 %v82
    %v722 = vunpack.c.h.b16 %v82
    %v723 = vunpack.c.l.b16 %v83
    %v724 = vunpack.c.h.b16 %v83
    %v725 = vunpack.c.l.b16 %v84
    %v726 = vunpack.c.h.b16 %v84
    %v727 = vunpack.c.l.b16 %v85
    %v728 = vunpack.c.h.b16 %v85
    %v729 = vunpack.c.l.b16 %v86
    %v730 = vunpack.c.h.b16 %v86
    %v731 = vunpack.c.l.b16 %v87
    %v732 = vunpack.c.h.b16 %v87
    %v733 = vunpack.c.l.b16 %v88
    %v734 = vunpack.c.h.b16 %v88
    %v735 = vunpack.c.l.b16 %v89
    %v736 = vunpack.c.h.b16 %v89
    %v737 = vunpack.c.l.b16 %v90
    %v738 = vunpack.c.h.b16 %v90
    %v739 = vunpack.c.l.b16 %v91
    %v740 = vunpack.c.h.b16 %v91
    %v741 = vunpack.c.l.b16 %v92
    %v742 = vunpack.c.h.b16 %v92
    %v743 = vunpack.c.l.b16 %v93
    %v744 = vunpack.c.h.b16 %v93
    %v745 = vunpack.c.l.b16 %v94
    %v746 = vunpack.c.h.b16 %v94
    %v747 = vunpack.c.l.b16 %v95
    %v748 = vunpack.c.h.b16 %v95
    %v749 = vunpack.c.l.b16 %v96
    %v750 = vunpack.c.h.b16 %v96
    %v751 = vunpack.c.l.b16 %v97
    %v752 = vunpack.c.h.b16 %v97
    %v753 = vunpack.c.l.b16 %v98
    %v754 = vunpack.c.h.b16 %v98
    %v755 = vunpack.c.l.b16 %v99
    %v756 = vunpack.c.h.b16 %v99
    %v757 = vunpack.c.l.b16 %v100
    %v758 = vunpack.c.h.b16 %v100
    %v759 = vunpack.c.l.b16 %v101
    %v760 = vunpack.c.h.b16 %v101
    %v761 = vunpack.c.l.b16 %v102
    %v762 = vunpack.c.h.b16 %v102
    %v763 = vunpack.c.l.b16 %v103
    %v764 = vunpack.c.h.b16 %v103
    %v765 = vunpack.c.l.b16 %v104
    %v766 = vunpack.c.h.b16 %v104
    %v767 = vunpack.c.l.b16 %v105
    %v768 = vunpack.c.h.b16 %v105
    %v769 = vunpack.c.l.b16 %v106
    %v770 = vunpack.c.h.b16 %v106
    %v771 = vunpack.c.l.b16 %v107
    %v772 = vunpack.c.h.b16 %v107
    %v773 = vunpack.c.l.b16 %v108
    %v774 = vunpack.c.h.b16 %v108
    %v775 = vunpack.c.l.b16 %v109
    %v776 = vunpack.c.h.b16 %v109
    %v777 = vunpack.c.l.b16 %v110
    %v778 = vunpack.c.h.b16 %v110
    %v779 = vunpack.c.l.b16 %v111
    %v780 = vunpack.c.h.b16 %v111
    %v781 = vunpack.c.l.b16 %v112
    %v782 = vunpack.c.h.b16 %v112
    %v783 = vunpack.c.l.b16 %v113
    %v784 = vunpack.c.h.b16 %v113
    %v785 = vunpack.c.l.b16 %v114
    %v786 = vunpack.c.h.b16 %v114
    %v787 = vunpack.c.l.b16 %v115
    %v788 = vunpack.c.h.b16 %v115
    %v789 = vunpack.c.l.b16 %v116
    %v790 = vunpack.c.h.b16 %v116
    %v791 = vunpack.c.l.b16 %v117
    %v792 = vunpack.c.h.b16 %v117
    %v793 = vunpack.c.l.b16 %v118
    %v794 = vunpack.c.h.b16 %v118
    %v795 = vunpack.c.l.b16 %v119
    %v796 = vunpack.c.h.b16 %v119
    %v797 = vunpack.c.l.b16 %v120
    %v798 = vunpack.c.h.b16 %v120
    %v799 = vunpack.c.l.b16 %v121
    %v800 = vunpack.c.h.b16 %v121
    %v801 = vunpack.c.l.b16 %v122
    %v802 = vunpack.c.h.b16 %v122
    %v803 = vunpack.c.l.b16 %v123
    %v804 = vunpack.c.h.b16 %v123
    %v805 = vunpack.c.l.b16 %v124
    %v806 = vunpack.c.h.b16 %v124
    %v807 = vunpack.c.l.b16 %v125
    %v808 = vunpack.c.h.b16 %v125
    %v809 = vunpack.c.l.b16 %v126
    %v810 = vunpack.c.h.b16 %v126
    %v811 = vunpack.c.l.b16 %v127
    %v812 = vunpack.c.h.b16 %v127
    %v813 = vunpack.c.l.b16 %v128
    %v814 = vunpack.c.h.b16 %v128
    %v815 = vunpack.c.l.b16 %v129
    %v816 = vunpack.c.h.b16 %v129
    %v817 = vunpack.c.l.b16 %v130
    %v818 = vunpack.c.h.b16 %v130
    %v819 = vunpack.c.l.b16 %v131
    %v820 = vunpack.c.h.b16 %v131
    %v821 = vunpack.c.l.b16 %v132
    %v822 = vunpack.c.h.b16 %v132
    %v823 = vunpack.c.l.b16 %v133
    %v824 = vunpack.c.h.b16 %v133
    %v825 = vunpack.c.l.b16 %v134
    %v826 = vunpack.c.h.b16 %v134
    %v827 = vunpack.c.l.b16 %v135
    %v828 = vunpack.c.h.b16 %v135
    %v829 = vunpack.c.l.b16 %v136
    %v830 = vunpack.c.h.b16 %v136
    %v831 = vunpack.c.l.b16 %v137
    %v832 = vunpack.c.h.b16 %v137
    %v833 = vunpack.c.l.b16 %v138
    %v834 = vunpack.c.h.b16 %v138
    %v835 = vunpack.c.l.b16 %v139
    %v836 = vunpack.c.h.b16 %v139
    %v837 = vunpack.c.l.b16 %v140
    %v838 = vunpack.c.h.b16 %v140
    %v839 = vunpack.c.l.b16 %v141
    %v840 = vunpack.c.h.b16 %v141
    %v841 = vunpack.c.l.b16 %v142
    %v842 = vunpack.c.h.b16 %v142
    %v843 = vunpack.c.l.b16 %v143
    %v844 = vunpack.c.h.b16 %v143
    %v845 = vunpack.c.l.b16 %v144
    %v846 = vunpack.c.h.b16 %v144
    %v847 = vunpack.c.l.b16 %v145
    %v848 = vunpack.c.h.b16 %v145
    %v849 = vunpack.c.l.b16 %v146
    %v850 = vunpack.c.h.b16 %v146
    %v851 = vunpack.c.l.b16 %v147
    %v852 = vunpack.c.h.b16 %v147
    %v853 = vunpack.c.l.b16 %v148
    %v854 = vunpack.c.h.b16 %v148
    %v855 = vunpack.c.l.b16 %v149
    %v856 = vunpack.c.h.b16 %v149
    %v857 = vunpack.c.l.b16 %v150
    %v858 = vunpack.c.h.b16 %v150
    %v859 = vunpack.c.l.b16 %v151
    %v860 = vunpack.c.h.b16 %v151
    %v861 = vunpack.c.l.b16 %v152
    %v862 = vunpack.c.h.b16 %v152
    %v863 = vunpack.c.l.b16 %v153
    %v864 = vunpack.c.h.b16 %v153
    %v865 = vunpack.c.l.b16 %v154
    %v866 = vunpack.c.h.b16 %v154
    %v867 = vunpack.c.l.b16 %v155
    %v868 = vunpack.c.h.b16 %v155
    %v869 = vunpack.c.l.b16 %v156
    %v870 = vunpack.c.h.b16 %v156
    %v871 = vunpack.c.l.b16 %v157
    %v872 = vunpack.c.h.b16 %v157
    %v873 = vunpack.c.l.b16 %v158
    %v874 = vunpack.c.h.b16 %v158
    %v875 = vunpack.c.l.b16 %v159
    %v876 = vunpack.c.h.b16 %v159
    %v877 = vunpack.c.l.b16 %v160
    %v878 = vunpack.c.h.b16 %v160
    %v879 = vunpack.c.l.b16 %v161
    %v880 = vunpack.c.h.b16 %v161
    %v881 = vunpack.c.l.b16 %v162
    %v882 = vunpack.c.h.b16 %v162
    %v883 = vunpack.c.l.b16 %v163
    %v884 = vunpack.c.h.b16 %v163
    %v885 = vunpack.c.l.b16 %v164
    %v886 = vunpack.c.h.b16 %v164
    %v887 = vunpack.c.l.b16 %v165
    %v888 = vunpack.c.h.b16 %v165
    %v889 = vunpack.c.l.b16 %v166
    %v890 = vunpack.c.h.b16 %v166
    %v891 = vunpack.c.l.b16 %v167
    %v892 = vunpack.c.h.b16 %v167
    %v893 = vunpack.c.l.b16 %v168
    %v894 = vunpack.c.h.b16 %v168
    %v895 = vunpack.c.l.b16 %v169
    %v896 = vunpack.c.h.b16 %v169
    %v897 = vunpack.c.l.b16 %v170
    %v898 = vunpack.c.h.b16 %v170
    %v899 = vunpack.c.l.b16 %v171
    %v900 = vunpack.c.h.b16 %v171
    %v901 = vunpack.c.l.b16 %v172
    %v902 = vunpack.c.h.b16 %v172
    %v903 = vunpack.c.l.b16 %v173
    %v904 = vunpack.c.h.b16 %v173
    %v905 = vunpack.c.l.b16 %v174
    %v906 = vunpack.c.h.b16 %v174
    %v907 = vunpack.c.l.b16 %v175
    %v908 = vunpack.c.h.b16 %v175
    %v909 = vunpack.c.l.b16 %v176
    %v910 = vunpack.c.h.b16 %v176
    %v911 = vunpack.c.l.b16 %v177
    %v912 = vunpack.c.h.b16 %v177
    %v913 = vunpack.c.l.b16 %v178
    %v914 = vunpack.c.h.b16 %v178
    %v915 = vunpack.c.l.b16 %v179
    %v916 = vunpack.c.h.b16 %v179
    %v917 = vunpack.c.l.b16 %v180
    %v918 = vunpack.c.h.b16 %v180
    %v919 = vunpack.c.l.b16 %v181
    %v920 = vunpack.c.h.b16 %v181
    %v921 = vunpack.c.l.b16 %v182
    %v922 = vunpack.c.h.b16 %v182
    %v923 = vunpack.c.l.b16 %v183
    %v924 = vunpack.c.h.b16 %v183
    %v925 = vunpack.c.l.b16 %v184
    %v926 = vunpack.c.h.b16 %v184
    %v927 = vunpack.c.l.b16 %v185
    %v928 = vunpack.c.h.b16 %v185
    %v929 = vunpack.c.l.b16 %v186
    %v930 = vunpack.c.h.b16 %v186
    %v931 = vunpack.c.l.b16 %v187
    %v932 = vunpack.c.h.b16 %v187
    %v933 = vunpack.c.l.b16 %v188
    %v934 = vunpack.c.h.b16 %v188
    %v935 = vunpack.c.l.b16 %v189
    %v936 = vunpack.c.h.b16 %v189
    %v937 = vunpack.c.l.b16 %v190
    %v938 = vunpack.c.h.b16 %v190
    %v939 = vunpack.c.l.b16 %v191
    %v940 = vunpack.c.h.b16 %v191
    %v941 = vunpack.c.l.b16 %v192
    %v942 = vunpack.c.h.b16 %v192
    %v943 = vunpack.c.l.b16 %v193
    %v944 = vunpack.c.h.b16 %v193
    %v945 = vunpack.c.l.b16 %v194
    %v946 = vunpack.c.h.b16 %v194
    %v947 = vunpack.c.l.b16 %v195
    %v948 = vunpack.c.h.b16 %v195
    %v949 = vunpack.c.l.b16 %v196
    %v950 = vunpack.c.h.b16 %v196
    %v951 = vunpack.c.l.b16 %v197
    %v952 = vunpack.c.h.b16 %v197
    %v953 = vunpack.c.l.b16 %v198
    %v954 = vunpack.c.h.b16 %v198
    %v955 = vunpack.c.l.b16 %v199
    %v956 = vunpack.c.h.b16 %v199
    %v957 = vunpack.c.l.b16 %v200
    %v958 = vunpack.c.h.b16 %v200
    %v959 = vunpack.c.l.b16 %v201
    %v960 = vunpack.c.h.b16 %v201
    %v961 = vunpack.c.l.b16 %v202
    %v962 = vunpack.c.h.b16 %v202
    %v963 = vunpack.c.l.b16 %v203
    %v964 = vunpack.c.h.b16 %v203
    %v965 = vunpack.c.l.b16 %v204
    %v966 = vunpack.c.h.b16 %v204
    %v967 = vunpack.c.l.b16 %v205
    %v968 = vunpack.c.h.b16 %v205
    %v969 = vunpack.c.l.b16 %v206
    %v970 = vunpack.c.h.b16 %v206
    %v971 = vunpack.c.l.b16 %v207
    %v972 = vunpack.c.h.b16 %v207
    %v973 = vunpack.c.l.b16 %v208
    %v974 = vunpack.c.h.b16 %v208
    %v975 = vunpack.c.l.b16 %v209
    %v976 = vunpack.c.h.b16 %v209
    %v977 = vunpack.c.l.b16 %v210
    %v978 = vunpack.c.h.b16 %v210
    %v979 = vunpack.c.l.b16 %v211
    %v980 = vunpack.c.h.b16 %v211
    %v981 = vunpack.c.l.b16 %v212
    %v982 = vunpack.c.h.b16 %v212
    %v983 = vunpack.c.l.b16 %v213
    %v984 = vunpack.c.h.b16 %v213
    %v985 = vunpack.c.l.b16 %v214
    %v986 = vunpack.c.h.b16 %v214
    %v987 = vunpack.c.l.b16 %v215
    %v988 = vunpack.c.h.b16 %v215
    %v989 = vunpack.c.l.b16 %v216
    %v990 = vunpack.c.h.b16 %v216
    %v991 = vunpack.c.l.b16 %v217
    %v992 = vunpack.c.h.b16 %v217
    %v993 = vunpack.c.l.b16 %v218
    %v994 = vunpack.c.h.b16 %v218
    %v995 = vunpack.c.l.b16 %v219
    %v996 = vunpack.c.h.b16 %v219
    %v997 = vunpack.c.l.b16 %v220
    %v998 = vunpack.c.h.b16 %v220
    %v999 = vunpack.c.l.b16 %v221
    %v1000 = vunpack.c.h.b16 %v221
    %v1001 = vunpack.c.l.b16 %v222
    %v1002 = vunpack.c.h.b16 %v222
    %v1003 = vunpack.c.l.b16 %v223
    %v1004 = vunpack.c.h.b16 %v223
    %v1005 = vunpack.c.l.b16 %v224
    %v1006 = vunpack.c.h.b16 %v224
    %v1007 = vunpack.c.l.b16 %v225
    %v1008 = vunpack.c.h.b16 %v225
    %v1009 = vunpack.c.l.b16 %v226
    %v1010 = vunpack.c.h.b16 %v226
    %v1011 = vunpack.c.l.b16 %v227
    %v1012 = vunpack.c.h.b16 %v227
    %v1013 = vunpack.c.l.b16 %v228
    %v1014 = vunpack.c.h.b16 %v228
    %v1015 = vunpack.c.l.b16 %v229
    %v1016 = vunpack.c.h.b16 %v229
    %v1017 = vunpack.c.l.b16 %v230
    %v1018 = vunpack.c.h.b16 %v230
    %v1019 = vunpack.c.l.b16 %v231
    %v1020 = vunpack.c.h.b16 %v231
    %v1021 = vunpack.c.l.b16 %v232
    %v1022 = vunpack.c.h.b16 %v232
    %v1023 = vunpack.c.l.b16 %v233
    %v1024 = vunpack.c.h.b16 %v233
    %v1025 = vunpack.c.l.b16 %v234
    %v1026 = vunpack.c.h.b16 %v234
    %v1027 = vunpack.c.l.b16 %v235
    %v1028 = vunpack.c.h.b16 %v235
    %v1029 = vunpack.c.l.b16 %v236
    %v1030 = vunpack.c.h.b16 %v236
    %v1031 = vunpack.c.l.b16 %v237
    %v1032 = vunpack.c.h.b16 %v237
    %v1033 = vunpack.c.l.b16 %v238
    %v1034 = vunpack.c.h.b16 %v238
    %v1035 = vunpack.c.l.b16 %v239
    %v1036 = vunpack.c.h.b16 %v239
    %v1037 = vunpack.c.l.b16 %v240
    %v1038 = vunpack.c.h.b16 %v240
    %v1039 = vunpack.c.l.b16 %v241
    %v1040 = vunpack.c.h.b16 %v241
    %v1041 = vunpack.c.l.b16 %v242
    %v1042 = vunpack.c.h.b16 %v242
    %v1043 = vunpack.c.l.b16 %v243
    %v1044 = vunpack.c.h.b16 %v243
    %v1045 = vunpack.c.l.b16 %v244
    %v1046 = vunpack.c.h.b16 %v244
    %v1047 = vunpack.c.l.b16 %v245
    %v1048 = vunpack.c.h.b16 %v245
    %v1049 = vunpack.c.l.b16 %v246
    %v1050 = vunpack.c.h.b16 %v246
    %v1051 = vunpack.c.l.b16 %v247
    %v1052 = vunpack.c.h.b16 %v247
    %v1053 = vunpack.c.l.b16 %v248
    %v1054 = vunpack.c.h.b16 %v248
    %v1055 = vunpack.c.l.b16 %v249
    %v1056 = vunpack.c.h.b16 %v249
    %v1057 = vunpack.c.l.b16 %v250
    %v1058 = vunpack.c.h.b16 %v250
    %v1059 = vunpack.c.l.b16 %v251
    %v1060 = vunpack.c.h.b16 %v251
    %v1061 = vunpack.c.l.b16 %v252
    %v1062 = vunpack.c.h.b16 %v252
    %v1063 = vunpack.c.l.b16 %v253
    %v1064 = vunpack.c.h.b16 %v253
    %v1065 = vunpack.c.l.b16 %v254
    %v1066 = vunpack.c.h.b16 %v254
    %v1067 = vunpack.c.l.b16 %v255
    %v1068 = vunpack.c.h.b16 %v255
    %v1069 = vunpack.c.l.b16 %v256
    %v1070 = vunpack.c.h.b16 %v256
    %v1071 = vunpack.c.l.b16 %v257
    %v1072 = vunpack.c.h.b16 %v257
    %v1073 = vunpack.c.l.b16 %v258
    %v1074 = vunpack.c.h.b16 %v258
    %v1075 = vunpack.c.l.b16 %v259
    %v1076 = vunpack.c.h.b16 %v259
    %v1077 = vunpack.c.l.b16 %v260
    %v1078 = vunpack.c.h.b16 %v260
    %v1079 = vunpack.c.l.b16 %v261
    %v1080 = vunpack.c.h.b16 %v261
    %v1081 = vunpack.c.l.b16 %v262
    %v1082 = vunpack.c.h.b16 %v262
    %v1083 = vunpack.c.l.b16 %v263
    %v1084 = vunpack.c.h.b16 %v263
    %v1085 = vunpack.c.l.b16 %v264
    %v1086 = vunpack.c.h.b16 %v264
    %v1087 = vunpack.c.l.b16 %v265
    %v1088 = vunpack.c.h.b16 %v265
    %v1089 = vunpack.c.l.b16 %v266
    %v1090 = vunpack.c.h.b16 %v266
    %v1091 = vunpack.c.l.b16 %v267
    %v1092 = vunpack.c.h.b16 %v267
    %v1093 = vunpack.c.l.b16 %v268
    %v1094 = vunpack.c.h.b16 %v268
    %v1095 = vunpack.c.l.b16 %v269
    %v1096 = vunpack.c.h.b16 %v269
    %v1097 = vunpack.c.l.b16 %v270
    %v1098 = vunpack.c.h.b16 %v270
    %v1099 = vunpack.c.l.b16 %v271
    %v1100 = vunpack.c.h.b16 %v271
    %v1101 = vunpack.c.l.b16 %v272
    %v1102 = vunpack.c.h.b16 %v272
    %v1103 = vunpack.c.l.b16 %v273
    %v1104 = vunpack.c.h.b16 %v273
    %v1105 = vunpack.c.l.b16 %v274
    %v1106 = vunpack.c.h.b16 %v274
    %v1107 = vunpack.c.l.b16 %v275
    %v1108 = vunpack.c.h.b16 %v275
    %v1109 = vunpack.c.l.b16 %v276
    %v1110 = vunpack.c.h.b16 %v276
    %v1111 = vunpack.c.l.b16 %v277
    %v1112 = vunpack.c.h.b16 %v277
    %v1113 = vunpack.c.l.b16 %v278
    %v1114 = vunpack.c.h.b16 %v278
    %v1115 = vpack.c.b16 %v605, %v603
    %v1116 = vpack.c.b16 %v606, %v604
    %v1117 = vpack.c.b16 %v609, %v607
    %v1118 = vpack.c.b16 %v610, %v608
    %v1119 = vpack.c.b16 %v613, %v611
    %v1120 = vpack.c.b16 %v614, %v612
    %v1121 = vpack.c.b16 %v617, %v615
    %v1122 = vpack.c.b16 %v618, %v616
    %v1123 = vpack.c.b16 %v621, %v619
    %v1124 = vpack.c.b16 %v622, %v620
    %v1125 = vpack.c.b16 %v625, %v623
    %v1126 = vpack.c.b16 %v626, %v624
    %v1127 = vpack.c.b16 %v629, %v627
    %v1128 = vpack.c.b16 %v630, %v628
    %v1129 = vpack.c.b16 %v633, %v631
    %v1130 = vpack.c.b16 %v634, %v632
    %v1131 = vpack.c.b16 %v637, %v635
    %v1132 = vpack.c.b16 %v638, %v636
    %v1133 = vpack.c.b16 %v641, %v639
    %v1134 = vpack.c.b16 %v642, %v640
    %v1135 = vpack.c.b16 %v645, %v643
    %v1136 = vpack.c.b16 %v646, %v644
    %v1137 = vpack.c.b16 %v649, %v647
    %v1138 = vpack.c.b16 %v650, %v648
    %v1139 = vpack.c.b16 %v653, %v651
    %v1140 = vpack.c.b16 %v654, %v652
    %v1141 = vpack.c.b16 %v657, %v655
    %v1142 = vpack.c.b16 %v658, %v656
    %v1143 = vpack.c.b16 %v661, %v659
    %v1144 = vpack.c.b16 %v662, %v660
    %v1145 = vpack.c.b16 %v665, %v663
    %v1146 = vpack.c.b16 %v666, %v664
    %v1147 = vpack.c.b16 %v669, %v667
    %v1148 = vpack.c.b16 %v670, %v668
    %v1149 = vpack.c.b16 %v673, %v671
    %v1150 = vpack.c.b16 %v674, %v672
    %v1151 = vpack.c.b16 %v677, %v675
    %v1152 = vpack.c.b16 %v678, %v676
    %v1153 = vpack.c.b16 %v681, %v679
    %v1154 = vpack.c.b16 %v682, %v680
    %v1155 = vpack.c.b16 %v685, %v683
    %v1156 = vpack.c.b16 %v686, %v684
    %v1157 = vpack.c.b16 %v689, %v687
    %v1158 = vpack.c.b16 %v690, %v688
    %v1159 = vpack.c.b16 %v693, %v691
    %v1160 = vpack.c.b16 %v694, %v692
    %v1161 = vpack.c.b16 %v697, %v695
    %v1162 = vpack.c.b16 %v698, %v696
    %v1163 = vpack.c.b16 %v701, %v699
    %v1164 = vpack.c.b16 %v702, %v700
    %v1165 = vpack.c.b16 %v705, %v703
    %v1166 = vpack.c.b16 %v706, %v704
    %v1167 = vpack.c.b16 %v709, %v707
    %v1168 = vpack.c.b16 %v710, %v708
    %v1169 = vpack.c.b16 %v713, %v711
    %v1170 = vpack.c.b16 %v714, %v712
    %v1171 = vpack.c.b16 %v717, %v715
    %v1172 = vpack.c.b16 %v718, %v716
    %v1173 = vpack.c.b16 %v721, %v719
    %v1174 = vpack.c.b16 %v722, %v720
    %v1175 = vpack.c.b16 %v725, %v723
    %v1176 = vpack.c.b16 %v726, %v724
    %v1177 = vpack.c.b16 %v729, %v727
    %v1178 = vpack.c.b16 %v730, %v728
    %v1179 = vpack.c.b16 %v733, %v731
    %v1180 = vpack.c.b16 %v734, %v732
    %v1181 = vpack.c.b16 %v737, %v735
    %v1182 = vpack.c.b16 %v738, %v736
    %v1183 = vpack.c.b16 %v741, %v739
    %v1184 = vpack.c.b16 %v742, %v740
    %v1185 = vpack.c.b16 %v745, %v743
    %v1186 = vpack.c.b16 %v746, %v744
    %v1187 = vpack.c.b16 %v749, %v747
    %v1188 = vpack.c.b16 %v750, %v748
    %v1189 = vpack.c.b16 %v753, %v751
    %v1190 = vpack.c.b16 %v754, %v752
    %v1191 = vpack.c.b16 %v757, %v755
    %v1192 = vpack.c.b16 %v758, %v756
    %v1193 = vpack.c.b16 %v761, %v759
    %v1194 = vpack.c.b16 %v762, %v760
    %v1195 = vpack.c.b16 %v765, %v763
    %v1196 = vpack.c.b16 %v766, %v764
    %v1197 = vpack.c.b16 %v769, %v767
    %v1198 = vpack.c.b16 %v770, %v768
    %v1199 = vpack.c.b16 %v773, %v771
    %v1200 = vpack.c.b16 %v774, %v772
    %v1201 = vpack.c.b16 %v777, %v775
    %v1202 = vpack.c.b16 %v778, %v776
    %v1203 = vpack.c.b16 %v781, %v779
    %v1204 = vpack.c.b16 %v782, %v780
    %v1205 = vpack.c.b16 %v785, %v783
    %v1206 = vpack.c.b16 %v786, %v784
    %v1207 = vpack.c.b16 %v789, %v787
    %v1208 = vpack.c.b16 %v790, %v788
    %v1209 = vpack.c.b16 %v793, %v791
    %v1210 = vpack.c.b16 %v794, %v792
    %v1211 = vpack.c.b16 %v797, %v795
    %v1212 = vpack.c.b16 %v798, %v796
    %v1213 = vpack.c.b16 %v801, %v799
    %v1214 = vpack.c.b16 %v802, %v800
    %v1215 = vpack.c.b16 %v805, %v803
    %v1216 = vpack.c.b16 %v806, %v804
    %v1217 = vpack.c.b16 %v809, %v807
    %v1218 = vpack.c.b16 %v810, %v808
    %v1219 = vpack.c.b16 %v813, %v811
    %v1220 = vpack.c.b16 %v814, %v812
    %v1221 = vpack.c.b16 %v817, %v815
    %v1222 = vpack.c.b16 %v818, %v816
    %v1223 = vpack.c.b16 %v821, %v819
    %v1224 = vpack.c.b16 %v822, %v820
    %v1225 = vpack.c.b16 %v825, %v823
    %v1226 = vpack.c.b16 %v826, %v824
    %v1227 = vpack.c.b16 %v829, %v827
    %v1228 = vpack.c.b16 %v830, %v828
    %v1229 = vpack.c.b16 %v833, %v831
    %v1230 = vpack.c.b16 %v834, %v832
    %v1231 = vpack.c.b16 %v837, %v835
    %v1232 = vpack.c.b16 %v838, %v836
    %v1233 = vpack.c.b16 %v841, %v839
    %v1234 = vpack.c.b16 %v842, %v840
    %v1235 = vpack.c.b16 %v845, %v843
    %v1236 = vpack.c.b16 %v846, %v844
    %v1237 = vpack.c.b16 %v849, %v847
    %v1238 = vpack.c.b16 %v850, %v848
    %v1239 = vpack.c.b16 %v853, %v851
    %v1240 = vpack.c.b16 %v854, %v852
    %v1241 = vpack.c.b16 %v857, %v855
    %v1242 = vpack.c.b16 %v858, %v856
    %v1243 = vpack.c.b16 %v861, %v859
    %v1244 = vpack.c.b16 %v862, %v860
    %v1245 = vpack.c.b16 %v865, %v863
    %v1246 = vpack.c.b16 %v866, %v864
    %v1247 = vpack.c.b16 %v869, %v867
    %v1248 = vpack.c.b16 %v870, %v868
    %v1249 = vpack.c.b16 %v873, %v871
    %v1250 = vpack.c.b16 %v874, %v872
    %v1251 = vpack.c.b16 %v877, %v875
    %v1252 = vpack.c.b16 %v878, %v876
    %v1253 = vpack.c.b16 %v881, %v879
    %v1254 = vpack.c.b16 %v882, %v880
    %v1255 = vpack.c.b16 %v885, %v883
    %v1256 = vpack.c.b16 %v886, %v884
    %v1257 = vpack.c.b16 %v889, %v887
    %v1258 = vpack.c.b16 %v890, %v888
    %v1259 = vpack.c.b16 %v893, %v891
    %v1260 = vpack.c.b16 %v894, %v892
    %v1261 = vpack.c.b16 %v897, %v895
    %v1262 = vpack.c.b16 %v898, %v896
    %v1263 = vpack.c.b16 %v901, %v899
    %v1264 = vpack.c.b16 %v902, %v900
    %v1265 = vpack.c.b16 %v905, %v903
    %v1266 = vpack.c.b16 %v906, %v904
    %v1267 = vpack.c.b16 %v909, %v907
    %v1268 = vpack.c.b16 %v910, %v908
    %v1269 = vpack.c.b16 %v913, %v911
    %v1270 = vpack.c.b16 %v914, %v912
    %v1271 = vpack.c.b16 %v917, %v915
    %v1272 = vpack.c.b16 %v918, %v916
    %v1273 = vpack.c.b16 %v921, %v919
    %v1274 = vpack.c.b16 %v922, %v920
    %v1275 = vpack.c.b16 %v925, %v923
    %v1276 = vpack.c.b16 %v926, %v924
    %v1277 = vpack.c.b16 %v929, %v927
    %v1278 = vpack.c.b16 %v930, %v928
    %v1279 = vpack.c.b16 %v933, %v931
    %v1280 = vpack.c.b16 %v934, %v932
    %v1281 = vpack.c.b16 %v937, %v935
    %v1282 = vpack.c.b16 %v938, %v936
    %v1283 = vpack.c.b16 %v941, %v939
    %v1284 = vpack.c.b16 %v942, %v940
    %v1285 = vpack.c.b16 %v945, %v943
    %v1286 = vpack.c.b16 %v946, %v944
    %v1287 = vpack.c.b16 %v949, %v947
    %v1288 = vpack.c.b16 %v950, %v948
    %v1289 = vpack.c.b16 %v953, %v951
    %v1290 = vpack.c.b16 %v954, %v952
    %v1291 = vpack.c.b16 %v957, %v955
    %v1292 = vpack.c.b16 %v958, %v956
    %v1293 = vpack.c.b16 %v961, %v959
    %v1294 = vpack.c.b16 %v962, %v960
    %v1295 = vpack.c.b16 %v965, %v963
    %v1296 = vpack.c.b16 %v966, %v964
    %v1297 = vpack.c.b16 %v969, %v967
    %v1298 = vpack.c.b16 %v970, %v968
    %v1299 = vpack.c.b16 %v973, %v971
    %v1300 = vpack.c.b16 %v974, %v972
    %v1301 = vpack.c.b16 %v977, %v975
    %v1302 = vpack.c.b16 %v978, %v976
    %v1303 = vpack.c.b16 %v981, %v979
    %v1304 = vpack.c.b16 %v982, %v980
    %v1305 = vpack.c.b16 %v985, %v983
    %v1306 = vpack.c.b16 %v986, %v984
    %v1307 = vpack.c.b16 %v989, %v987
    %v1308 = vpack.c.b16 %v990, %v988
    %v1309 = vpack.c.b16 %v993, %v991
    %v1310 = vpack.c.b16 %v994, %v992
    %v1311 = vpack.c.b16 %v997, %v995
    %v1312 = vpack.c.b16 %v998, %v996
    %v1313 = vpack.c.b16 %v1001, %v999
    %v1314 = vpack.c.b16 %v1002, %v1000
    %v1315 = vpack.c.b16 %v1005, %v1003
    %v1316 = vpack.c.b16 %v1006, %v1004
    %v1317 = vpack.c.b16 %v1009, %v1007
    %v1318 = vpack.c.b16 %v1010, %v1008
    %v1319 = vpack.c.b16 %v1013, %v1011
    %v1320 = vpack.c.b16 %v1014, %v1012
    %v1321 = vpack.c.b16 %v1017, %v1015
    %v1322 = vpack.c.b16 %v1018, %v1016
    %v1323 = vpack.c.b16 %v1021, %v1019
    %v1324 = vpack.c.b16 %v1022, %v1020
    %v1325 = vpack.c.b16 %v1025, %v1023
    %v1326 = vpack.c.b16 %v1026, %v1024
    %v1327 = vpack.c.b16 %v1029, %v1027
    %v1328 = vpack.c.b16 %v1030, %v1028
    %v1329 = vpack.c.b16 %v1033, %v1031
    %v1330 = vpack.c.b16 %v1034, %v1032
    %v1331 = vpack.c.b16 %v1037, %v1035
    %v1332 = vpack.c.b16 %v1038, %v1036
    %v1333 = vpack.c.b16 %v1041, %v1039
    %v1334 = vpack.c.b16 %v1042, %v1040
    %v1335 = vpack.c.b16 %v1045, %v1043
    %v1336 = vpack.c.b16 %v1046, %v1044
    %v1337 = vpack.c.b16 %v1049, %v1047
    %v1338 = vpack.c.b16 %v1050, %v1048
    %v1339 = vpack.c.b16 %v1053, %v1051
    %v1340 = vpack.c.b16 %v1054, %v1052
    %v1341 = vpack.c.b16 %v1057, %v1055
    %v1342 = vpack.c.b16 %v1058, %v1056
    %v1343 = vpack.c.b16 %v1061, %v1059
    %v1344 = vpack.c.b16 %v1062, %v1060
    %v1345 = vpack.c.b16 %v1065, %v1063
    %v1346 = vpack.c.b16 %v1066, %v1064
    %v1347 = vpack.c.b16 %v1069, %v1067
    %v1348 = vpack.c.b16 %v1070, %v1068
    %v1349 = vpack.c.b16 %v1073, %v1071
    %v1350 = vpack.c.b16 %v1074, %v1072
    %v1351 = vpack.c.b16 %v1077, %v1075
    %v1352 = vpack.c.b16 %v1078, %v1076
    %v1353 = vpack.c.b16 %v1081, %v1079
    %v1354 = vpack.c.b16 %v1082, %v1080
    %v1355 = vpack.c.b16 %v1085, %v1083
    %v1356 = vpack.c.b16 %v1086, %v1084
    %v1357 = vpack.c.b16 %v1089, %v1087
    %v1358 = vpack.c.b16 %v1090, %v1088
    %v1359 = vpack.c.b16 %v1093, %v1091
    %v1360 = vpack.c.b16 %v1094, %v1092
    %v1361 = vpack.c.b16 %v1097, %v1095
    %v1362 = vpack.c.b16 %v1098, %v1096
    %v1363 = vpack.c.b16 %v1101, %v1099
    %v1364 = vpack.c.b16 %v1102, %v1100
    %v1365 = vpack.c.b16 %v1105, %v1103
    %v1366 = vpack.c.b16 %v1106, %v1104
    %v1367 = vpack.c.b16 %v1109, %v1107
    %v1368 = vpack.c.b16 %v1110, %v1108
    %v1369 = vpack.c.b16 %v1113, %v1111
    %v1370 = vpack.c.b16 %v1114, %v1112
    %1627 = vmatprep.subr.bf16.mxu0 %v1116
    %1628 = vmatpush1.bf16.msra.mxu0 %v1115
    %1629 = vmatprep.subr.bf16.mxu0 %v1118
    %1630 = vmatpush1.bf16.msra.mxu0 %v1117
    %1631 = vmatprep.subr.bf16.mxu0 %v1120
    %1632 = vmatpush1.bf16.msra.mxu0 %v1119
    %1633 = vmatprep.subr.bf16.mxu0 %v1122
    %1634 = vmatpush1.bf16.msra.mxu0 %v1121
    %1635 = vmatprep.subr.bf16.mxu0 %v1124
    %1636 = vmatpush1.bf16.msra.mxu0 %v1123
    %1637 = vmatprep.subr.bf16.mxu0 %v1126
    %1638 = vmatpush1.bf16.msra.mxu0 %v1125
    %1639 = vmatprep.subr.bf16.mxu0 %v1128
    %1640 = vmatpush1.bf16.msra.mxu0 %v1127
    %1641 = vmatprep.subr.bf16.mxu0 %v1130
    %1642 = vmatpush1.bf16.msra.mxu0 %v1129
    %1643 = vmatprep.subr.bf16.mxu0 %v1132
    %1644 = vmatpush1.bf16.msra.mxu0 %v1131
    %1645 = vmatprep.subr.bf16.mxu0 %v1134
    %1646 = vmatpush1.bf16.msra.mxu0 %v1133
    %1647 = vmatprep.subr.bf16.mxu0 %v1136
    %1648 = vmatpush1.bf16.msra.mxu0 %v1135
    %1649 = vmatprep.subr.bf16.mxu0 %v1138
    %1650 = vmatpush1.bf16.msra.mxu0 %v1137
    %1651 = vmatprep.subr.bf16.mxu0 %v1140
    %1652 = vmatpush1.bf16.msra.mxu0 %v1139
    %1653 = vmatprep.subr.bf16.mxu0 %v1142
    %1654 = vmatpush1.bf16.msra.mxu0 %v1141
    %1655 = vmatprep.subr.bf16.mxu0 %v1144
    %1656 = vmatpush1.bf16.msra.mxu0 %v1143
    %1657 = vmatprep.subr.bf16.mxu0 %v1146
    %1658 = vmatpush1.bf16.msra.mxu0 %v1145
    %1659 = vmatprep.mubr.bf16.mxu0 %v316
    %1660 = vmatmul.mubr.bf16.gmra.mrb[0].mxu0 %v315
    %v1661 = vpop.f32.mrb[0].mxu0
    %v1662 = vadd.f32 %v284, %v1661
    %v1663 = vpop.f32.mrb[0].mxu0
    %v1664 = vadd.f32 %v288, %v1663
    %v1665 = vpop.f32.mrb[0].mxu0
    %v1666 = vpop.f32.mrb[0].mxu0
    %1667 = vdwg.mxu0
    %1668 = vmatprep.subr.bf16.mxu0 %v1148
    %1669 = vmatpush1.bf16.msra.mxu0 %v1147
    %1670 = vmatprep.subr.bf16.mxu0 %v1150
    %1671 = vmatpush1.bf16.msra.mxu0 %v1149
    %1672 = vmatprep.subr.bf16.mxu0 %v1152
    %1673 = vmatpush1.bf16.msra.mxu0 %v1151
    %1674 = vmatprep.subr.bf16.mxu0 %v1154
    %1675 = vmatpush1.bf16.msra.mxu0 %v1153
    %1676 = vmatprep.subr.bf16.mxu0 %v1156
    %1677 = vmatpush1.bf16.msra.mxu0 %v1155
    %1678 = vmatprep.subr.bf16.mxu0 %v1158
    %1679 = vmatpush1.bf16.msra.mxu0 %v1157
    %1680 = vmatprep.subr.bf16.mxu0 %v1160
    %1681 = vmatpush1.bf16.msra.mxu0 %v1159
    %1682 = vmatprep.subr.bf16.mxu0 %v1162
    %1683 = vmatpush1.bf16.msra.mxu0 %v1161
    %1684 = vmatprep.subr.bf16.mxu0 %v1164
    %1685 = vmatpush1.bf16.msra.mxu0 %v1163
    %1686 = vmatprep.subr.bf16.mxu0 %v1166
    %1687 = vmatpush1.bf16.msra.mxu0 %v1165
    %1688 = vmatprep.subr.bf16.mxu0 %v1168
    %1689 = vmatpush1.bf16.msra.mxu0 %v1167
    %1690 = vmatprep.subr.bf16.mxu0 %v1170
    %1691 = vmatpush1.bf16.msra.mxu0 %v1169
    %1692 = vmatprep.subr.bf16.mxu0 %v1172
    %1693 = vmatpush1.bf16.msra.mxu0 %v1171
    %1694 = vmatprep.subr.bf16.mxu0 %v1174
    %1695 = vmatpush1.bf16.msra.mxu0 %v1173
    %1696 = vmatprep.subr.bf16.mxu0 %v1176
    %1697 = vmatpush1.bf16.msra.mxu0 %v1175
    %1698 = vmatprep.subr.bf16.mxu0 %v1178
    %1699 = vmatpush1.bf16.msra.mxu0 %v1177
    %1700 = vmatprep.mubr.bf16.mxu0 %v318
    %1701 = vmatmul.mubr.bf16.gmra.mrb[0].mxu0 %v317
    %v1702 = vpop.f32.mrb[0].mxu0
    %v1703 = vadd.f32 %v1662, %v1702
    %v1704 = vpop.f32.mrb[0].mxu0
    %v1705 = vadd.f32 %v1664, %v1704
    %v1706 = vpop.f32.mrb[0].mxu0
    %v1707 = vpop.f32.mrb[0].mxu0
    %1708 = vdwg.mxu0
    %1709 = vmatprep.subr.bf16.mxu0 %v1180
    %1710 = vmatpush1.bf16.msra.mxu0 %v1179
    %1711 = vmatprep.subr.bf16.mxu0 %v1182
    %1712 = vmatpush1.bf16.msra.mxu0 %v1181
    %1713 = vmatprep.subr.bf16.mxu0 %v1184
    %1714 = vmatpush1.bf16.msra.mxu0 %v1183
    %1715 = vmatprep.subr.bf16.mxu0 %v1186
    %1716 = vmatpush1.bf16.msra.mxu0 %v1185
    %1717 = vmatprep.subr.bf16.mxu0 %v1188
    %1718 = vmatpush1.bf16.msra.mxu0 %v1187
    %1719 = vmatprep.subr.bf16.mxu0 %v1190
    %1720 = vmatpush1.bf16.msra.mxu0 %v1189
    %1721 = vmatprep.subr.bf16.mxu0 %v1192
    %1722 = vmatpush1.bf16.msra.mxu0 %v1191
    %1723 = vmatprep.subr.bf16.mxu0 %v1194
    %1724 = vmatpush1.bf16.msra.mxu0 %v1193
    %1725 = vmatprep.subr.bf16.mxu0 %v1196
    %1726 = vmatpush1.bf16.msra.mxu0 %v1195
    %1727 = vmatprep.subr.bf16.mxu0 %v1198
    %1728 = vmatpush1.bf16.msra.mxu0 %v1197
    %1729 = vmatprep.subr.bf16.mxu0 %v1200
    %1730 = vmatpush1.bf16.msra.mxu0 %v1199
    %1731 = vmatprep.subr.bf16.mxu0 %v1202
    %1732 = vmatpush1.bf16.msra.mxu0 %v1201
    %1733 = vmatprep.subr.bf16.mxu0 %v1204
    %1734 = vmatpush1.bf16.msra.mxu0 %v1203
    %1735 = vmatprep.subr.bf16.mxu0 %v1206
    %1736 = vmatpush1.bf16.msra.mxu0 %v1205
    %1737 = vmatprep.subr.bf16.mxu0 %v1208
    %1738 = vmatpush1.bf16.msra.mxu0 %v1207
    %1739 = vmatprep.subr.bf16.mxu0 %v1210
    %1740 = vmatpush1.bf16.msra.mxu0 %v1209
    %1741 = vmatprep.mubr.bf16.mxu0 %v320
    %1742 = vmatmul.mubr.bf16.gmra.mrb[0].mxu0 %v319
    %v1743 = vpop.f32.mrb[0].mxu0
    %v1744 = vadd.f32 %v1703, %v1743
    %v1745 = vpop.f32.mrb[0].mxu0
    %v1746 = vadd.f32 %v1705, %v1745
    %v1747 = vpop.f32.mrb[0].mxu0
    %v1748 = vpop.f32.mrb[0].mxu0
    %1749 = vdwg.mxu0
    %1750 = vmatprep.subr.bf16.mxu0 %v1212
    %1751 = vmatpush1.bf16.msra.mxu0 %v1211
    %1752 = vmatprep.subr.bf16.mxu0 %v1214
    %1753 = vmatpush1.bf16.msra.mxu0 %v1213
    %1754 = vmatprep.subr.bf16.mxu0 %v1216
    %1755 = vmatpush1.bf16.msra.mxu0 %v1215
    %1756 = vmatprep.subr.bf16.mxu0 %v1218
    %1757 = vmatpush1.bf16.msra.mxu0 %v1217
    %1758 = vmatprep.subr.bf16.mxu0 %v1220
    %1759 = vmatpush1.bf16.msra.mxu0 %v1219
    %1760 = vmatprep.subr.bf16.mxu0 %v1222
    %1761 = vmatpush1.bf16.msra.mxu0 %v1221
    %1762 = vmatprep.subr.bf16.mxu0 %v1224
    %1763 = vmatpush1.bf16.msra.mxu0 %v1223
    %1764 = vmatprep.subr.bf16.mxu0 %v1226
    %1765 = vmatpush1.bf16.msra.mxu0 %v1225
    %1766 = vmatprep.subr.bf16.mxu0 %v1228
    %1767 = vmatpush1.bf16.msra.mxu0 %v1227
    %1768 = vmatprep.subr.bf16.mxu0 %v1230
    %1769 = vmatpush1.bf16.msra.mxu0 %v1229
    %1770 = vmatprep.subr.bf16.mxu0 %v1232
    %1771 = vmatpush1.bf16.msra.mxu0 %v1231
    %1772 = vmatprep.subr.bf16.mxu0 %v1234
    %1773 = vmatpush1.bf16.msra.mxu0 %v1233
    %1774 = vmatprep.subr.bf16.mxu0 %v1236
    %1775 = vmatpush1.bf16.msra.mxu0 %v1235
    %1776 = vmatprep.subr.bf16.mxu0 %v1238
    %1777 = vmatpush1.bf16.msra.mxu0 %v1237
    %1778 = vmatprep.subr.bf16.mxu0 %v1240
    %1779 = vmatpush1.bf16.msra.mxu0 %v1239
    %1780 = vmatprep.subr.bf16.mxu0 %v1242
    %1781 = vmatpush1.bf16.msra.mxu0 %v1241
    %1782 = vmatprep.mubr.bf16.mxu0 %v322
    %1783 = vmatmul.mubr.bf16.gmra.mrb[0].mxu0 %v321
    %v1784 = vpop.f32.mrb[0].mxu0
    %v1785 = vadd.f32 %v1744, %v1784
    %v1786 = vpop.f32.mrb[0].mxu0
    %v1787 = vadd.f32 %v1746, %v1786
    %v1788 = vpop.f32.mrb[0].mxu0
    %v1789 = vpop.f32.mrb[0].mxu0
    %1790 = vdwg.mxu0
    %1791 = vmatprep.subr.bf16.mxu0 %v1244
    %1792 = vmatpush1.bf16.msra.mxu0 %v1243
    %1793 = vmatprep.subr.bf16.mxu0 %v1246
    %1794 = vmatpush1.bf16.msra.mxu0 %v1245
    %1795 = vmatprep.subr.bf16.mxu0 %v1248
    %1796 = vmatpush1.bf16.msra.mxu0 %v1247
    %1797 = vmatprep.subr.bf16.mxu0 %v1250
    %1798 = vmatpush1.bf16.msra.mxu0 %v1249
    %1799 = vmatprep.subr.bf16.mxu0 %v1252
    %1800 = vmatpush1.bf16.msra.mxu0 %v1251
    %1801 = vmatprep.subr.bf16.mxu0 %v1254
    %1802 = vmatpush1.bf16.msra.mxu0 %v1253
    %1803 = vmatprep.subr.bf16.mxu0 %v1256
    %1804 = vmatpush1.bf16.msra.mxu0 %v1255
    %1805 = vmatprep.subr.bf16.mxu0 %v1258
    %1806 = vmatpush1.bf16.msra.mxu0 %v1257
    %1807 = vmatprep.subr.bf16.mxu0 %v1260
    %1808 = vmatpush1.bf16.msra.mxu0 %v1259
    %1809 = vmatprep.subr.bf16.mxu0 %v1262
    %1810 = vmatpush1.bf16.msra.mxu0 %v1261
    %1811 = vmatprep.subr.bf16.mxu0 %v1264
    %1812 = vmatpush1.bf16.msra.mxu0 %v1263
    %1813 = vmatprep.subr.bf16.mxu0 %v1266
    %1814 = vmatpush1.bf16.msra.mxu0 %v1265
    %1815 = vmatprep.subr.bf16.mxu0 %v1268
    %1816 = vmatpush1.bf16.msra.mxu0 %v1267
    %1817 = vmatprep.subr.bf16.mxu0 %v1270
    %1818 = vmatpush1.bf16.msra.mxu0 %v1269
    %1819 = vmatprep.subr.bf16.mxu0 %v1272
    %1820 = vmatpush1.bf16.msra.mxu0 %v1271
    %1821 = vmatprep.subr.bf16.mxu0 %v1274
    %1822 = vmatpush1.bf16.msra.mxu0 %v1273
    %1823 = vmatprep.mubr.bf16.mxu0 %v324
    %1824 = vmatmul.mubr.bf16.gmra.mrb[0].mxu0 %v323
    %v1825 = vpop.f32.mrb[0].mxu0
    %v1826 = vadd.f32 %v1785, %v1825
    %v1827 = vpop.f32.mrb[0].mxu0
    %v1828 = vadd.f32 %v1787, %v1827
    %v1829 = vpop.f32.mrb[0].mxu0
    %v1830 = vpop.f32.mrb[0].mxu0
    %1831 = vdwg.mxu0
    %1832 = vmatprep.subr.bf16.mxu0 %v1276
    %1833 = vmatpush1.bf16.msra.mxu0 %v1275
    %1834 = vmatprep.subr.bf16.mxu0 %v1278
    %1835 = vmatpush1.bf16.msra.mxu0 %v1277
    %1836 = vmatprep.subr.bf16.mxu0 %v1280
    %1837 = vmatpush1.bf16.msra.mxu0 %v1279
    %1838 = vmatprep.subr.bf16.mxu0 %v1282
    %1839 = vmatpush1.bf16.msra.mxu0 %v1281
    %1840 = vmatprep.subr.bf16.mxu0 %v1284
    %1841 = vmatpush1.bf16.msra.mxu0 %v1283
    %1842 = vmatprep.subr.bf16.mxu0 %v1286
    %1843 = vmatpush1.bf16.msra.mxu0 %v1285
    %1844 = vmatprep.subr.bf16.mxu0 %v1288
    %1845 = vmatpush1.bf16.msra.mxu0 %v1287
    %1846 = vmatprep.subr.bf16.mxu0 %v1290
    %1847 = vmatpush1.bf16.msra.mxu0 %v1289
    %1848 = vmatprep.subr.bf16.mxu0 %v1292
    %1849 = vmatpush1.bf16.msra.mxu0 %v1291
    %1850 = vmatprep.subr.bf16.mxu0 %v1294
    %1851 = vmatpush1.bf16.msra.mxu0 %v1293
    %1852 = vmatprep.subr.bf16.mxu0 %v1296
    %1853 = vmatpush1.bf16.msra.mxu0 %v1295
    %1854 = vmatprep.subr.bf16.mxu0 %v1298
    %1855 = vmatpush1.bf16.msra.mxu0 %v1297
    %1856 = vmatprep.subr.bf16.mxu0 %v1300
    %1857 = vmatpush1.bf16.msra.mxu0 %v1299
    %1858 = vmatprep.subr.bf16.mxu0 %v1302
    %1859 = vmatpush1.bf16.msra.mxu0 %v1301
    %1860 = vmatprep.subr.bf16.mxu0 %v1304
    %1861 = vmatpush1.bf16.msra.mxu0 %v1303
    %1862 = vmatprep.subr.bf16.mxu0 %v1306
    %1863 = vmatpush1.bf16.msra.mxu0 %v1305
    %1864 = vmatprep.mubr.bf16.mxu0 %v326
    %1865 = vmatmul.mubr.bf16.gmra.mrb[0].mxu0 %v325
    %v1866 = vpop.f32.mrb[0].mxu0
    %v1867 = vadd.f32 %v1826, %v1866
    %v1868 = vpop.f32.mrb[0].mxu0
    %v1869 = vadd.f32 %v1828, %v1868
    %v1870 = vpop.f32.mrb[0].mxu0
    %v1871 = vpop.f32.mrb[0].mxu0
    %1872 = vdwg.mxu0
    %1873 = vmatprep.subr.bf16.mxu0 %v1308
    %1874 = vmatpush1.bf16.msra.mxu0 %v1307
    %1875 = vmatprep.subr.bf16.mxu0 %v1310
    %1876 = vmatpush1.bf16.msra.mxu0 %v1309
    %1877 = vmatprep.subr.bf16.mxu0 %v1312
    %1878 = vmatpush1.bf16.msra.mxu0 %v1311
    %1879 = vmatprep.subr.bf16.mxu0 %v1314
    %1880 = vmatpush1.bf16.msra.mxu0 %v1313
    %1881 = vmatprep.subr.bf16.mxu0 %v1316
    %1882 = vmatpush1.bf16.msra.mxu0 %v1315
    %1883 = vmatprep.subr.bf16.mxu0 %v1318
    %1884 = vmatpush1.bf16.msra.mxu0 %v1317
    %1885 = vmatprep.subr.bf16.mxu0 %v1320
    %1886 = vmatpush1.bf16.msra.mxu0 %v1319
    %1887 = vmatprep.subr.bf16.mxu0 %v1322
    %1888 = vmatpush1.bf16.msra.mxu0 %v1321
    %1889 = vmatprep.subr.bf16.mxu0 %v1324
    %1890 = vmatpush1.bf16.msra.mxu0 %v1323
    %1891 = vmatprep.subr.bf16.mxu0 %v1326
    %1892 = vmatpush1.bf16.msra.mxu0 %v1325
    %1893 = vmatprep.subr.bf16.mxu0 %v1328
    %1894 = vmatpush1.bf16.msra.mxu0 %v1327
    %1895 = vmatprep.subr.bf16.mxu0 %v1330
    %1896 = vmatpush1.bf16.msra.mxu0 %v1329
    %1897 = vmatprep.subr.bf16.mxu0 %v1332
    %1898 = vmatpush1.bf16.msra.mxu0 %v1331
    %1899 = vmatprep.subr.bf16.mxu0 %v1334
    %1900 = vmatpush1.bf16.msra.mxu0 %v1333
    %1901 = vmatprep.subr.bf16.mxu0 %v1336
    %1902 = vmatpush1.bf16.msra.mxu0 %v1335
    %1903 = vmatprep.subr.bf16.mxu0 %v1338
    %1904 = vmatpush1.bf16.msra.mxu0 %v1337
    %1905 = vmatprep.mubr.bf16.mxu0 %v328
    %1906 = vmatmul.mubr.bf16.gmra.mrb[0].mxu0 %v327
    %v1907 = vpop.f32.mrb[0].mxu0
    %v1908 = vadd.f32 %v1867, %v1907
    %v1909 = vpop.f32.mrb[0].mxu0
    %v1910 = vadd.f32 %v1869, %v1909
    %v1911 = vpop.f32.mrb[0].mxu0
    %v1912 = vpop.f32.mrb[0].mxu0
    %1913 = vdwg.mxu0
    %1914 = vmatprep.subr.bf16.mxu0 %v1340
    %1915 = vmatpush1.bf16.msra.mxu0 %v1339
    %1916 = vmatprep.subr.bf16.mxu0 %v1342
    %1917 = vmatpush1.bf16.msra.mxu0 %v1341
    %1918 = vmatprep.subr.bf16.mxu0 %v1344
    %1919 = vmatpush1.bf16.msra.mxu0 %v1343
    %1920 = vmatprep.subr.bf16.mxu0 %v1346
    %1921 = vmatpush1.bf16.msra.mxu0 %v1345
    %1922 = vmatprep.subr.bf16.mxu0 %v1348
    %1923 = vmatpush1.bf16.msra.mxu0 %v1347
    %1924 = vmatprep.subr.bf16.mxu0 %v1350
    %1925 = vmatpush1.bf16.msra.mxu0 %v1349
    %1926 = vmatprep.subr.bf16.mxu0 %v1352
    %1927 = vmatpush1.bf16.msra.mxu0 %v1351
    %1928 = vmatprep.subr.bf16.mxu0 %v1354
    %1929 = vmatpush1.bf16.msra.mxu0 %v1353
    %1930 = vmatprep.subr.bf16.mxu0 %v1356
    %1931 = vmatpush1.bf16.msra.mxu0 %v1355
    %1932 = vmatprep.subr.bf16.mxu0 %v1358
    %1933 = vmatpush1.bf16.msra.mxu0 %v1357
    %1934 = vmatprep.subr.bf16.mxu0 %v1360
    %1935 = vmatpush1.bf16.msra.mxu0 %v1359
    %1936 = vmatprep.subr.bf16.mxu0 %v1362
    %1937 = vmatpush1.bf16.msra.mxu0 %v1361
    %1938 = vmatprep.subr.bf16.mxu0 %v1364
    %1939 = vmatpush1.bf16.msra.mxu0 %v1363
    %1940 = vmatprep.subr.bf16.mxu0 %v1366
    %1941 = vmatpush1.bf16.msra.mxu0 %v1365
    %1942 = vmatprep.subr.bf16.mxu0 %v1368
    %1943 = vmatpush1.bf16.msra.mxu0 %v1367
    %1944 = vmatprep.subr.bf16.mxu0 %v1370
    %1945 = vmatpush1.bf16.msra.mxu0 %v1369
    %1946 = vmatprep.mubr.bf16.mxu0 %v330
    %1947 = vmatmul.mubr.bf16.gmra.mrb[0].mxu0 %v329
    %v1948 = vpop.f32.mrb[0].mxu0
    %v1949 = vadd.f32 %v1908, %v1948
    %v1950 = vpop.f32.mrb[0].mxu0
    %v1951 = vadd.f32 %v1910, %v1950
    %v1952 = vpop.f32.mrb[0].mxu0
    %v1953 = vpop.f32.mrb[0].mxu0
    %1954 = vdwg.mxu0
    %1955 = vst [vmem:[#allocation2] sm:$0xff] %v1949
    %1956 = vst [vmem:[#allocation2 + $0x8] sm:$0xff] %v1951
    // Predicated region
    $region14: #{forward.5} parent=1 // pred_check
      _
    $region15: #{forward.5} parent=1 // pred_check_branch
      %1958 = sbr.rel (0) target = $region17
    $region16: #{forward.5} parent=1 // pred_region
      %s1960 = ssub.s32 256, 256
      %1961 = vsyncadd [#allocation3], %s1960
      %s1963 = sshll.u32 [#allocation2], 4
      %s1964 = int_to_ptr.vmem [resolvable:$true] %s1963
      %1966 = dma.vmem_to_hbm [thread:$0]  %s1964, 256, %s3, [#allocation3]
    $region17: #{forward.5} parent=1 // pred_fallthru
      _
    // Predicated region
    $region18: #{forward.5} parent=1 // pred_check
      _
    $region19: #{forward.5} parent=1 // pred_check_branch
      %1968 = sbr.rel (0) target = $region21
    $region20: #{forward.5} parent=1 // pred_region
      %1969 = dma.done [#allocation3], 256
    $region21: #{forward.5} parent=1 // pred_fallthru
      _
    %1970 = vsyncpa [#allocation3], 1

// kernel: forward.3
$region0: #{forward.3}
  #allocation0 [shape = 'u32[]', space=smem, size = 0x4, offset = 0x4, fixed_abs, tag = 'smem constant byte address 0x4 - core index']
  #allocation1 [shape = 'u32[144,128]{1,0:T(1,128)}', space=vmem, size = 0x12000, scoped, tag = 'internal scratch']
  %s0 = inlined_call_operand.vmem [shape: bf16[8,2048], index: 0, kind: input, shape index: {}]
  %s1 = inlined_call_operand.hbm [shape: bf16[2048,2048], index: 1, kind: input, shape index: {}]
  %s2 = inlined_call_operand.hbm [shape: f32[1,2048], index: 2, kind: input, shape index: {}]
  %s3 = inlined_call_operand.vmem [shape: bf16[8,2048], index: 3, kind: output, shape index: {}]
  %s4 = sld [smem:[#allocation0]]
  $region53: #{forward.3} parent=0
    _
  %s6 = ssub.s32 1, %s4
  %s7 = scalar_select 0, %s6, %s4
  $region1: #{forward.3} parent=0
    #allocation2 [shape = 'u8[4194304]{0}', space=vmem, size = 0x400000, scoped, tag = 'input window, operand 1']
    #allocation3 [shape = 's32[2]{0}', space=sflag, size = 0x8, scoped, tag = 'scoped memory for forward.3']
    #allocation4 [shape = 'u8[4096]{0}', space=vmem, size = 0x1000, scoped, tag = 'input window, operand 2']
    #allocation5 [shape = 's32[2]{0}', space=sflag, size = 0x8, scoped, tag = 'scoped memory for forward.3']
    %8 = vsyncpa [#allocation3], 0
    %s9 = scalar_lea.sflag [#allocation3], 1
    %10 = vsyncpa %s9, 0
    %11 = vsyncpa [#allocation5], 0
    %s12 = scalar_lea.sflag [#allocation5], 1
    %13 = vsyncpa %s12, 0
    loop: start=0, step=1, limit=6
    $region2: #{forward.3} parent=1 // loop_pre_header
      _
    $region3: #{forward.3} parent=1 // loop_header
      %s15 = sphi 0, %s19
      %p16 = scmp.ge.s32.totalorder %s15, 6
      %s22 = sphi 0, %s34
      %s23 = sphi 0, %s30
      %s24 = sphi 0, %s22
      %s25 = sphi 0, %s23
      %s26 = sphi 0, %s24
      %s27 = sphi 0, %s25
      %s37 = sphi 0, %s39
      %s40 = sphi 0, %s37
      %s41 = sphi 0, %s40
      %s57 = sphi 0, %s41
      %s63 = sphi 0, %s65
      %s66 = sphi 0, %s63
      %s67 = sphi 0, %s66
      %s83 = sphi 0, %s67
      %s89 = sphi 0, %s91
      %s92 = sphi 0, %s89
      %s93 = sphi 0, %s92
      %s109 = sphi 0, %s93
      %s117 = sphi 0, %s119
      %s120 = sphi 0, %s117
      %s121 = sphi 0, %s120
      %s137 = sphi 0, %s121
    $region4: #{forward.3} parent=1 // loop_header_branch
      %18 = sbr.rel (%p16) target = $region8
    $region5: #{forward.3} parent=1 // loop_body
      %s20 = ssub.s32 %s15, 1
      %s21 = ssub.s32 %s15, 2
      %s28 = sadd.s32 1, %s23
      %p29 = scmp.ge.s32.totalorder %s28, 4
      %s30 = scalar_select %p29, 0, %s28
      %s31 = sadd.s32 1, %s22
      %s32 = scalar_select %p29, %s31, %s22
      %p33 = scmp.ge.s32.totalorder %s32, 1
      %s34 = scalar_select %p33, 0, %s32
      %s35 = ssub.s32 %s22, %s34
      %p36 = scmp.eq.s32.totalorder %s35, 0
      %s38 = sadd.s32 %s37, 1
      %s39 = scalar_select %p36, %s37, %s38
      %p42 = pneg %p36
      %p43 = scmp.eq.s32.totalorder %s15, 3
      %p44 = por %p42, %p43
      %p45 = scmp.ne.s32.totalorder %s37, %s40
      %p46 = scmp.eq.s32.totalorder %s15, 0
      %p47 = por %p45, %p46
      %p48 = scmp.ne.s32.totalorder %s37, %s40
      %p49 = scmp.eq.s32.totalorder %s20, 3
      %p50 = por %p48, %p49
      %p51 = scmp.ne.s32.totalorder %s40, %s41
      %p52 = scmp.eq.s32.totalorder %s20, 0
      %p53 = por %p51, %p52
      %p54 = scmp.ne.s32.totalorder %s40, %s41
      %p55 = scmp.eq.s32.totalorder %s21, 3
      %p56 = por %p54, %p55
      %p58 = scmp.ne.s32.totalorder %s41, %s57
      %p59 = scmp.eq.s32.totalorder %s21, 0
      %p60 = por %p58, %p59
      %s61 = ssub.s32 %s23, %s30
      %p62 = scmp.eq.s32.totalorder %s61, 0
      %s64 = sadd.s32 %s63, 1
      %s65 = scalar_select %p62, %s63, %s64
      %p68 = pneg %p62
      %p69 = scmp.eq.s32.totalorder %s15, 3
      %p70 = por %p68, %p69
      %p71 = scmp.ne.s32.totalorder %s63, %s66
      %p72 = scmp.eq.s32.totalorder %s15, 0
      %p73 = por %p71, %p72
      %p74 = scmp.ne.s32.totalorder %s63, %s66
      %p75 = scmp.eq.s32.totalorder %s20, 3
      %p76 = por %p74, %p75
      %p77 = scmp.ne.s32.totalorder %s66, %s67
      %p78 = scmp.eq.s32.totalorder %s20, 0
      %p79 = por %p77, %p78
      %p80 = scmp.ne.s32.totalorder %s66, %s67
      %p81 = scmp.eq.s32.totalorder %s21, 3
      %p82 = por %p80, %p81
      %p84 = scmp.ne.s32.totalorder %s67, %s83
      %p85 = scmp.eq.s32.totalorder %s21, 0
      %p86 = por %p84, %p85
      %s87 = ssub.s32 %s23, %s30
      %p88 = scmp.eq.s32.totalorder %s87, 0
      %s90 = sadd.s32 %s89, 1
      %s91 = scalar_select %p88, %s89, %s90
      %p94 = pneg %p88
      %p95 = scmp.eq.s32.totalorder %s15, 3
      %p96 = por %p94, %p95
      %p97 = scmp.ne.s32.totalorder %s89, %s92
      %p98 = scmp.eq.s32.totalorder %s15, 0
      %p99 = por %p97, %p98
      %p100 = scmp.ne.s32.totalorder %s89, %s92
      %p101 = scmp.eq.s32.totalorder %s20, 3
      %p102 = por %p100, %p101
      %p103 = scmp.ne.s32.totalorder %s92, %s93
      %p104 = scmp.eq.s32.totalorder %s20, 0
      %p105 = por %p103, %p104
      %p106 = scmp.ne.s32.totalorder %s92, %s93
      %p107 = scmp.eq.s32.totalorder %s21, 3
      %p108 = por %p106, %p107
      %p110 = scmp.ne.s32.totalorder %s93, %s109
      %p111 = scmp.eq.s32.totalorder %s21, 0
      %p112 = por %p110, %p111
      %s113 = ssub.s32 %s22, %s34
      %s114 = ssub.s32 %s23, %s30
      %s115 = sor.u32 %s113, %s114
      %p116 = scmp.eq.s32.totalorder %s115, 0
      %s118 = sadd.s32 %s117, 1
      %s119 = scalar_select %p116, %s117, %s118
      %p122 = pneg %p116
      %p123 = scmp.eq.s32.totalorder %s15, 3
      %p124 = por %p122, %p123
      %p125 = scmp.ne.s32.totalorder %s117, %s120
      %p126 = scmp.eq.s32.totalorder %s15, 0
      %p127 = por %p125, %p126
      %p128 = scmp.ne.s32.totalorder %s117, %s120
      %p129 = scmp.eq.s32.totalorder %s20, 3
      %p130 = por %p128, %p129
      %p131 = scmp.ne.s32.totalorder %s120, %s121
      %p132 = scmp.eq.s32.totalorder %s20, 0
      %p133 = por %p131, %p132
      %p134 = scmp.ne.s32.totalorder %s120, %s121
      %p135 = scmp.eq.s32.totalorder %s21, 3
      %p136 = por %p134, %p135
      %p138 = scmp.ne.s32.totalorder %s121, %s137
      %p139 = scmp.eq.s32.totalorder %s21, 0
      %p140 = por %p138, %p139
      %p141 = scmp.le.s32.totalorder 1, %s15
      %p142 = scmp.lt.s32.totalorder %s15, 5
      %p143 = pnand %p141, %p142
      %p144 = pneg %p143
      // Predicated region
      $region9: #{forward.3} parent=5 // pred_check
        _
      $region10: #{forward.3} parent=5 // pred_check_branch
        %146 = sbr.rel (%p143) target = $region12
      $region11: #{forward.3} parent=5 // pred_region
        %s147 = ssub.s32 %s15, 1
        // Predicated region
        $region13: #{forward.3} parent=11 // pred_check
          %p148 = pneg %p53
        $region14: #{forward.3} parent=11 // pred_check_branch
          %150 = sbr.rel (%p148) target = $region16
        $region15: #{forward.3} parent=11 // pred_region
          %p151 = scmp.lt.s32.totalorder %s24, 0
          %s152 = scalar_select %p151, %s24, 0
          %s153 = smul.addr %s152, 16
          %s154 = smul.addr %s153, 4
          %s155 = scalar_lea.vmem %s0, %s154
        $region16: #{forward.3} parent=11 // pred_fallthru
          _
      $region12: #{forward.3} parent=5 // pred_fallthru
        _
      %p156 = scmp.lt.s32.totalorder %s15, 4
      // Predicated region
      $region17: #{forward.3} parent=5 // pred_check
        %p157 = pneg %p156
      $region18: #{forward.3} parent=5 // pred_check_branch
        %159 = sbr.rel (%p157) target = $region20
      $region19: #{forward.3} parent=5 // pred_region
        // Predicated region
        $region21: #{forward.3} parent=19 // pred_check
          %p160 = pneg %p73
        $region22: #{forward.3} parent=19 // pred_check_branch
          %162 = sbr.rel (%p160) target = $region24
        $region23: #{forward.3} parent=19 // pred_region
          %s163 = sand.u32 %s63, 1
          %s164 = scalar_lea.sflag [#allocation3], %s163
          %s165 = sand.u32 %s63, 1
          %s166 = smul.addr %s165, 4096
          %s167 = scalar_lea.vmem [#allocation2], %s166
          %s168 = smul.u32 4, %s23
          %s170 = ssub.s32 65536, 65536
          %171 = vsyncadd %s164, %s170
          %s172 = smul.addr %s168, 64
          %s173 = scalar_lea.hbm %s1, %s172
          %s174 = sshll.u32 %s167, 4
          %s175 = int_to_ptr.vmem [resolvable:$true] %s174
          %180 = dma.hbm_to_vmem [thread:$0]  %s173, 65536, %s175, %s164, 1024, 256, 16
        $region24: #{forward.3} parent=19 // pred_fallthru
          _
        // Predicated region
        $region25: #{forward.3} parent=19 // pred_check
          %p181 = pneg %p99
        $region26: #{forward.3} parent=19 // pred_check_branch
          %183 = sbr.rel (%p181) target = $region28
        $region27: #{forward.3} parent=19 // pred_region
          %s184 = sand.u32 %s89, 1
          %s185 = scalar_lea.sflag [#allocation5], %s184
          %s186 = sand.u32 %s89, 1
          %s187 = smul.addr %s186, 4
          %s188 = scalar_lea.vmem [#allocation4], %s187
          %s189 = smul.u32 4, %s23
          %s191 = ssub.s32 64, 64
          %192 = vsyncadd %s185, %s191
          %s193 = smul.addr %s189, 16
          %s194 = scalar_lea.hbm %s2, %s193
          %s196 = sshll.u32 %s188, 4
          %s197 = int_to_ptr.vmem [resolvable:$true] %s196
          %199 = dma.hbm_to_vmem [thread:$0]  %s194, 64, %s197, %s185
        $region28: #{forward.3} parent=19 // pred_fallthru
          _
      $region20: #{forward.3} parent=5 // pred_fallthru
        _
      %p200 = scmp.le.s32.totalorder 1, %s15
      %p201 = scmp.lt.s32.totalorder %s15, 5
      %p202 = pnand %p200, %p201
      %p203 = pneg %p202
      // Predicated region
      $region29: #{forward.3} parent=5 // pred_check
        _
      $region30: #{forward.3} parent=5 // pred_check_branch
        %205 = sbr.rel (%p202) target = $region32
      $region31: #{forward.3} parent=5 // pred_region
        %s206 = ssub.s32 %s15, 1
        %s207 = sand.u32 %s66, 1
        %s208 = scalar_lea.sflag [#allocation3], %s207
        %s209 = sand.u32 %s66, 1
        %s210 = smul.addr %s209, 4096
        %s211 = scalar_lea.vmem [#allocation2], %s210
        // Predicated region
        $region33: #{forward.3} parent=31 // pred_check
          %p212 = pneg %p79
        $region34: #{forward.3} parent=31 // pred_check_branch
          %214 = sbr.rel (%p212) target = $region36
        $region35: #{forward.3} parent=31 // pred_region
          %215 = dma.done %s208, 65536
        $region36: #{forward.3} parent=31 // pred_fallthru
          _
        %s216 = sand.u32 %s92, 1
        %s217 = scalar_lea.sflag [#allocation5], %s216
        %s218 = sand.u32 %s92, 1
        %s219 = smul.addr %s218, 4
        %s220 = scalar_lea.vmem [#allocation4], %s219
        // Predicated region
        $region37: #{forward.3} parent=31 // pred_check
          %p221 = pneg %p105
        $region38: #{forward.3} parent=31 // pred_check_branch
          %223 = sbr.rel (%p221) target = $region40
        $region39: #{forward.3} parent=31 // pred_region
          %224 = dma.done %s217, 64
        $region40: #{forward.3} parent=31 // pred_fallthru
          _
        %p225 = scmp.lt.s32.totalorder %s24, 0
        %s226 = scalar_select %p225, %s24, 0
        %s227 = smul.addr %s226, 16
        %s228 = smul.addr %s227, 4
        %s229 = scalar_lea.vmem %s0, %s228
        %p230 = pneg %p53
        %p231 = pneg %p50
        %s232 = sand.u32 %s66, 1
        %s233 = scalar_lea.sflag [#allocation3], %s232
        %s234 = sand.u32 %s66, 1
        %s235 = smul.addr %s234, 4096
        %s236 = scalar_lea.vmem [#allocation2], %s235
        %p237 = pneg %p79
        %p238 = pneg %p76
        %s239 = sand.u32 %s92, 1
        %s240 = scalar_lea.sflag [#allocation5], %s239
        %s241 = sand.u32 %s92, 1
        %s242 = smul.addr %s241, 4
        %s243 = scalar_lea.vmem [#allocation4], %s242
        %p244 = pneg %p105
        %p245 = pneg %p102
        %p246 = pneg %p133
        %p247 = pneg %p130
        %s248 = smul.u32 4, %s25
        %p249 = scmp.lt.s32.totalorder %s24, 0
        %s250 = scalar_select %p249, %s24, 0
        %p251 = scmp.lt.s32.totalorder %s248, 15
        %s252 = scalar_select %p251, %s248, 15
        %s253 = smul.addr %s250, 16
        %s254 = sadd.s32 %s252, %s253
        %s255 = smul.addr %s254, 4
        %s256 = scalar_lea.vmem %s3, %s255
        %p257 = scmp.lt.s32.totalorder %s24, 0
        %s258 = scalar_select %p257, %s24, 0
        %s259 = smul.addr %s258, 16
        %s260 = smul.addr %s259, 4
        %s261 = scalar_lea.vmem %s0, %s260
        %s262 = smul.u32 4, %s25
        %s263 = smul.u32 4, %s25
        %s264 = smul.u32 4, %s25
        %p265 = scmp.lt.s32.totalorder %s24, 0
        %s266 = scalar_select %p265, %s24, 0
        %p267 = scmp.lt.s32.totalorder %s264, 15
        %s268 = scalar_select %p267, %s264, 15
        %s269 = smul.addr %s266, 16
        %s270 = sadd.s32 %s268, %s269
        %s271 = smul.addr %s270, 4
        %s272 = scalar_lea.vmem %s3, %s271
        %s273 = smul.u32 4, %s25
        %v274 = vld [vmem:[%s261] sm:$0xff]
        %v275 = vld [vmem:[%s261 + $0x8] sm:$0xff]
        %v276 = vld [vmem:[%s261 + $0x10] sm:$0xff]
        %v277 = vld [vmem:[%s261 + $0x18] sm:$0xff]
        %v278 = vld [vmem:[%s261 + $0x20] sm:$0xff]
        %v279 = vld [vmem:[%s261 + $0x28] sm:$0xff]
        %v280 = vld [vmem:[%s261 + $0x30] sm:$0xff]
        %v281 = vld [vmem:[%s261 + $0x38] sm:$0xff]
        %v282 = vld [vmem:[%s211] sm:$0xff]
        %v283 = vld [vmem:[%s211 + $0x8] sm:$0xff]
        %v284 = vld [vmem:[%s211 + $0x10] sm:$0xff]
        %v285 = vld [vmem:[%s211 + $0x18] sm:$0xff]
        %v286 = vld [vmem:[%s211 + $0x20] sm:$0xff]
        %v287 = vld [vmem:[%s211 + $0x28] sm:$0xff]
        %v288 = vld [vmem:[%s211 + $0x30] sm:$0xff]
        %v289 = vld [vmem:[%s211 + $0x38] sm:$0xff]
        %v290 = vld [vmem:[%s211 + $0x40] sm:$0xff]
        %v291 = vld [vmem:[%s211 + $0x48] sm:$0xff]
        %v292 = vld [vmem:[%s211 + $0x50] sm:$0xff]
        %v293 = vld [vmem:[%s211 + $0x58] sm:$0xff]
        %v294 = vld [vmem:[%s211 + $0x60] sm:$0xff]
        %v295 = vld [vmem:[%s211 + $0x68] sm:$0xff]
        %v296 = vld [vmem:[%s211 + $0x70] sm:$0xff]
        %v297 = vld [vmem:[%s211 + $0x78] sm:$0xff]
        %v298 = vld [vmem:[%s211 + $0x80] sm:$0xff]
        %v299 = vld [vmem:[%s211 + $0x88] sm:$0xff]
        %v300 = vld [vmem:[%s211 + $0x90] sm:$0xff]
        %v301 = vld [vmem:[%s211 + $0x98] sm:$0xff]
        %v302 = vld [vmem:[%s211 + $0xa0] sm:$0xff]
        %v303 = vld [vmem:[%s211 + $0xa8] sm:$0xff]
        %v304 = vld [vmem:[%s211 + $0xb0] sm:$0xff]
        %v305 = vld [vmem:[%s211 + $0xb8] sm:$0xff]
        %v306 = vld [vmem:[%s211 + $0xc0] sm:$0xff]
        %v307 = vld [vmem:[%s211 + $0xc8] sm:$0xff]
        %v308 = vld [vmem:[%s211 + $0xd0] sm:$0xff]
        %v309 = vld [vmem:[%s211 + $0xd8] sm:$0xff]
        %v310 = vld [vmem:[%s211 + $0xe0] sm:$0xff]
        %v311 = vld [vmem:[%s211 + $0xe8] sm:$0xff]
        %v312 = vld [vmem:[%s211 + $0xf0] sm:$0xff]
        %v313 = vld [vmem:[%s211 + $0xf8] sm:$0xff]
        %v314 = vld [vmem:[%s211 + $0x100] sm:$0xff]
        %v315 = vld [vmem:[%s211 + $0x108] sm:$0xff]
        %v316 = vld [vmem:[%s211 + $0x110] sm:$0xff]
        %v317 = vld [vmem:[%s211 + $0x118] sm:$0xff]
        %v318 = vld [vmem:[%s211 + $0x120] sm:$0xff]
        %v319 = vld [vmem:[%s211 + $0x128] sm:$0xff]
        %v320 = vld [vmem:[%s211 + $0x130] sm:$0xff]
        %v321 = vld [vmem:[%s211 + $0x138] sm:$0xff]
        %v322 = vld [vmem:[%s211 + $0x140] sm:$0xff]
        %v323 = vld [vmem:[%s211 + $0x148] sm:$0xff]
        %v324 = vld [vmem:[%s211 + $0x150] sm:$0xff]
        %v325 = vld [vmem:[%s211 + $0x158] sm:$0xff]
        %v326 = vld [vmem:[%s211 + $0x160] sm:$0xff]
        %v327 = vld [vmem:[%s211 + $0x168] sm:$0xff]
        %v328 = vld [vmem:[%s211 + $0x170] sm:$0xff]
        %v329 = vld [vmem:[%s211 + $0x178] sm:$0xff]
        %v330 = vld [vmem:[%s211 + $0x180] sm:$0xff]
        %v331 = vld [vmem:[%s211 + $0x188] sm:$0xff]
        %v332 = vld [vmem:[%s211 + $0x190] sm:$0xff]
        %v333 = vld [vmem:[%s211 + $0x198] sm:$0xff]
        %v334 = vld [vmem:[%s211 + $0x1a0] sm:$0xff]
        %v335 = vld [vmem:[%s211 + $0x1a8] sm:$0xff]
        %v336 = vld [vmem:[%s211 + $0x1b0] sm:$0xff]
        %v337 = vld [vmem:[%s211 + $0x1b8] sm:$0xff]
        %v338 = vld [vmem:[%s211 + $0x1c0] sm:$0xff]
        %v339 = vld [vmem:[%s211 + $0x1c8] sm:$0xff]
        %v340 = vld [vmem:[%s211 + $0x1d0] sm:$0xff]
        %v341 = vld [vmem:[%s211 + $0x1d8] sm:$0xff]
        %v342 = vld [vmem:[%s211 + $0x1e0] sm:$0xff]
        %v343 = vld [vmem:[%s211 + $0x1e8] sm:$0xff]
        %v344 = vld [vmem:[%s211 + $0x1f0] sm:$0xff]
        %v345 = vld [vmem:[%s211 + $0x1f8] sm:$0xff]
        %v346 = vld [vmem:[%s211 + $0x200] sm:$0xff]
        %v347 = vld [vmem:[%s211 + $0x208] sm:$0xff]
        %v348 = vld [vmem:[%s211 + $0x210] sm:$0xff]
        %v349 = vld [vmem:[%s211 + $0x218] sm:$0xff]
        %v350 = vld [vmem:[%s211 + $0x220] sm:$0xff]
        %v351 = vld [vmem:[%s211 + $0x228] sm:$0xff]
        %v352 = vld [vmem:[%s211 + $0x230] sm:$0xff]
        %v353 = vld [vmem:[%s211 + $0x238] sm:$0xff]
        %v354 = vld [vmem:[%s211 + $0x240] sm:$0xff]
        %v355 = vld [vmem:[%s211 + $0x248] sm:$0xff]
        %v356 = vld [vmem:[%s211 + $0x250] sm:$0xff]
        %v357 = vld [vmem:[%s211 + $0x258] sm:$0xff]
        %v358 = vld [vmem:[%s211 + $0x260] sm:$0xff]
        %v359 = vld [vmem:[%s211 + $0x268] sm:$0xff]
        %v360 = vld [vmem:[%s211 + $0x270] sm:$0xff]
        %v361 = vld [vmem:[%s211 + $0x278] sm:$0xff]
        %v362 = vld [vmem:[%s211 + $0x280] sm:$0xff]
        %v363 = vld [vmem:[%s211 + $0x288] sm:$0xff]
        %v364 = vld [vmem:[%s211 + $0x290] sm:$0xff]
        %v365 = vld [vmem:[%s211 + $0x298] sm:$0xff]
        %v366 = vld [vmem:[%s211 + $0x2a0] sm:$0xff]
        %v367 = vld [vmem:[%s211 + $0x2a8] sm:$0xff]
        %v368 = vld [vmem:[%s211 + $0x2b0] sm:$0xff]
        %v369 = vld [vmem:[%s211 + $0x2b8] sm:$0xff]
        %v370 = vld [vmem:[%s211 + $0x2c0] sm:$0xff]
        %v371 = vld [vmem:[%s211 + $0x2c8] sm:$0xff]
        %v372 = vld [vmem:[%s211 + $0x2d0] sm:$0xff]
        %v373 = vld [vmem:[%s211 + $0x2d8] sm:$0xff]
        %v374 = vld [vmem:[%s211 + $0x2e0] sm:$0xff]
        %v375 = vld [vmem:[%s211 + $0x2e8] sm:$0xff]
        %v376 = vld [vmem:[%s211 + $0x2f0] sm:$0xff]
        %v377 = vld [vmem:[%s211 + $0x2f8] sm:$0xff]
        %v378 = vld [vmem:[%s211 + $0x300] sm:$0xff]
        %v379 = vld [vmem:[%s211 + $0x308] sm:$0xff]
        %v380 = vld [vmem:[%s211 + $0x310] sm:$0xff]
        %v381 = vld [vmem:[%s211 + $0x318] sm:$0xff]
        %v382 = vld [vmem:[%s211 + $0x320] sm:$0xff]
        %v383 = vld [vmem:[%s211 + $0x328] sm:$0xff]
        %v384 = vld [vmem:[%s211 + $0x330] sm:$0xff]
        %v385 = vld [vmem:[%s211 + $0x338] sm:$0xff]
        %v386 = vld [vmem:[%s211 + $0x340] sm:$0xff]
        %v387 = vld [vmem:[%s211 + $0x348] sm:$0xff]
        %v388 = vld [vmem:[%s211 + $0x350] sm:$0xff]
        %v389 = vld [vmem:[%s211 + $0x358] sm:$0xff]
        %v390 = vld [vmem:[%s211 + $0x360] sm:$0xff]
        %v391 = vld [vmem:[%s211 + $0x368] sm:$0xff]
        %v392 = vld [vmem:[%s211 + $0x370] sm:$0xff]
        %v393 = vld [vmem:[%s211 + $0x378] sm:$0xff]
        %v394 = vld [vmem:[%s211 + $0x380] sm:$0xff]
        %v395 = vld [vmem:[%s211 + $0x388] sm:$0xff]
        %v396 = vld [vmem:[%s211 + $0x390] sm:$0xff]
        %v397 = vld [vmem:[%s211 + $0x398] sm:$0xff]
        %v398 = vld [vmem:[%s211 + $0x3a0] sm:$0xff]
        %v399 = vld [vmem:[%s211 + $0x3a8] sm:$0xff]
        %v400 = vld [vmem:[%s211 + $0x3b0] sm:$0xff]
        %v401 = vld [vmem:[%s211 + $0x3b8] sm:$0xff]
        %v402 = vld [vmem:[%s211 + $0x3c0] sm:$0xff]
        %v403 = vld [vmem:[%s211 + $0x3c8] sm:$0xff]
        %v404 = vld [vmem:[%s211 + $0x3d0] sm:$0xff]
        %v405 = vld [vmem:[%s211 + $0x3d8] sm:$0xff]
        %v406 = vld [vmem:[%s211 + $0x3e0] sm:$0xff]
        %v407 = vld [vmem:[%s211 + $0x3e8] sm:$0xff]
        %v408 = vld [vmem:[%s211 + $0x3f0] sm:$0xff]
        %v409 = vld [vmem:[%s211 + $0x3f8] sm:$0xff]
        %v410 = vld [vmem:[%s211 + $0x400] sm:$0xff]
        %v411 = vld [vmem:[%s211 + $0x408] sm:$0xff]
        %v412 = vld [vmem:[%s211 + $0x410] sm:$0xff]
        %v413 = vld [vmem:[%s211 + $0x418] sm:$0xff]
        %v414 = vld [vmem:[%s211 + $0x420] sm:$0xff]
        %v415 = vld [vmem:[%s211 + $0x428] sm:$0xff]
        %v416 = vld [vmem:[%s211 + $0x430] sm:$0xff]
        %v417 = vld [vmem:[%s211 + $0x438] sm:$0xff]
        %v418 = vld [vmem:[%s211 + $0x440] sm:$0xff]
        %v419 = vld [vmem:[%s211 + $0x448] sm:$0xff]
        %v420 = vld [vmem:[%s211 + $0x450] sm:$0xff]
        %v421 = vld [vmem:[%s211 + $0x458] sm:$0xff]
        %v422 = vld [vmem:[%s211 + $0x460] sm:$0xff]
        %v423 = vld [vmem:[%s211 + $0x468] sm:$0xff]
        %v424 = vld [vmem:[%s211 + $0x470] sm:$0xff]
        %v425 = vld [vmem:[%s211 + $0x478] sm:$0xff]
        %v426 = vld [vmem:[%s211 + $0x480] sm:$0xff]
        %v427 = vld [vmem:[%s211 + $0x488] sm:$0xff]
        %v428 = vld [vmem:[%s211 + $0x490] sm:$0xff]
        %v429 = vld [vmem:[%s211 + $0x498] sm:$0xff]
        %v430 = vld [vmem:[%s211 + $0x4a0] sm:$0xff]
        %v431 = vld [vmem:[%s211 + $0x4a8] sm:$0xff]
        %v432 = vld [vmem:[%s211 + $0x4b0] sm:$0xff]
        %v433 = vld [vmem:[%s211 + $0x4b8] sm:$0xff]
        %v434 = vld [vmem:[%s211 + $0x4c0] sm:$0xff]
        %v435 = vld [vmem:[%s211 + $0x4c8] sm:$0xff]
        %v436 = vld [vmem:[%s211 + $0x4d0] sm:$0xff]
        %v437 = vld [vmem:[%s211 + $0x4d8] sm:$0xff]
        %v438 = vld [vmem:[%s211 + $0x4e0] sm:$0xff]
        %v439 = vld [vmem:[%s211 + $0x4e8] sm:$0xff]
        %v440 = vld [vmem:[%s211 + $0x4f0] sm:$0xff]
        %v441 = vld [vmem:[%s211 + $0x4f8] sm:$0xff]
        %v442 = vld [vmem:[%s211 + $0x500] sm:$0xff]
        %v443 = vld [vmem:[%s211 + $0x508] sm:$0xff]
        %v444 = vld [vmem:[%s211 + $0x510] sm:$0xff]
        %v445 = vld [vmem:[%s211 + $0x518] sm:$0xff]
        %v446 = vld [vmem:[%s211 + $0x520] sm:$0xff]
        %v447 = vld [vmem:[%s211 + $0x528] sm:$0xff]
        %v448 = vld [vmem:[%s211 + $0x530] sm:$0xff]
        %v449 = vld [vmem:[%s211 + $0x538] sm:$0xff]
        %v450 = vld [vmem:[%s211 + $0x540] sm:$0xff]
        %v451 = vld [vmem:[%s211 + $0x548] sm:$0xff]
        %v452 = vld [vmem:[%s211 + $0x550] sm:$0xff]
        %v453 = vld [vmem:[%s211 + $0x558] sm:$0xff]
        %v454 = vld [vmem:[%s211 + $0x560] sm:$0xff]
        %v455 = vld [vmem:[%s211 + $0x568] sm:$0xff]
        %v456 = vld [vmem:[%s211 + $0x570] sm:$0xff]
        %v457 = vld [vmem:[%s211 + $0x578] sm:$0xff]
        %v458 = vld [vmem:[%s211 + $0x580] sm:$0xff]
        %v459 = vld [vmem:[%s211 + $0x588] sm:$0xff]
        %v460 = vld [vmem:[%s211 + $0x590] sm:$0xff]
        %v461 = vld [vmem:[%s211 + $0x598] sm:$0xff]
        %v462 = vld [vmem:[%s211 + $0x5a0] sm:$0xff]
        %v463 = vld [vmem:[%s211 + $0x5a8] sm:$0xff]
        %v464 = vld [vmem:[%s211 + $0x5b0] sm:$0xff]
        %v465 = vld [vmem:[%s211 + $0x5b8] sm:$0xff]
        %v466 = vld [vmem:[%s211 + $0x5c0] sm:$0xff]
        %v467 = vld [vmem:[%s211 + $0x5c8] sm:$0xff]
        %v468 = vld [vmem:[%s211 + $0x5d0] sm:$0xff]
        %v469 = vld [vmem:[%s211 + $0x5d8] sm:$0xff]
        %v470 = vld [vmem:[%s211 + $0x5e0] sm:$0xff]
        %v471 = vld [vmem:[%s211 + $0x5e8] sm:$0xff]
        %v472 = vld [vmem:[%s211 + $0x5f0] sm:$0xff]
        %v473 = vld [vmem:[%s211 + $0x5f8] sm:$0xff]
        %v474 = vld [vmem:[%s211 + $0x600] sm:$0xff]
        %v475 = vld [vmem:[%s211 + $0x608] sm:$0xff]
        %v476 = vld [vmem:[%s211 + $0x610] sm:$0xff]
        %v477 = vld [vmem:[%s211 + $0x618] sm:$0xff]
        %v478 = vld [vmem:[%s211 + $0x620] sm:$0xff]
        %v479 = vld [vmem:[%s211 + $0x628] sm:$0xff]
        %v480 = vld [vmem:[%s211 + $0x630] sm:$0xff]
        %v481 = vld [vmem:[%s211 + $0x638] sm:$0xff]
        %v482 = vld [vmem:[%s211 + $0x640] sm:$0xff]
        %v483 = vld [vmem:[%s211 + $0x648] sm:$0xff]
        %v484 = vld [vmem:[%s211 + $0x650] sm:$0xff]
        %v485 = vld [vmem:[%s211 + $0x658] sm:$0xff]
        %v486 = vld [vmem:[%s211 + $0x660] sm:$0xff]
        %v487 = vld [vmem:[%s211 + $0x668] sm:$0xff]
        %v488 = vld [vmem:[%s211 + $0x670] sm:$0xff]
        %v489 = vld [vmem:[%s211 + $0x678] sm:$0xff]
        %v490 = vld [vmem:[%s211 + $0x680] sm:$0xff]
        %v491 = vld [vmem:[%s211 + $0x688] sm:$0xff]
        %v492 = vld [vmem:[%s211 + $0x690] sm:$0xff]
        %v493 = vld [vmem:[%s211 + $0x698] sm:$0xff]
        %v494 = vld [vmem:[%s211 + $0x6a0] sm:$0xff]
        %v495 = vld [vmem:[%s211 + $0x6a8] sm:$0xff]
        %v496 = vld [vmem:[%s211 + $0x6b0] sm:$0xff]
        %v497 = vld [vmem:[%s211 + $0x6b8] sm:$0xff]
        %v498 = vld [vmem:[%s211 + $0x6c0] sm:$0xff]
        %v499 = vld [vmem:[%s211 + $0x6c8] sm:$0xff]
        %v500 = vld [vmem:[%s211 + $0x6d0] sm:$0xff]
        %v501 = vld [vmem:[%s211 + $0x6d8] sm:$0xff]
        %v502 = vld [vmem:[%s211 + $0x6e0] sm:$0xff]
        %v503 = vld [vmem:[%s211 + $0x6e8] sm:$0xff]
        %v504 = vld [vmem:[%s211 + $0x6f0] sm:$0xff]
        %v505 = vld [vmem:[%s211 + $0x6f8] sm:$0xff]
        %v506 = vld [vmem:[%s211 + $0x700] sm:$0xff]
        %v507 = vld [vmem:[%s211 + $0x708] sm:$0xff]
        %v508 = vld [vmem:[%s211 + $0x710] sm:$0xff]
        %v509 = vld [vmem:[%s211 + $0x718] sm:$0xff]
        %v510 = vld [vmem:[%s211 + $0x720] sm:$0xff]
        %v511 = vld [vmem:[%s211 + $0x728] sm:$0xff]
        %v512 = vld [vmem:[%s211 + $0x730] sm:$0xff]
        %v513 = vld [vmem:[%s211 + $0x738] sm:$0xff]
        %v514 = vld [vmem:[%s211 + $0x740] sm:$0xff]
        %v515 = vld [vmem:[%s211 + $0x748] sm:$0xff]
        %v516 = vld [vmem:[%s211 + $0x750] sm:$0xff]
        %v517 = vld [vmem:[%s211 + $0x758] sm:$0xff]
        %v518 = vld [vmem:[%s211 + $0x760] sm:$0xff]
        %v519 = vld [vmem:[%s211 + $0x768] sm:$0xff]
        %v520 = vld [vmem:[%s211 + $0x770] sm:$0xff]
        %v521 = vld [vmem:[%s211 + $0x778] sm:$0xff]
        %v522 = vld [vmem:[%s211 + $0x780] sm:$0xff]
        %v523 = vld [vmem:[%s211 + $0x788] sm:$0xff]
        %v524 = vld [vmem:[%s211 + $0x790] sm:$0xff]
        %v525 = vld [vmem:[%s211 + $0x798] sm:$0xff]
        %v526 = vld [vmem:[%s211 + $0x7a0] sm:$0xff]
        %v527 = vld [vmem:[%s211 + $0x7a8] sm:$0xff]
        %v528 = vld [vmem:[%s211 + $0x7b0] sm:$0xff]
        %v529 = vld [vmem:[%s211 + $0x7b8] sm:$0xff]
        %v530 = vld [vmem:[%s211 + $0x7c0] sm:$0xff]
        %v531 = vld [vmem:[%s211 + $0x7c8] sm:$0xff]
        %v532 = vld [vmem:[%s211 + $0x7d0] sm:$0xff]
        %v533 = vld [vmem:[%s211 + $0x7d8] sm:$0xff]
        %v534 = vld [vmem:[%s211 + $0x7e0] sm:$0xff]
        %v535 = vld [vmem:[%s211 + $0x7e8] sm:$0xff]
        %v536 = vld [vmem:[%s211 + $0x7f0] sm:$0xff]
        %v537 = vld [vmem:[%s211 + $0x7f8] sm:$0xff]
        %v538 = vld [vmem:[%s211 + $0x800] sm:$0xff]
        %v539 = vld [vmem:[%s211 + $0x808] sm:$0xff]
        %v540 = vld [vmem:[%s211 + $0x810] sm:$0xff]
        %v541 = vld [vmem:[%s211 + $0x818] sm:$0xff]
        %v542 = vld [vmem:[%s211 + $0x820] sm:$0xff]
        %v543 = vld [vmem:[%s211 + $0x828] sm:$0xff]
        %v544 = vld [vmem:[%s211 + $0x830] sm:$0xff]
        %v545 = vld [vmem:[%s211 + $0x838] sm:$0xff]
        %v546 = vld [vmem:[%s211 + $0x840] sm:$0xff]
        %v547 = vld [vmem:[%s211 + $0x848] sm:$0xff]
        %v548 = vld [vmem:[%s211 + $0x850] sm:$0xff]
        %v549 = vld [vmem:[%s211 + $0x858] sm:$0xff]
        %v550 = vld [vmem:[%s211 + $0x860] sm:$0xff]
        %v551 = vld [vmem:[%s211 + $0x868] sm:$0xff]
        %v552 = vld [vmem:[%s211 + $0x870] sm:$0xff]
        %v553 = vld [vmem:[%s211 + $0x878] sm:$0xff]
        %v554 = vld [vmem:[%s211 + $0x880] sm:$0xff]
        %v555 = vld [vmem:[%s211 + $0x888] sm:$0xff]
        %v556 = vld [vmem:[%s211 + $0x890] sm:$0xff]
        %v557 = vld [vmem:[%s211 + $0x898] sm:$0xff]
        %v558 = vld [vmem:[%s211 + $0x8a0] sm:$0xff]
        %v559 = vld [vmem:[%s211 + $0x8a8] sm:$0xff]
        %v560 = vld [vmem:[%s211 + $0x8b0] sm:$0xff]
        %v561 = vld [vmem:[%s211 + $0x8b8] sm:$0xff]
        %v562 = vld [vmem:[%s211 + $0x8c0] sm:$0xff]
        %v563 = vld [vmem:[%s211 + $0x8c8] sm:$0xff]
        %v564 = vld [vmem:[%s211 + $0x8d0] sm:$0xff]
        %v565 = vld [vmem:[%s211 + $0x8d8] sm:$0xff]
        %v566 = vld [vmem:[%s211 + $0x8e0] sm:$0xff]
        %v567 = vld [vmem:[%s211 + $0x8e8] sm:$0xff]
        %v568 = vld [vmem:[%s211 + $0x8f0] sm:$0xff]
        %v569 = vld [vmem:[%s211 + $0x8f8] sm:$0xff]
        %v570 = vld [vmem:[%s211 + $0x900] sm:$0xff]
        %v571 = vld [vmem:[%s211 + $0x908] sm:$0xff]
        %v572 = vld [vmem:[%s211 + $0x910] sm:$0xff]
        %v573 = vld [vmem:[%s211 + $0x918] sm:$0xff]
        %v574 = vld [vmem:[%s211 + $0x920] sm:$0xff]
        %v575 = vld [vmem:[%s211 + $0x928] sm:$0xff]
        %v576 = vld [vmem:[%s211 + $0x930] sm:$0xff]
        %v577 = vld [vmem:[%s211 + $0x938] sm:$0xff]
        %v578 = vld [vmem:[%s211 + $0x940] sm:$0xff]
        %v579 = vld [vmem:[%s211 + $0x948] sm:$0xff]
        %v580 = vld [vmem:[%s211 + $0x950] sm:$0xff]
        %v581 = vld [vmem:[%s211 + $0x958] sm:$0xff]
        %v582 = vld [vmem:[%s211 + $0x960] sm:$0xff]
        %v583 = vld [vmem:[%s211 + $0x968] sm:$0xff]
        %v584 = vld [vmem:[%s211 + $0x970] sm:$0xff]
        %v585 = vld [vmem:[%s211 + $0x978] sm:$0xff]
        %v586 = vld [vmem:[%s211 + $0x980] sm:$0xff]
        %v587 = vld [vmem:[%s211 + $0x988] sm:$0xff]
        %v588 = vld [vmem:[%s211 + $0x990] sm:$0xff]
        %v589 = vld [vmem:[%s211 + $0x998] sm:$0xff]
        %v590 = vld [vmem:[%s211 + $0x9a0] sm:$0xff]
        %v591 = vld [vmem:[%s211 + $0x9a8] sm:$0xff]
        %v592 = vld [vmem:[%s211 + $0x9b0] sm:$0xff]
        %v593 = vld [vmem:[%s211 + $0x9b8] sm:$0xff]
        %v594 = vld [vmem:[%s211 + $0x9c0] sm:$0xff]
        %v595 = vld [vmem:[%s211 + $0x9c8] sm:$0xff]
        %v596 = vld [vmem:[%s211 + $0x9d0] sm:$0xff]
        %v597 = vld [vmem:[%s211 + $0x9d8] sm:$0xff]
        %v598 = vld [vmem:[%s211 + $0x9e0] sm:$0xff]
        %v599 = vld [vmem:[%s211 + $0x9e8] sm:$0xff]
        %v600 = vld [vmem:[%s211 + $0x9f0] sm:$0xff]
        %v601 = vld [vmem:[%s211 + $0x9f8] sm:$0xff]
        %v602 = vld [vmem:[%s211 + $0xa00] sm:$0xff]
        %v603 = vld [vmem:[%s211 + $0xa08] sm:$0xff]
        %v604 = vld [vmem:[%s211 + $0xa10] sm:$0xff]
        %v605 = vld [vmem:[%s211 + $0xa18] sm:$0xff]
        %v606 = vld [vmem:[%s211 + $0xa20] sm:$0xff]
        %v607 = vld [vmem:[%s211 + $0xa28] sm:$0xff]
        %v608 = vld [vmem:[%s211 + $0xa30] sm:$0xff]
        %v609 = vld [vmem:[%s211 + $0xa38] sm:$0xff]
        %v610 = vld [vmem:[%s211 + $0xa40] sm:$0xff]
        %v611 = vld [vmem:[%s211 + $0xa48] sm:$0xff]
        %v612 = vld [vmem:[%s211 + $0xa50] sm:$0xff]
        %v613 = vld [vmem:[%s211 + $0xa58] sm:$0xff]
        %v614 = vld [vmem:[%s211 + $0xa60] sm:$0xff]
        %v615 = vld [vmem:[%s211 + $0xa68] sm:$0xff]
        %v616 = vld [vmem:[%s211 + $0xa70] sm:$0xff]
        %v617 = vld [vmem:[%s211 + $0xa78] sm:$0xff]
        %v618 = vld [vmem:[%s211 + $0xa80] sm:$0xff]
        %v619 = vld [vmem:[%s211 + $0xa88] sm:$0xff]
        %v620 = vld [vmem:[%s211 + $0xa90] sm:$0xff]
        %v621 = vld [vmem:[%s211 + $0xa98] sm:$0xff]
        %v622 = vld [vmem:[%s211 + $0xaa0] sm:$0xff]
        %v623 = vld [vmem:[%s211 + $0xaa8] sm:$0xff]
        %v624 = vld [vmem:[%s211 + $0xab0] sm:$0xff]
        %v625 = vld [vmem:[%s211 + $0xab8] sm:$0xff]
        %v626 = vld [vmem:[%s211 + $0xac0] sm:$0xff]
        %v627 = vld [vmem:[%s211 + $0xac8] sm:$0xff]
        %v628 = vld [vmem:[%s211 + $0xad0] sm:$0xff]
        %v629 = vld [vmem:[%s211 + $0xad8] sm:$0xff]
        %v630 = vld [vmem:[%s211 + $0xae0] sm:$0xff]
        %v631 = vld [vmem:[%s211 + $0xae8] sm:$0xff]
        %v632 = vld [vmem:[%s211 + $0xaf0] sm:$0xff]
        %v633 = vld [vmem:[%s211 + $0xaf8] sm:$0xff]
        %v634 = vld [vmem:[%s211 + $0xb00] sm:$0xff]
        %v635 = vld [vmem:[%s211 + $0xb08] sm:$0xff]
        %v636 = vld [vmem:[%s211 + $0xb10] sm:$0xff]
        %v637 = vld [vmem:[%s211 + $0xb18] sm:$0xff]
        %v638 = vld [vmem:[%s211 + $0xb20] sm:$0xff]
        %v639 = vld [vmem:[%s211 + $0xb28] sm:$0xff]
        %v640 = vld [vmem:[%s211 + $0xb30] sm:$0xff]
        %v641 = vld [vmem:[%s211 + $0xb38] sm:$0xff]
        %v642 = vld [vmem:[%s211 + $0xb40] sm:$0xff]
        %v643 = vld [vmem:[%s211 + $0xb48] sm:$0xff]
        %v644 = vld [vmem:[%s211 + $0xb50] sm:$0xff]
        %v645 = vld [vmem:[%s211 + $0xb58] sm:$0xff]
        %v646 = vld [vmem:[%s211 + $0xb60] sm:$0xff]
        %v647 = vld [vmem:[%s211 + $0xb68] sm:$0xff]
        %v648 = vld [vmem:[%s211 + $0xb70] sm:$0xff]
        %v649 = vld [vmem:[%s211 + $0xb78] sm:$0xff]
        %v650 = vld [vmem:[%s211 + $0xb80] sm:$0xff]
        %v651 = vld [vmem:[%s211 + $0xb88] sm:$0xff]
        %v652 = vld [vmem:[%s211 + $0xb90] sm:$0xff]
        %v653 = vld [vmem:[%s211 + $0xb98] sm:$0xff]
        %v654 = vld [vmem:[%s211 + $0xba0] sm:$0xff]
        %v655 = vld [vmem:[%s211 + $0xba8] sm:$0xff]
        %v656 = vld [vmem:[%s211 + $0xbb0] sm:$0xff]
        %v657 = vld [vmem:[%s211 + $0xbb8] sm:$0xff]
        %v658 = vld [vmem:[%s211 + $0xbc0] sm:$0xff]
        %v659 = vld [vmem:[%s211 + $0xbc8] sm:$0xff]
        %v660 = vld [vmem:[%s211 + $0xbd0] sm:$0xff]
        %v661 = vld [vmem:[%s211 + $0xbd8] sm:$0xff]
        %v662 = vld [vmem:[%s211 + $0xbe0] sm:$0xff]
        %v663 = vld [vmem:[%s211 + $0xbe8] sm:$0xff]
        %v664 = vld [vmem:[%s211 + $0xbf0] sm:$0xff]
        %v665 = vld [vmem:[%s211 + $0xbf8] sm:$0xff]
        %v666 = vld [vmem:[%s211 + $0xc00] sm:$0xff]
        %v667 = vld [vmem:[%s211 + $0xc08] sm:$0xff]
        %v668 = vld [vmem:[%s211 + $0xc10] sm:$0xff]
        %v669 = vld [vmem:[%s211 + $0xc18] sm:$0xff]
        %v670 = vld [vmem:[%s211 + $0xc20] sm:$0xff]
        %v671 = vld [vmem:[%s211 + $0xc28] sm:$0xff]
        %v672 = vld [vmem:[%s211 + $0xc30] sm:$0xff]
        %v673 = vld [vmem:[%s211 + $0xc38] sm:$0xff]
        %v674 = vld [vmem:[%s211 + $0xc40] sm:$0xff]
        %v675 = vld [vmem:[%s211 + $0xc48] sm:$0xff]
        %v676 = vld [vmem:[%s211 + $0xc50] sm:$0xff]
        %v677 = vld [vmem:[%s211 + $0xc58] sm:$0xff]
        %v678 = vld [vmem:[%s211 + $0xc60] sm:$0xff]
        %v679 = vld [vmem:[%s211 + $0xc68] sm:$0xff]
        %v680 = vld [vmem:[%s211 + $0xc70] sm:$0xff]
        %v681 = vld [vmem:[%s211 + $0xc78] sm:$0xff]
        %v682 = vld [vmem:[%s211 + $0xc80] sm:$0xff]
        %v683 = vld [vmem:[%s211 + $0xc88] sm:$0xff]
        %v684 = vld [vmem:[%s211 + $0xc90] sm:$0xff]
        %v685 = vld [vmem:[%s211 + $0xc98] sm:$0xff]
        %v686 = vld [vmem:[%s211 + $0xca0] sm:$0xff]
        %v687 = vld [vmem:[%s211 + $0xca8] sm:$0xff]
        %v688 = vld [vmem:[%s211 + $0xcb0] sm:$0xff]
        %v689 = vld [vmem:[%s211 + $0xcb8] sm:$0xff]
        %v690 = vld [vmem:[%s211 + $0xcc0] sm:$0xff]
        %v691 = vld [vmem:[%s211 + $0xcc8] sm:$0xff]
        %v692 = vld [vmem:[%s211 + $0xcd0] sm:$0xff]
        %v693 = vld [vmem:[%s211 + $0xcd8] sm:$0xff]
        %v694 = vld [vmem:[%s211 + $0xce0] sm:$0xff]
        %v695 = vld [vmem:[%s211 + $0xce8] sm:$0xff]
        %v696 = vld [vmem:[%s211 + $0xcf0] sm:$0xff]
        %v697 = vld [vmem:[%s211 + $0xcf8] sm:$0xff]
        %v698 = vld [vmem:[%s211 + $0xd00] sm:$0xff]
        %v699 = vld [vmem:[%s211 + $0xd08] sm:$0xff]
        %v700 = vld [vmem:[%s211 + $0xd10] sm:$0xff]
        %v701 = vld [vmem:[%s211 + $0xd18] sm:$0xff]
        %v702 = vld [vmem:[%s211 + $0xd20] sm:$0xff]
        %v703 = vld [vmem:[%s211 + $0xd28] sm:$0xff]
        %v704 = vld [vmem:[%s211 + $0xd30] sm:$0xff]
        %v705 = vld [vmem:[%s211 + $0xd38] sm:$0xff]
        %v706 = vld [vmem:[%s211 + $0xd40] sm:$0xff]
        %v707 = vld [vmem:[%s211 + $0xd48] sm:$0xff]
        %v708 = vld [vmem:[%s211 + $0xd50] sm:$0xff]
        %v709 = vld [vmem:[%s211 + $0xd58] sm:$0xff]
        %v710 = vld [vmem:[%s211 + $0xd60] sm:$0xff]
        %v711 = vld [vmem:[%s211 + $0xd68] sm:$0xff]
        %v712 = vld [vmem:[%s211 + $0xd70] sm:$0xff]
        %v713 = vld [vmem:[%s211 + $0xd78] sm:$0xff]
        %v714 = vld [vmem:[%s211 + $0xd80] sm:$0xff]
        %v715 = vld [vmem:[%s211 + $0xd88] sm:$0xff]
        %v716 = vld [vmem:[%s211 + $0xd90] sm:$0xff]
        %v717 = vld [vmem:[%s211 + $0xd98] sm:$0xff]
        %v718 = vld [vmem:[%s211 + $0xda0] sm:$0xff]
        %v719 = vld [vmem:[%s211 + $0xda8] sm:$0xff]
        %v720 = vld [vmem:[%s211 + $0xdb0] sm:$0xff]
        %v721 = vld [vmem:[%s211 + $0xdb8] sm:$0xff]
        %v722 = vld [vmem:[%s211 + $0xdc0] sm:$0xff]
        %v723 = vld [vmem:[%s211 + $0xdc8] sm:$0xff]
        %v724 = vld [vmem:[%s211 + $0xdd0] sm:$0xff]
        %v725 = vld [vmem:[%s211 + $0xdd8] sm:$0xff]
        %v726 = vld [vmem:[%s211 + $0xde0] sm:$0xff]
        %v727 = vld [vmem:[%s211 + $0xde8] sm:$0xff]
        %v728 = vld [vmem:[%s211 + $0xdf0] sm:$0xff]
        %v729 = vld [vmem:[%s211 + $0xdf8] sm:$0xff]
        %v730 = vld [vmem:[%s211 + $0xe00] sm:$0xff]
        %v731 = vld [vmem:[%s211 + $0xe08] sm:$0xff]
        %v732 = vld [vmem:[%s211 + $0xe10] sm:$0xff]
        %v733 = vld [vmem:[%s211 + $0xe18] sm:$0xff]
        %v734 = vld [vmem:[%s211 + $0xe20] sm:$0xff]
        %v735 = vld [vmem:[%s211 + $0xe28] sm:$0xff]
        %v736 = vld [vmem:[%s211 + $0xe30] sm:$0xff]
        %v737 = vld [vmem:[%s211 + $0xe38] sm:$0xff]
        %v738 = vld [vmem:[%s211 + $0xe40] sm:$0xff]
        %v739 = vld [vmem:[%s211 + $0xe48] sm:$0xff]
        %v740 = vld [vmem:[%s211 + $0xe50] sm:$0xff]
        %v741 = vld [vmem:[%s211 + $0xe58] sm:$0xff]
        %v742 = vld [vmem:[%s211 + $0xe60] sm:$0xff]
        %v743 = vld [vmem:[%s211 + $0xe68] sm:$0xff]
        %v744 = vld [vmem:[%s211 + $0xe70] sm:$0xff]
        %v745 = vld [vmem:[%s211 + $0xe78] sm:$0xff]
        %v746 = vld [vmem:[%s211 + $0xe80] sm:$0xff]
        %v747 = vld [vmem:[%s211 + $0xe88] sm:$0xff]
        %v748 = vld [vmem:[%s211 + $0xe90] sm:$0xff]
        %v749 = vld [vmem:[%s211 + $0xe98] sm:$0xff]
        %v750 = vld [vmem:[%s211 + $0xea0] sm:$0xff]
        %v751 = vld [vmem:[%s211 + $0xea8] sm:$0xff]
        %v752 = vld [vmem:[%s211 + $0xeb0] sm:$0xff]
        %v753 = vld [vmem:[%s211 + $0xeb8] sm:$0xff]
        %v754 = vld [vmem:[%s211 + $0xec0] sm:$0xff]
        %v755 = vld [vmem:[%s211 + $0xec8] sm:$0xff]
        %v756 = vld [vmem:[%s211 + $0xed0] sm:$0xff]
        %v757 = vld [vmem:[%s211 + $0xed8] sm:$0xff]
        %v758 = vld [vmem:[%s211 + $0xee0] sm:$0xff]
        %v759 = vld [vmem:[%s211 + $0xee8] sm:$0xff]
        %v760 = vld [vmem:[%s211 + $0xef0] sm:$0xff]
        %v761 = vld [vmem:[%s211 + $0xef8] sm:$0xff]
        %v762 = vld [vmem:[%s211 + $0xf00] sm:$0xff]
        %v763 = vld [vmem:[%s211 + $0xf08] sm:$0xff]
        %v764 = vld [vmem:[%s211 + $0xf10] sm:$0xff]
        %v765 = vld [vmem:[%s211 + $0xf18] sm:$0xff]
        %v766 = vld [vmem:[%s211 + $0xf20] sm:$0xff]
        %v767 = vld [vmem:[%s211 + $0xf28] sm:$0xff]
        %v768 = vld [vmem:[%s211 + $0xf30] sm:$0xff]
        %v769 = vld [vmem:[%s211 + $0xf38] sm:$0xff]
        %v770 = vld [vmem:[%s211 + $0xf40] sm:$0xff]
        %v771 = vld [vmem:[%s211 + $0xf48] sm:$0xff]
        %v772 = vld [vmem:[%s211 + $0xf50] sm:$0xff]
        %v773 = vld [vmem:[%s211 + $0xf58] sm:$0xff]
        %v774 = vld [vmem:[%s211 + $0xf60] sm:$0xff]
        %v775 = vld [vmem:[%s211 + $0xf68] sm:$0xff]
        %v776 = vld [vmem:[%s211 + $0xf70] sm:$0xff]
        %v777 = vld [vmem:[%s211 + $0xf78] sm:$0xff]
        %v778 = vld [vmem:[%s211 + $0xf80] sm:$0xff]
        %v779 = vld [vmem:[%s211 + $0xf88] sm:$0xff]
        %v780 = vld [vmem:[%s211 + $0xf90] sm:$0xff]
        %v781 = vld [vmem:[%s211 + $0xf98] sm:$0xff]
        %v782 = vld [vmem:[%s211 + $0xfa0] sm:$0xff]
        %v783 = vld [vmem:[%s211 + $0xfa8] sm:$0xff]
        %v784 = vld [vmem:[%s211 + $0xfb0] sm:$0xff]
        %v785 = vld [vmem:[%s211 + $0xfb8] sm:$0xff]
        %v786 = vld [vmem:[%s211 + $0xfc0] sm:$0xff]
        %v787 = vld [vmem:[%s211 + $0xfc8] sm:$0xff]
        %v788 = vld [vmem:[%s211 + $0xfd0] sm:$0xff]
        %v789 = vld [vmem:[%s211 + $0xfd8] sm:$0xff]
        %v790 = vld [vmem:[%s211 + $0xfe0] sm:$0xff]
        %v791 = vld [vmem:[%s211 + $0xfe8] sm:$0xff]
        %v792 = vld [vmem:[%s211 + $0xff0] sm:$0xff]
        %v793 = vld [vmem:[%s211 + $0xff8] sm:$0xff]
        %v794 = vld [vmem:[%s220] sm:$0xf]
        %v796 = vlaneseq
        %v797 = vshrl.u32 %v796, 7
        %v798 = vsub.s32 0, %v797
        %v799 = vrot.slane %v794, %v798
        %v800 = vlaneseq
        %v801 = vshrl.u32 %v800, 7
        %v802 = vsub.s32 1, %v801
        %v803 = vrot.slane %v794, %v802
        %v804 = vlaneseq
        %v805 = vshrl.u32 %v804, 7
        %v806 = vsub.s32 2, %v805
        %v807 = vrot.slane %v794, %v806
        %v808 = vlaneseq
        %v809 = vshrl.u32 %v808, 7
        %v810 = vsub.s32 3, %v809
        %v811 = vrot.slane %v794, %v810
        %v824 = vunpack.c.l.b16 %v274
        %v825 = vunpack.c.h.b16 %v274
        %v826 = vunpack.c.l.b16 %v275
        %v827 = vunpack.c.h.b16 %v275
        %v828 = vunpack.c.l.b16 %v276
        %v829 = vunpack.c.h.b16 %v276
        %v830 = vunpack.c.l.b16 %v277
        %v831 = vunpack.c.h.b16 %v277
        %v832 = vunpack.c.l.b16 %v278
        %v833 = vunpack.c.h.b16 %v278
        %v834 = vunpack.c.l.b16 %v279
        %v835 = vunpack.c.h.b16 %v279
        %v836 = vunpack.c.l.b16 %v280
        %v837 = vunpack.c.h.b16 %v280
        %v838 = vunpack.c.l.b16 %v281
        %v839 = vunpack.c.h.b16 %v281
        %v840 = vpack.c.b16 %v824, %v824
        %v841 = vpack.c.b16 %v825, %v825
        %v842 = vpack.c.b16 %v826, %v826
        %v843 = vpack.c.b16 %v827, %v827
        %v844 = vpack.c.b16 %v828, %v828
        %v845 = vpack.c.b16 %v829, %v829
        %v846 = vpack.c.b16 %v830, %v830
        %v847 = vpack.c.b16 %v831, %v831
        %v848 = vpack.c.b16 %v832, %v832
        %v849 = vpack.c.b16 %v833, %v833
        %v850 = vpack.c.b16 %v834, %v834
        %v851 = vpack.c.b16 %v835, %v835
        %v852 = vpack.c.b16 %v836, %v836
        %v853 = vpack.c.b16 %v837, %v837
        %v854 = vpack.c.b16 %v838, %v838
        %v855 = vpack.c.b16 %v839, %v839
        %v1384 = vunpack.c.l.b16 %v282
        %v1385 = vunpack.c.h.b16 %v282
        %v1386 = vunpack.c.l.b16 %v283
        %v1387 = vunpack.c.h.b16 %v283
        %v1388 = vunpack.c.l.b16 %v284
        %v1389 = vunpack.c.h.b16 %v284
        %v1390 = vunpack.c.l.b16 %v285
        %v1391 = vunpack.c.h.b16 %v285
        %v1392 = vunpack.c.l.b16 %v286
        %v1393 = vunpack.c.h.b16 %v286
        %v1394 = vunpack.c.l.b16 %v287
        %v1395 = vunpack.c.h.b16 %v287
        %v1396 = vunpack.c.l.b16 %v288
        %v1397 = vunpack.c.h.b16 %v288
        %v1398 = vunpack.c.l.b16 %v289
        %v1399 = vunpack.c.h.b16 %v289
        %v1400 = vunpack.c.l.b16 %v290
        %v1401 = vunpack.c.h.b16 %v290
        %v1402 = vunpack.c.l.b16 %v291
        %v1403 = vunpack.c.h.b16 %v291
        %v1404 = vunpack.c.l.b16 %v292
        %v1405 = vunpack.c.h.b16 %v292
        %v1406 = vunpack.c.l.b16 %v293
        %v1407 = vunpack.c.h.b16 %v293
        %v1408 = vunpack.c.l.b16 %v294
        %v1409 = vunpack.c.h.b16 %v294
        %v1410 = vunpack.c.l.b16 %v295
        %v1411 = vunpack.c.h.b16 %v295
        %v1412 = vunpack.c.l.b16 %v296
        %v1413 = vunpack.c.h.b16 %v296
        %v1414 = vunpack.c.l.b16 %v297
        %v1415 = vunpack.c.h.b16 %v297
        %v1416 = vunpack.c.l.b16 %v298
        %v1417 = vunpack.c.h.b16 %v298
        %v1418 = vunpack.c.l.b16 %v299
        %v1419 = vunpack.c.h.b16 %v299
        %v1420 = vunpack.c.l.b16 %v300
        %v1421 = vunpack.c.h.b16 %v300
        %v1422 = vunpack.c.l.b16 %v301
        %v1423 = vunpack.c.h.b16 %v301
        %v1424 = vunpack.c.l.b16 %v302
        %v1425 = vunpack.c.h.b16 %v302
        %v1426 = vunpack.c.l.b16 %v303
        %v1427 = vunpack.c.h.b16 %v303
        %v1428 = vunpack.c.l.b16 %v304
        %v1429 = vunpack.c.h.b16 %v304
        %v1430 = vunpack.c.l.b16 %v305
        %v1431 = vunpack.c.h.b16 %v305
        %v1432 = vunpack.c.l.b16 %v306
        %v1433 = vunpack.c.h.b16 %v306
        %v1434 = vunpack.c.l.b16 %v307
        %v1435 = vunpack.c.h.b16 %v307
        %v1436 = vunpack.c.l.b16 %v308
        %v1437 = vunpack.c.h.b16 %v308
        %v1438 = vunpack.c.l.b16 %v309
        %v1439 = vunpack.c.h.b16 %v309
        %v1440 = vunpack.c.l.b16 %v310
        %v1441 = vunpack.c.h.b16 %v310
        %v1442 = vunpack.c.l.b16 %v311
        %v1443 = vunpack.c.h.b16 %v311
        %v1444 = vunpack.c.l.b16 %v312
        %v1445 = vunpack.c.h.b16 %v312
        %v1446 = vunpack.c.l.b16 %v313
        %v1447 = vunpack.c.h.b16 %v313
        %v1448 = vunpack.c.l.b16 %v314
        %v1449 = vunpack.c.h.b16 %v314
        %v1450 = vunpack.c.l.b16 %v315
        %v1451 = vunpack.c.h.b16 %v315
        %v1452 = vunpack.c.l.b16 %v316
        %v1453 = vunpack.c.h.b16 %v316
        %v1454 = vunpack.c.l.b16 %v317
        %v1455 = vunpack.c.h.b16 %v317
        %v1456 = vunpack.c.l.b16 %v318
        %v1457 = vunpack.c.h.b16 %v318
        %v1458 = vunpack.c.l.b16 %v319
        %v1459 = vunpack.c.h.b16 %v319
        %v1460 = vunpack.c.l.b16 %v320
        %v1461 = vunpack.c.h.b16 %v320
        %v1462 = vunpack.c.l.b16 %v321
        %v1463 = vunpack.c.h.b16 %v321
        %v1464 = vunpack.c.l.b16 %v322
        %v1465 = vunpack.c.h.b16 %v322
        %v1466 = vunpack.c.l.b16 %v323
        %v1467 = vunpack.c.h.b16 %v323
        %v1468 = vunpack.c.l.b16 %v324
        %v1469 = vunpack.c.h.b16 %v324
        %v1470 = vunpack.c.l.b16 %v325
        %v1471 = vunpack.c.h.b16 %v325
        %v1472 = vunpack.c.l.b16 %v326
        %v1473 = vunpack.c.h.b16 %v326
        %v1474 = vunpack.c.l.b16 %v327
        %v1475 = vunpack.c.h.b16 %v327
        %v1476 = vunpack.c.l.b16 %v328
        %v1477 = vunpack.c.h.b16 %v328
        %v1478 = vunpack.c.l.b16 %v329
        %v1479 = vunpack.c.h.b16 %v329
        %v1480 = vunpack.c.l.b16 %v330
        %v1481 = vunpack.c.h.b16 %v330
        %v1482 = vunpack.c.l.b16 %v331
        %v1483 = vunpack.c.h.b16 %v331
        %v1484 = vunpack.c.l.b16 %v332
        %v1485 = vunpack.c.h.b16 %v332
        %v1486 = vunpack.c.l.b16 %v333
        %v1487 = vunpack.c.h.b16 %v333
        %v1488 = vunpack.c.l.b16 %v334
        %v1489 = vunpack.c.h.b16 %v334
        %v1490 = vunpack.c.l.b16 %v335
        %v1491 = vunpack.c.h.b16 %v335
        %v1492 = vunpack.c.l.b16 %v336
        %v1493 = vunpack.c.h.b16 %v336
        %v1494 = vunpack.c.l.b16 %v337
        %v1495 = vunpack.c.h.b16 %v337
        %v1496 = vunpack.c.l.b16 %v338
        %v1497 = vunpack.c.h.b16 %v338
        %v1498 = vunpack.c.l.b16 %v339
        %v1499 = vunpack.c.h.b16 %v339
        %v1500 = vunpack.c.l.b16 %v340
        %v1501 = vunpack.c.h.b16 %v340
        %v1502 = vunpack.c.l.b16 %v341
        %v1503 = vunpack.c.h.b16 %v341
        %v1504 = vunpack.c.l.b16 %v342
        %v1505 = vunpack.c.h.b16 %v342
        %v1506 = vunpack.c.l.b16 %v343
        %v1507 = vunpack.c.h.b16 %v343
        %v1508 = vunpack.c.l.b16 %v344
        %v1509 = vunpack.c.h.b16 %v344
        %v1510 = vunpack.c.l.b16 %v345
        %v1511 = vunpack.c.h.b16 %v345
        %v1512 = vunpack.c.l.b16 %v346
        %v1513 = vunpack.c.h.b16 %v346
        %v1514 = vunpack.c.l.b16 %v347
        %v1515 = vunpack.c.h.b16 %v347
        %v1516 = vunpack.c.l.b16 %v348
        %v1517 = vunpack.c.h.b16 %v348
        %v1518 = vunpack.c.l.b16 %v349
        %v1519 = vunpack.c.h.b16 %v349
        %v1520 = vunpack.c.l.b16 %v350
        %v1521 = vunpack.c.h.b16 %v350
        %v1522 = vunpack.c.l.b16 %v351
        %v1523 = vunpack.c.h.b16 %v351
        %v1524 = vunpack.c.l.b16 %v352
        %v1525 = vunpack.c.h.b16 %v352
        %v1526 = vunpack.c.l.b16 %v353
        %v1527 = vunpack.c.h.b16 %v353
        %v1528 = vunpack.c.l.b16 %v354
        %v1529 = vunpack.c.h.b16 %v354
        %v1530 = vunpack.c.l.b16 %v355
        %v1531 = vunpack.c.h.b16 %v355
        %v1532 = vunpack.c.l.b16 %v356
        %v1533 = vunpack.c.h.b16 %v356
        %v1534 = vunpack.c.l.b16 %v357
        %v1535 = vunpack.c.h.b16 %v357
        %v1536 = vunpack.c.l.b16 %v358
        %v1537 = vunpack.c.h.b16 %v358
        %v1538 = vunpack.c.l.b16 %v359
        %v1539 = vunpack.c.h.b16 %v359
        %v1540 = vunpack.c.l.b16 %v360
        %v1541 = vunpack.c.h.b16 %v360
        %v1542 = vunpack.c.l.b16 %v361
        %v1543 = vunpack.c.h.b16 %v361
        %v1544 = vunpack.c.l.b16 %v362
        %v1545 = vunpack.c.h.b16 %v362
        %v1546 = vunpack.c.l.b16 %v363
        %v1547 = vunpack.c.h.b16 %v363
        %v1548 = vunpack.c.l.b16 %v364
        %v1549 = vunpack.c.h.b16 %v364
        %v1550 = vunpack.c.l.b16 %v365
        %v1551 = vunpack.c.h.b16 %v365
        %v1552 = vunpack.c.l.b16 %v366
        %v1553 = vunpack.c.h.b16 %v366
        %v1554 = vunpack.c.l.b16 %v367
        %v1555 = vunpack.c.h.b16 %v367
        %v1556 = vunpack.c.l.b16 %v368
        %v1557 = vunpack.c.h.b16 %v368
        %v1558 = vunpack.c.l.b16 %v369
        %v1559 = vunpack.c.h.b16 %v369
        %v1560 = vunpack.c.l.b16 %v370
        %v1561 = vunpack.c.h.b16 %v370
        %v1562 = vunpack.c.l.b16 %v371
        %v1563 = vunpack.c.h.b16 %v371
        %v1564 = vunpack.c.l.b16 %v372
        %v1565 = vunpack.c.h.b16 %v372
        %v1566 = vunpack.c.l.b16 %v373
        %v1567 = vunpack.c.h.b16 %v373
        %v1568 = vunpack.c.l.b16 %v374
        %v1569 = vunpack.c.h.b16 %v374
        %v1570 = vunpack.c.l.b16 %v375
        %v1571 = vunpack.c.h.b16 %v375
        %v1572 = vunpack.c.l.b16 %v376
        %v1573 = vunpack.c.h.b16 %v376
        %v1574 = vunpack.c.l.b16 %v377
        %v1575 = vunpack.c.h.b16 %v377
        %v1576 = vunpack.c.l.b16 %v378
        %v1577 = vunpack.c.h.b16 %v378
        %v1578 = vunpack.c.l.b16 %v379
        %v1579 = vunpack.c.h.b16 %v379
        %v1580 = vunpack.c.l.b16 %v380
        %v1581 = vunpack.c.h.b16 %v380
        %v1582 = vunpack.c.l.b16 %v381
        %v1583 = vunpack.c.h.b16 %v381
        %v1584 = vunpack.c.l.b16 %v382
        %v1585 = vunpack.c.h.b16 %v382
        %v1586 = vunpack.c.l.b16 %v383
        %v1587 = vunpack.c.h.b16 %v383
        %v1588 = vunpack.c.l.b16 %v384
        %v1589 = vunpack.c.h.b16 %v384
        %v1590 = vunpack.c.l.b16 %v385
        %v1591 = vunpack.c.h.b16 %v385
        %v1592 = vunpack.c.l.b16 %v386
        %v1593 = vunpack.c.h.b16 %v386
        %v1594 = vunpack.c.l.b16 %v387
        %v1595 = vunpack.c.h.b16 %v387
        %v1596 = vunpack.c.l.b16 %v388
        %v1597 = vunpack.c.h.b16 %v388
        %v1598 = vunpack.c.l.b16 %v389
        %v1599 = vunpack.c.h.b16 %v389
        %v1600 = vunpack.c.l.b16 %v390
        %v1601 = vunpack.c.h.b16 %v390
        %v1602 = vunpack.c.l.b16 %v391
        %v1603 = vunpack.c.h.b16 %v391
        %v1604 = vunpack.c.l.b16 %v392
        %v1605 = vunpack.c.h.b16 %v392
        %v1606 = vunpack.c.l.b16 %v393
        %v1607 = vunpack.c.h.b16 %v393
        %v1608 = vunpack.c.l.b16 %v394
        %v1609 = vunpack.c.h.b16 %v394
        %v1610 = vunpack.c.l.b16 %v395
        %v1611 = vunpack.c.h.b16 %v395
        %v1612 = vunpack.c.l.b16 %v396
        %v1613 = vunpack.c.h.b16 %v396
        %v1614 = vunpack.c.l.b16 %v397
        %v1615 = vunpack.c.h.b16 %v397
        %v1616 = vunpack.c.l.b16 %v398
        %v1617 = vunpack.c.h.b16 %v398
        %v1618 = vunpack.c.l.b16 %v399
        %v1619 = vunpack.c.h.b16 %v399
        %v1620 = vunpack.c.l.b16 %v400
        %v1621 = vunpack.c.h.b16 %v400
        %v1622 = vunpack.c.l.b16 %v401
        %v1623 = vunpack.c.h.b16 %v401
        %v1624 = vunpack.c.l.b16 %v402
        %v1625 = vunpack.c.h.b16 %v402
        %v1626 = vunpack.c.l.b16 %v403
        %v1627 = vunpack.c.h.b16 %v403
        %v1628 = vunpack.c.l.b16 %v404
        %v1629 = vunpack.c.h.b16 %v404
        %v1630 = vunpack.c.l.b16 %v405
        %v1631 = vunpack.c.h.b16 %v405
        %v1632 = vunpack.c.l.b16 %v406
        %v1633 = vunpack.c.h.b16 %v406
        %v1634 = vunpack.c.l.b16 %v407
        %v1635 = vunpack.c.h.b16 %v407
        %v1636 = vunpack.c.l.b16 %v408
        %v1637 = vunpack.c.h.b16 %v408
        %v1638 = vunpack.c.l.b16 %v409
        %v1639 = vunpack.c.h.b16 %v409
        %v1640 = vunpack.c.l.b16 %v410
        %v1641 = vunpack.c.h.b16 %v410
        %v1642 = vunpack.c.l.b16 %v411
        %v1643 = vunpack.c.h.b16 %v411
        %v1644 = vunpack.c.l.b16 %v412
        %v1645 = vunpack.c.h.b16 %v412
        %v1646 = vunpack.c.l.b16 %v413
        %v1647 = vunpack.c.h.b16 %v413
        %v1648 = vunpack.c.l.b16 %v414
        %v1649 = vunpack.c.h.b16 %v414
        %v1650 = vunpack.c.l.b16 %v415
        %v1651 = vunpack.c.h.b16 %v415
        %v1652 = vunpack.c.l.b16 %v416
        %v1653 = vunpack.c.h.b16 %v416
        %v1654 = vunpack.c.l.b16 %v417
        %v1655 = vunpack.c.h.b16 %v417
        %v1656 = vunpack.c.l.b16 %v418
        %v1657 = vunpack.c.h.b16 %v418
        %v1658 = vunpack.c.l.b16 %v419
        %v1659 = vunpack.c.h.b16 %v419
        %v1660 = vunpack.c.l.b16 %v420
        %v1661 = vunpack.c.h.b16 %v420
        %v1662 = vunpack.c.l.b16 %v421
        %v1663 = vunpack.c.h.b16 %v421
        %v1664 = vunpack.c.l.b16 %v422
        %v1665 = vunpack.c.h.b16 %v422
        %v1666 = vunpack.c.l.b16 %v423
        %v1667 = vunpack.c.h.b16 %v423
        %v1668 = vunpack.c.l.b16 %v424
        %v1669 = vunpack.c.h.b16 %v424
        %v1670 = vunpack.c.l.b16 %v425
        %v1671 = vunpack.c.h.b16 %v425
        %v1672 = vunpack.c.l.b16 %v426
        %v1673 = vunpack.c.h.b16 %v426
        %v1674 = vunpack.c.l.b16 %v427
        %v1675 = vunpack.c.h.b16 %v427
        %v1676 = vunpack.c.l.b16 %v428
        %v1677 = vunpack.c.h.b16 %v428
        %v1678 = vunpack.c.l.b16 %v429
        %v1679 = vunpack.c.h.b16 %v429
        %v1680 = vunpack.c.l.b16 %v430
        %v1681 = vunpack.c.h.b16 %v430
        %v1682 = vunpack.c.l.b16 %v431
        %v1683 = vunpack.c.h.b16 %v431
        %v1684 = vunpack.c.l.b16 %v432
        %v1685 = vunpack.c.h.b16 %v432
        %v1686 = vunpack.c.l.b16 %v433
        %v1687 = vunpack.c.h.b16 %v433
        %v1688 = vunpack.c.l.b16 %v434
        %v1689 = vunpack.c.h.b16 %v434
        %v1690 = vunpack.c.l.b16 %v435
        %v1691 = vunpack.c.h.b16 %v435
        %v1692 = vunpack.c.l.b16 %v436
        %v1693 = vunpack.c.h.b16 %v436
        %v1694 = vunpack.c.l.b16 %v437
        %v1695 = vunpack.c.h.b16 %v437
        %v1696 = vunpack.c.l.b16 %v438
        %v1697 = vunpack.c.h.b16 %v438
        %v1698 = vunpack.c.l.b16 %v439
        %v1699 = vunpack.c.h.b16 %v439
        %v1700 = vunpack.c.l.b16 %v440
        %v1701 = vunpack.c.h.b16 %v440
        %v1702 = vunpack.c.l.b16 %v441
        %v1703 = vunpack.c.h.b16 %v441
        %v1704 = vunpack.c.l.b16 %v442
        %v1705 = vunpack.c.h.b16 %v442
        %v1706 = vunpack.c.l.b16 %v443
        %v1707 = vunpack.c.h.b16 %v443
        %v1708 = vunpack.c.l.b16 %v444
        %v1709 = vunpack.c.h.b16 %v444
        %v1710 = vunpack.c.l.b16 %v445
        %v1711 = vunpack.c.h.b16 %v445
        %v1712 = vunpack.c.l.b16 %v446
        %v1713 = vunpack.c.h.b16 %v446
        %v1714 = vunpack.c.l.b16 %v447
        %v1715 = vunpack.c.h.b16 %v447
        %v1716 = vunpack.c.l.b16 %v448
        %v1717 = vunpack.c.h.b16 %v448
        %v1718 = vunpack.c.l.b16 %v449
        %v1719 = vunpack.c.h.b16 %v449
        %v1720 = vunpack.c.l.b16 %v450
        %v1721 = vunpack.c.h.b16 %v450
        %v1722 = vunpack.c.l.b16 %v451
        %v1723 = vunpack.c.h.b16 %v451
        %v1724 = vunpack.c.l.b16 %v452
        %v1725 = vunpack.c.h.b16 %v452
        %v1726 = vunpack.c.l.b16 %v453
        %v1727 = vunpack.c.h.b16 %v453
        %v1728 = vunpack.c.l.b16 %v454
        %v1729 = vunpack.c.h.b16 %v454
        %v1730 = vunpack.c.l.b16 %v455
        %v1731 = vunpack.c.h.b16 %v455
        %v1732 = vunpack.c.l.b16 %v456
        %v1733 = vunpack.c.h.b16 %v456
        %v1734 = vunpack.c.l.b16 %v457
        %v1735 = vunpack.c.h.b16 %v457
        %v1736 = vunpack.c.l.b16 %v458
        %v1737 = vunpack.c.h.b16 %v458
        %v1738 = vunpack.c.l.b16 %v459
        %v1739 = vunpack.c.h.b16 %v459
        %v1740 = vunpack.c.l.b16 %v460
        %v1741 = vunpack.c.h.b16 %v460
        %v1742 = vunpack.c.l.b16 %v461
        %v1743 = vunpack.c.h.b16 %v461
        %v1744 = vunpack.c.l.b16 %v462
        %v1745 = vunpack.c.h.b16 %v462
        %v1746 = vunpack.c.l.b16 %v463
        %v1747 = vunpack.c.h.b16 %v463
        %v1748 = vunpack.c.l.b16 %v464
        %v1749 = vunpack.c.h.b16 %v464
        %v1750 = vunpack.c.l.b16 %v465
        %v1751 = vunpack.c.h.b16 %v465
        %v1752 = vunpack.c.l.b16 %v466
        %v1753 = vunpack.c.h.b16 %v466
        %v1754 = vunpack.c.l.b16 %v467
        %v1755 = vunpack.c.h.b16 %v467
        %v1756 = vunpack.c.l.b16 %v468
        %v1757 = vunpack.c.h.b16 %v468
        %v1758 = vunpack.c.l.b16 %v469
        %v1759 = vunpack.c.h.b16 %v469
        %v1760 = vunpack.c.l.b16 %v470
        %v1761 = vunpack.c.h.b16 %v470
        %v1762 = vunpack.c.l.b16 %v471
        %v1763 = vunpack.c.h.b16 %v471
        %v1764 = vunpack.c.l.b16 %v472
        %v1765 = vunpack.c.h.b16 %v472
        %v1766 = vunpack.c.l.b16 %v473
        %v1767 = vunpack.c.h.b16 %v473
        %v1768 = vunpack.c.l.b16 %v474
        %v1769 = vunpack.c.h.b16 %v474
        %v1770 = vunpack.c.l.b16 %v475
        %v1771 = vunpack.c.h.b16 %v475
        %v1772 = vunpack.c.l.b16 %v476
        %v1773 = vunpack.c.h.b16 %v476
        %v1774 = vunpack.c.l.b16 %v477
        %v1775 = vunpack.c.h.b16 %v477
        %v1776 = vunpack.c.l.b16 %v478
        %v1777 = vunpack.c.h.b16 %v478
        %v1778 = vunpack.c.l.b16 %v479
        %v1779 = vunpack.c.h.b16 %v479
        %v1780 = vunpack.c.l.b16 %v480
        %v1781 = vunpack.c.h.b16 %v480
        %v1782 = vunpack.c.l.b16 %v481
        %v1783 = vunpack.c.h.b16 %v481
        %v1784 = vunpack.c.l.b16 %v482
        %v1785 = vunpack.c.h.b16 %v482
        %v1786 = vunpack.c.l.b16 %v483
        %v1787 = vunpack.c.h.b16 %v483
        %v1788 = vunpack.c.l.b16 %v484
        %v1789 = vunpack.c.h.b16 %v484
        %v1790 = vunpack.c.l.b16 %v485
        %v1791 = vunpack.c.h.b16 %v485
        %v1792 = vunpack.c.l.b16 %v486
        %v1793 = vunpack.c.h.b16 %v486
        %v1794 = vunpack.c.l.b16 %v487
        %v1795 = vunpack.c.h.b16 %v487
        %v1796 = vunpack.c.l.b16 %v488
        %v1797 = vunpack.c.h.b16 %v488
        %v1798 = vunpack.c.l.b16 %v489
        %v1799 = vunpack.c.h.b16 %v489
        %v1800 = vunpack.c.l.b16 %v490
        %v1801 = vunpack.c.h.b16 %v490
        %v1802 = vunpack.c.l.b16 %v491
        %v1803 = vunpack.c.h.b16 %v491
        %v1804 = vunpack.c.l.b16 %v492
        %v1805 = vunpack.c.h.b16 %v492
        %v1806 = vunpack.c.l.b16 %v493
        %v1807 = vunpack.c.h.b16 %v493
        %v1808 = vunpack.c.l.b16 %v494
        %v1809 = vunpack.c.h.b16 %v494
        %v1810 = vunpack.c.l.b16 %v495
        %v1811 = vunpack.c.h.b16 %v495
        %v1812 = vunpack.c.l.b16 %v496
        %v1813 = vunpack.c.h.b16 %v496
        %v1814 = vunpack.c.l.b16 %v497
        %v1815 = vunpack.c.h.b16 %v497
        %v1816 = vunpack.c.l.b16 %v498
        %v1817 = vunpack.c.h.b16 %v498
        %v1818 = vunpack.c.l.b16 %v499
        %v1819 = vunpack.c.h.b16 %v499
        %v1820 = vunpack.c.l.b16 %v500
        %v1821 = vunpack.c.h.b16 %v500
        %v1822 = vunpack.c.l.b16 %v501
        %v1823 = vunpack.c.h.b16 %v501
        %v1824 = vunpack.c.l.b16 %v502
        %v1825 = vunpack.c.h.b16 %v502
        %v1826 = vunpack.c.l.b16 %v503
        %v1827 = vunpack.c.h.b16 %v503
        %v1828 = vunpack.c.l.b16 %v504
        %v1829 = vunpack.c.h.b16 %v504
        %v1830 = vunpack.c.l.b16 %v505
        %v1831 = vunpack.c.h.b16 %v505
        %v1832 = vunpack.c.l.b16 %v506
        %v1833 = vunpack.c.h.b16 %v506
        %v1834 = vunpack.c.l.b16 %v507
        %v1835 = vunpack.c.h.b16 %v507
        %v1836 = vunpack.c.l.b16 %v508
        %v1837 = vunpack.c.h.b16 %v508
        %v1838 = vunpack.c.l.b16 %v509
        %v1839 = vunpack.c.h.b16 %v509
        %v1840 = vunpack.c.l.b16 %v510
        %v1841 = vunpack.c.h.b16 %v510
        %v1842 = vunpack.c.l.b16 %v511
        %v1843 = vunpack.c.h.b16 %v511
        %v1844 = vunpack.c.l.b16 %v512
        %v1845 = vunpack.c.h.b16 %v512
        %v1846 = vunpack.c.l.b16 %v513
        %v1847 = vunpack.c.h.b16 %v513
        %v1848 = vunpack.c.l.b16 %v514
        %v1849 = vunpack.c.h.b16 %v514
        %v1850 = vunpack.c.l.b16 %v515
        %v1851 = vunpack.c.h.b16 %v515
        %v1852 = vunpack.c.l.b16 %v516
        %v1853 = vunpack.c.h.b16 %v516
        %v1854 = vunpack.c.l.b16 %v517
        %v1855 = vunpack.c.h.b16 %v517
        %v1856 = vunpack.c.l.b16 %v518
        %v1857 = vunpack.c.h.b16 %v518
        %v1858 = vunpack.c.l.b16 %v519
        %v1859 = vunpack.c.h.b16 %v519
        %v1860 = vunpack.c.l.b16 %v520
        %v1861 = vunpack.c.h.b16 %v520
        %v1862 = vunpack.c.l.b16 %v521
        %v1863 = vunpack.c.h.b16 %v521
        %v1864 = vunpack.c.l.b16 %v522
        %v1865 = vunpack.c.h.b16 %v522
        %v1866 = vunpack.c.l.b16 %v523
        %v1867 = vunpack.c.h.b16 %v523
        %v1868 = vunpack.c.l.b16 %v524
        %v1869 = vunpack.c.h.b16 %v524
        %v1870 = vunpack.c.l.b16 %v525
        %v1871 = vunpack.c.h.b16 %v525
        %v1872 = vunpack.c.l.b16 %v526
        %v1873 = vunpack.c.h.b16 %v526
        %v1874 = vunpack.c.l.b16 %v527
        %v1875 = vunpack.c.h.b16 %v527
        %v1876 = vunpack.c.l.b16 %v528
        %v1877 = vunpack.c.h.b16 %v528
        %v1878 = vunpack.c.l.b16 %v529
        %v1879 = vunpack.c.h.b16 %v529
        %v1880 = vunpack.c.l.b16 %v530
        %v1881 = vunpack.c.h.b16 %v530
        %v1882 = vunpack.c.l.b16 %v531
        %v1883 = vunpack.c.h.b16 %v531
        %v1884 = vunpack.c.l.b16 %v532
        %v1885 = vunpack.c.h.b16 %v532
        %v1886 = vunpack.c.l.b16 %v533
        %v1887 = vunpack.c.h.b16 %v533
        %v1888 = vunpack.c.l.b16 %v534
        %v1889 = vunpack.c.h.b16 %v534
        %v1890 = vunpack.c.l.b16 %v535
        %v1891 = vunpack.c.h.b16 %v535
        %v1892 = vunpack.c.l.b16 %v536
        %v1893 = vunpack.c.h.b16 %v536
        %v1894 = vunpack.c.l.b16 %v537
        %v1895 = vunpack.c.h.b16 %v537
        %v1896 = vunpack.c.l.b16 %v538
        %v1897 = vunpack.c.h.b16 %v538
        %v1898 = vunpack.c.l.b16 %v539
        %v1899 = vunpack.c.h.b16 %v539
        %v1900 = vunpack.c.l.b16 %v540
        %v1901 = vunpack.c.h.b16 %v540
        %v1902 = vunpack.c.l.b16 %v541
        %v1903 = vunpack.c.h.b16 %v541
        %v1904 = vunpack.c.l.b16 %v542
        %v1905 = vunpack.c.h.b16 %v542
        %v1906 = vunpack.c.l.b16 %v543
        %v1907 = vunpack.c.h.b16 %v543
        %v1908 = vunpack.c.l.b16 %v544
        %v1909 = vunpack.c.h.b16 %v544
        %v1910 = vunpack.c.l.b16 %v545
        %v1911 = vunpack.c.h.b16 %v545
        %v1912 = vunpack.c.l.b16 %v546
        %v1913 = vunpack.c.h.b16 %v546
        %v1914 = vunpack.c.l.b16 %v547
        %v1915 = vunpack.c.h.b16 %v547
        %v1916 = vunpack.c.l.b16 %v548
        %v1917 = vunpack.c.h.b16 %v548
        %v1918 = vunpack.c.l.b16 %v549
        %v1919 = vunpack.c.h.b16 %v549
        %v1920 = vunpack.c.l.b16 %v550
        %v1921 = vunpack.c.h.b16 %v550
        %v1922 = vunpack.c.l.b16 %v551
        %v1923 = vunpack.c.h.b16 %v551
        %v1924 = vunpack.c.l.b16 %v552
        %v1925 = vunpack.c.h.b16 %v552
        %v1926 = vunpack.c.l.b16 %v553
        %v1927 = vunpack.c.h.b16 %v553
        %v1928 = vunpack.c.l.b16 %v554
        %v1929 = vunpack.c.h.b16 %v554
        %v1930 = vunpack.c.l.b16 %v555
        %v1931 = vunpack.c.h.b16 %v555
        %v1932 = vunpack.c.l.b16 %v556
        %v1933 = vunpack.c.h.b16 %v556
        %v1934 = vunpack.c.l.b16 %v557
        %v1935 = vunpack.c.h.b16 %v557
        %v1936 = vunpack.c.l.b16 %v558
        %v1937 = vunpack.c.h.b16 %v558
        %v1938 = vunpack.c.l.b16 %v559
        %v1939 = vunpack.c.h.b16 %v559
        %v1940 = vunpack.c.l.b16 %v560
        %v1941 = vunpack.c.h.b16 %v560
        %v1942 = vunpack.c.l.b16 %v561
        %v1943 = vunpack.c.h.b16 %v561
        %v1944 = vunpack.c.l.b16 %v562
        %v1945 = vunpack.c.h.b16 %v562
        %v1946 = vunpack.c.l.b16 %v563
        %v1947 = vunpack.c.h.b16 %v563
        %v1948 = vunpack.c.l.b16 %v564
        %v1949 = vunpack.c.h.b16 %v564
        %v1950 = vunpack.c.l.b16 %v565
        %v1951 = vunpack.c.h.b16 %v565
        %v1952 = vunpack.c.l.b16 %v566
        %v1953 = vunpack.c.h.b16 %v566
        %v1954 = vunpack.c.l.b16 %v567
        %v1955 = vunpack.c.h.b16 %v567
        %v1956 = vunpack.c.l.b16 %v568
        %v1957 = vunpack.c.h.b16 %v568
        %v1958 = vunpack.c.l.b16 %v569
        %v1959 = vunpack.c.h.b16 %v569
        %v1960 = vunpack.c.l.b16 %v570
        %v1961 = vunpack.c.h.b16 %v570
        %v1962 = vunpack.c.l.b16 %v571
        %v1963 = vunpack.c.h.b16 %v571
        %v1964 = vunpack.c.l.b16 %v572
        %v1965 = vunpack.c.h.b16 %v572
        %v1966 = vunpack.c.l.b16 %v573
        %v1967 = vunpack.c.h.b16 %v573
        %v1968 = vunpack.c.l.b16 %v574
        %v1969 = vunpack.c.h.b16 %v574
        %v1970 = vunpack.c.l.b16 %v575
        %v1971 = vunpack.c.h.b16 %v575
        %v1972 = vunpack.c.l.b16 %v576
        %v1973 = vunpack.c.h.b16 %v576
        %v1974 = vunpack.c.l.b16 %v577
        %v1975 = vunpack.c.h.b16 %v577
        %v1976 = vunpack.c.l.b16 %v578
        %v1977 = vunpack.c.h.b16 %v578
        %v1978 = vunpack.c.l.b16 %v579
        %v1979 = vunpack.c.h.b16 %v579
        %v1980 = vunpack.c.l.b16 %v580
        %v1981 = vunpack.c.h.b16 %v580
        %v1982 = vunpack.c.l.b16 %v581
        %v1983 = vunpack.c.h.b16 %v581
        %v1984 = vunpack.c.l.b16 %v582
        %v1985 = vunpack.c.h.b16 %v582
        %v1986 = vunpack.c.l.b16 %v583
        %v1987 = vunpack.c.h.b16 %v583
        %v1988 = vunpack.c.l.b16 %v584
        %v1989 = vunpack.c.h.b16 %v584
        %v1990 = vunpack.c.l.b16 %v585
        %v1991 = vunpack.c.h.b16 %v585
        %v1992 = vunpack.c.l.b16 %v586
        %v1993 = vunpack.c.h.b16 %v586
        %v1994 = vunpack.c.l.b16 %v587
        %v1995 = vunpack.c.h.b16 %v587
        %v1996 = vunpack.c.l.b16 %v588
        %v1997 = vunpack.c.h.b16 %v588
        %v1998 = vunpack.c.l.b16 %v589
        %v1999 = vunpack.c.h.b16 %v589
        %v2000 = vunpack.c.l.b16 %v590
        %v2001 = vunpack.c.h.b16 %v590
        %v2002 = vunpack.c.l.b16 %v591
        %v2003 = vunpack.c.h.b16 %v591
        %v2004 = vunpack.c.l.b16 %v592
        %v2005 = vunpack.c.h.b16 %v592
        %v2006 = vunpack.c.l.b16 %v593
        %v2007 = vunpack.c.h.b16 %v593
        %v2008 = vunpack.c.l.b16 %v594
        %v2009 = vunpack.c.h.b16 %v594
        %v2010 = vunpack.c.l.b16 %v595
        %v2011 = vunpack.c.h.b16 %v595
        %v2012 = vunpack.c.l.b16 %v596
        %v2013 = vunpack.c.h.b16 %v596
        %v2014 = vunpack.c.l.b16 %v597
        %v2015 = vunpack.c.h.b16 %v597
        %v2016 = vunpack.c.l.b16 %v598
        %v2017 = vunpack.c.h.b16 %v598
        %v2018 = vunpack.c.l.b16 %v599
        %v2019 = vunpack.c.h.b16 %v599
        %v2020 = vunpack.c.l.b16 %v600
        %v2021 = vunpack.c.h.b16 %v600
        %v2022 = vunpack.c.l.b16 %v601
        %v2023 = vunpack.c.h.b16 %v601
        %v2024 = vunpack.c.l.b16 %v602
        %v2025 = vunpack.c.h.b16 %v602
        %v2026 = vunpack.c.l.b16 %v603
        %v2027 = vunpack.c.h.b16 %v603
        %v2028 = vunpack.c.l.b16 %v604
        %v2029 = vunpack.c.h.b16 %v604
        %v2030 = vunpack.c.l.b16 %v605
        %v2031 = vunpack.c.h.b16 %v605
        %v2032 = vunpack.c.l.b16 %v606
        %v2033 = vunpack.c.h.b16 %v606
        %v2034 = vunpack.c.l.b16 %v607
        %v2035 = vunpack.c.h.b16 %v607
        %v2036 = vunpack.c.l.b16 %v608
        %v2037 = vunpack.c.h.b16 %v608
        %v2038 = vunpack.c.l.b16 %v609
        %v2039 = vunpack.c.h.b16 %v609
        %v2040 = vunpack.c.l.b16 %v610
        %v2041 = vunpack.c.h.b16 %v610
        %v2042 = vunpack.c.l.b16 %v611
        %v2043 = vunpack.c.h.b16 %v611
        %v2044 = vunpack.c.l.b16 %v612
        %v2045 = vunpack.c.h.b16 %v612
        %v2046 = vunpack.c.l.b16 %v613
        %v2047 = vunpack.c.h.b16 %v613
        %v2048 = vunpack.c.l.b16 %v614
        %v2049 = vunpack.c.h.b16 %v614
        %v2050 = vunpack.c.l.b16 %v615
        %v2051 = vunpack.c.h.b16 %v615
        %v2052 = vunpack.c.l.b16 %v616
        %v2053 = vunpack.c.h.b16 %v616
        %v2054 = vunpack.c.l.b16 %v617
        %v2055 = vunpack.c.h.b16 %v617
        %v2056 = vunpack.c.l.b16 %v618
        %v2057 = vunpack.c.h.b16 %v618
        %v2058 = vunpack.c.l.b16 %v619
        %v2059 = vunpack.c.h.b16 %v619
        %v2060 = vunpack.c.l.b16 %v620
        %v2061 = vunpack.c.h.b16 %v620
        %v2062 = vunpack.c.l.b16 %v621
        %v2063 = vunpack.c.h.b16 %v621
        %v2064 = vunpack.c.l.b16 %v622
        %v2065 = vunpack.c.h.b16 %v622
        %v2066 = vunpack.c.l.b16 %v623
        %v2067 = vunpack.c.h.b16 %v623
        %v2068 = vunpack.c.l.b16 %v624
        %v2069 = vunpack.c.h.b16 %v624
        %v2070 = vunpack.c.l.b16 %v625
        %v2071 = vunpack.c.h.b16 %v625
        %v2072 = vunpack.c.l.b16 %v626
        %v2073 = vunpack.c.h.b16 %v626
        %v2074 = vunpack.c.l.b16 %v627
        %v2075 = vunpack.c.h.b16 %v627
        %v2076 = vunpack.c.l.b16 %v628
        %v2077 = vunpack.c.h.b16 %v628
        %v2078 = vunpack.c.l.b16 %v629
        %v2079 = vunpack.c.h.b16 %v629
        %v2080 = vunpack.c.l.b16 %v630
        %v2081 = vunpack.c.h.b16 %v630
        %v2082 = vunpack.c.l.b16 %v631
        %v2083 = vunpack.c.h.b16 %v631
        %v2084 = vunpack.c.l.b16 %v632
        %v2085 = vunpack.c.h.b16 %v632
        %v2086 = vunpack.c.l.b16 %v633
        %v2087 = vunpack.c.h.b16 %v633
        %v2088 = vunpack.c.l.b16 %v634
        %v2089 = vunpack.c.h.b16 %v634
        %v2090 = vunpack.c.l.b16 %v635
        %v2091 = vunpack.c.h.b16 %v635
        %v2092 = vunpack.c.l.b16 %v636
        %v2093 = vunpack.c.h.b16 %v636
        %v2094 = vunpack.c.l.b16 %v637
        %v2095 = vunpack.c.h.b16 %v637
        %v2096 = vunpack.c.l.b16 %v638
        %v2097 = vunpack.c.h.b16 %v638
        %v2098 = vunpack.c.l.b16 %v639
        %v2099 = vunpack.c.h.b16 %v639
        %v2100 = vunpack.c.l.b16 %v640
        %v2101 = vunpack.c.h.b16 %v640
        %v2102 = vunpack.c.l.b16 %v641
        %v2103 = vunpack.c.h.b16 %v641
        %v2104 = vunpack.c.l.b16 %v642
        %v2105 = vunpack.c.h.b16 %v642
        %v2106 = vunpack.c.l.b16 %v643
        %v2107 = vunpack.c.h.b16 %v643
        %v2108 = vunpack.c.l.b16 %v644
        %v2109 = vunpack.c.h.b16 %v644
        %v2110 = vunpack.c.l.b16 %v645
        %v2111 = vunpack.c.h.b16 %v645
        %v2112 = vunpack.c.l.b16 %v646
        %v2113 = vunpack.c.h.b16 %v646
        %v2114 = vunpack.c.l.b16 %v647
        %v2115 = vunpack.c.h.b16 %v647
        %v2116 = vunpack.c.l.b16 %v648
        %v2117 = vunpack.c.h.b16 %v648
        %v2118 = vunpack.c.l.b16 %v649
        %v2119 = vunpack.c.h.b16 %v649
        %v2120 = vunpack.c.l.b16 %v650
        %v2121 = vunpack.c.h.b16 %v650
        %v2122 = vunpack.c.l.b16 %v651
        %v2123 = vunpack.c.h.b16 %v651
        %v2124 = vunpack.c.l.b16 %v652
        %v2125 = vunpack.c.h.b16 %v652
        %v2126 = vunpack.c.l.b16 %v653
        %v2127 = vunpack.c.h.b16 %v653
        %v2128 = vunpack.c.l.b16 %v654
        %v2129 = vunpack.c.h.b16 %v654
        %v2130 = vunpack.c.l.b16 %v655
        %v2131 = vunpack.c.h.b16 %v655
        %v2132 = vunpack.c.l.b16 %v656
        %v2133 = vunpack.c.h.b16 %v656
        %v2134 = vunpack.c.l.b16 %v657
        %v2135 = vunpack.c.h.b16 %v657
        %v2136 = vunpack.c.l.b16 %v658
        %v2137 = vunpack.c.h.b16 %v658
        %v2138 = vunpack.c.l.b16 %v659
        %v2139 = vunpack.c.h.b16 %v659
        %v2140 = vunpack.c.l.b16 %v660
        %v2141 = vunpack.c.h.b16 %v660
        %v2142 = vunpack.c.l.b16 %v661
        %v2143 = vunpack.c.h.b16 %v661
        %v2144 = vunpack.c.l.b16 %v662
        %v2145 = vunpack.c.h.b16 %v662
        %v2146 = vunpack.c.l.b16 %v663
        %v2147 = vunpack.c.h.b16 %v663
        %v2148 = vunpack.c.l.b16 %v664
        %v2149 = vunpack.c.h.b16 %v664
        %v2150 = vunpack.c.l.b16 %v665
        %v2151 = vunpack.c.h.b16 %v665
        %v2152 = vunpack.c.l.b16 %v666
        %v2153 = vunpack.c.h.b16 %v666
        %v2154 = vunpack.c.l.b16 %v667
        %v2155 = vunpack.c.h.b16 %v667
        %v2156 = vunpack.c.l.b16 %v668
        %v2157 = vunpack.c.h.b16 %v668
        %v2158 = vunpack.c.l.b16 %v669
        %v2159 = vunpack.c.h.b16 %v669
        %v2160 = vunpack.c.l.b16 %v670
        %v2161 = vunpack.c.h.b16 %v670
        %v2162 = vunpack.c.l.b16 %v671
        %v2163 = vunpack.c.h.b16 %v671
        %v2164 = vunpack.c.l.b16 %v672
        %v2165 = vunpack.c.h.b16 %v672
        %v2166 = vunpack.c.l.b16 %v673
        %v2167 = vunpack.c.h.b16 %v673
        %v2168 = vunpack.c.l.b16 %v674
        %v2169 = vunpack.c.h.b16 %v674
        %v2170 = vunpack.c.l.b16 %v675
        %v2171 = vunpack.c.h.b16 %v675
        %v2172 = vunpack.c.l.b16 %v676
        %v2173 = vunpack.c.h.b16 %v676
        %v2174 = vunpack.c.l.b16 %v677
        %v2175 = vunpack.c.h.b16 %v677
        %v2176 = vunpack.c.l.b16 %v678
        %v2177 = vunpack.c.h.b16 %v678
        %v2178 = vunpack.c.l.b16 %v679
        %v2179 = vunpack.c.h.b16 %v679
        %v2180 = vunpack.c.l.b16 %v680
        %v2181 = vunpack.c.h.b16 %v680
        %v2182 = vunpack.c.l.b16 %v681
        %v2183 = vunpack.c.h.b16 %v681
        %v2184 = vunpack.c.l.b16 %v682
        %v2185 = vunpack.c.h.b16 %v682
        %v2186 = vunpack.c.l.b16 %v683
        %v2187 = vunpack.c.h.b16 %v683
        %v2188 = vunpack.c.l.b16 %v684
        %v2189 = vunpack.c.h.b16 %v684
        %v2190 = vunpack.c.l.b16 %v685
        %v2191 = vunpack.c.h.b16 %v685
        %v2192 = vunpack.c.l.b16 %v686
        %v2193 = vunpack.c.h.b16 %v686
        %v2194 = vunpack.c.l.b16 %v687
        %v2195 = vunpack.c.h.b16 %v687
        %v2196 = vunpack.c.l.b16 %v688
        %v2197 = vunpack.c.h.b16 %v688
        %v2198 = vunpack.c.l.b16 %v689
        %v2199 = vunpack.c.h.b16 %v689
        %v2200 = vunpack.c.l.b16 %v690
        %v2201 = vunpack.c.h.b16 %v690
        %v2202 = vunpack.c.l.b16 %v691
        %v2203 = vunpack.c.h.b16 %v691
        %v2204 = vunpack.c.l.b16 %v692
        %v2205 = vunpack.c.h.b16 %v692
        %v2206 = vunpack.c.l.b16 %v693
        %v2207 = vunpack.c.h.b16 %v693
        %v2208 = vunpack.c.l.b16 %v694
        %v2209 = vunpack.c.h.b16 %v694
        %v2210 = vunpack.c.l.b16 %v695
        %v2211 = vunpack.c.h.b16 %v695
        %v2212 = vunpack.c.l.b16 %v696
        %v2213 = vunpack.c.h.b16 %v696
        %v2214 = vunpack.c.l.b16 %v697
        %v2215 = vunpack.c.h.b16 %v697
        %v2216 = vunpack.c.l.b16 %v698
        %v2217 = vunpack.c.h.b16 %v698
        %v2218 = vunpack.c.l.b16 %v699
        %v2219 = vunpack.c.h.b16 %v699
        %v2220 = vunpack.c.l.b16 %v700
        %v2221 = vunpack.c.h.b16 %v700
        %v2222 = vunpack.c.l.b16 %v701
        %v2223 = vunpack.c.h.b16 %v701
        %v2224 = vunpack.c.l.b16 %v702
        %v2225 = vunpack.c.h.b16 %v702
        %v2226 = vunpack.c.l.b16 %v703
        %v2227 = vunpack.c.h.b16 %v703
        %v2228 = vunpack.c.l.b16 %v704
        %v2229 = vunpack.c.h.b16 %v704
        %v2230 = vunpack.c.l.b16 %v705
        %v2231 = vunpack.c.h.b16 %v705
        %v2232 = vunpack.c.l.b16 %v706
        %v2233 = vunpack.c.h.b16 %v706
        %v2234 = vunpack.c.l.b16 %v707
        %v2235 = vunpack.c.h.b16 %v707
        %v2236 = vunpack.c.l.b16 %v708
        %v2237 = vunpack.c.h.b16 %v708
        %v2238 = vunpack.c.l.b16 %v709
        %v2239 = vunpack.c.h.b16 %v709
        %v2240 = vunpack.c.l.b16 %v710
        %v2241 = vunpack.c.h.b16 %v710
        %v2242 = vunpack.c.l.b16 %v711
        %v2243 = vunpack.c.h.b16 %v711
        %v2244 = vunpack.c.l.b16 %v712
        %v2245 = vunpack.c.h.b16 %v712
        %v2246 = vunpack.c.l.b16 %v713
        %v2247 = vunpack.c.h.b16 %v713
        %v2248 = vunpack.c.l.b16 %v714
        %v2249 = vunpack.c.h.b16 %v714
        %v2250 = vunpack.c.l.b16 %v715
        %v2251 = vunpack.c.h.b16 %v715
        %v2252 = vunpack.c.l.b16 %v716
        %v2253 = vunpack.c.h.b16 %v716
        %v2254 = vunpack.c.l.b16 %v717
        %v2255 = vunpack.c.h.b16 %v717
        %v2256 = vunpack.c.l.b16 %v718
        %v2257 = vunpack.c.h.b16 %v718
        %v2258 = vunpack.c.l.b16 %v719
        %v2259 = vunpack.c.h.b16 %v719
        %v2260 = vunpack.c.l.b16 %v720
        %v2261 = vunpack.c.h.b16 %v720
        %v2262 = vunpack.c.l.b16 %v721
        %v2263 = vunpack.c.h.b16 %v721
        %v2264 = vunpack.c.l.b16 %v722
        %v2265 = vunpack.c.h.b16 %v722
        %v2266 = vunpack.c.l.b16 %v723
        %v2267 = vunpack.c.h.b16 %v723
        %v2268 = vunpack.c.l.b16 %v724
        %v2269 = vunpack.c.h.b16 %v724
        %v2270 = vunpack.c.l.b16 %v725
        %v2271 = vunpack.c.h.b16 %v725
        %v2272 = vunpack.c.l.b16 %v726
        %v2273 = vunpack.c.h.b16 %v726
        %v2274 = vunpack.c.l.b16 %v727
        %v2275 = vunpack.c.h.b16 %v727
        %v2276 = vunpack.c.l.b16 %v728
        %v2277 = vunpack.c.h.b16 %v728
        %v2278 = vunpack.c.l.b16 %v729
        %v2279 = vunpack.c.h.b16 %v729
        %v2280 = vunpack.c.l.b16 %v730
        %v2281 = vunpack.c.h.b16 %v730
        %v2282 = vunpack.c.l.b16 %v731
        %v2283 = vunpack.c.h.b16 %v731
        %v2284 = vunpack.c.l.b16 %v732
        %v2285 = vunpack.c.h.b16 %v732
        %v2286 = vunpack.c.l.b16 %v733
        %v2287 = vunpack.c.h.b16 %v733
        %v2288 = vunpack.c.l.b16 %v734
        %v2289 = vunpack.c.h.b16 %v734
        %v2290 = vunpack.c.l.b16 %v735
        %v2291 = vunpack.c.h.b16 %v735
        %v2292 = vunpack.c.l.b16 %v736
        %v2293 = vunpack.c.h.b16 %v736
        %v2294 = vunpack.c.l.b16 %v737
        %v2295 = vunpack.c.h.b16 %v737
        %v2296 = vunpack.c.l.b16 %v738
        %v2297 = vunpack.c.h.b16 %v738
        %v2298 = vunpack.c.l.b16 %v739
        %v2299 = vunpack.c.h.b16 %v739
        %v2300 = vunpack.c.l.b16 %v740
        %v2301 = vunpack.c.h.b16 %v740
        %v2302 = vunpack.c.l.b16 %v741
        %v2303 = vunpack.c.h.b16 %v741
        %v2304 = vunpack.c.l.b16 %v742
        %v2305 = vunpack.c.h.b16 %v742
        %v2306 = vunpack.c.l.b16 %v743
        %v2307 = vunpack.c.h.b16 %v743
        %v2308 = vunpack.c.l.b16 %v744
        %v2309 = vunpack.c.h.b16 %v744
        %v2310 = vunpack.c.l.b16 %v745
        %v2311 = vunpack.c.h.b16 %v745
        %v2312 = vunpack.c.l.b16 %v746
        %v2313 = vunpack.c.h.b16 %v746
        %v2314 = vunpack.c.l.b16 %v747
        %v2315 = vunpack.c.h.b16 %v747
        %v2316 = vunpack.c.l.b16 %v748
        %v2317 = vunpack.c.h.b16 %v748
        %v2318 = vunpack.c.l.b16 %v749
        %v2319 = vunpack.c.h.b16 %v749
        %v2320 = vunpack.c.l.b16 %v750
        %v2321 = vunpack.c.h.b16 %v750
        %v2322 = vunpack.c.l.b16 %v751
        %v2323 = vunpack.c.h.b16 %v751
        %v2324 = vunpack.c.l.b16 %v752
        %v2325 = vunpack.c.h.b16 %v752
        %v2326 = vunpack.c.l.b16 %v753
        %v2327 = vunpack.c.h.b16 %v753
        %v2328 = vunpack.c.l.b16 %v754
        %v2329 = vunpack.c.h.b16 %v754
        %v2330 = vunpack.c.l.b16 %v755
        %v2331 = vunpack.c.h.b16 %v755
        %v2332 = vunpack.c.l.b16 %v756
        %v2333 = vunpack.c.h.b16 %v756
        %v2334 = vunpack.c.l.b16 %v757
        %v2335 = vunpack.c.h.b16 %v757
        %v2336 = vunpack.c.l.b16 %v758
        %v2337 = vunpack.c.h.b16 %v758
        %v2338 = vunpack.c.l.b16 %v759
        %v2339 = vunpack.c.h.b16 %v759
        %v2340 = vunpack.c.l.b16 %v760
        %v2341 = vunpack.c.h.b16 %v760
        %v2342 = vunpack.c.l.b16 %v761
        %v2343 = vunpack.c.h.b16 %v761
        %v2344 = vunpack.c.l.b16 %v762
        %v2345 = vunpack.c.h.b16 %v762
        %v2346 = vunpack.c.l.b16 %v763
        %v2347 = vunpack.c.h.b16 %v763
        %v2348 = vunpack.c.l.b16 %v764
        %v2349 = vunpack.c.h.b16 %v764
        %v2350 = vunpack.c.l.b16 %v765
        %v2351 = vunpack.c.h.b16 %v765
        %v2352 = vunpack.c.l.b16 %v766
        %v2353 = vunpack.c.h.b16 %v766
        %v2354 = vunpack.c.l.b16 %v767
        %v2355 = vunpack.c.h.b16 %v767
        %v2356 = vunpack.c.l.b16 %v768
        %v2357 = vunpack.c.h.b16 %v768
        %v2358 = vunpack.c.l.b16 %v769
        %v2359 = vunpack.c.h.b16 %v769
        %v2360 = vunpack.c.l.b16 %v770
        %v2361 = vunpack.c.h.b16 %v770
        %v2362 = vunpack.c.l.b16 %v771
        %v2363 = vunpack.c.h.b16 %v771
        %v2364 = vunpack.c.l.b16 %v772
        %v2365 = vunpack.c.h.b16 %v772
        %v2366 = vunpack.c.l.b16 %v773
        %v2367 = vunpack.c.h.b16 %v773
        %v2368 = vunpack.c.l.b16 %v774
        %v2369 = vunpack.c.h.b16 %v774
        %v2370 = vunpack.c.l.b16 %v775
        %v2371 = vunpack.c.h.b16 %v775
        %v2372 = vunpack.c.l.b16 %v776
        %v2373 = vunpack.c.h.b16 %v776
        %v2374 = vunpack.c.l.b16 %v777
        %v2375 = vunpack.c.h.b16 %v777
        %v2376 = vunpack.c.l.b16 %v778
        %v2377 = vunpack.c.h.b16 %v778
        %v2378 = vunpack.c.l.b16 %v779
        %v2379 = vunpack.c.h.b16 %v779
        %v2380 = vunpack.c.l.b16 %v780
        %v2381 = vunpack.c.h.b16 %v780
        %v2382 = vunpack.c.l.b16 %v781
        %v2383 = vunpack.c.h.b16 %v781
        %v2384 = vunpack.c.l.b16 %v782
        %v2385 = vunpack.c.h.b16 %v782
        %v2386 = vunpack.c.l.b16 %v783
        %v2387 = vunpack.c.h.b16 %v783
        %v2388 = vunpack.c.l.b16 %v784
        %v2389 = vunpack.c.h.b16 %v784
        %v2390 = vunpack.c.l.b16 %v785
        %v2391 = vunpack.c.h.b16 %v785
        %v2392 = vunpack.c.l.b16 %v786
        %v2393 = vunpack.c.h.b16 %v786
        %v2394 = vunpack.c.l.b16 %v787
        %v2395 = vunpack.c.h.b16 %v787
        %v2396 = vunpack.c.l.b16 %v788
        %v2397 = vunpack.c.h.b16 %v788
        %v2398 = vunpack.c.l.b16 %v789
        %v2399 = vunpack.c.h.b16 %v789
        %v2400 = vunpack.c.l.b16 %v790
        %v2401 = vunpack.c.h.b16 %v790
        %v2402 = vunpack.c.l.b16 %v791
        %v2403 = vunpack.c.h.b16 %v791
        %v2404 = vunpack.c.l.b16 %v792
        %v2405 = vunpack.c.h.b16 %v792
        %v2406 = vunpack.c.l.b16 %v793
        %v2407 = vunpack.c.h.b16 %v793
        %v2408 = vpack.c.b16 %v1388, %v1384
        %v2409 = vpack.c.b16 %v1389, %v1385
        %v2410 = vpack.c.b16 %v1390, %v1386
        %v2411 = vpack.c.b16 %v1391, %v1387
        %v2412 = vpack.c.b16 %v1396, %v1392
        %v2413 = vpack.c.b16 %v1397, %v1393
        %v2414 = vpack.c.b16 %v1398, %v1394
        %v2415 = vpack.c.b16 %v1399, %v1395
        %v2416 = vpack.c.b16 %v1404, %v1400
        %v2417 = vpack.c.b16 %v1405, %v1401
        %v2418 = vpack.c.b16 %v1406, %v1402
        %v2419 = vpack.c.b16 %v1407, %v1403
        %v2420 = vpack.c.b16 %v1412, %v1408
        %v2421 = vpack.c.b16 %v1413, %v1409
        %v2422 = vpack.c.b16 %v1414, %v1410
        %v2423 = vpack.c.b16 %v1415, %v1411
        %v2424 = vpack.c.b16 %v1420, %v1416
        %v2425 = vpack.c.b16 %v1421, %v1417
        %v2426 = vpack.c.b16 %v1422, %v1418
        %v2427 = vpack.c.b16 %v1423, %v1419
        %v2428 = vpack.c.b16 %v1428, %v1424
        %v2429 = vpack.c.b16 %v1429, %v1425
        %v2430 = vpack.c.b16 %v1430, %v1426
        %v2431 = vpack.c.b16 %v1431, %v1427
        %v2432 = vpack.c.b16 %v1436, %v1432
        %v2433 = vpack.c.b16 %v1437, %v1433
        %v2434 = vpack.c.b16 %v1438, %v1434
        %v2435 = vpack.c.b16 %v1439, %v1435
        %v2436 = vpack.c.b16 %v1444, %v1440
        %v2437 = vpack.c.b16 %v1445, %v1441
        %v2438 = vpack.c.b16 %v1446, %v1442
        %v2439 = vpack.c.b16 %v1447, %v1443
        %v2440 = vpack.c.b16 %v1452, %v1448
        %v2441 = vpack.c.b16 %v1453, %v1449
        %v2442 = vpack.c.b16 %v1454, %v1450
        %v2443 = vpack.c.b16 %v1455, %v1451
        %v2444 = vpack.c.b16 %v1460, %v1456
        %v2445 = vpack.c.b16 %v1461, %v1457
        %v2446 = vpack.c.b16 %v1462, %v1458
        %v2447 = vpack.c.b16 %v1463, %v1459
        %v2448 = vpack.c.b16 %v1468, %v1464
        %v2449 = vpack.c.b16 %v1469, %v1465
        %v2450 = vpack.c.b16 %v1470, %v1466
        %v2451 = vpack.c.b16 %v1471, %v1467
        %v2452 = vpack.c.b16 %v1476, %v1472
        %v2453 = vpack.c.b16 %v1477, %v1473
        %v2454 = vpack.c.b16 %v1478, %v1474
        %v2455 = vpack.c.b16 %v1479, %v1475
        %v2456 = vpack.c.b16 %v1484, %v1480
        %v2457 = vpack.c.b16 %v1485, %v1481
        %v2458 = vpack.c.b16 %v1486, %v1482
        %v2459 = vpack.c.b16 %v1487, %v1483
        %v2460 = vpack.c.b16 %v1492, %v1488
        %v2461 = vpack.c.b16 %v1493, %v1489
        %v2462 = vpack.c.b16 %v1494, %v1490
        %v2463 = vpack.c.b16 %v1495, %v1491
        %v2464 = vpack.c.b16 %v1500, %v1496
        %v2465 = vpack.c.b16 %v1501, %v1497
        %v2466 = vpack.c.b16 %v1502, %v1498
        %v2467 = vpack.c.b16 %v1503, %v1499
        %v2468 = vpack.c.b16 %v1508, %v1504
        %v2469 = vpack.c.b16 %v1509, %v1505
        %v2470 = vpack.c.b16 %v1510, %v1506
        %v2471 = vpack.c.b16 %v1511, %v1507
        %v2472 = vpack.c.b16 %v1516, %v1512
        %v2473 = vpack.c.b16 %v1517, %v1513
        %v2474 = vpack.c.b16 %v1518, %v1514
        %v2475 = vpack.c.b16 %v1519, %v1515
        %v2476 = vpack.c.b16 %v1524, %v1520
        %v2477 = vpack.c.b16 %v1525, %v1521
        %v2478 = vpack.c.b16 %v1526, %v1522
        %v2479 = vpack.c.b16 %v1527, %v1523
        %v2480 = vpack.c.b16 %v1532, %v1528
        %v2481 = vpack.c.b16 %v1533, %v1529
        %v2482 = vpack.c.b16 %v1534, %v1530
        %v2483 = vpack.c.b16 %v1535, %v1531
        %v2484 = vpack.c.b16 %v1540, %v1536
        %v2485 = vpack.c.b16 %v1541, %v1537
        %v2486 = vpack.c.b16 %v1542, %v1538
        %v2487 = vpack.c.b16 %v1543, %v1539
        %v2488 = vpack.c.b16 %v1548, %v1544
        %v2489 = vpack.c.b16 %v1549, %v1545
        %v2490 = vpack.c.b16 %v1550, %v1546
        %v2491 = vpack.c.b16 %v1551, %v1547
        %v2492 = vpack.c.b16 %v1556, %v1552
        %v2493 = vpack.c.b16 %v1557, %v1553
        %v2494 = vpack.c.b16 %v1558, %v1554
        %v2495 = vpack.c.b16 %v1559, %v1555
        %v2496 = vpack.c.b16 %v1564, %v1560
        %v2497 = vpack.c.b16 %v1565, %v1561
        %v2498 = vpack.c.b16 %v1566, %v1562
        %v2499 = vpack.c.b16 %v1567, %v1563
        %v2500 = vpack.c.b16 %v1572, %v1568
        %v2501 = vpack.c.b16 %v1573, %v1569
        %v2502 = vpack.c.b16 %v1574, %v1570
        %v2503 = vpack.c.b16 %v1575, %v1571
        %v2504 = vpack.c.b16 %v1580, %v1576
        %v2505 = vpack.c.b16 %v1581, %v1577
        %v2506 = vpack.c.b16 %v1582, %v1578
        %v2507 = vpack.c.b16 %v1583, %v1579
        %v2508 = vpack.c.b16 %v1588, %v1584
        %v2509 = vpack.c.b16 %v1589, %v1585
        %v2510 = vpack.c.b16 %v1590, %v1586
        %v2511 = vpack.c.b16 %v1591, %v1587
        %v2512 = vpack.c.b16 %v1596, %v1592
        %v2513 = vpack.c.b16 %v1597, %v1593
        %v2514 = vpack.c.b16 %v1598, %v1594
        %v2515 = vpack.c.b16 %v1599, %v1595
        %v2516 = vpack.c.b16 %v1604, %v1600
        %v2517 = vpack.c.b16 %v1605, %v1601
        %v2518 = vpack.c.b16 %v1606, %v1602
        %v2519 = vpack.c.b16 %v1607, %v1603
        %v2520 = vpack.c.b16 %v1612, %v1608
        %v2521 = vpack.c.b16 %v1613, %v1609
        %v2522 = vpack.c.b16 %v1614, %v1610
        %v2523 = vpack.c.b16 %v1615, %v1611
        %v2524 = vpack.c.b16 %v1620, %v1616
        %v2525 = vpack.c.b16 %v1621, %v1617
        %v2526 = vpack.c.b16 %v1622, %v1618
        %v2527 = vpack.c.b16 %v1623, %v1619
        %v2528 = vpack.c.b16 %v1628, %v1624
        %v2529 = vpack.c.b16 %v1629, %v1625
        %v2530 = vpack.c.b16 %v1630, %v1626
        %v2531 = vpack.c.b16 %v1631, %v1627
        %v2532 = vpack.c.b16 %v1636, %v1632
        %v2533 = vpack.c.b16 %v1637, %v1633
        %v2534 = vpack.c.b16 %v1638, %v1634
        %v2535 = vpack.c.b16 %v1639, %v1635
        %v2536 = vpack.c.b16 %v1644, %v1640
        %v2537 = vpack.c.b16 %v1645, %v1641
        %v2538 = vpack.c.b16 %v1646, %v1642
        %v2539 = vpack.c.b16 %v1647, %v1643
        %v2540 = vpack.c.b16 %v1652, %v1648
        %v2541 = vpack.c.b16 %v1653, %v1649
        %v2542 = vpack.c.b16 %v1654, %v1650
        %v2543 = vpack.c.b16 %v1655, %v1651
        %v2544 = vpack.c.b16 %v1660, %v1656
        %v2545 = vpack.c.b16 %v1661, %v1657
        %v2546 = vpack.c.b16 %v1662, %v1658
        %v2547 = vpack.c.b16 %v1663, %v1659
        %v2548 = vpack.c.b16 %v1668, %v1664
        %v2549 = vpack.c.b16 %v1669, %v1665
        %v2550 = vpack.c.b16 %v1670, %v1666
        %v2551 = vpack.c.b16 %v1671, %v1667
        %v2552 = vpack.c.b16 %v1676, %v1672
        %v2553 = vpack.c.b16 %v1677, %v1673
        %v2554 = vpack.c.b16 %v1678, %v1674
        %v2555 = vpack.c.b16 %v1679, %v1675
        %v2556 = vpack.c.b16 %v1684, %v1680
        %v2557 = vpack.c.b16 %v1685, %v1681
        %v2558 = vpack.c.b16 %v1686, %v1682
        %v2559 = vpack.c.b16 %v1687, %v1683
        %v2560 = vpack.c.b16 %v1692, %v1688
        %v2561 = vpack.c.b16 %v1693, %v1689
        %v2562 = vpack.c.b16 %v1694, %v1690
        %v2563 = vpack.c.b16 %v1695, %v1691
        %v2564 = vpack.c.b16 %v1700, %v1696
        %v2565 = vpack.c.b16 %v1701, %v1697
        %v2566 = vpack.c.b16 %v1702, %v1698
        %v2567 = vpack.c.b16 %v1703, %v1699
        %v2568 = vpack.c.b16 %v1708, %v1704
        %v2569 = vpack.c.b16 %v1709, %v1705
        %v2570 = vpack.c.b16 %v1710, %v1706
        %v2571 = vpack.c.b16 %v1711, %v1707
        %v2572 = vpack.c.b16 %v1716, %v1712
        %v2573 = vpack.c.b16 %v1717, %v1713
        %v2574 = vpack.c.b16 %v1718, %v1714
        %v2575 = vpack.c.b16 %v1719, %v1715
        %v2576 = vpack.c.b16 %v1724, %v1720
        %v2577 = vpack.c.b16 %v1725, %v1721
        %v2578 = vpack.c.b16 %v1726, %v1722
        %v2579 = vpack.c.b16 %v1727, %v1723
        %v2580 = vpack.c.b16 %v1732, %v1728
        %v2581 = vpack.c.b16 %v1733, %v1729
        %v2582 = vpack.c.b16 %v1734, %v1730
        %v2583 = vpack.c.b16 %v1735, %v1731
        %v2584 = vpack.c.b16 %v1740, %v1736
        %v2585 = vpack.c.b16 %v1741, %v1737
        %v2586 = vpack.c.b16 %v1742, %v1738
        %v2587 = vpack.c.b16 %v1743, %v1739
        %v2588 = vpack.c.b16 %v1748, %v1744
        %v2589 = vpack.c.b16 %v1749, %v1745
        %v2590 = vpack.c.b16 %v1750, %v1746
        %v2591 = vpack.c.b16 %v1751, %v1747
        %v2592 = vpack.c.b16 %v1756, %v1752
        %v2593 = vpack.c.b16 %v1757, %v1753
        %v2594 = vpack.c.b16 %v1758, %v1754
        %v2595 = vpack.c.b16 %v1759, %v1755
        %v2596 = vpack.c.b16 %v1764, %v1760
        %v2597 = vpack.c.b16 %v1765, %v1761
        %v2598 = vpack.c.b16 %v1766, %v1762
        %v2599 = vpack.c.b16 %v1767, %v1763
        %v2600 = vpack.c.b16 %v1772, %v1768
        %v2601 = vpack.c.b16 %v1773, %v1769
        %v2602 = vpack.c.b16 %v1774, %v1770
        %v2603 = vpack.c.b16 %v1775, %v1771
        %v2604 = vpack.c.b16 %v1780, %v1776
        %v2605 = vpack.c.b16 %v1781, %v1777
        %v2606 = vpack.c.b16 %v1782, %v1778
        %v2607 = vpack.c.b16 %v1783, %v1779
        %v2608 = vpack.c.b16 %v1788, %v1784
        %v2609 = vpack.c.b16 %v1789, %v1785
        %v2610 = vpack.c.b16 %v1790, %v1786
        %v2611 = vpack.c.b16 %v1791, %v1787
        %v2612 = vpack.c.b16 %v1796, %v1792
        %v2613 = vpack.c.b16 %v1797, %v1793
        %v2614 = vpack.c.b16 %v1798, %v1794
        %v2615 = vpack.c.b16 %v1799, %v1795
        %v2616 = vpack.c.b16 %v1804, %v1800
        %v2617 = vpack.c.b16 %v1805, %v1801
        %v2618 = vpack.c.b16 %v1806, %v1802
        %v2619 = vpack.c.b16 %v1807, %v1803
        %v2620 = vpack.c.b16 %v1812, %v1808
        %v2621 = vpack.c.b16 %v1813, %v1809
        %v2622 = vpack.c.b16 %v1814, %v1810
        %v2623 = vpack.c.b16 %v1815, %v1811
        %v2624 = vpack.c.b16 %v1820, %v1816
        %v2625 = vpack.c.b16 %v1821, %v1817
        %v2626 = vpack.c.b16 %v1822, %v1818
        %v2627 = vpack.c.b16 %v1823, %v1819
        %v2628 = vpack.c.b16 %v1828, %v1824
        %v2629 = vpack.c.b16 %v1829, %v1825
        %v2630 = vpack.c.b16 %v1830, %v1826
        %v2631 = vpack.c.b16 %v1831, %v1827
        %v2632 = vpack.c.b16 %v1836, %v1832
        %v2633 = vpack.c.b16 %v1837, %v1833
        %v2634 = vpack.c.b16 %v1838, %v1834
        %v2635 = vpack.c.b16 %v1839, %v1835
        %v2636 = vpack.c.b16 %v1844, %v1840
        %v2637 = vpack.c.b16 %v1845, %v1841
        %v2638 = vpack.c.b16 %v1846, %v1842
        %v2639 = vpack.c.b16 %v1847, %v1843
        %v2640 = vpack.c.b16 %v1852, %v1848
        %v2641 = vpack.c.b16 %v1853, %v1849
        %v2642 = vpack.c.b16 %v1854, %v1850
        %v2643 = vpack.c.b16 %v1855, %v1851
        %v2644 = vpack.c.b16 %v1860, %v1856
        %v2645 = vpack.c.b16 %v1861, %v1857
        %v2646 = vpack.c.b16 %v1862, %v1858
        %v2647 = vpack.c.b16 %v1863, %v1859
        %v2648 = vpack.c.b16 %v1868, %v1864
        %v2649 = vpack.c.b16 %v1869, %v1865
        %v2650 = vpack.c.b16 %v1870, %v1866
        %v2651 = vpack.c.b16 %v1871, %v1867
        %v2652 = vpack.c.b16 %v1876, %v1872
        %v2653 = vpack.c.b16 %v1877, %v1873
        %v2654 = vpack.c.b16 %v1878, %v1874
        %v2655 = vpack.c.b16 %v1879, %v1875
        %v2656 = vpack.c.b16 %v1884, %v1880
        %v2657 = vpack.c.b16 %v1885, %v1881
        %v2658 = vpack.c.b16 %v1886, %v1882
        %v2659 = vpack.c.b16 %v1887, %v1883
        %v2660 = vpack.c.b16 %v1892, %v1888
        %v2661 = vpack.c.b16 %v1893, %v1889
        %v2662 = vpack.c.b16 %v1894, %v1890
        %v2663 = vpack.c.b16 %v1895, %v1891
        %v2664 = vpack.c.b16 %v1900, %v1896
        %v2665 = vpack.c.b16 %v1901, %v1897
        %v2666 = vpack.c.b16 %v1902, %v1898
        %v2667 = vpack.c.b16 %v1903, %v1899
        %v2668 = vpack.c.b16 %v1908, %v1904
        %v2669 = vpack.c.b16 %v1909, %v1905
        %v2670 = vpack.c.b16 %v1910, %v1906
        %v2671 = vpack.c.b16 %v1911, %v1907
        %v2672 = vpack.c.b16 %v1916, %v1912
        %v2673 = vpack.c.b16 %v1917, %v1913
        %v2674 = vpack.c.b16 %v1918, %v1914
        %v2675 = vpack.c.b16 %v1919, %v1915
        %v2676 = vpack.c.b16 %v1924, %v1920
        %v2677 = vpack.c.b16 %v1925, %v1921
        %v2678 = vpack.c.b16 %v1926, %v1922
        %v2679 = vpack.c.b16 %v1927, %v1923
        %v2680 = vpack.c.b16 %v1932, %v1928
        %v2681 = vpack.c.b16 %v1933, %v1929
        %v2682 = vpack.c.b16 %v1934, %v1930
        %v2683 = vpack.c.b16 %v1935, %v1931
        %v2684 = vpack.c.b16 %v1940, %v1936
        %v2685 = vpack.c.b16 %v1941, %v1937
        %v2686 = vpack.c.b16 %v1942, %v1938
        %v2687 = vpack.c.b16 %v1943, %v1939
        %v2688 = vpack.c.b16 %v1948, %v1944
        %v2689 = vpack.c.b16 %v1949, %v1945
        %v2690 = vpack.c.b16 %v1950, %v1946
        %v2691 = vpack.c.b16 %v1951, %v1947
        %v2692 = vpack.c.b16 %v1956, %v1952
        %v2693 = vpack.c.b16 %v1957, %v1953
        %v2694 = vpack.c.b16 %v1958, %v1954
        %v2695 = vpack.c.b16 %v1959, %v1955
        %v2696 = vpack.c.b16 %v1964, %v1960
        %v2697 = vpack.c.b16 %v1965, %v1961
        %v2698 = vpack.c.b16 %v1966, %v1962
        %v2699 = vpack.c.b16 %v1967, %v1963
        %v2700 = vpack.c.b16 %v1972, %v1968
        %v2701 = vpack.c.b16 %v1973, %v1969
        %v2702 = vpack.c.b16 %v1974, %v1970
        %v2703 = vpack.c.b16 %v1975, %v1971
        %v2704 = vpack.c.b16 %v1980, %v1976
        %v2705 = vpack.c.b16 %v1981, %v1977
        %v2706 = vpack.c.b16 %v1982, %v1978
        %v2707 = vpack.c.b16 %v1983, %v1979
        %v2708 = vpack.c.b16 %v1988, %v1984
        %v2709 = vpack.c.b16 %v1989, %v1985
        %v2710 = vpack.c.b16 %v1990, %v1986
        %v2711 = vpack.c.b16 %v1991, %v1987
        %v2712 = vpack.c.b16 %v1996, %v1992
        %v2713 = vpack.c.b16 %v1997, %v1993
        %v2714 = vpack.c.b16 %v1998, %v1994
        %v2715 = vpack.c.b16 %v1999, %v1995
        %v2716 = vpack.c.b16 %v2004, %v2000
        %v2717 = vpack.c.b16 %v2005, %v2001
        %v2718 = vpack.c.b16 %v2006, %v2002
        %v2719 = vpack.c.b16 %v2007, %v2003
        %v2720 = vpack.c.b16 %v2012, %v2008
        %v2721 = vpack.c.b16 %v2013, %v2009
        %v2722 = vpack.c.b16 %v2014, %v2010
        %v2723 = vpack.c.b16 %v2015, %v2011
        %v2724 = vpack.c.b16 %v2020, %v2016
        %v2725 = vpack.c.b16 %v2021, %v2017
        %v2726 = vpack.c.b16 %v2022, %v2018
        %v2727 = vpack.c.b16 %v2023, %v2019
        %v2728 = vpack.c.b16 %v2028, %v2024
        %v2729 = vpack.c.b16 %v2029, %v2025
        %v2730 = vpack.c.b16 %v2030, %v2026
        %v2731 = vpack.c.b16 %v2031, %v2027
        %v2732 = vpack.c.b16 %v2036, %v2032
        %v2733 = vpack.c.b16 %v2037, %v2033
        %v2734 = vpack.c.b16 %v2038, %v2034
        %v2735 = vpack.c.b16 %v2039, %v2035
        %v2736 = vpack.c.b16 %v2044, %v2040
        %v2737 = vpack.c.b16 %v2045, %v2041
        %v2738 = vpack.c.b16 %v2046, %v2042
        %v2739 = vpack.c.b16 %v2047, %v2043
        %v2740 = vpack.c.b16 %v2052, %v2048
        %v2741 = vpack.c.b16 %v2053, %v2049
        %v2742 = vpack.c.b16 %v2054, %v2050
        %v2743 = vpack.c.b16 %v2055, %v2051
        %v2744 = vpack.c.b16 %v2060, %v2056
        %v2745 = vpack.c.b16 %v2061, %v2057
        %v2746 = vpack.c.b16 %v2062, %v2058
        %v2747 = vpack.c.b16 %v2063, %v2059
        %v2748 = vpack.c.b16 %v2068, %v2064
        %v2749 = vpack.c.b16 %v2069, %v2065
        %v2750 = vpack.c.b16 %v2070, %v2066
        %v2751 = vpack.c.b16 %v2071, %v2067
        %v2752 = vpack.c.b16 %v2076, %v2072
        %v2753 = vpack.c.b16 %v2077, %v2073
        %v2754 = vpack.c.b16 %v2078, %v2074
        %v2755 = vpack.c.b16 %v2079, %v2075
        %v2756 = vpack.c.b16 %v2084, %v2080
        %v2757 = vpack.c.b16 %v2085, %v2081
        %v2758 = vpack.c.b16 %v2086, %v2082
        %v2759 = vpack.c.b16 %v2087, %v2083
        %v2760 = vpack.c.b16 %v2092, %v2088
        %v2761 = vpack.c.b16 %v2093, %v2089
        %v2762 = vpack.c.b16 %v2094, %v2090
        %v2763 = vpack.c.b16 %v2095, %v2091
        %v2764 = vpack.c.b16 %v2100, %v2096
        %v2765 = vpack.c.b16 %v2101, %v2097
        %v2766 = vpack.c.b16 %v2102, %v2098
        %v2767 = vpack.c.b16 %v2103, %v2099
        %v2768 = vpack.c.b16 %v2108, %v2104
        %v2769 = vpack.c.b16 %v2109, %v2105
        %v2770 = vpack.c.b16 %v2110, %v2106
        %v2771 = vpack.c.b16 %v2111, %v2107
        %v2772 = vpack.c.b16 %v2116, %v2112
        %v2773 = vpack.c.b16 %v2117, %v2113
        %v2774 = vpack.c.b16 %v2118, %v2114
        %v2775 = vpack.c.b16 %v2119, %v2115
        %v2776 = vpack.c.b16 %v2124, %v2120
        %v2777 = vpack.c.b16 %v2125, %v2121
        %v2778 = vpack.c.b16 %v2126, %v2122
        %v2779 = vpack.c.b16 %v2127, %v2123
        %v2780 = vpack.c.b16 %v2132, %v2128
        %v2781 = vpack.c.b16 %v2133, %v2129
        %v2782 = vpack.c.b16 %v2134, %v2130
        %v2783 = vpack.c.b16 %v2135, %v2131
        %v2784 = vpack.c.b16 %v2140, %v2136
        %v2785 = vpack.c.b16 %v2141, %v2137
        %v2786 = vpack.c.b16 %v2142, %v2138
        %v2787 = vpack.c.b16 %v2143, %v2139
        %v2788 = vpack.c.b16 %v2148, %v2144
        %v2789 = vpack.c.b16 %v2149, %v2145
        %v2790 = vpack.c.b16 %v2150, %v2146
        %v2791 = vpack.c.b16 %v2151, %v2147
        %v2792 = vpack.c.b16 %v2156, %v2152
        %v2793 = vpack.c.b16 %v2157, %v2153
        %v2794 = vpack.c.b16 %v2158, %v2154
        %v2795 = vpack.c.b16 %v2159, %v2155
        %v2796 = vpack.c.b16 %v2164, %v2160
        %v2797 = vpack.c.b16 %v2165, %v2161
        %v2798 = vpack.c.b16 %v2166, %v2162
        %v2799 = vpack.c.b16 %v2167, %v2163
        %v2800 = vpack.c.b16 %v2172, %v2168
        %v2801 = vpack.c.b16 %v2173, %v2169
        %v2802 = vpack.c.b16 %v2174, %v2170
        %v2803 = vpack.c.b16 %v2175, %v2171
        %v2804 = vpack.c.b16 %v2180, %v2176
        %v2805 = vpack.c.b16 %v2181, %v2177
        %v2806 = vpack.c.b16 %v2182, %v2178
        %v2807 = vpack.c.b16 %v2183, %v2179
        %v2808 = vpack.c.b16 %v2188, %v2184
        %v2809 = vpack.c.b16 %v2189, %v2185
        %v2810 = vpack.c.b16 %v2190, %v2186
        %v2811 = vpack.c.b16 %v2191, %v2187
        %v2812 = vpack.c.b16 %v2196, %v2192
        %v2813 = vpack.c.b16 %v2197, %v2193
        %v2814 = vpack.c.b16 %v2198, %v2194
        %v2815 = vpack.c.b16 %v2199, %v2195
        %v2816 = vpack.c.b16 %v2204, %v2200
        %v2817 = vpack.c.b16 %v2205, %v2201
        %v2818 = vpack.c.b16 %v2206, %v2202
        %v2819 = vpack.c.b16 %v2207, %v2203
        %v2820 = vpack.c.b16 %v2212, %v2208
        %v2821 = vpack.c.b16 %v2213, %v2209
        %v2822 = vpack.c.b16 %v2214, %v2210
        %v2823 = vpack.c.b16 %v2215, %v2211
        %v2824 = vpack.c.b16 %v2220, %v2216
        %v2825 = vpack.c.b16 %v2221, %v2217
        %v2826 = vpack.c.b16 %v2222, %v2218
        %v2827 = vpack.c.b16 %v2223, %v2219
        %v2828 = vpack.c.b16 %v2228, %v2224
        %v2829 = vpack.c.b16 %v2229, %v2225
        %v2830 = vpack.c.b16 %v2230, %v2226
        %v2831 = vpack.c.b16 %v2231, %v2227
        %v2832 = vpack.c.b16 %v2236, %v2232
        %v2833 = vpack.c.b16 %v2237, %v2233
        %v2834 = vpack.c.b16 %v2238, %v2234
        %v2835 = vpack.c.b16 %v2239, %v2235
        %v2836 = vpack.c.b16 %v2244, %v2240
        %v2837 = vpack.c.b16 %v2245, %v2241
        %v2838 = vpack.c.b16 %v2246, %v2242
        %v2839 = vpack.c.b16 %v2247, %v2243
        %v2840 = vpack.c.b16 %v2252, %v2248
        %v2841 = vpack.c.b16 %v2253, %v2249
        %v2842 = vpack.c.b16 %v2254, %v2250
        %v2843 = vpack.c.b16 %v2255, %v2251
        %v2844 = vpack.c.b16 %v2260, %v2256
        %v2845 = vpack.c.b16 %v2261, %v2257
        %v2846 = vpack.c.b16 %v2262, %v2258
        %v2847 = vpack.c.b16 %v2263, %v2259
        %v2848 = vpack.c.b16 %v2268, %v2264
        %v2849 = vpack.c.b16 %v2269, %v2265
        %v2850 = vpack.c.b16 %v2270, %v2266
        %v2851 = vpack.c.b16 %v2271, %v2267
        %v2852 = vpack.c.b16 %v2276, %v2272
        %v2853 = vpack.c.b16 %v2277, %v2273
        %v2854 = vpack.c.b16 %v2278, %v2274
        %v2855 = vpack.c.b16 %v2279, %v2275
        %v2856 = vpack.c.b16 %v2284, %v2280
        %v2857 = vpack.c.b16 %v2285, %v2281
        %v2858 = vpack.c.b16 %v2286, %v2282
        %v2859 = vpack.c.b16 %v2287, %v2283
        %v2860 = vpack.c.b16 %v2292, %v2288
        %v2861 = vpack.c.b16 %v2293, %v2289
        %v2862 = vpack.c.b16 %v2294, %v2290
        %v2863 = vpack.c.b16 %v2295, %v2291
        %v2864 = vpack.c.b16 %v2300, %v2296
        %v2865 = vpack.c.b16 %v2301, %v2297
        %v2866 = vpack.c.b16 %v2302, %v2298
        %v2867 = vpack.c.b16 %v2303, %v2299
        %v2868 = vpack.c.b16 %v2308, %v2304
        %v2869 = vpack.c.b16 %v2309, %v2305
        %v2870 = vpack.c.b16 %v2310, %v2306
        %v2871 = vpack.c.b16 %v2311, %v2307
        %v2872 = vpack.c.b16 %v2316, %v2312
        %v2873 = vpack.c.b16 %v2317, %v2313
        %v2874 = vpack.c.b16 %v2318, %v2314
        %v2875 = vpack.c.b16 %v2319, %v2315
        %v2876 = vpack.c.b16 %v2324, %v2320
        %v2877 = vpack.c.b16 %v2325, %v2321
        %v2878 = vpack.c.b16 %v2326, %v2322
        %v2879 = vpack.c.b16 %v2327, %v2323
        %v2880 = vpack.c.b16 %v2332, %v2328
        %v2881 = vpack.c.b16 %v2333, %v2329
        %v2882 = vpack.c.b16 %v2334, %v2330
        %v2883 = vpack.c.b16 %v2335, %v2331
        %v2884 = vpack.c.b16 %v2340, %v2336
        %v2885 = vpack.c.b16 %v2341, %v2337
        %v2886 = vpack.c.b16 %v2342, %v2338
        %v2887 = vpack.c.b16 %v2343, %v2339
        %v2888 = vpack.c.b16 %v2348, %v2344
        %v2889 = vpack.c.b16 %v2349, %v2345
        %v2890 = vpack.c.b16 %v2350, %v2346
        %v2891 = vpack.c.b16 %v2351, %v2347
        %v2892 = vpack.c.b16 %v2356, %v2352
        %v2893 = vpack.c.b16 %v2357, %v2353
        %v2894 = vpack.c.b16 %v2358, %v2354
        %v2895 = vpack.c.b16 %v2359, %v2355
        %v2896 = vpack.c.b16 %v2364, %v2360
        %v2897 = vpack.c.b16 %v2365, %v2361
        %v2898 = vpack.c.b16 %v2366, %v2362
        %v2899 = vpack.c.b16 %v2367, %v2363
        %v2900 = vpack.c.b16 %v2372, %v2368
        %v2901 = vpack.c.b16 %v2373, %v2369
        %v2902 = vpack.c.b16 %v2374, %v2370
        %v2903 = vpack.c.b16 %v2375, %v2371
        %v2904 = vpack.c.b16 %v2380, %v2376
        %v2905 = vpack.c.b16 %v2381, %v2377
        %v2906 = vpack.c.b16 %v2382, %v2378
        %v2907 = vpack.c.b16 %v2383, %v2379
        %v2908 = vpack.c.b16 %v2388, %v2384
        %v2909 = vpack.c.b16 %v2389, %v2385
        %v2910 = vpack.c.b16 %v2390, %v2386
        %v2911 = vpack.c.b16 %v2391, %v2387
        %v2912 = vpack.c.b16 %v2396, %v2392
        %v2913 = vpack.c.b16 %v2397, %v2393
        %v2914 = vpack.c.b16 %v2398, %v2394
        %v2915 = vpack.c.b16 %v2399, %v2395
        %v2916 = vpack.c.b16 %v2404, %v2400
        %v2917 = vpack.c.b16 %v2405, %v2401
        %v2918 = vpack.c.b16 %v2406, %v2402
        %v2919 = vpack.c.b16 %v2407, %v2403
        %3432 = vmatprep.subr.bf16.mxu0 %v2409
        %3433 = vmatpush1.bf16.msra.mxu0 %v2408
        %3434 = vmatprep.subr.bf16.mxu0 %v2413
        %3435 = vmatpush1.bf16.msra.mxu0 %v2412
        %3436 = vmatprep.subr.bf16.mxu0 %v2417
        %3437 = vmatpush1.bf16.msra.mxu0 %v2416
        %3438 = vmatprep.subr.bf16.mxu0 %v2421
        %3439 = vmatpush1.bf16.msra.mxu0 %v2420
        %3440 = vmatprep.subr.bf16.mxu0 %v2425
        %3441 = vmatpush1.bf16.msra.mxu0 %v2424
        %3442 = vmatprep.subr.bf16.mxu0 %v2429
        %3443 = vmatpush1.bf16.msra.mxu0 %v2428
        %3444 = vmatprep.subr.bf16.mxu0 %v2433
        %3445 = vmatpush1.bf16.msra.mxu0 %v2432
        %3446 = vmatprep.subr.bf16.mxu0 %v2437
        %3447 = vmatpush1.bf16.msra.mxu0 %v2436
        %3448 = vmatprep.subr.bf16.mxu0 %v2441
        %3449 = vmatpush1.bf16.msra.mxu0 %v2440
        %3450 = vmatprep.subr.bf16.mxu0 %v2445
        %3451 = vmatpush1.bf16.msra.mxu0 %v2444
        %3452 = vmatprep.subr.bf16.mxu0 %v2449
        %3453 = vmatpush1.bf16.msra.mxu0 %v2448
        %3454 = vmatprep.subr.bf16.mxu0 %v2453
        %3455 = vmatpush1.bf16.msra.mxu0 %v2452
        %3456 = vmatprep.subr.bf16.mxu0 %v2457
        %3457 = vmatpush1.bf16.msra.mxu0 %v2456
        %3458 = vmatprep.subr.bf16.mxu0 %v2461
        %3459 = vmatpush1.bf16.msra.mxu0 %v2460
        %3460 = vmatprep.subr.bf16.mxu0 %v2465
        %3461 = vmatpush1.bf16.msra.mxu0 %v2464
        %3462 = vmatprep.subr.bf16.mxu0 %v2469
        %3463 = vmatpush1.bf16.msra.mxu0 %v2468
        %3464 = vmatprep.mubr.bf16.mxu0 %v841
        %3465 = vmatmul.mubr.bf16.gmra.mrb[0].mxu0 %v840
        %v3466 = vpop.f32.mrb[0].mxu0
        %v3467 = vadd.f32 %v799, %v3466
        %v3468 = vpop.f32.mrb[0].mxu0
        %v3469 = vadd.f32 %v803, %v3468
        %v3470 = vpop.f32.mrb[0].mxu0
        %v3471 = vpop.f32.mrb[0].mxu0
        %3472 = vdwg.mxu0
        %3473 = vmatprep.subr.bf16.mxu0 %v2473
        %3474 = vmatpush1.bf16.msra.mxu0 %v2472
        %3475 = vmatprep.subr.bf16.mxu0 %v2477
        %3476 = vmatpush1.bf16.msra.mxu0 %v2476
        %3477 = vmatprep.subr.bf16.mxu0 %v2481
        %3478 = vmatpush1.bf16.msra.mxu0 %v2480
        %3479 = vmatprep.subr.bf16.mxu0 %v2485
        %3480 = vmatpush1.bf16.msra.mxu0 %v2484
        %3481 = vmatprep.subr.bf16.mxu0 %v2489
        %3482 = vmatpush1.bf16.msra.mxu0 %v2488
        %3483 = vmatprep.subr.bf16.mxu0 %v2493
        %3484 = vmatpush1.bf16.msra.mxu0 %v2492
        %3485 = vmatprep.subr.bf16.mxu0 %v2497
        %3486 = vmatpush1.bf16.msra.mxu0 %v2496
        %3487 = vmatprep.subr.bf16.mxu0 %v2501
        %3488 = vmatpush1.bf16.msra.mxu0 %v2500
        %3489 = vmatprep.subr.bf16.mxu0 %v2505
        %3490 = vmatpush1.bf16.msra.mxu0 %v2504
        %3491 = vmatprep.subr.bf16.mxu0 %v2509
        %3492 = vmatpush1.bf16.msra.mxu0 %v2508
        %3493 = vmatprep.subr.bf16.mxu0 %v2513
        %3494 = vmatpush1.bf16.msra.mxu0 %v2512
        %3495 = vmatprep.subr.bf16.mxu0 %v2517
        %3496 = vmatpush1.bf16.msra.mxu0 %v2516
        %3497 = vmatprep.subr.bf16.mxu0 %v2521
        %3498 = vmatpush1.bf16.msra.mxu0 %v2520
        %3499 = vmatprep.subr.bf16.mxu0 %v2525
        %3500 = vmatpush1.bf16.msra.mxu0 %v2524
        %3501 = vmatprep.subr.bf16.mxu0 %v2529
        %3502 = vmatpush1.bf16.msra.mxu0 %v2528
        %3503 = vmatprep.subr.bf16.mxu0 %v2533
        %3504 = vmatpush1.bf16.msra.mxu0 %v2532
        %3505 = vmatprep.mubr.bf16.mxu0 %v843
        %3506 = vmatmul.mubr.bf16.gmra.mrb[0].mxu0 %v842
        %v3507 = vpop.f32.mrb[0].mxu0
        %v3508 = vadd.f32 %v3467, %v3507
        %v3509 = vpop.f32.mrb[0].mxu0
        %v3510 = vadd.f32 %v3469, %v3509
        %v3511 = vpop.f32.mrb[0].mxu0
        %v3512 = vpop.f32.mrb[0].mxu0
        %3513 = vdwg.mxu0
        %3514 = vmatprep.subr.bf16.mxu0 %v2537
        %3515 = vmatpush1.bf16.msra.mxu0 %v2536
        %3516 = vmatprep.subr.bf16.mxu0 %v2541
        %3517 = vmatpush1.bf16.msra.mxu0 %v2540
        %3518 = vmatprep.subr.bf16.mxu0 %v2545
        %3519 = vmatpush1.bf16.msra.mxu0 %v2544
        %3520 = vmatprep.subr.bf16.mxu0 %v2549
        %3521 = vmatpush1.bf16.msra.mxu0 %v2548
        %3522 = vmatprep.subr.bf16.mxu0 %v2553
        %3523 = vmatpush1.bf16.msra.mxu0 %v2552
        %3524 = vmatprep.subr.bf16.mxu0 %v2557
        %3525 = vmatpush1.bf16.msra.mxu0 %v2556
        %3526 = vmatprep.subr.bf16.mxu0 %v2561
        %3527 = vmatpush1.bf16.msra.mxu0 %v2560
        %3528 = vmatprep.subr.bf16.mxu0 %v2565
        %3529 = vmatpush1.bf16.msra.mxu0 %v2564
        %3530 = vmatprep.subr.bf16.mxu0 %v2569
        %3531 = vmatpush1.bf16.msra.mxu0 %v2568
        %3532 = vmatprep.subr.bf16.mxu0 %v2573
        %3533 = vmatpush1.bf16.msra.mxu0 %v2572
        %3534 = vmatprep.subr.bf16.mxu0 %v2577
        %3535 = vmatpush1.bf16.msra.mxu0 %v2576
        %3536 = vmatprep.subr.bf16.mxu0 %v2581
        %3537 = vmatpush1.bf16.msra.mxu0 %v2580
        %3538 = vmatprep.subr.bf16.mxu0 %v2585
        %3539 = vmatpush1.bf16.msra.mxu0 %v2584
        %3540 = vmatprep.subr.bf16.mxu0 %v2589
        %3541 = vmatpush1.bf16.msra.mxu0 %v2588
        %3542 = vmatprep.subr.bf16.mxu0 %v2593
        %3543 = vmatpush1.bf16.msra.mxu0 %v2592
        %3544 = vmatprep.subr.bf16.mxu0 %v2597
        %3545 = vmatpush1.bf16.msra.mxu0 %v2596
        %3546 = vmatprep.mubr.bf16.mxu0 %v845
        %3547 = vmatmul.mubr.bf16.gmra.mrb[0].mxu0 %v844
        %v3548 = vpop.f32.mrb[0].mxu0
        %v3549 = vadd.f32 %v3508, %v3548
        %v3550 = vpop.f32.mrb[0].mxu0
        %v3551 = vadd.f32 %v3510, %v3550
        %v3552 = vpop.f32.mrb[0].mxu0
        %v3553 = vpop.f32.mrb[0].mxu0
        %3554 = vdwg.mxu0
        %3555 = vmatprep.subr.bf16.mxu0 %v2601
        %3556 = vmatpush1.bf16.msra.mxu0 %v2600
        %3557 = vmatprep.subr.bf16.mxu0 %v2605
        %3558 = vmatpush1.bf16.msra.mxu0 %v2604
        %3559 = vmatprep.subr.bf16.mxu0 %v2609
        %3560 = vmatpush1.bf16.msra.mxu0 %v2608
        %3561 = vmatprep.subr.bf16.mxu0 %v2613
        %3562 = vmatpush1.bf16.msra.mxu0 %v2612
        %3563 = vmatprep.subr.bf16.mxu0 %v2617
        %3564 = vmatpush1.bf16.msra.mxu0 %v2616
        %3565 = vmatprep.subr.bf16.mxu0 %v2621
        %3566 = vmatpush1.bf16.msra.mxu0 %v2620
        %3567 = vmatprep.subr.bf16.mxu0 %v2625
        %3568 = vmatpush1.bf16.msra.mxu0 %v2624
        %3569 = vmatprep.subr.bf16.mxu0 %v2629
        %3570 = vmatpush1.bf16.msra.mxu0 %v2628
        %3571 = vmatprep.subr.bf16.mxu0 %v2633
        %3572 = vmatpush1.bf16.msra.mxu0 %v2632
        %3573 = vmatprep.subr.bf16.mxu0 %v2637
        %3574 = vmatpush1.bf16.msra.mxu0 %v2636
        %3575 = vmatprep.subr.bf16.mxu0 %v2641
        %3576 = vmatpush1.bf16.msra.mxu0 %v2640
        %3577 = vmatprep.subr.bf16.mxu0 %v2645
        %3578 = vmatpush1.bf16.msra.mxu0 %v2644
        %3579 = vmatprep.subr.bf16.mxu0 %v2649
        %3580 = vmatpush1.bf16.msra.mxu0 %v2648
        %3581 = vmatprep.subr.bf16.mxu0 %v2653
        %3582 = vmatpush1.bf16.msra.mxu0 %v2652
        %3583 = vmatprep.subr.bf16.mxu0 %v2657
        %3584 = vmatpush1.bf16.msra.mxu0 %v2656
        %3585 = vmatprep.subr.bf16.mxu0 %v2661
        %3586 = vmatpush1.bf16.msra.mxu0 %v2660
        %3587 = vmatprep.mubr.bf16.mxu0 %v847
        %3588 = vmatmul.mubr.bf16.gmra.mrb[0].mxu0 %v846
        %v3589 = vpop.f32.mrb[0].mxu0
        %v3590 = vadd.f32 %v3549, %v3589
        %v3591 = vpop.f32.mrb[0].mxu0
        %v3592 = vadd.f32 %v3551, %v3591
        %v3593 = vpop.f32.mrb[0].mxu0
        %v3594 = vpop.f32.mrb[0].mxu0
        %3595 = vdwg.mxu0
        %3596 = vmatprep.subr.bf16.mxu0 %v2665
        %3597 = vmatpush1.bf16.msra.mxu0 %v2664
        %3598 = vmatprep.subr.bf16.mxu0 %v2669
        %3599 = vmatpush1.bf16.msra.mxu0 %v2668
        %3600 = vmatprep.subr.bf16.mxu0 %v2673
        %3601 = vmatpush1.bf16.msra.mxu0 %v2672
        %3602 = vmatprep.subr.bf16.mxu0 %v2677
        %3603 = vmatpush1.bf16.msra.mxu0 %v2676
        %3604 = vmatprep.subr.bf16.mxu0 %v2681
        %3605 = vmatpush1.bf16.msra.mxu0 %v2680
        %3606 = vmatprep.subr.bf16.mxu0 %v2685
        %3607 = vmatpush1.bf16.msra.mxu0 %v2684
        %3608 = vmatprep.subr.bf16.mxu0 %v2689
        %3609 = vmatpush1.bf16.msra.mxu0 %v2688
        %3610 = vmatprep.subr.bf16.mxu0 %v2693
        %3611 = vmatpush1.bf16.msra.mxu0 %v2692
        %3612 = vmatprep.subr.bf16.mxu0 %v2697
        %3613 = vmatpush1.bf16.msra.mxu0 %v2696
        %3614 = vmatprep.subr.bf16.mxu0 %v2701
        %3615 = vmatpush1.bf16.msra.mxu0 %v2700
        %3616 = vmatprep.subr.bf16.mxu0 %v2705
        %3617 = vmatpush1.bf16.msra.mxu0 %v2704
        %3618 = vmatprep.subr.bf16.mxu0 %v2709
        %3619 = vmatpush1.bf16.msra.mxu0 %v2708
        %3620 = vmatprep.subr.bf16.mxu0 %v2713
        %3621 = vmatpush1.bf16.msra.mxu0 %v2712
        %3622 = vmatprep.subr.bf16.mxu0 %v2717
        %3623 = vmatpush1.bf16.msra.mxu0 %v2716
        %3624 = vmatprep.subr.bf16.mxu0 %v2721
        %3625 = vmatpush1.bf16.msra.mxu0 %v2720
        %3626 = vmatprep.subr.bf16.mxu0 %v2725
        %3627 = vmatpush1.bf16.msra.mxu0 %v2724
        %3628 = vmatprep.mubr.bf16.mxu0 %v849
        %3629 = vmatmul.mubr.bf16.gmra.mrb[0].mxu0 %v848
        %v3630 = vpop.f32.mrb[0].mxu0
        %v3631 = vadd.f32 %v3590, %v3630
        %v3632 = vpop.f32.mrb[0].mxu0
        %v3633 = vadd.f32 %v3592, %v3632
        %v3634 = vpop.f32.mrb[0].mxu0
        %v3635 = vpop.f32.mrb[0].mxu0
        %3636 = vdwg.mxu0
        %3637 = vmatprep.subr.bf16.mxu0 %v2729
        %3638 = vmatpush1.bf16.msra.mxu0 %v2728
        %3639 = vmatprep.subr.bf16.mxu0 %v2733
        %3640 = vmatpush1.bf16.msra.mxu0 %v2732
        %3641 = vmatprep.subr.bf16.mxu0 %v2737
        %3642 = vmatpush1.bf16.msra.mxu0 %v2736
        %3643 = vmatprep.subr.bf16.mxu0 %v2741
        %3644 = vmatpush1.bf16.msra.mxu0 %v2740
        %3645 = vmatprep.subr.bf16.mxu0 %v2745
        %3646 = vmatpush1.bf16.msra.mxu0 %v2744
        %3647 = vmatprep.subr.bf16.mxu0 %v2749
        %3648 = vmatpush1.bf16.msra.mxu0 %v2748
        %3649 = vmatprep.subr.bf16.mxu0 %v2753
        %3650 = vmatpush1.bf16.msra.mxu0 %v2752
        %3651 = vmatprep.subr.bf16.mxu0 %v2757
        %3652 = vmatpush1.bf16.msra.mxu0 %v2756
        %3653 = vmatprep.subr.bf16.mxu0 %v2761
        %3654 = vmatpush1.bf16.msra.mxu0 %v2760
        %3655 = vmatprep.subr.bf16.mxu0 %v2765
        %3656 = vmatpush1.bf16.msra.mxu0 %v2764
        %3657 = vmatprep.subr.bf16.mxu0 %v2769
        %3658 = vmatpush1.bf16.msra.mxu0 %v2768
        %3659 = vmatprep.subr.bf16.mxu0 %v2773
        %3660 = vmatpush1.bf16.msra.mxu0 %v2772
        %3661 = vmatprep.subr.bf16.mxu0 %v2777
        %3662 = vmatpush1.bf16.msra.mxu0 %v2776
        %3663 = vmatprep.subr.bf16.mxu0 %v2781
        %3664 = vmatpush1.bf16.msra.mxu0 %v2780
        %3665 = vmatprep.subr.bf16.mxu0 %v2785
        %3666 = vmatpush1.bf16.msra.mxu0 %v2784
        %3667 = vmatprep.subr.bf16.mxu0 %v2789
        %3668 = vmatpush1.bf16.msra.mxu0 %v2788
        %3669 = vmatprep.mubr.bf16.mxu0 %v851
        %3670 = vmatmul.mubr.bf16.gmra.mrb[0].mxu0 %v850
        %v3671 = vpop.f32.mrb[0].mxu0
        %v3672 = vadd.f32 %v3631, %v3671
        %v3673 = vpop.f32.mrb[0].mxu0
        %v3674 = vadd.f32 %v3633, %v3673
        %v3675 = vpop.f32.mrb[0].mxu0
        %v3676 = vpop.f32.mrb[0].mxu0
        %3677 = vdwg.mxu0
        %3678 = vmatprep.subr.bf16.mxu0 %v2793
        %3679 = vmatpush1.bf16.msra.mxu0 %v2792
        %3680 = vmatprep.subr.bf16.mxu0 %v2797
        %3681 = vmatpush1.bf16.msra.mxu0 %v2796
        %3682 = vmatprep.subr.bf16.mxu0 %v2801
        %3683 = vmatpush1.bf16.msra.mxu0 %v2800
        %3684 = vmatprep.subr.bf16.mxu0 %v2805
        %3685 = vmatpush1.bf16.msra.mxu0 %v2804
        %3686 = vmatprep.subr.bf16.mxu0 %v2809
        %3687 = vmatpush1.bf16.msra.mxu0 %v2808
        %3688 = vmatprep.subr.bf16.mxu0 %v2813
        %3689 = vmatpush1.bf16.msra.mxu0 %v2812
        %3690 = vmatprep.subr.bf16.mxu0 %v2817
        %3691 = vmatpush1.bf16.msra.mxu0 %v2816
        %3692 = vmatprep.subr.bf16.mxu0 %v2821
        %3693 = vmatpush1.bf16.msra.mxu0 %v2820
        %3694 = vmatprep.subr.bf16.mxu0 %v2825
        %3695 = vmatpush1.bf16.msra.mxu0 %v2824
        %3696 = vmatprep.subr.bf16.mxu0 %v2829
        %3697 = vmatpush1.bf16.msra.mxu0 %v2828
        %3698 = vmatprep.subr.bf16.mxu0 %v2833
        %3699 = vmatpush1.bf16.msra.mxu0 %v2832
        %3700 = vmatprep.subr.bf16.mxu0 %v2837
        %3701 = vmatpush1.bf16.msra.mxu0 %v2836
        %3702 = vmatprep.subr.bf16.mxu0 %v2841
        %3703 = vmatpush1.bf16.msra.mxu0 %v2840
        %3704 = vmatprep.subr.bf16.mxu0 %v2845
        %3705 = vmatpush1.bf16.msra.mxu0 %v2844
        %3706 = vmatprep.subr.bf16.mxu0 %v2849
        %3707 = vmatpush1.bf16.msra.mxu0 %v2848
        %3708 = vmatprep.subr.bf16.mxu0 %v2853
        %3709 = vmatpush1.bf16.msra.mxu0 %v2852
        %3710 = vmatprep.mubr.bf16.mxu0 %v853
        %3711 = vmatmul.mubr.bf16.gmra.mrb[0].mxu0 %v852
        %v3712 = vpop.f32.mrb[0].mxu0
        %v3713 = vadd.f32 %v3672, %v3712
        %v3714 = vpop.f32.mrb[0].mxu0
        %v3715 = vadd.f32 %v3674, %v3714
        %v3716 = vpop.f32.mrb[0].mxu0
        %v3717 = vpop.f32.mrb[0].mxu0
        %3718 = vdwg.mxu0
        %3719 = vmatprep.subr.bf16.mxu0 %v2857
        %3720 = vmatpush1.bf16.msra.mxu0 %v2856
        %3721 = vmatprep.subr.bf16.mxu0 %v2861
        %3722 = vmatpush1.bf16.msra.mxu0 %v2860
        %3723 = vmatprep.subr.bf16.mxu0 %v2865
        %3724 = vmatpush1.bf16.msra.mxu0 %v2864
        %3725 = vmatprep.subr.bf16.mxu0 %v2869
        %3726 = vmatpush1.bf16.msra.mxu0 %v2868
        %3727 = vmatprep.subr.bf16.mxu0 %v2873
        %3728 = vmatpush1.bf16.msra.mxu0 %v2872
        %3729 = vmatprep.subr.bf16.mxu0 %v2877
        %3730 = vmatpush1.bf16.msra.mxu0 %v2876
        %3731 = vmatprep.subr.bf16.mxu0 %v2881
        %3732 = vmatpush1.bf16.msra.mxu0 %v2880
        %3733 = vmatprep.subr.bf16.mxu0 %v2885
        %3734 = vmatpush1.bf16.msra.mxu0 %v2884
        %3735 = vmatprep.subr.bf16.mxu0 %v2889
        %3736 = vmatpush1.bf16.msra.mxu0 %v2888
        %3737 = vmatprep.subr.bf16.mxu0 %v2893
        %3738 = vmatpush1.bf16.msra.mxu0 %v2892
        %3739 = vmatprep.subr.bf16.mxu0 %v2897
        %3740 = vmatpush1.bf16.msra.mxu0 %v2896
        %3741 = vmatprep.subr.bf16.mxu0 %v2901
        %3742 = vmatpush1.bf16.msra.mxu0 %v2900
        %3743 = vmatprep.subr.bf16.mxu0 %v2905
        %3744 = vmatpush1.bf16.msra.mxu0 %v2904
        %3745 = vmatprep.subr.bf16.mxu0 %v2909
        %3746 = vmatpush1.bf16.msra.mxu0 %v2908
        %3747 = vmatprep.subr.bf16.mxu0 %v2913
        %3748 = vmatpush1.bf16.msra.mxu0 %v2912
        %3749 = vmatprep.subr.bf16.mxu0 %v2917
        %3750 = vmatpush1.bf16.msra.mxu0 %v2916
        %3751 = vmatprep.mubr.bf16.mxu0 %v855
        %3752 = vmatmul.mubr.bf16.gmra.mrb[0].mxu0 %v854
        %v3753 = vpop.f32.mrb[0].mxu0
        %v3754 = vadd.f32 %v3713, %v3753
        %v3755 = vpop.f32.mrb[0].mxu0
        %v3756 = vadd.f32 %v3715, %v3755
        %v3757 = vpop.f32.mrb[0].mxu0
        %v3758 = vpop.f32.mrb[0].mxu0
        %3759 = vdwg.mxu0
        %3760 = vmatprep.subr.bf16.mxu0 %v2411
        %3761 = vmatpush1.bf16.msra.mxu0 %v2410
        %3762 = vmatprep.subr.bf16.mxu0 %v2415
        %3763 = vmatpush1.bf16.msra.mxu0 %v2414
        %3764 = vmatprep.subr.bf16.mxu0 %v2419
        %3765 = vmatpush1.bf16.msra.mxu0 %v2418
        %3766 = vmatprep.subr.bf16.mxu0 %v2423
        %3767 = vmatpush1.bf16.msra.mxu0 %v2422
        %3768 = vmatprep.subr.bf16.mxu0 %v2427
        %3769 = vmatpush1.bf16.msra.mxu0 %v2426
        %3770 = vmatprep.subr.bf16.mxu0 %v2431
        %3771 = vmatpush1.bf16.msra.mxu0 %v2430
        %3772 = vmatprep.subr.bf16.mxu0 %v2435
        %3773 = vmatpush1.bf16.msra.mxu0 %v2434
        %3774 = vmatprep.subr.bf16.mxu0 %v2439
        %3775 = vmatpush1.bf16.msra.mxu0 %v2438
        %3776 = vmatprep.subr.bf16.mxu0 %v2443
        %3777 = vmatpush1.bf16.msra.mxu0 %v2442
        %3778 = vmatprep.subr.bf16.mxu0 %v2447
        %3779 = vmatpush1.bf16.msra.mxu0 %v2446
        %3780 = vmatprep.subr.bf16.mxu0 %v2451
        %3781 = vmatpush1.bf16.msra.mxu0 %v2450
        %3782 = vmatprep.subr.bf16.mxu0 %v2455
        %3783 = vmatpush1.bf16.msra.mxu0 %v2454
        %3784 = vmatprep.subr.bf16.mxu0 %v2459
        %3785 = vmatpush1.bf16.msra.mxu0 %v2458
        %3786 = vmatprep.subr.bf16.mxu0 %v2463
        %3787 = vmatpush1.bf16.msra.mxu0 %v2462
        %3788 = vmatprep.subr.bf16.mxu0 %v2467
        %3789 = vmatpush1.bf16.msra.mxu0 %v2466
        %3790 = vmatprep.subr.bf16.mxu0 %v2471
        %3791 = vmatpush1.bf16.msra.mxu0 %v2470
        %3792 = vmatprep.mubr.bf16.mxu0 %v841
        %3793 = vmatmul.mubr.bf16.gmra.mrb[0].mxu0 %v840
        %v3794 = vpop.f32.mrb[0].mxu0
        %v3795 = vadd.f32 %v807, %v3794
        %v3796 = vpop.f32.mrb[0].mxu0
        %v3797 = vadd.f32 %v811, %v3796
        %v3798 = vpop.f32.mrb[0].mxu0
        %v3799 = vpop.f32.mrb[0].mxu0
        %3800 = vdwg.mxu0
        %3801 = vmatprep.subr.bf16.mxu0 %v2475
        %3802 = vmatpush1.bf16.msra.mxu0 %v2474
        %3803 = vmatprep.subr.bf16.mxu0 %v2479
        %3804 = vmatpush1.bf16.msra.mxu0 %v2478
        %3805 = vmatprep.subr.bf16.mxu0 %v2483
        %3806 = vmatpush1.bf16.msra.mxu0 %v2482
        %3807 = vmatprep.subr.bf16.mxu0 %v2487
        %3808 = vmatpush1.bf16.msra.mxu0 %v2486
        %3809 = vmatprep.subr.bf16.mxu0 %v2491
        %3810 = vmatpush1.bf16.msra.mxu0 %v2490
        %3811 = vmatprep.subr.bf16.mxu0 %v2495
        %3812 = vmatpush1.bf16.msra.mxu0 %v2494
        %3813 = vmatprep.subr.bf16.mxu0 %v2499
        %3814 = vmatpush1.bf16.msra.mxu0 %v2498
        %3815 = vmatprep.subr.bf16.mxu0 %v2503
        %3816 = vmatpush1.bf16.msra.mxu0 %v2502
        %3817 = vmatprep.subr.bf16.mxu0 %v2507
        %3818 = vmatpush1.bf16.msra.mxu0 %v2506
        %3819 = vmatprep.subr.bf16.mxu0 %v2511
        %3820 = vmatpush1.bf16.msra.mxu0 %v2510
        %3821 = vmatprep.subr.bf16.mxu0 %v2515
        %3822 = vmatpush1.bf16.msra.mxu0 %v2514
        %3823 = vmatprep.subr.bf16.mxu0 %v2519
        %3824 = vmatpush1.bf16.msra.mxu0 %v2518
        %3825 = vmatprep.subr.bf16.mxu0 %v2523
        %3826 = vmatpush1.bf16.msra.mxu0 %v2522
        %3827 = vmatprep.subr.bf16.mxu0 %v2527
        %3828 = vmatpush1.bf16.msra.mxu0 %v2526
        %3829 = vmatprep.subr.bf16.mxu0 %v2531
        %3830 = vmatpush1.bf16.msra.mxu0 %v2530
        %3831 = vmatprep.subr.bf16.mxu0 %v2535
        %3832 = vmatpush1.bf16.msra.mxu0 %v2534
        %3833 = vmatprep.mubr.bf16.mxu0 %v843
        %3834 = vmatmul.mubr.bf16.gmra.mrb[0].mxu0 %v842
        %v3835 = vpop.f32.mrb[0].mxu0
        %v3836 = vadd.f32 %v3795, %v3835
        %v3837 = vpop.f32.mrb[0].mxu0
        %v3838 = vadd.f32 %v3797, %v3837
        %v3839 = vpop.f32.mrb[0].mxu0
        %v3840 = vpop.f32.mrb[0].mxu0
        %3841 = vdwg.mxu0
        %3842 = vmatprep.subr.bf16.mxu0 %v2539
        %3843 = vmatpush1.bf16.msra.mxu0 %v2538
        %3844 = vmatprep.subr.bf16.mxu0 %v2543
        %3845 = vmatpush1.bf16.msra.mxu0 %v2542
        %3846 = vmatprep.subr.bf16.mxu0 %v2547
        %3847 = vmatpush1.bf16.msra.mxu0 %v2546
        %3848 = vmatprep.subr.bf16.mxu0 %v2551
        %3849 = vmatpush1.bf16.msra.mxu0 %v2550
        %3850 = vmatprep.subr.bf16.mxu0 %v2555
        %3851 = vmatpush1.bf16.msra.mxu0 %v2554
        %3852 = vmatprep.subr.bf16.mxu0 %v2559
        %3853 = vmatpush1.bf16.msra.mxu0 %v2558
        %3854 = vmatprep.subr.bf16.mxu0 %v2563
        %3855 = vmatpush1.bf16.msra.mxu0 %v2562
        %3856 = vmatprep.subr.bf16.mxu0 %v2567
        %3857 = vmatpush1.bf16.msra.mxu0 %v2566
        %3858 = vmatprep.subr.bf16.mxu0 %v2571
        %3859 = vmatpush1.bf16.msra.mxu0 %v2570
        %3860 = vmatprep.subr.bf16.mxu0 %v2575
        %3861 = vmatpush1.bf16.msra.mxu0 %v2574
        %3862 = vmatprep.subr.bf16.mxu0 %v2579
        %3863 = vmatpush1.bf16.msra.mxu0 %v2578
        %3864 = vmatprep.subr.bf16.mxu0 %v2583
        %3865 = vmatpush1.bf16.msra.mxu0 %v2582
        %3866 = vmatprep.subr.bf16.mxu0 %v2587
        %3867 = vmatpush1.bf16.msra.mxu0 %v2586
        %3868 = vmatprep.subr.bf16.mxu0 %v2591
        %3869 = vmatpush1.bf16.msra.mxu0 %v2590
        %3870 = vmatprep.subr.bf16.mxu0 %v2595
        %3871 = vmatpush1.bf16.msra.mxu0 %v2594
        %3872 = vmatprep.subr.bf16.mxu0 %v2599
        %3873 = vmatpush1.bf16.msra.mxu0 %v2598
        %3874 = vmatprep.mubr.bf16.mxu0 %v845
        %3875 = vmatmul.mubr.bf16.gmra.mrb[0].mxu0 %v844
        %v3876 = vpop.f32.mrb[0].mxu0
        %v3877 = vadd.f32 %v3836, %v3876
        %v3878 = vpop.f32.mrb[0].mxu0
        %v3879 = vadd.f32 %v3838, %v3878
        %v3880 = vpop.f32.mrb[0].mxu0
        %v3881 = vpop.f32.mrb[0].mxu0
        %3882 = vdwg.mxu0
        %3883 = vmatprep.subr.bf16.mxu0 %v2603
        %3884 = vmatpush1.bf16.msra.mxu0 %v2602
        %3885 = vmatprep.subr.bf16.mxu0 %v2607
        %3886 = vmatpush1.bf16.msra.mxu0 %v2606
        %3887 = vmatprep.subr.bf16.mxu0 %v2611
        %3888 = vmatpush1.bf16.msra.mxu0 %v2610
        %3889 = vmatprep.subr.bf16.mxu0 %v2615
        %3890 = vmatpush1.bf16.msra.mxu0 %v2614
        %3891 = vmatprep.subr.bf16.mxu0 %v2619
        %3892 = vmatpush1.bf16.msra.mxu0 %v2618
        %3893 = vmatprep.subr.bf16.mxu0 %v2623
        %3894 = vmatpush1.bf16.msra.mxu0 %v2622
        %3895 = vmatprep.subr.bf16.mxu0 %v2627
        %3896 = vmatpush1.bf16.msra.mxu0 %v2626
        %3897 = vmatprep.subr.bf16.mxu0 %v2631
        %3898 = vmatpush1.bf16.msra.mxu0 %v2630
        %3899 = vmatprep.subr.bf16.mxu0 %v2635
        %3900 = vmatpush1.bf16.msra.mxu0 %v2634
        %3901 = vmatprep.subr.bf16.mxu0 %v2639
        %3902 = vmatpush1.bf16.msra.mxu0 %v2638
        %3903 = vmatprep.subr.bf16.mxu0 %v2643
        %3904 = vmatpush1.bf16.msra.mxu0 %v2642
        %3905 = vmatprep.subr.bf16.mxu0 %v2647
        %3906 = vmatpush1.bf16.msra.mxu0 %v2646
        %3907 = vmatprep.subr.bf16.mxu0 %v2651
        %3908 = vmatpush1.bf16.msra.mxu0 %v2650
        %3909 = vmatprep.subr.bf16.mxu0 %v2655
        %3910 = vmatpush1.bf16.msra.mxu0 %v2654
        %3911 = vmatprep.subr.bf16.mxu0 %v2659
        %3912 = vmatpush1.bf16.msra.mxu0 %v2658
        %3913 = vmatprep.subr.bf16.mxu0 %v2663
        %3914 = vmatpush1.bf16.msra.mxu0 %v2662
        %3915 = vmatprep.mubr.bf16.mxu0 %v847
        %3916 = vmatmul.mubr.bf16.gmra.mrb[0].mxu0 %v846
        %v3917 = vpop.f32.mrb[0].mxu0
        %v3918 = vadd.f32 %v3877, %v3917
        %v3919 = vpop.f32.mrb[0].mxu0
        %v3920 = vadd.f32 %v3879, %v3919
        %v3921 = vpop.f32.mrb[0].mxu0
        %v3922 = vpop.f32.mrb[0].mxu0
        %3923 = vdwg.mxu0
        %3924 = vmatprep.subr.bf16.mxu0 %v2667
        %3925 = vmatpush1.bf16.msra.mxu0 %v2666
        %3926 = vmatprep.subr.bf16.mxu0 %v2671
        %3927 = vmatpush1.bf16.msra.mxu0 %v2670
        %3928 = vmatprep.subr.bf16.mxu0 %v2675
        %3929 = vmatpush1.bf16.msra.mxu0 %v2674
        %3930 = vmatprep.subr.bf16.mxu0 %v2679
        %3931 = vmatpush1.bf16.msra.mxu0 %v2678
        %3932 = vmatprep.subr.bf16.mxu0 %v2683
        %3933 = vmatpush1.bf16.msra.mxu0 %v2682
        %3934 = vmatprep.subr.bf16.mxu0 %v2687
        %3935 = vmatpush1.bf16.msra.mxu0 %v2686
        %3936 = vmatprep.subr.bf16.mxu0 %v2691
        %3937 = vmatpush1.bf16.msra.mxu0 %v2690
        %3938 = vmatprep.subr.bf16.mxu0 %v2695
        %3939 = vmatpush1.bf16.msra.mxu0 %v2694
        %3940 = vmatprep.subr.bf16.mxu0 %v2699
        %3941 = vmatpush1.bf16.msra.mxu0 %v2698
        %3942 = vmatprep.subr.bf16.mxu0 %v2703
        %3943 = vmatpush1.bf16.msra.mxu0 %v2702
        %3944 = vmatprep.subr.bf16.mxu0 %v2707
        %3945 = vmatpush1.bf16.msra.mxu0 %v2706
        %3946 = vmatprep.subr.bf16.mxu0 %v2711
        %3947 = vmatpush1.bf16.msra.mxu0 %v2710
        %3948 = vmatprep.subr.bf16.mxu0 %v2715
        %3949 = vmatpush1.bf16.msra.mxu0 %v2714
        %3950 = vmatprep.subr.bf16.mxu0 %v2719
        %3951 = vmatpush1.bf16.msra.mxu0 %v2718
        %3952 = vmatprep.subr.bf16.mxu0 %v2723
        %3953 = vmatpush1.bf16.msra.mxu0 %v2722
        %3954 = vmatprep.subr.bf16.mxu0 %v2727
        %3955 = vmatpush1.bf16.msra.mxu0 %v2726
        %3956 = vmatprep.mubr.bf16.mxu0 %v849
        %3957 = vmatmul.mubr.bf16.gmra.mrb[0].mxu0 %v848
        %v3958 = vpop.f32.mrb[0].mxu0
        %v3959 = vadd.f32 %v3918, %v3958
        %v3960 = vpop.f32.mrb[0].mxu0
        %v3961 = vadd.f32 %v3920, %v3960
        %v3962 = vpop.f32.mrb[0].mxu0
        %v3963 = vpop.f32.mrb[0].mxu0
        %3964 = vdwg.mxu0
        %3965 = vmatprep.subr.bf16.mxu0 %v2731
        %3966 = vmatpush1.bf16.msra.mxu0 %v2730
        %3967 = vmatprep.subr.bf16.mxu0 %v2735
        %3968 = vmatpush1.bf16.msra.mxu0 %v2734
        %3969 = vmatprep.subr.bf16.mxu0 %v2739
        %3970 = vmatpush1.bf16.msra.mxu0 %v2738
        %3971 = vmatprep.subr.bf16.mxu0 %v2743
        %3972 = vmatpush1.bf16.msra.mxu0 %v2742
        %3973 = vmatprep.subr.bf16.mxu0 %v2747
        %3974 = vmatpush1.bf16.msra.mxu0 %v2746
        %3975 = vmatprep.subr.bf16.mxu0 %v2751
        %3976 = vmatpush1.bf16.msra.mxu0 %v2750
        %3977 = vmatprep.subr.bf16.mxu0 %v2755
        %3978 = vmatpush1.bf16.msra.mxu0 %v2754
        %3979 = vmatprep.subr.bf16.mxu0 %v2759
        %3980 = vmatpush1.bf16.msra.mxu0 %v2758
        %3981 = vmatprep.subr.bf16.mxu0 %v2763
        %3982 = vmatpush1.bf16.msra.mxu0 %v2762
        %3983 = vmatprep.subr.bf16.mxu0 %v2767
        %3984 = vmatpush1.bf16.msra.mxu0 %v2766
        %3985 = vmatprep.subr.bf16.mxu0 %v2771
        %3986 = vmatpush1.bf16.msra.mxu0 %v2770
        %3987 = vmatprep.subr.bf16.mxu0 %v2775
        %3988 = vmatpush1.bf16.msra.mxu0 %v2774
        %3989 = vmatprep.subr.bf16.mxu0 %v2779
        %3990 = vmatpush1.bf16.msra.mxu0 %v2778
        %3991 = vmatprep.subr.bf16.mxu0 %v2783
        %3992 = vmatpush1.bf16.msra.mxu0 %v2782
        %3993 = vmatprep.subr.bf16.mxu0 %v2787
        %3994 = vmatpush1.bf16.msra.mxu0 %v2786
        %3995 = vmatprep.subr.bf16.mxu0 %v2791
        %3996 = vmatpush1.bf16.msra.mxu0 %v2790
        %3997 = vmatprep.mubr.bf16.mxu0 %v851
        %3998 = vmatmul.mubr.bf16.gmra.mrb[0].mxu0 %v850
        %v3999 = vpop.f32.mrb[0].mxu0
        %v4000 = vadd.f32 %v3959, %v3999
        %v4001 = vpop.f32.mrb[0].mxu0
        %v4002 = vadd.f32 %v3961, %v4001
        %v4003 = vpop.f32.mrb[0].mxu0
        %v4004 = vpop.f32.mrb[0].mxu0
        %4005 = vdwg.mxu0
        %4006 = vmatprep.subr.bf16.mxu0 %v2795
        %4007 = vmatpush1.bf16.msra.mxu0 %v2794
        %4008 = vmatprep.subr.bf16.mxu0 %v2799
        %4009 = vmatpush1.bf16.msra.mxu0 %v2798
        %4010 = vmatprep.subr.bf16.mxu0 %v2803
        %4011 = vmatpush1.bf16.msra.mxu0 %v2802
        %4012 = vmatprep.subr.bf16.mxu0 %v2807
        %4013 = vmatpush1.bf16.msra.mxu0 %v2806
        %4014 = vmatprep.subr.bf16.mxu0 %v2811
        %4015 = vmatpush1.bf16.msra.mxu0 %v2810
        %4016 = vmatprep.subr.bf16.mxu0 %v2815
        %4017 = vmatpush1.bf16.msra.mxu0 %v2814
        %4018 = vmatprep.subr.bf16.mxu0 %v2819
        %4019 = vmatpush1.bf16.msra.mxu0 %v2818
        %4020 = vmatprep.subr.bf16.mxu0 %v2823
        %4021 = vmatpush1.bf16.msra.mxu0 %v2822
        %4022 = vmatprep.subr.bf16.mxu0 %v2827
        %4023 = vmatpush1.bf16.msra.mxu0 %v2826
        %4024 = vmatprep.subr.bf16.mxu0 %v2831
        %4025 = vmatpush1.bf16.msra.mxu0 %v2830
        %4026 = vmatprep.subr.bf16.mxu0 %v2835
        %4027 = vmatpush1.bf16.msra.mxu0 %v2834
        %4028 = vmatprep.subr.bf16.mxu0 %v2839
        %4029 = vmatpush1.bf16.msra.mxu0 %v2838
        %4030 = vmatprep.subr.bf16.mxu0 %v2843
        %4031 = vmatpush1.bf16.msra.mxu0 %v2842
        %4032 = vmatprep.subr.bf16.mxu0 %v2847
        %4033 = vmatpush1.bf16.msra.mxu0 %v2846
        %4034 = vmatprep.subr.bf16.mxu0 %v2851
        %4035 = vmatpush1.bf16.msra.mxu0 %v2850
        %4036 = vmatprep.subr.bf16.mxu0 %v2855
        %4037 = vmatpush1.bf16.msra.mxu0 %v2854
        %4038 = vmatprep.mubr.bf16.mxu0 %v853
        %4039 = vmatmul.mubr.bf16.gmra.mrb[0].mxu0 %v852
        %v4040 = vpop.f32.mrb[0].mxu0
        %v4041 = vadd.f32 %v4000, %v4040
        %v4042 = vpop.f32.mrb[0].mxu0
        %v4043 = vadd.f32 %v4002, %v4042
        %v4044 = vpop.f32.mrb[0].mxu0
        %v4045 = vpop.f32.mrb[0].mxu0
        %4046 = vdwg.mxu0
        %4047 = vmatprep.subr.bf16.mxu0 %v2859
        %4048 = vmatpush1.bf16.msra.mxu0 %v2858
        %4049 = vmatprep.subr.bf16.mxu0 %v2863
        %4050 = vmatpush1.bf16.msra.mxu0 %v2862
        %4051 = vmatprep.subr.bf16.mxu0 %v2867
        %4052 = vmatpush1.bf16.msra.mxu0 %v2866
        %4053 = vmatprep.subr.bf16.mxu0 %v2871
        %4054 = vmatpush1.bf16.msra.mxu0 %v2870
        %4055 = vmatprep.subr.bf16.mxu0 %v2875
        %4056 = vmatpush1.bf16.msra.mxu0 %v2874
        %4057 = vmatprep.subr.bf16.mxu0 %v2879
        %4058 = vmatpush1.bf16.msra.mxu0 %v2878
        %4059 = vmatprep.subr.bf16.mxu0 %v2883
        %4060 = vmatpush1.bf16.msra.mxu0 %v2882
        %4061 = vmatprep.subr.bf16.mxu0 %v2887
        %4062 = vmatpush1.bf16.msra.mxu0 %v2886
        %4063 = vmatprep.subr.bf16.mxu0 %v2891
        %4064 = vmatpush1.bf16.msra.mxu0 %v2890
        %4065 = vmatprep.subr.bf16.mxu0 %v2895
        %4066 = vmatpush1.bf16.msra.mxu0 %v2894
        %4067 = vmatprep.subr.bf16.mxu0 %v2899
        %4068 = vmatpush1.bf16.msra.mxu0 %v2898
        %4069 = vmatprep.subr.bf16.mxu0 %v2903
        %4070 = vmatpush1.bf16.msra.mxu0 %v2902
        %4071 = vmatprep.subr.bf16.mxu0 %v2907
        %4072 = vmatpush1.bf16.msra.mxu0 %v2906
        %4073 = vmatprep.subr.bf16.mxu0 %v2911
        %4074 = vmatpush1.bf16.msra.mxu0 %v2910
        %4075 = vmatprep.subr.bf16.mxu0 %v2915
        %4076 = vmatpush1.bf16.msra.mxu0 %v2914
        %4077 = vmatprep.subr.bf16.mxu0 %v2919
        %4078 = vmatpush1.bf16.msra.mxu0 %v2918
        %4079 = vmatprep.mubr.bf16.mxu0 %v855
        %4080 = vmatmul.mubr.bf16.gmra.mrb[0].mxu0 %v854
        %v4081 = vpop.f32.mrb[0].mxu0
        %v4082 = vadd.f32 %v4041, %v4081
        %v4083 = vpop.f32.mrb[0].mxu0
        %v4084 = vadd.f32 %v4043, %v4083
        %v4085 = vpop.f32.mrb[0].mxu0
        %v4086 = vpop.f32.mrb[0].mxu0
        %4087 = vdwg.mxu0
        %v4088 = vmax.f32 %v3754, 0.0
        %v4089 = vmax.f32 %v3756, 0.0
        %v4090 = vmax.f32 %v4082, 0.0
        %v4091 = vmax.f32 %v4084, 0.0
        %v4092 = vpack.c.bf16 %v4088, %v4088
        %v4093 = vpack.c.bf16 %v4089, %v4089
        %v4094 = vpack.c.bf16 %v4090, %v4090
        %v4095 = vpack.c.bf16 %v4091, %v4091
        %v4100 = vunpack.c.l.b16 %v4092
        %v4101 = vunpack.c.l.b16 %v4093
        %v4102 = vunpack.c.l.b16 %v4094
        %v4103 = vunpack.c.l.b16 %v4095
        %v4104 = vpack.c.b16 %v4101, %v4100
        %v4105 = vpack.c.b16 %v4103, %v4102
        %4108 = vst [vmem:[%s272] sm:$0xff] %v4104
        %4109 = vst [vmem:[%s272 + $0x8] sm:$0xff] %v4105
        %s4110 = smul.u32 4, %s25
        %p4111 = scmp.lt.s32.totalorder %s24, 0
        %s4112 = scalar_select %p4111, %s24, 0
        %p4113 = scmp.lt.s32.totalorder %s4110, 15
        %s4114 = scalar_select %p4113, %s4110, 15
        %s4115 = smul.addr %s4112, 16
        %s4116 = sadd.s32 %s4114, %s4115
        %s4117 = smul.addr %s4116, 4
        %s4118 = scalar_lea.vmem %s3, %s4117
        // Predicated region
        $region41: #{forward.3} parent=31 // pred_check
          %p4119 = pneg %p130
        $region42: #{forward.3} parent=31 // pred_check_branch
          %4121 = sbr.rel (%p4119) target = $region44
        $region43: #{forward.3} parent=31 // pred_region
          %s4122 = smul.u32 4, %s25
        $region44: #{forward.3} parent=31 // pred_fallthru
          _
      $region32: #{forward.3} parent=5 // pred_fallthru
        _
      %p4123 = scmp.le.s32.totalorder 2, %s15
      // Predicated region
      $region45: #{forward.3} parent=5 // pred_check
        %p4124 = pneg %p4123
      $region46: #{forward.3} parent=5 // pred_check_branch
        %4126 = sbr.rel (%p4124) target = $region48
      $region47: #{forward.3} parent=5 // pred_region
        %s4127 = ssub.s32 %s15, 2
        // Predicated region
        $region49: #{forward.3} parent=47 // pred_check
          %p4128 = pneg %p136
        $region50: #{forward.3} parent=47 // pred_check_branch
          %4130 = sbr.rel (%p4128) target = $region52
        $region51: #{forward.3} parent=47 // pred_region
          %s4131 = smul.u32 4, %s27
          %p4132 = scmp.lt.s32.totalorder %s26, 0
          %s4133 = scalar_select %p4132, %s26, 0
          %p4134 = scmp.lt.s32.totalorder %s4131, 15
          %s4135 = scalar_select %p4134, %s4131, 15
          %s4136 = smul.addr %s4133, 16
          %s4137 = sadd.s32 %s4135, %s4136
          %s4138 = smul.addr %s4137, 4
          %s4139 = scalar_lea.vmem %s3, %s4138
        $region52: #{forward.3} parent=47 // pred_fallthru
          _
      $region48: #{forward.3} parent=5 // pred_fallthru
        _
    $region6: #{forward.3} parent=1 // loop_footer
      %s19 = sadd.s32 1, %s15
    $region7: #{forward.3} parent=1 // loop_footer_branch
      %14 = sbr.rel target = $region3
    $region8: #{forward.3} parent=1 // loop_exit
      _
    %4140 = vsyncpa [#allocation3], 1
    %s4141 = scalar_lea.sflag [#allocation3], 1
    %4142 = vsyncpa %s4141, 1
    %4143 = vsyncpa [#allocation5], 1
    %s4144 = scalar_lea.sflag [#allocation5], 1
    %4145 = vsyncpa %s4144, 1

// kernel: forward.4
$region0: #{forward.4}
  #allocation0 [shape = 'u32[]', space=smem, size = 0x4, offset = 0x4, fixed_abs, tag = 'smem constant byte address 0x4 - core index']
  #allocation1 [shape = 'u32[144,128]{1,0:T(1,128)}', space=vmem, size = 0x12000, scoped, tag = 'internal scratch']
  %s0 = inlined_call_operand.vmem [shape: bf16[8,2048], index: 0, kind: input, shape index: {}]
  %s1 = inlined_call_operand.vmem [shape: bf16[2048,2048], index: 1, kind: input, shape index: {}]
  %s2 = inlined_call_operand.vmem [shape: f32[1,2048], index: 2, kind: input, shape index: {}]
  %s3 = inlined_call_operand.vmem [shape: bf16[8,2048], index: 3, kind: output, shape index: {}]
  %s4 = sld [smem:[#allocation0]]
  $region68: #{forward.4} parent=0
    _
  %s6 = ssub.s32 1, %s4
  %s7 = scalar_select 0, %s6, %s4
  $region1: #{forward.4} parent=0
    #allocation2 [shape = 'u8[4194304]{0}', space=vmem, size = 0x400000, scoped, tag = 'input window, operand 1']
    loop: start=0, step=1, limit=6
    $region2: #{forward.4} parent=1 // loop_pre_header
      _
    $region3: #{forward.4} parent=1 // loop_header
      %s9 = sphi 0, %s13
      %p10 = scmp.ge.s32.totalorder %s9, 6
      %s16 = sphi 0, %s28
      %s17 = sphi 0, %s24
      %s18 = sphi 0, %s16
      %s19 = sphi 0, %s17
      %s20 = sphi 0, %s18
      %s21 = sphi 0, %s19
      %s31 = sphi 0, %s33
      %s34 = sphi 0, %s31
      %s35 = sphi 0, %s34
      %s51 = sphi 0, %s35
      %s57 = sphi 0, %s59
      %s60 = sphi 0, %s57
      %s61 = sphi 0, %s60
      %s77 = sphi 0, %s61
      %s83 = sphi 0, %s85
      %s86 = sphi 0, %s83
      %s87 = sphi 0, %s86
      %s103 = sphi 0, %s87
      %s111 = sphi 0, %s113
      %s114 = sphi 0, %s111
      %s115 = sphi 0, %s114
      %s131 = sphi 0, %s115
    $region4: #{forward.4} parent=1 // loop_header_branch
      %12 = sbr.rel (%p10) target = $region8
    $region5: #{forward.4} parent=1 // loop_body
      %s14 = ssub.s32 %s9, 1
      %s15 = ssub.s32 %s9, 2
      %s22 = sadd.s32 1, %s17
      %p23 = scmp.ge.s32.totalorder %s22, 4
      %s24 = scalar_select %p23, 0, %s22
      %s25 = sadd.s32 1, %s16
      %s26 = scalar_select %p23, %s25, %s16
      %p27 = scmp.ge.s32.totalorder %s26, 1
      %s28 = scalar_select %p27, 0, %s26
      %s29 = ssub.s32 %s16, %s28
      %p30 = scmp.eq.s32.totalorder %s29, 0
      %s32 = sadd.s32 %s31, 1
      %s33 = scalar_select %p30, %s31, %s32
      %p36 = pneg %p30
      %p37 = scmp.eq.s32.totalorder %s9, 3
      %p38 = por %p36, %p37
      %p39 = scmp.ne.s32.totalorder %s31, %s34
      %p40 = scmp.eq.s32.totalorder %s9, 0
      %p41 = por %p39, %p40
      %p42 = scmp.ne.s32.totalorder %s31, %s34
      %p43 = scmp.eq.s32.totalorder %s14, 3
      %p44 = por %p42, %p43
      %p45 = scmp.ne.s32.totalorder %s34, %s35
      %p46 = scmp.eq.s32.totalorder %s14, 0
      %p47 = por %p45, %p46
      %p48 = scmp.ne.s32.totalorder %s34, %s35
      %p49 = scmp.eq.s32.totalorder %s15, 3
      %p50 = por %p48, %p49
      %p52 = scmp.ne.s32.totalorder %s35, %s51
      %p53 = scmp.eq.s32.totalorder %s15, 0
      %p54 = por %p52, %p53
      %s55 = ssub.s32 %s17, %s24
      %p56 = scmp.eq.s32.totalorder %s55, 0
      %s58 = sadd.s32 %s57, 1
      %s59 = scalar_select %p56, %s57, %s58
      %p62 = pneg %p56
      %p63 = scmp.eq.s32.totalorder %s9, 3
      %p64 = por %p62, %p63
      %p65 = scmp.ne.s32.totalorder %s57, %s60
      %p66 = scmp.eq.s32.totalorder %s9, 0
      %p67 = por %p65, %p66
      %p68 = scmp.ne.s32.totalorder %s57, %s60
      %p69 = scmp.eq.s32.totalorder %s14, 3
      %p70 = por %p68, %p69
      %p71 = scmp.ne.s32.totalorder %s60, %s61
      %p72 = scmp.eq.s32.totalorder %s14, 0
      %p73 = por %p71, %p72
      %p74 = scmp.ne.s32.totalorder %s60, %s61
      %p75 = scmp.eq.s32.totalorder %s15, 3
      %p76 = por %p74, %p75
      %p78 = scmp.ne.s32.totalorder %s61, %s77
      %p79 = scmp.eq.s32.totalorder %s15, 0
      %p80 = por %p78, %p79
      %s81 = ssub.s32 %s17, %s24
      %p82 = scmp.eq.s32.totalorder %s81, 0
      %s84 = sadd.s32 %s83, 1
      %s85 = scalar_select %p82, %s83, %s84
      %p88 = pneg %p82
      %p89 = scmp.eq.s32.totalorder %s9, 3
      %p90 = por %p88, %p89
      %p91 = scmp.ne.s32.totalorder %s83, %s86
      %p92 = scmp.eq.s32.totalorder %s9, 0
      %p93 = por %p91, %p92
      %p94 = scmp.ne.s32.totalorder %s83, %s86
      %p95 = scmp.eq.s32.totalorder %s14, 3
      %p96 = por %p94, %p95
      %p97 = scmp.ne.s32.totalorder %s86, %s87
      %p98 = scmp.eq.s32.totalorder %s14, 0
      %p99 = por %p97, %p98
      %p100 = scmp.ne.s32.totalorder %s86, %s87
      %p101 = scmp.eq.s32.totalorder %s15, 3
      %p102 = por %p100, %p101
      %p104 = scmp.ne.s32.totalorder %s87, %s103
      %p105 = scmp.eq.s32.totalorder %s15, 0
      %p106 = por %p104, %p105
      %s107 = ssub.s32 %s16, %s28
      %s108 = ssub.s32 %s17, %s24
      %s109 = sor.u32 %s107, %s108
      %p110 = scmp.eq.s32.totalorder %s109, 0
      %s112 = sadd.s32 %s111, 1
      %s113 = scalar_select %p110, %s111, %s112
      %p116 = pneg %p110
      %p117 = scmp.eq.s32.totalorder %s9, 3
      %p118 = por %p116, %p117
      %p119 = scmp.ne.s32.totalorder %s111, %s114
      %p120 = scmp.eq.s32.totalorder %s9, 0
      %p121 = por %p119, %p120
      %p122 = scmp.ne.s32.totalorder %s111, %s114
      %p123 = scmp.eq.s32.totalorder %s14, 3
      %p124 = por %p122, %p123
      %p125 = scmp.ne.s32.totalorder %s114, %s115
      %p126 = scmp.eq.s32.totalorder %s14, 0
      %p127 = por %p125, %p126
      %p128 = scmp.ne.s32.totalorder %s114, %s115
      %p129 = scmp.eq.s32.totalorder %s15, 3
      %p130 = por %p128, %p129
      %p132 = scmp.ne.s32.totalorder %s115, %s131
      %p133 = scmp.eq.s32.totalorder %s15, 0
      %p134 = por %p132, %p133
      %p135 = scmp.le.s32.totalorder 1, %s9
      %p136 = scmp.lt.s32.totalorder %s9, 5
      %p137 = pnand %p135, %p136
      %p138 = pneg %p137
      // Predicated region
      $region9: #{forward.4} parent=5 // pred_check
        _
      $region10: #{forward.4} parent=5 // pred_check_branch
        %140 = sbr.rel (%p137) target = $region12
      $region11: #{forward.4} parent=5 // pred_region
        %s141 = ssub.s32 %s9, 1
        // Predicated region
        $region13: #{forward.4} parent=11 // pred_check
          %p142 = pneg %p47
        $region14: #{forward.4} parent=11 // pred_check_branch
          %144 = sbr.rel (%p142) target = $region16
        $region15: #{forward.4} parent=11 // pred_region
          %p145 = scmp.lt.s32.totalorder %s18, 0
          %s146 = scalar_select %p145, %s18, 0
          %s147 = smul.addr %s146, 16
          %s148 = smul.addr %s147, 4
          %s149 = scalar_lea.vmem %s0, %s148
        $region16: #{forward.4} parent=11 // pred_fallthru
          _
      $region12: #{forward.4} parent=5 // pred_fallthru
        _
      %p150 = scmp.lt.s32.totalorder %s9, 4
      // Predicated region
      $region17: #{forward.4} parent=5 // pred_check
        %p151 = pneg %p150
      $region18: #{forward.4} parent=5 // pred_check_branch
        %153 = sbr.rel (%p151) target = $region20
      $region19: #{forward.4} parent=5 // pred_region
        // Predicated region
        $region21: #{forward.4} parent=19 // pred_check
          %p154 = pneg %p67
        $region22: #{forward.4} parent=19 // pred_check_branch
          %156 = sbr.rel (%p154) target = $region24
        $region23: #{forward.4} parent=19 // pred_region
          %s157 = sand.u32 %s57, 1
          %s158 = sand.u32 %s57, 1
          %s159 = smul.addr %s158, 4096
          %s160 = scalar_lea.vmem [#allocation2], %s159
          %s161 = smul.u32 4, %s17
          %s162 = smul.addr %s161, 4
          %s163 = scalar_lea.vmem %s1, %s162
          // Predicated region
          $region25: #{forward.4} parent=23 // pred_check
            _
          $region26: #{forward.4} parent=23 // pred_check_branch
            %165 = sbr.rel (0) target = $region28
          $region27: #{forward.4} parent=23 // pred_region
            // Predicated region
            $region29: #{forward.4} parent=27 // pred_check
              _
            $region30: #{forward.4} parent=27 // pred_check_branch
              %167 = sbr.rel (0) target = $region32
            $region31: #{forward.4} parent=27 // pred_region
              loop: start=0, step=1, limit=1
              $region33: #{forward.4} parent=31 // loop_pre_header
                _
              $region34: #{forward.4} parent=31 // loop_header
                %s169 = sphi 0, %s173
                %p170 = scmp.ge.s32.totalorder %s169, 1
                %s174 = sphi %s163, %s163
                %s175 = sphi %s160, %s160
              $region35: #{forward.4} parent=31 // loop_header_branch
                %172 = sbr.rel (%p170) target = $region39
              $region36: #{forward.4} parent=31 // loop_body
                %v176 = vld [vmem:[%s174] sm:$0xff]
                %177 = vst [vmem:[%s175] sm:$0xff] %v176
                %v178 = vld [vmem:[%s174 + $0x8] sm:$0xff]
                %179 = vst [vmem:[%s175 + $0x8] sm:$0xff] %v178
                %v180 = vld [vmem:[%s174 + $0x40] sm:$0xff]
                %181 = vst [vmem:[%s175 + $0x10] sm:$0xff] %v180
                %v182 = vld [vmem:[%s174 + $0x48] sm:$0xff]
                %183 = vst [vmem:[%s175 + $0x18] sm:$0xff] %v182
                %v184 = vld [vmem:[%s174 + $0x80] sm:$0xff]
                %185 = vst [vmem:[%s175 + $0x20] sm:$0xff] %v184
                %v186 = vld [vmem:[%s174 + $0x88] sm:$0xff]
                %187 = vst [vmem:[%s175 + $0x28] sm:$0xff] %v186
                %v188 = vld [vmem:[%s174 + $0xc0] sm:$0xff]
                %189 = vst [vmem:[%s175 + $0x30] sm:$0xff] %v188
                %v190 = vld [vmem:[%s174 + $0xc8] sm:$0xff]
                %191 = vst [vmem:[%s175 + $0x38] sm:$0xff] %v190
                %v192 = vld [vmem:[%s174 + $0x100] sm:$0xff]
                %193 = vst [vmem:[%s175 + $0x40] sm:$0xff] %v192
                %v194 = vld [vmem:[%s174 + $0x108] sm:$0xff]
                %195 = vst [vmem:[%s175 + $0x48] sm:$0xff] %v194
                %v196 = vld [vmem:[%s174 + $0x140] sm:$0xff]
                %197 = vst [vmem:[%s175 + $0x50] sm:$0xff] %v196
                %v198 = vld [vmem:[%s174 + $0x148] sm:$0xff]
                %199 = vst [vmem:[%s175 + $0x58] sm:$0xff] %v198
                %v200 = vld [vmem:[%s174 + $0x180] sm:$0xff]
                %201 = vst [vmem:[%s175 + $0x60] sm:$0xff] %v200
                %v202 = vld [vmem:[%s174 + $0x188] sm:$0xff]
                %203 = vst [vmem:[%s175 + $0x68] sm:$0xff] %v202
                %v204 = vld [vmem:[%s174 + $0x1c0] sm:$0xff]
                %205 = vst [vmem:[%s175 + $0x70] sm:$0xff] %v204
                %v206 = vld [vmem:[%s174 + $0x1c8] sm:$0xff]
                %207 = vst [vmem:[%s175 + $0x78] sm:$0xff] %v206
                %v208 = vld [vmem:[%s174 + $0x200] sm:$0xff]
                %209 = vst [vmem:[%s175 + $0x80] sm:$0xff] %v208
                %v210 = vld [vmem:[%s174 + $0x208] sm:$0xff]
                %211 = vst [vmem:[%s175 + $0x88] sm:$0xff] %v210
                %v212 = vld [vmem:[%s174 + $0x240] sm:$0xff]
                %213 = vst [vmem:[%s175 + $0x90] sm:$0xff] %v212
                %v214 = vld [vmem:[%s174 + $0x248] sm:$0xff]
                %215 = vst [vmem:[%s175 + $0x98] sm:$0xff] %v214
                %v216 = vld [vmem:[%s174 + $0x280] sm:$0xff]
                %217 = vst [vmem:[%s175 + $0xa0] sm:$0xff] %v216
                %v218 = vld [vmem:[%s174 + $0x288] sm:$0xff]
                %219 = vst [vmem:[%s175 + $0xa8] sm:$0xff] %v218
                %v220 = vld [vmem:[%s174 + $0x2c0] sm:$0xff]
                %221 = vst [vmem:[%s175 + $0xb0] sm:$0xff] %v220
                %v222 = vld [vmem:[%s174 + $0x2c8] sm:$0xff]
                %223 = vst [vmem:[%s175 + $0xb8] sm:$0xff] %v222
                %v224 = vld [vmem:[%s174 + $0x300] sm:$0xff]
                %225 = vst [vmem:[%s175 + $0xc0] sm:$0xff] %v224
                %v226 = vld [vmem:[%s174 + $0x308] sm:$0xff]
                %227 = vst [vmem:[%s175 + $0xc8] sm:$0xff] %v226
                %v228 = vld [vmem:[%s174 + $0x340] sm:$0xff]
                %229 = vst [vmem:[%s175 + $0xd0] sm:$0xff] %v228
                %v230 = vld [vmem:[%s174 + $0x348] sm:$0xff]
                %231 = vst [vmem:[%s175 + $0xd8] sm:$0xff] %v230
                %v232 = vld [vmem:[%s174 + $0x380] sm:$0xff]
                %233 = vst [vmem:[%s175 + $0xe0] sm:$0xff] %v232
                %v234 = vld [vmem:[%s174 + $0x388] sm:$0xff]
                %235 = vst [vmem:[%s175 + $0xe8] sm:$0xff] %v234
                %v236 = vld [vmem:[%s174 + $0x3c0] sm:$0xff]
                %237 = vst [vmem:[%s175 + $0xf0] sm:$0xff] %v236
                %v238 = vld [vmem:[%s174 + $0x3c8] sm:$0xff]
                %239 = vst [vmem:[%s175 + $0xf8] sm:$0xff] %v238
                %v240 = vld [vmem:[%s174 + $0x400] sm:$0xff]
                %241 = vst [vmem:[%s175 + $0x100] sm:$0xff] %v240
                %v242 = vld [vmem:[%s174 + $0x408] sm:$0xff]
                %243 = vst [vmem:[%s175 + $0x108] sm:$0xff] %v242
                %v244 = vld [vmem:[%s174 + $0x440] sm:$0xff]
                %245 = vst [vmem:[%s175 + $0x110] sm:$0xff] %v244
                %v246 = vld [vmem:[%s174 + $0x448] sm:$0xff]
                %247 = vst [vmem:[%s175 + $0x118] sm:$0xff] %v246
                %v248 = vld [vmem:[%s174 + $0x480] sm:$0xff]
                %249 = vst [vmem:[%s175 + $0x120] sm:$0xff] %v248
                %v250 = vld [vmem:[%s174 + $0x488] sm:$0xff]
                %251 = vst [vmem:[%s175 + $0x128] sm:$0xff] %v250
                %v252 = vld [vmem:[%s174 + $0x4c0] sm:$0xff]
                %253 = vst [vmem:[%s175 + $0x130] sm:$0xff] %v252
                %v254 = vld [vmem:[%s174 + $0x4c8] sm:$0xff]
                %255 = vst [vmem:[%s175 + $0x138] sm:$0xff] %v254
                %v256 = vld [vmem:[%s174 + $0x500] sm:$0xff]
                %257 = vst [vmem:[%s175 + $0x140] sm:$0xff] %v256
                %v258 = vld [vmem:[%s174 + $0x508] sm:$0xff]
                %259 = vst [vmem:[%s175 + $0x148] sm:$0xff] %v258
                %v260 = vld [vmem:[%s174 + $0x540] sm:$0xff]
                %261 = vst [vmem:[%s175 + $0x150] sm:$0xff] %v260
                %v262 = vld [vmem:[%s174 + $0x548] sm:$0xff]
                %263 = vst [vmem:[%s175 + $0x158] sm:$0xff] %v262
                %v264 = vld [vmem:[%s174 + $0x580] sm:$0xff]
                %265 = vst [vmem:[%s175 + $0x160] sm:$0xff] %v264
                %v266 = vld [vmem:[%s174 + $0x588] sm:$0xff]
                %267 = vst [vmem:[%s175 + $0x168] sm:$0xff] %v266
                %v268 = vld [vmem:[%s174 + $0x5c0] sm:$0xff]
                %269 = vst [vmem:[%s175 + $0x170] sm:$0xff] %v268
                %v270 = vld [vmem:[%s174 + $0x5c8] sm:$0xff]
                %271 = vst [vmem:[%s175 + $0x178] sm:$0xff] %v270
                %v272 = vld [vmem:[%s174 + $0x600] sm:$0xff]
                %273 = vst [vmem:[%s175 + $0x180] sm:$0xff] %v272
                %v274 = vld [vmem:[%s174 + $0x608] sm:$0xff]
                %275 = vst [vmem:[%s175 + $0x188] sm:$0xff] %v274
                %v276 = vld [vmem:[%s174 + $0x640] sm:$0xff]
                %277 = vst [vmem:[%s175 + $0x190] sm:$0xff] %v276
                %v278 = vld [vmem:[%s174 + $0x648] sm:$0xff]
                %279 = vst [vmem:[%s175 + $0x198] sm:$0xff] %v278
                %v280 = vld [vmem:[%s174 + $0x680] sm:$0xff]
                %281 = vst [vmem:[%s175 + $0x1a0] sm:$0xff] %v280
                %v282 = vld [vmem:[%s174 + $0x688] sm:$0xff]
                %283 = vst [vmem:[%s175 + $0x1a8] sm:$0xff] %v282
                %v284 = vld [vmem:[%s174 + $0x6c0] sm:$0xff]
                %285 = vst [vmem:[%s175 + $0x1b0] sm:$0xff] %v284
                %v286 = vld [vmem:[%s174 + $0x6c8] sm:$0xff]
                %287 = vst [vmem:[%s175 + $0x1b8] sm:$0xff] %v286
                %v288 = vld [vmem:[%s174 + $0x700] sm:$0xff]
                %289 = vst [vmem:[%s175 + $0x1c0] sm:$0xff] %v288
                %v290 = vld [vmem:[%s174 + $0x708] sm:$0xff]
                %291 = vst [vmem:[%s175 + $0x1c8] sm:$0xff] %v290
                %v292 = vld [vmem:[%s174 + $0x740] sm:$0xff]
                %293 = vst [vmem:[%s175 + $0x1d0] sm:$0xff] %v292
                %v294 = vld [vmem:[%s174 + $0x748] sm:$0xff]
                %295 = vst [vmem:[%s175 + $0x1d8] sm:$0xff] %v294
                %v296 = vld [vmem:[%s174 + $0x780] sm:$0xff]
                %297 = vst [vmem:[%s175 + $0x1e0] sm:$0xff] %v296
                %v298 = vld [vmem:[%s174 + $0x788] sm:$0xff]
                %299 = vst [vmem:[%s175 + $0x1e8] sm:$0xff] %v298
                %v300 = vld [vmem:[%s174 + $0x7c0] sm:$0xff]
                %301 = vst [vmem:[%s175 + $0x1f0] sm:$0xff] %v300
                %v302 = vld [vmem:[%s174 + $0x7c8] sm:$0xff]
                %303 = vst [vmem:[%s175 + $0x1f8] sm:$0xff] %v302
                %v304 = vld [vmem:[%s174 + $0x800] sm:$0xff]
                %305 = vst [vmem:[%s175 + $0x200] sm:$0xff] %v304
                %v306 = vld [vmem:[%s174 + $0x808] sm:$0xff]
                %307 = vst [vmem:[%s175 + $0x208] sm:$0xff] %v306
                %v308 = vld [vmem:[%s174 + $0x840] sm:$0xff]
                %309 = vst [vmem:[%s175 + $0x210] sm:$0xff] %v308
                %v310 = vld [vmem:[%s174 + $0x848] sm:$0xff]
                %311 = vst [vmem:[%s175 + $0x218] sm:$0xff] %v310
                %v312 = vld [vmem:[%s174 + $0x880] sm:$0xff]
                %313 = vst [vmem:[%s175 + $0x220] sm:$0xff] %v312
                %v314 = vld [vmem:[%s174 + $0x888] sm:$0xff]
                %315 = vst [vmem:[%s175 + $0x228] sm:$0xff] %v314
                %v316 = vld [vmem:[%s174 + $0x8c0] sm:$0xff]
                %317 = vst [vmem:[%s175 + $0x230] sm:$0xff] %v316
                %v318 = vld [vmem:[%s174 + $0x8c8] sm:$0xff]
                %319 = vst [vmem:[%s175 + $0x238] sm:$0xff] %v318
                %v320 = vld [vmem:[%s174 + $0x900] sm:$0xff]
                %321 = vst [vmem:[%s175 + $0x240] sm:$0xff] %v320
                %v322 = vld [vmem:[%s174 + $0x908] sm:$0xff]
                %323 = vst [vmem:[%s175 + $0x248] sm:$0xff] %v322
                %v324 = vld [vmem:[%s174 + $0x940] sm:$0xff]
                %325 = vst [vmem:[%s175 + $0x250] sm:$0xff] %v324
                %v326 = vld [vmem:[%s174 + $0x948] sm:$0xff]
                %327 = vst [vmem:[%s175 + $0x258] sm:$0xff] %v326
                %v328 = vld [vmem:[%s174 + $0x980] sm:$0xff]
                %329 = vst [vmem:[%s175 + $0x260] sm:$0xff] %v328
                %v330 = vld [vmem:[%s174 + $0x988] sm:$0xff]
                %331 = vst [vmem:[%s175 + $0x268] sm:$0xff] %v330
                %v332 = vld [vmem:[%s174 + $0x9c0] sm:$0xff]
                %333 = vst [vmem:[%s175 + $0x270] sm:$0xff] %v332
                %v334 = vld [vmem:[%s174 + $0x9c8] sm:$0xff]
                %335 = vst [vmem:[%s175 + $0x278] sm:$0xff] %v334
                %v336 = vld [vmem:[%s174 + $0xa00] sm:$0xff]
                %337 = vst [vmem:[%s175 + $0x280] sm:$0xff] %v336
                %v338 = vld [vmem:[%s174 + $0xa08] sm:$0xff]
                %339 = vst [vmem:[%s175 + $0x288] sm:$0xff] %v338
                %v340 = vld [vmem:[%s174 + $0xa40] sm:$0xff]
                %341 = vst [vmem:[%s175 + $0x290] sm:$0xff] %v340
                %v342 = vld [vmem:[%s174 + $0xa48] sm:$0xff]
                %343 = vst [vmem:[%s175 + $0x298] sm:$0xff] %v342
                %v344 = vld [vmem:[%s174 + $0xa80] sm:$0xff]
                %345 = vst [vmem:[%s175 + $0x2a0] sm:$0xff] %v344
                %v346 = vld [vmem:[%s174 + $0xa88] sm:$0xff]
                %347 = vst [vmem:[%s175 + $0x2a8] sm:$0xff] %v346
                %v348 = vld [vmem:[%s174 + $0xac0] sm:$0xff]
                %349 = vst [vmem:[%s175 + $0x2b0] sm:$0xff] %v348
                %v350 = vld [vmem:[%s174 + $0xac8] sm:$0xff]
                %351 = vst [vmem:[%s175 + $0x2b8] sm:$0xff] %v350
                %v352 = vld [vmem:[%s174 + $0xb00] sm:$0xff]
                %353 = vst [vmem:[%s175 + $0x2c0] sm:$0xff] %v352
                %v354 = vld [vmem:[%s174 + $0xb08] sm:$0xff]
                %355 = vst [vmem:[%s175 + $0x2c8] sm:$0xff] %v354
                %v356 = vld [vmem:[%s174 + $0xb40] sm:$0xff]
                %357 = vst [vmem:[%s175 + $0x2d0] sm:$0xff] %v356
                %v358 = vld [vmem:[%s174 + $0xb48] sm:$0xff]
                %359 = vst [vmem:[%s175 + $0x2d8] sm:$0xff] %v358
                %v360 = vld [vmem:[%s174 + $0xb80] sm:$0xff]
                %361 = vst [vmem:[%s175 + $0x2e0] sm:$0xff] %v360
                %v362 = vld [vmem:[%s174 + $0xb88] sm:$0xff]
                %363 = vst [vmem:[%s175 + $0x2e8] sm:$0xff] %v362
                %v364 = vld [vmem:[%s174 + $0xbc0] sm:$0xff]
                %365 = vst [vmem:[%s175 + $0x2f0] sm:$0xff] %v364
                %v366 = vld [vmem:[%s174 + $0xbc8] sm:$0xff]
                %367 = vst [vmem:[%s175 + $0x2f8] sm:$0xff] %v366
                %v368 = vld [vmem:[%s174 + $0xc00] sm:$0xff]
                %369 = vst [vmem:[%s175 + $0x300] sm:$0xff] %v368
                %v370 = vld [vmem:[%s174 + $0xc08] sm:$0xff]
                %371 = vst [vmem:[%s175 + $0x308] sm:$0xff] %v370
                %v372 = vld [vmem:[%s174 + $0xc40] sm:$0xff]
                %373 = vst [vmem:[%s175 + $0x310] sm:$0xff] %v372
                %v374 = vld [vmem:[%s174 + $0xc48] sm:$0xff]
                %375 = vst [vmem:[%s175 + $0x318] sm:$0xff] %v374
                %v376 = vld [vmem:[%s174 + $0xc80] sm:$0xff]
                %377 = vst [vmem:[%s175 + $0x320] sm:$0xff] %v376
                %v378 = vld [vmem:[%s174 + $0xc88] sm:$0xff]
                %379 = vst [vmem:[%s175 + $0x328] sm:$0xff] %v378
                %v380 = vld [vmem:[%s174 + $0xcc0] sm:$0xff]
                %381 = vst [vmem:[%s175 + $0x330] sm:$0xff] %v380
                %v382 = vld [vmem:[%s174 + $0xcc8] sm:$0xff]
                %383 = vst [vmem:[%s175 + $0x338] sm:$0xff] %v382
                %v384 = vld [vmem:[%s174 + $0xd00] sm:$0xff]
                %385 = vst [vmem:[%s175 + $0x340] sm:$0xff] %v384
                %v386 = vld [vmem:[%s174 + $0xd08] sm:$0xff]
                %387 = vst [vmem:[%s175 + $0x348] sm:$0xff] %v386
                %v388 = vld [vmem:[%s174 + $0xd40] sm:$0xff]
                %389 = vst [vmem:[%s175 + $0x350] sm:$0xff] %v388
                %v390 = vld [vmem:[%s174 + $0xd48] sm:$0xff]
                %391 = vst [vmem:[%s175 + $0x358] sm:$0xff] %v390
                %v392 = vld [vmem:[%s174 + $0xd80] sm:$0xff]
                %393 = vst [vmem:[%s175 + $0x360] sm:$0xff] %v392
                %v394 = vld [vmem:[%s174 + $0xd88] sm:$0xff]
                %395 = vst [vmem:[%s175 + $0x368] sm:$0xff] %v394
                %v396 = vld [vmem:[%s174 + $0xdc0] sm:$0xff]
                %397 = vst [vmem:[%s175 + $0x370] sm:$0xff] %v396
                %v398 = vld [vmem:[%s174 + $0xdc8] sm:$0xff]
                %399 = vst [vmem:[%s175 + $0x378] sm:$0xff] %v398
                %v400 = vld [vmem:[%s174 + $0xe00] sm:$0xff]
                %401 = vst [vmem:[%s175 + $0x380] sm:$0xff] %v400
                %v402 = vld [vmem:[%s174 + $0xe08] sm:$0xff]
                %403 = vst [vmem:[%s175 + $0x388] sm:$0xff] %v402
                %v404 = vld [vmem:[%s174 + $0xe40] sm:$0xff]
                %405 = vst [vmem:[%s175 + $0x390] sm:$0xff] %v404
                %v406 = vld [vmem:[%s174 + $0xe48] sm:$0xff]
                %407 = vst [vmem:[%s175 + $0x398] sm:$0xff] %v406
                %v408 = vld [vmem:[%s174 + $0xe80] sm:$0xff]
                %409 = vst [vmem:[%s175 + $0x3a0] sm:$0xff] %v408
                %v410 = vld [vmem:[%s174 + $0xe88] sm:$0xff]
                %411 = vst [vmem:[%s175 + $0x3a8] sm:$0xff] %v410
                %v412 = vld [vmem:[%s174 + $0xec0] sm:$0xff]
                %413 = vst [vmem:[%s175 + $0x3b0] sm:$0xff] %v412
                %v414 = vld [vmem:[%s174 + $0xec8] sm:$0xff]
                %415 = vst [vmem:[%s175 + $0x3b8] sm:$0xff] %v414
                %v416 = vld [vmem:[%s174 + $0xf00] sm:$0xff]
                %417 = vst [vmem:[%s175 + $0x3c0] sm:$0xff] %v416
                %v418 = vld [vmem:[%s174 + $0xf08] sm:$0xff]
                %419 = vst [vmem:[%s175 + $0x3c8] sm:$0xff] %v418
                %v420 = vld [vmem:[%s174 + $0xf40] sm:$0xff]
                %421 = vst [vmem:[%s175 + $0x3d0] sm:$0xff] %v420
                %v422 = vld [vmem:[%s174 + $0xf48] sm:$0xff]
                %423 = vst [vmem:[%s175 + $0x3d8] sm:$0xff] %v422
                %v424 = vld [vmem:[%s174 + $0xf80] sm:$0xff]
                %425 = vst [vmem:[%s175 + $0x3e0] sm:$0xff] %v424
                %v426 = vld [vmem:[%s174 + $0xf88] sm:$0xff]
                %427 = vst [vmem:[%s175 + $0x3e8] sm:$0xff] %v426
                %v428 = vld [vmem:[%s174 + $0xfc0] sm:$0xff]
                %429 = vst [vmem:[%s175 + $0x3f0] sm:$0xff] %v428
                %v430 = vld [vmem:[%s174 + $0xfc8] sm:$0xff]
                %431 = vst [vmem:[%s175 + $0x3f8] sm:$0xff] %v430
                %v432 = vld [vmem:[%s174 + $0x1000] sm:$0xff]
                %433 = vst [vmem:[%s175 + $0x400] sm:$0xff] %v432
                %v434 = vld [vmem:[%s174 + $0x1008] sm:$0xff]
                %435 = vst [vmem:[%s175 + $0x408] sm:$0xff] %v434
                %v436 = vld [vmem:[%s174 + $0x1040] sm:$0xff]
                %437 = vst [vmem:[%s175 + $0x410] sm:$0xff] %v436
                %v438 = vld [vmem:[%s174 + $0x1048] sm:$0xff]
                %439 = vst [vmem:[%s175 + $0x418] sm:$0xff] %v438
                %v440 = vld [vmem:[%s174 + $0x1080] sm:$0xff]
                %441 = vst [vmem:[%s175 + $0x420] sm:$0xff] %v440
                %v442 = vld [vmem:[%s174 + $0x1088] sm:$0xff]
                %443 = vst [vmem:[%s175 + $0x428] sm:$0xff] %v442
                %v444 = vld [vmem:[%s174 + $0x10c0] sm:$0xff]
                %445 = vst [vmem:[%s175 + $0x430] sm:$0xff] %v444
                %v446 = vld [vmem:[%s174 + $0x10c8] sm:$0xff]
                %447 = vst [vmem:[%s175 + $0x438] sm:$0xff] %v446
                %v448 = vld [vmem:[%s174 + $0x1100] sm:$0xff]
                %449 = vst [vmem:[%s175 + $0x440] sm:$0xff] %v448
                %v450 = vld [vmem:[%s174 + $0x1108] sm:$0xff]
                %451 = vst [vmem:[%s175 + $0x448] sm:$0xff] %v450
                %v452 = vld [vmem:[%s174 + $0x1140] sm:$0xff]
                %453 = vst [vmem:[%s175 + $0x450] sm:$0xff] %v452
                %v454 = vld [vmem:[%s174 + $0x1148] sm:$0xff]
                %455 = vst [vmem:[%s175 + $0x458] sm:$0xff] %v454
                %v456 = vld [vmem:[%s174 + $0x1180] sm:$0xff]
                %457 = vst [vmem:[%s175 + $0x460] sm:$0xff] %v456
                %v458 = vld [vmem:[%s174 + $0x1188] sm:$0xff]
                %459 = vst [vmem:[%s175 + $0x468] sm:$0xff] %v458
                %v460 = vld [vmem:[%s174 + $0x11c0] sm:$0xff]
                %461 = vst [vmem:[%s175 + $0x470] sm:$0xff] %v460
                %v462 = vld [vmem:[%s174 + $0x11c8] sm:$0xff]
                %463 = vst [vmem:[%s175 + $0x478] sm:$0xff] %v462
                %v464 = vld [vmem:[%s174 + $0x1200] sm:$0xff]
                %465 = vst [vmem:[%s175 + $0x480] sm:$0xff] %v464
                %v466 = vld [vmem:[%s174 + $0x1208] sm:$0xff]
                %467 = vst [vmem:[%s175 + $0x488] sm:$0xff] %v466
                %v468 = vld [vmem:[%s174 + $0x1240] sm:$0xff]
                %469 = vst [vmem:[%s175 + $0x490] sm:$0xff] %v468
                %v470 = vld [vmem:[%s174 + $0x1248] sm:$0xff]
                %471 = vst [vmem:[%s175 + $0x498] sm:$0xff] %v470
                %v472 = vld [vmem:[%s174 + $0x1280] sm:$0xff]
                %473 = vst [vmem:[%s175 + $0x4a0] sm:$0xff] %v472
                %v474 = vld [vmem:[%s174 + $0x1288] sm:$0xff]
                %475 = vst [vmem:[%s175 + $0x4a8] sm:$0xff] %v474
                %v476 = vld [vmem:[%s174 + $0x12c0] sm:$0xff]
                %477 = vst [vmem:[%s175 + $0x4b0] sm:$0xff] %v476
                %v478 = vld [vmem:[%s174 + $0x12c8] sm:$0xff]
                %479 = vst [vmem:[%s175 + $0x4b8] sm:$0xff] %v478
                %v480 = vld [vmem:[%s174 + $0x1300] sm:$0xff]
                %481 = vst [vmem:[%s175 + $0x4c0] sm:$0xff] %v480
                %v482 = vld [vmem:[%s174 + $0x1308] sm:$0xff]
                %483 = vst [vmem:[%s175 + $0x4c8] sm:$0xff] %v482
                %v484 = vld [vmem:[%s174 + $0x1340] sm:$0xff]
                %485 = vst [vmem:[%s175 + $0x4d0] sm:$0xff] %v484
                %v486 = vld [vmem:[%s174 + $0x1348] sm:$0xff]
                %487 = vst [vmem:[%s175 + $0x4d8] sm:$0xff] %v486
                %v488 = vld [vmem:[%s174 + $0x1380] sm:$0xff]
                %489 = vst [vmem:[%s175 + $0x4e0] sm:$0xff] %v488
                %v490 = vld [vmem:[%s174 + $0x1388] sm:$0xff]
                %491 = vst [vmem:[%s175 + $0x4e8] sm:$0xff] %v490
                %v492 = vld [vmem:[%s174 + $0x13c0] sm:$0xff]
                %493 = vst [vmem:[%s175 + $0x4f0] sm:$0xff] %v492
                %v494 = vld [vmem:[%s174 + $0x13c8] sm:$0xff]
                %495 = vst [vmem:[%s175 + $0x4f8] sm:$0xff] %v494
                %v496 = vld [vmem:[%s174 + $0x1400] sm:$0xff]
                %497 = vst [vmem:[%s175 + $0x500] sm:$0xff] %v496
                %v498 = vld [vmem:[%s174 + $0x1408] sm:$0xff]
                %499 = vst [vmem:[%s175 + $0x508] sm:$0xff] %v498
                %v500 = vld [vmem:[%s174 + $0x1440] sm:$0xff]
                %501 = vst [vmem:[%s175 + $0x510] sm:$0xff] %v500
                %v502 = vld [vmem:[%s174 + $0x1448] sm:$0xff]
                %503 = vst [vmem:[%s175 + $0x518] sm:$0xff] %v502
                %v504 = vld [vmem:[%s174 + $0x1480] sm:$0xff]
                %505 = vst [vmem:[%s175 + $0x520] sm:$0xff] %v504
                %v506 = vld [vmem:[%s174 + $0x1488] sm:$0xff]
                %507 = vst [vmem:[%s175 + $0x528] sm:$0xff] %v506
                %v508 = vld [vmem:[%s174 + $0x14c0] sm:$0xff]
                %509 = vst [vmem:[%s175 + $0x530] sm:$0xff] %v508
                %v510 = vld [vmem:[%s174 + $0x14c8] sm:$0xff]
                %511 = vst [vmem:[%s175 + $0x538] sm:$0xff] %v510
                %v512 = vld [vmem:[%s174 + $0x1500] sm:$0xff]
                %513 = vst [vmem:[%s175 + $0x540] sm:$0xff] %v512
                %v514 = vld [vmem:[%s174 + $0x1508] sm:$0xff]
                %515 = vst [vmem:[%s175 + $0x548] sm:$0xff] %v514
                %v516 = vld [vmem:[%s174 + $0x1540] sm:$0xff]
                %517 = vst [vmem:[%s175 + $0x550] sm:$0xff] %v516
                %v518 = vld [vmem:[%s174 + $0x1548] sm:$0xff]
                %519 = vst [vmem:[%s175 + $0x558] sm:$0xff] %v518
                %v520 = vld [vmem:[%s174 + $0x1580] sm:$0xff]
                %521 = vst [vmem:[%s175 + $0x560] sm:$0xff] %v520
                %v522 = vld [vmem:[%s174 + $0x1588] sm:$0xff]
                %523 = vst [vmem:[%s175 + $0x568] sm:$0xff] %v522
                %v524 = vld [vmem:[%s174 + $0x15c0] sm:$0xff]
                %525 = vst [vmem:[%s175 + $0x570] sm:$0xff] %v524
                %v526 = vld [vmem:[%s174 + $0x15c8] sm:$0xff]
                %527 = vst [vmem:[%s175 + $0x578] sm:$0xff] %v526
                %v528 = vld [vmem:[%s174 + $0x1600] sm:$0xff]
                %529 = vst [vmem:[%s175 + $0x580] sm:$0xff] %v528
                %v530 = vld [vmem:[%s174 + $0x1608] sm:$0xff]
                %531 = vst [vmem:[%s175 + $0x588] sm:$0xff] %v530
                %v532 = vld [vmem:[%s174 + $0x1640] sm:$0xff]
                %533 = vst [vmem:[%s175 + $0x590] sm:$0xff] %v532
                %v534 = vld [vmem:[%s174 + $0x1648] sm:$0xff]
                %535 = vst [vmem:[%s175 + $0x598] sm:$0xff] %v534
                %v536 = vld [vmem:[%s174 + $0x1680] sm:$0xff]
                %537 = vst [vmem:[%s175 + $0x5a0] sm:$0xff] %v536
                %v538 = vld [vmem:[%s174 + $0x1688] sm:$0xff]
                %539 = vst [vmem:[%s175 + $0x5a8] sm:$0xff] %v538
                %v540 = vld [vmem:[%s174 + $0x16c0] sm:$0xff]
                %541 = vst [vmem:[%s175 + $0x5b0] sm:$0xff] %v540
                %v542 = vld [vmem:[%s174 + $0x16c8] sm:$0xff]
                %543 = vst [vmem:[%s175 + $0x5b8] sm:$0xff] %v542
                %v544 = vld [vmem:[%s174 + $0x1700] sm:$0xff]
                %545 = vst [vmem:[%s175 + $0x5c0] sm:$0xff] %v544
                %v546 = vld [vmem:[%s174 + $0x1708] sm:$0xff]
                %547 = vst [vmem:[%s175 + $0x5c8] sm:$0xff] %v546
                %v548 = vld [vmem:[%s174 + $0x1740] sm:$0xff]
                %549 = vst [vmem:[%s175 + $0x5d0] sm:$0xff] %v548
                %v550 = vld [vmem:[%s174 + $0x1748] sm:$0xff]
                %551 = vst [vmem:[%s175 + $0x5d8] sm:$0xff] %v550
                %v552 = vld [vmem:[%s174 + $0x1780] sm:$0xff]
                %553 = vst [vmem:[%s175 + $0x5e0] sm:$0xff] %v552
                %v554 = vld [vmem:[%s174 + $0x1788] sm:$0xff]
                %555 = vst [vmem:[%s175 + $0x5e8] sm:$0xff] %v554
                %v556 = vld [vmem:[%s174 + $0x17c0] sm:$0xff]
                %557 = vst [vmem:[%s175 + $0x5f0] sm:$0xff] %v556
                %v558 = vld [vmem:[%s174 + $0x17c8] sm:$0xff]
                %559 = vst [vmem:[%s175 + $0x5f8] sm:$0xff] %v558
                %v560 = vld [vmem:[%s174 + $0x1800] sm:$0xff]
                %561 = vst [vmem:[%s175 + $0x600] sm:$0xff] %v560
                %v562 = vld [vmem:[%s174 + $0x1808] sm:$0xff]
                %563 = vst [vmem:[%s175 + $0x608] sm:$0xff] %v562
                %v564 = vld [vmem:[%s174 + $0x1840] sm:$0xff]
                %565 = vst [vmem:[%s175 + $0x610] sm:$0xff] %v564
                %v566 = vld [vmem:[%s174 + $0x1848] sm:$0xff]
                %567 = vst [vmem:[%s175 + $0x618] sm:$0xff] %v566
                %v568 = vld [vmem:[%s174 + $0x1880] sm:$0xff]
                %569 = vst [vmem:[%s175 + $0x620] sm:$0xff] %v568
                %v570 = vld [vmem:[%s174 + $0x1888] sm:$0xff]
                %571 = vst [vmem:[%s175 + $0x628] sm:$0xff] %v570
                %v572 = vld [vmem:[%s174 + $0x18c0] sm:$0xff]
                %573 = vst [vmem:[%s175 + $0x630] sm:$0xff] %v572
                %v574 = vld [vmem:[%s174 + $0x18c8] sm:$0xff]
                %575 = vst [vmem:[%s175 + $0x638] sm:$0xff] %v574
                %v576 = vld [vmem:[%s174 + $0x1900] sm:$0xff]
                %577 = vst [vmem:[%s175 + $0x640] sm:$0xff] %v576
                %v578 = vld [vmem:[%s174 + $0x1908] sm:$0xff]
                %579 = vst [vmem:[%s175 + $0x648] sm:$0xff] %v578
                %v580 = vld [vmem:[%s174 + $0x1940] sm:$0xff]
                %581 = vst [vmem:[%s175 + $0x650] sm:$0xff] %v580
                %v582 = vld [vmem:[%s174 + $0x1948] sm:$0xff]
                %583 = vst [vmem:[%s175 + $0x658] sm:$0xff] %v582
                %v584 = vld [vmem:[%s174 + $0x1980] sm:$0xff]
                %585 = vst [vmem:[%s175 + $0x660] sm:$0xff] %v584
                %v586 = vld [vmem:[%s174 + $0x1988] sm:$0xff]
                %587 = vst [vmem:[%s175 + $0x668] sm:$0xff] %v586
                %v588 = vld [vmem:[%s174 + $0x19c0] sm:$0xff]
                %589 = vst [vmem:[%s175 + $0x670] sm:$0xff] %v588
                %v590 = vld [vmem:[%s174 + $0x19c8] sm:$0xff]
                %591 = vst [vmem:[%s175 + $0x678] sm:$0xff] %v590
                %v592 = vld [vmem:[%s174 + $0x1a00] sm:$0xff]
                %593 = vst [vmem:[%s175 + $0x680] sm:$0xff] %v592
                %v594 = vld [vmem:[%s174 + $0x1a08] sm:$0xff]
                %595 = vst [vmem:[%s175 + $0x688] sm:$0xff] %v594
                %v596 = vld [vmem:[%s174 + $0x1a40] sm:$0xff]
                %597 = vst [vmem:[%s175 + $0x690] sm:$0xff] %v596
                %v598 = vld [vmem:[%s174 + $0x1a48] sm:$0xff]
                %599 = vst [vmem:[%s175 + $0x698] sm:$0xff] %v598
                %v600 = vld [vmem:[%s174 + $0x1a80] sm:$0xff]
                %601 = vst [vmem:[%s175 + $0x6a0] sm:$0xff] %v600
                %v602 = vld [vmem:[%s174 + $0x1a88] sm:$0xff]
                %603 = vst [vmem:[%s175 + $0x6a8] sm:$0xff] %v602
                %v604 = vld [vmem:[%s174 + $0x1ac0] sm:$0xff]
                %605 = vst [vmem:[%s175 + $0x6b0] sm:$0xff] %v604
                %v606 = vld [vmem:[%s174 + $0x1ac8] sm:$0xff]
                %607 = vst [vmem:[%s175 + $0x6b8] sm:$0xff] %v606
                %v608 = vld [vmem:[%s174 + $0x1b00] sm:$0xff]
                %609 = vst [vmem:[%s175 + $0x6c0] sm:$0xff] %v608
                %v610 = vld [vmem:[%s174 + $0x1b08] sm:$0xff]
                %611 = vst [vmem:[%s175 + $0x6c8] sm:$0xff] %v610
                %v612 = vld [vmem:[%s174 + $0x1b40] sm:$0xff]
                %613 = vst [vmem:[%s175 + $0x6d0] sm:$0xff] %v612
                %v614 = vld [vmem:[%s174 + $0x1b48] sm:$0xff]
                %615 = vst [vmem:[%s175 + $0x6d8] sm:$0xff] %v614
                %v616 = vld [vmem:[%s174 + $0x1b80] sm:$0xff]
                %617 = vst [vmem:[%s175 + $0x6e0] sm:$0xff] %v616
                %v618 = vld [vmem:[%s174 + $0x1b88] sm:$0xff]
                %619 = vst [vmem:[%s175 + $0x6e8] sm:$0xff] %v618
                %v620 = vld [vmem:[%s174 + $0x1bc0] sm:$0xff]
                %621 = vst [vmem:[%s175 + $0x6f0] sm:$0xff] %v620
                %v622 = vld [vmem:[%s174 + $0x1bc8] sm:$0xff]
                %623 = vst [vmem:[%s175 + $0x6f8] sm:$0xff] %v622
                %v624 = vld [vmem:[%s174 + $0x1c00] sm:$0xff]
                %625 = vst [vmem:[%s175 + $0x700] sm:$0xff] %v624
                %v626 = vld [vmem:[%s174 + $0x1c08] sm:$0xff]
                %627 = vst [vmem:[%s175 + $0x708] sm:$0xff] %v626
                %v628 = vld [vmem:[%s174 + $0x1c40] sm:$0xff]
                %629 = vst [vmem:[%s175 + $0x710] sm:$0xff] %v628
                %v630 = vld [vmem:[%s174 + $0x1c48] sm:$0xff]
                %631 = vst [vmem:[%s175 + $0x718] sm:$0xff] %v630
                %v632 = vld [vmem:[%s174 + $0x1c80] sm:$0xff]
                %633 = vst [vmem:[%s175 + $0x720] sm:$0xff] %v632
                %v634 = vld [vmem:[%s174 + $0x1c88] sm:$0xff]
                %635 = vst [vmem:[%s175 + $0x728] sm:$0xff] %v634
                %v636 = vld [vmem:[%s174 + $0x1cc0] sm:$0xff]
                %637 = vst [vmem:[%s175 + $0x730] sm:$0xff] %v636
                %v638 = vld [vmem:[%s174 + $0x1cc8] sm:$0xff]
                %639 = vst [vmem:[%s175 + $0x738] sm:$0xff] %v638
                %v640 = vld [vmem:[%s174 + $0x1d00] sm:$0xff]
                %641 = vst [vmem:[%s175 + $0x740] sm:$0xff] %v640
                %v642 = vld [vmem:[%s174 + $0x1d08] sm:$0xff]
                %643 = vst [vmem:[%s175 + $0x748] sm:$0xff] %v642
                %v644 = vld [vmem:[%s174 + $0x1d40] sm:$0xff]
                %645 = vst [vmem:[%s175 + $0x750] sm:$0xff] %v644
                %v646 = vld [vmem:[%s174 + $0x1d48] sm:$0xff]
                %647 = vst [vmem:[%s175 + $0x758] sm:$0xff] %v646
                %v648 = vld [vmem:[%s174 + $0x1d80] sm:$0xff]
                %649 = vst [vmem:[%s175 + $0x760] sm:$0xff] %v648
                %v650 = vld [vmem:[%s174 + $0x1d88] sm:$0xff]
                %651 = vst [vmem:[%s175 + $0x768] sm:$0xff] %v650
                %v652 = vld [vmem:[%s174 + $0x1dc0] sm:$0xff]
                %653 = vst [vmem:[%s175 + $0x770] sm:$0xff] %v652
                %v654 = vld [vmem:[%s174 + $0x1dc8] sm:$0xff]
                %655 = vst [vmem:[%s175 + $0x778] sm:$0xff] %v654
                %v656 = vld [vmem:[%s174 + $0x1e00] sm:$0xff]
                %657 = vst [vmem:[%s175 + $0x780] sm:$0xff] %v656
                %v658 = vld [vmem:[%s174 + $0x1e08] sm:$0xff]
                %659 = vst [vmem:[%s175 + $0x788] sm:$0xff] %v658
                %v660 = vld [vmem:[%s174 + $0x1e40] sm:$0xff]
                %661 = vst [vmem:[%s175 + $0x790] sm:$0xff] %v660
                %v662 = vld [vmem:[%s174 + $0x1e48] sm:$0xff]
                %663 = vst [vmem:[%s175 + $0x798] sm:$0xff] %v662
                %v664 = vld [vmem:[%s174 + $0x1e80] sm:$0xff]
                %665 = vst [vmem:[%s175 + $0x7a0] sm:$0xff] %v664
                %v666 = vld [vmem:[%s174 + $0x1e88] sm:$0xff]
                %667 = vst [vmem:[%s175 + $0x7a8] sm:$0xff] %v666
                %v668 = vld [vmem:[%s174 + $0x1ec0] sm:$0xff]
                %669 = vst [vmem:[%s175 + $0x7b0] sm:$0xff] %v668
                %v670 = vld [vmem:[%s174 + $0x1ec8] sm:$0xff]
                %671 = vst [vmem:[%s175 + $0x7b8] sm:$0xff] %v670
                %v672 = vld [vmem:[%s174 + $0x1f00] sm:$0xff]
                %673 = vst [vmem:[%s175 + $0x7c0] sm:$0xff] %v672
                %v674 = vld [vmem:[%s174 + $0x1f08] sm:$0xff]
                %675 = vst [vmem:[%s175 + $0x7c8] sm:$0xff] %v674
                %v676 = vld [vmem:[%s174 + $0x1f40] sm:$0xff]
                %677 = vst [vmem:[%s175 + $0x7d0] sm:$0xff] %v676
                %v678 = vld [vmem:[%s174 + $0x1f48] sm:$0xff]
                %679 = vst [vmem:[%s175 + $0x7d8] sm:$0xff] %v678
                %v680 = vld [vmem:[%s174 + $0x1f80] sm:$0xff]
                %681 = vst [vmem:[%s175 + $0x7e0] sm:$0xff] %v680
                %v682 = vld [vmem:[%s174 + $0x1f88] sm:$0xff]
                %683 = vst [vmem:[%s175 + $0x7e8] sm:$0xff] %v682
                %v684 = vld [vmem:[%s174 + $0x1fc0] sm:$0xff]
                %685 = vst [vmem:[%s175 + $0x7f0] sm:$0xff] %v684
                %v686 = vld [vmem:[%s174 + $0x1fc8] sm:$0xff]
                %687 = vst [vmem:[%s175 + $0x7f8] sm:$0xff] %v686
                %v688 = vld [vmem:[%s174 + $0x2000] sm:$0xff]
                %689 = vst [vmem:[%s175 + $0x800] sm:$0xff] %v688
                %v690 = vld [vmem:[%s174 + $0x2008] sm:$0xff]
                %691 = vst [vmem:[%s175 + $0x808] sm:$0xff] %v690
                %v692 = vld [vmem:[%s174 + $0x2040] sm:$0xff]
                %693 = vst [vmem:[%s175 + $0x810] sm:$0xff] %v692
                %v694 = vld [vmem:[%s174 + $0x2048] sm:$0xff]
                %695 = vst [vmem:[%s175 + $0x818] sm:$0xff] %v694
                %v696 = vld [vmem:[%s174 + $0x2080] sm:$0xff]
                %697 = vst [vmem:[%s175 + $0x820] sm:$0xff] %v696
                %v698 = vld [vmem:[%s174 + $0x2088] sm:$0xff]
                %699 = vst [vmem:[%s175 + $0x828] sm:$0xff] %v698
                %v700 = vld [vmem:[%s174 + $0x20c0] sm:$0xff]
                %701 = vst [vmem:[%s175 + $0x830] sm:$0xff] %v700
                %v702 = vld [vmem:[%s174 + $0x20c8] sm:$0xff]
                %703 = vst [vmem:[%s175 + $0x838] sm:$0xff] %v702
                %v704 = vld [vmem:[%s174 + $0x2100] sm:$0xff]
                %705 = vst [vmem:[%s175 + $0x840] sm:$0xff] %v704
                %v706 = vld [vmem:[%s174 + $0x2108] sm:$0xff]
                %707 = vst [vmem:[%s175 + $0x848] sm:$0xff] %v706
                %v708 = vld [vmem:[%s174 + $0x2140] sm:$0xff]
                %709 = vst [vmem:[%s175 + $0x850] sm:$0xff] %v708
                %v710 = vld [vmem:[%s174 + $0x2148] sm:$0xff]
                %711 = vst [vmem:[%s175 + $0x858] sm:$0xff] %v710
                %v712 = vld [vmem:[%s174 + $0x2180] sm:$0xff]
                %713 = vst [vmem:[%s175 + $0x860] sm:$0xff] %v712
                %v714 = vld [vmem:[%s174 + $0x2188] sm:$0xff]
                %715 = vst [vmem:[%s175 + $0x868] sm:$0xff] %v714
                %v716 = vld [vmem:[%s174 + $0x21c0] sm:$0xff]
                %717 = vst [vmem:[%s175 + $0x870] sm:$0xff] %v716
                %v718 = vld [vmem:[%s174 + $0x21c8] sm:$0xff]
                %719 = vst [vmem:[%s175 + $0x878] sm:$0xff] %v718
                %v720 = vld [vmem:[%s174 + $0x2200] sm:$0xff]
                %721 = vst [vmem:[%s175 + $0x880] sm:$0xff] %v720
                %v722 = vld [vmem:[%s174 + $0x2208] sm:$0xff]
                %723 = vst [vmem:[%s175 + $0x888] sm:$0xff] %v722
                %v724 = vld [vmem:[%s174 + $0x2240] sm:$0xff]
                %725 = vst [vmem:[%s175 + $0x890] sm:$0xff] %v724
                %v726 = vld [vmem:[%s174 + $0x2248] sm:$0xff]
                %727 = vst [vmem:[%s175 + $0x898] sm:$0xff] %v726
                %v728 = vld [vmem:[%s174 + $0x2280] sm:$0xff]
                %729 = vst [vmem:[%s175 + $0x8a0] sm:$0xff] %v728
                %v730 = vld [vmem:[%s174 + $0x2288] sm:$0xff]
                %731 = vst [vmem:[%s175 + $0x8a8] sm:$0xff] %v730
                %v732 = vld [vmem:[%s174 + $0x22c0] sm:$0xff]
                %733 = vst [vmem:[%s175 + $0x8b0] sm:$0xff] %v732
                %v734 = vld [vmem:[%s174 + $0x22c8] sm:$0xff]
                %735 = vst [vmem:[%s175 + $0x8b8] sm:$0xff] %v734
                %v736 = vld [vmem:[%s174 + $0x2300] sm:$0xff]
                %737 = vst [vmem:[%s175 + $0x8c0] sm:$0xff] %v736
                %v738 = vld [vmem:[%s174 + $0x2308] sm:$0xff]
                %739 = vst [vmem:[%s175 + $0x8c8] sm:$0xff] %v738
                %v740 = vld [vmem:[%s174 + $0x2340] sm:$0xff]
                %741 = vst [vmem:[%s175 + $0x8d0] sm:$0xff] %v740
                %v742 = vld [vmem:[%s174 + $0x2348] sm:$0xff]
                %743 = vst [vmem:[%s175 + $0x8d8] sm:$0xff] %v742
                %v744 = vld [vmem:[%s174 + $0x2380] sm:$0xff]
                %745 = vst [vmem:[%s175 + $0x8e0] sm:$0xff] %v744
                %v746 = vld [vmem:[%s174 + $0x2388] sm:$0xff]
                %747 = vst [vmem:[%s175 + $0x8e8] sm:$0xff] %v746
                %v748 = vld [vmem:[%s174 + $0x23c0] sm:$0xff]
                %749 = vst [vmem:[%s175 + $0x8f0] sm:$0xff] %v748
                %v750 = vld [vmem:[%s174 + $0x23c8] sm:$0xff]
                %751 = vst [vmem:[%s175 + $0x8f8] sm:$0xff] %v750
                %v752 = vld [vmem:[%s174 + $0x2400] sm:$0xff]
                %753 = vst [vmem:[%s175 + $0x900] sm:$0xff] %v752
                %v754 = vld [vmem:[%s174 + $0x2408] sm:$0xff]
                %755 = vst [vmem:[%s175 + $0x908] sm:$0xff] %v754
                %v756 = vld [vmem:[%s174 + $0x2440] sm:$0xff]
                %757 = vst [vmem:[%s175 + $0x910] sm:$0xff] %v756
                %v758 = vld [vmem:[%s174 + $0x2448] sm:$0xff]
                %759 = vst [vmem:[%s175 + $0x918] sm:$0xff] %v758
                %v760 = vld [vmem:[%s174 + $0x2480] sm:$0xff]
                %761 = vst [vmem:[%s175 + $0x920] sm:$0xff] %v760
                %v762 = vld [vmem:[%s174 + $0x2488] sm:$0xff]
                %763 = vst [vmem:[%s175 + $0x928] sm:$0xff] %v762
                %v764 = vld [vmem:[%s174 + $0x24c0] sm:$0xff]
                %765 = vst [vmem:[%s175 + $0x930] sm:$0xff] %v764
                %v766 = vld [vmem:[%s174 + $0x24c8] sm:$0xff]
                %767 = vst [vmem:[%s175 + $0x938] sm:$0xff] %v766
                %v768 = vld [vmem:[%s174 + $0x2500] sm:$0xff]
                %769 = vst [vmem:[%s175 + $0x940] sm:$0xff] %v768
                %v770 = vld [vmem:[%s174 + $0x2508] sm:$0xff]
                %771 = vst [vmem:[%s175 + $0x948] sm:$0xff] %v770
                %v772 = vld [vmem:[%s174 + $0x2540] sm:$0xff]
                %773 = vst [vmem:[%s175 + $0x950] sm:$0xff] %v772
                %v774 = vld [vmem:[%s174 + $0x2548] sm:$0xff]
                %775 = vst [vmem:[%s175 + $0x958] sm:$0xff] %v774
                %v776 = vld [vmem:[%s174 + $0x2580] sm:$0xff]
                %777 = vst [vmem:[%s175 + $0x960] sm:$0xff] %v776
                %v778 = vld [vmem:[%s174 + $0x2588] sm:$0xff]
                %779 = vst [vmem:[%s175 + $0x968] sm:$0xff] %v778
                %v780 = vld [vmem:[%s174 + $0x25c0] sm:$0xff]
                %781 = vst [vmem:[%s175 + $0x970] sm:$0xff] %v780
                %v782 = vld [vmem:[%s174 + $0x25c8] sm:$0xff]
                %783 = vst [vmem:[%s175 + $0x978] sm:$0xff] %v782
                %v784 = vld [vmem:[%s174 + $0x2600] sm:$0xff]
                %785 = vst [vmem:[%s175 + $0x980] sm:$0xff] %v784
                %v786 = vld [vmem:[%s174 + $0x2608] sm:$0xff]
                %787 = vst [vmem:[%s175 + $0x988] sm:$0xff] %v786
                %v788 = vld [vmem:[%s174 + $0x2640] sm:$0xff]
                %789 = vst [vmem:[%s175 + $0x990] sm:$0xff] %v788
                %v790 = vld [vmem:[%s174 + $0x2648] sm:$0xff]
                %791 = vst [vmem:[%s175 + $0x998] sm:$0xff] %v790
                %v792 = vld [vmem:[%s174 + $0x2680] sm:$0xff]
                %793 = vst [vmem:[%s175 + $0x9a0] sm:$0xff] %v792
                %v794 = vld [vmem:[%s174 + $0x2688] sm:$0xff]
                %795 = vst [vmem:[%s175 + $0x9a8] sm:$0xff] %v794
                %v796 = vld [vmem:[%s174 + $0x26c0] sm:$0xff]
                %797 = vst [vmem:[%s175 + $0x9b0] sm:$0xff] %v796
                %v798 = vld [vmem:[%s174 + $0x26c8] sm:$0xff]
                %799 = vst [vmem:[%s175 + $0x9b8] sm:$0xff] %v798
                %v800 = vld [vmem:[%s174 + $0x2700] sm:$0xff]
                %801 = vst [vmem:[%s175 + $0x9c0] sm:$0xff] %v800
                %v802 = vld [vmem:[%s174 + $0x2708] sm:$0xff]
                %803 = vst [vmem:[%s175 + $0x9c8] sm:$0xff] %v802
                %v804 = vld [vmem:[%s174 + $0x2740] sm:$0xff]
                %805 = vst [vmem:[%s175 + $0x9d0] sm:$0xff] %v804
                %v806 = vld [vmem:[%s174 + $0x2748] sm:$0xff]
                %807 = vst [vmem:[%s175 + $0x9d8] sm:$0xff] %v806
                %v808 = vld [vmem:[%s174 + $0x2780] sm:$0xff]
                %809 = vst [vmem:[%s175 + $0x9e0] sm:$0xff] %v808
                %v810 = vld [vmem:[%s174 + $0x2788] sm:$0xff]
                %811 = vst [vmem:[%s175 + $0x9e8] sm:$0xff] %v810
                %v812 = vld [vmem:[%s174 + $0x27c0] sm:$0xff]
                %813 = vst [vmem:[%s175 + $0x9f0] sm:$0xff] %v812
                %v814 = vld [vmem:[%s174 + $0x27c8] sm:$0xff]
                %815 = vst [vmem:[%s175 + $0x9f8] sm:$0xff] %v814
                %v816 = vld [vmem:[%s174 + $0x2800] sm:$0xff]
                %817 = vst [vmem:[%s175 + $0xa00] sm:$0xff] %v816
                %v818 = vld [vmem:[%s174 + $0x2808] sm:$0xff]
                %819 = vst [vmem:[%s175 + $0xa08] sm:$0xff] %v818
                %v820 = vld [vmem:[%s174 + $0x2840] sm:$0xff]
                %821 = vst [vmem:[%s175 + $0xa10] sm:$0xff] %v820
                %v822 = vld [vmem:[%s174 + $0x2848] sm:$0xff]
                %823 = vst [vmem:[%s175 + $0xa18] sm:$0xff] %v822
                %v824 = vld [vmem:[%s174 + $0x2880] sm:$0xff]
                %825 = vst [vmem:[%s175 + $0xa20] sm:$0xff] %v824
                %v826 = vld [vmem:[%s174 + $0x2888] sm:$0xff]
                %827 = vst [vmem:[%s175 + $0xa28] sm:$0xff] %v826
                %v828 = vld [vmem:[%s174 + $0x28c0] sm:$0xff]
                %829 = vst [vmem:[%s175 + $0xa30] sm:$0xff] %v828
                %v830 = vld [vmem:[%s174 + $0x28c8] sm:$0xff]
                %831 = vst [vmem:[%s175 + $0xa38] sm:$0xff] %v830
                %v832 = vld [vmem:[%s174 + $0x2900] sm:$0xff]
                %833 = vst [vmem:[%s175 + $0xa40] sm:$0xff] %v832
                %v834 = vld [vmem:[%s174 + $0x2908] sm:$0xff]
                %835 = vst [vmem:[%s175 + $0xa48] sm:$0xff] %v834
                %v836 = vld [vmem:[%s174 + $0x2940] sm:$0xff]
                %837 = vst [vmem:[%s175 + $0xa50] sm:$0xff] %v836
                %v838 = vld [vmem:[%s174 + $0x2948] sm:$0xff]
                %839 = vst [vmem:[%s175 + $0xa58] sm:$0xff] %v838
                %v840 = vld [vmem:[%s174 + $0x2980] sm:$0xff]
                %841 = vst [vmem:[%s175 + $0xa60] sm:$0xff] %v840
                %v842 = vld [vmem:[%s174 + $0x2988] sm:$0xff]
                %843 = vst [vmem:[%s175 + $0xa68] sm:$0xff] %v842
                %v844 = vld [vmem:[%s174 + $0x29c0] sm:$0xff]
                %845 = vst [vmem:[%s175 + $0xa70] sm:$0xff] %v844
                %v846 = vld [vmem:[%s174 + $0x29c8] sm:$0xff]
                %847 = vst [vmem:[%s175 + $0xa78] sm:$0xff] %v846
                %v848 = vld [vmem:[%s174 + $0x2a00] sm:$0xff]
                %849 = vst [vmem:[%s175 + $0xa80] sm:$0xff] %v848
                %v850 = vld [vmem:[%s174 + $0x2a08] sm:$0xff]
                %851 = vst [vmem:[%s175 + $0xa88] sm:$0xff] %v850
                %v852 = vld [vmem:[%s174 + $0x2a40] sm:$0xff]
                %853 = vst [vmem:[%s175 + $0xa90] sm:$0xff] %v852
                %v854 = vld [vmem:[%s174 + $0x2a48] sm:$0xff]
                %855 = vst [vmem:[%s175 + $0xa98] sm:$0xff] %v854
                %v856 = vld [vmem:[%s174 + $0x2a80] sm:$0xff]
                %857 = vst [vmem:[%s175 + $0xaa0] sm:$0xff] %v856
                %v858 = vld [vmem:[%s174 + $0x2a88] sm:$0xff]
                %859 = vst [vmem:[%s175 + $0xaa8] sm:$0xff] %v858
                %v860 = vld [vmem:[%s174 + $0x2ac0] sm:$0xff]
                %861 = vst [vmem:[%s175 + $0xab0] sm:$0xff] %v860
                %v862 = vld [vmem:[%s174 + $0x2ac8] sm:$0xff]
                %863 = vst [vmem:[%s175 + $0xab8] sm:$0xff] %v862
                %v864 = vld [vmem:[%s174 + $0x2b00] sm:$0xff]
                %865 = vst [vmem:[%s175 + $0xac0] sm:$0xff] %v864
                %v866 = vld [vmem:[%s174 + $0x2b08] sm:$0xff]
                %867 = vst [vmem:[%s175 + $0xac8] sm:$0xff] %v866
                %v868 = vld [vmem:[%s174 + $0x2b40] sm:$0xff]
                %869 = vst [vmem:[%s175 + $0xad0] sm:$0xff] %v868
                %v870 = vld [vmem:[%s174 + $0x2b48] sm:$0xff]
                %871 = vst [vmem:[%s175 + $0xad8] sm:$0xff] %v870
                %v872 = vld [vmem:[%s174 + $0x2b80] sm:$0xff]
                %873 = vst [vmem:[%s175 + $0xae0] sm:$0xff] %v872
                %v874 = vld [vmem:[%s174 + $0x2b88] sm:$0xff]
                %875 = vst [vmem:[%s175 + $0xae8] sm:$0xff] %v874
                %v876 = vld [vmem:[%s174 + $0x2bc0] sm:$0xff]
                %877 = vst [vmem:[%s175 + $0xaf0] sm:$0xff] %v876
                %v878 = vld [vmem:[%s174 + $0x2bc8] sm:$0xff]
                %879 = vst [vmem:[%s175 + $0xaf8] sm:$0xff] %v878
                %v880 = vld [vmem:[%s174 + $0x2c00] sm:$0xff]
                %881 = vst [vmem:[%s175 + $0xb00] sm:$0xff] %v880
                %v882 = vld [vmem:[%s174 + $0x2c08] sm:$0xff]
                %883 = vst [vmem:[%s175 + $0xb08] sm:$0xff] %v882
                %v884 = vld [vmem:[%s174 + $0x2c40] sm:$0xff]
                %885 = vst [vmem:[%s175 + $0xb10] sm:$0xff] %v884
                %v886 = vld [vmem:[%s174 + $0x2c48] sm:$0xff]
                %887 = vst [vmem:[%s175 + $0xb18] sm:$0xff] %v886
                %v888 = vld [vmem:[%s174 + $0x2c80] sm:$0xff]
                %889 = vst [vmem:[%s175 + $0xb20] sm:$0xff] %v888
                %v890 = vld [vmem:[%s174 + $0x2c88] sm:$0xff]
                %891 = vst [vmem:[%s175 + $0xb28] sm:$0xff] %v890
                %v892 = vld [vmem:[%s174 + $0x2cc0] sm:$0xff]
                %893 = vst [vmem:[%s175 + $0xb30] sm:$0xff] %v892
                %v894 = vld [vmem:[%s174 + $0x2cc8] sm:$0xff]
                %895 = vst [vmem:[%s175 + $0xb38] sm:$0xff] %v894
                %v896 = vld [vmem:[%s174 + $0x2d00] sm:$0xff]
                %897 = vst [vmem:[%s175 + $0xb40] sm:$0xff] %v896
                %v898 = vld [vmem:[%s174 + $0x2d08] sm:$0xff]
                %899 = vst [vmem:[%s175 + $0xb48] sm:$0xff] %v898
                %v900 = vld [vmem:[%s174 + $0x2d40] sm:$0xff]
                %901 = vst [vmem:[%s175 + $0xb50] sm:$0xff] %v900
                %v902 = vld [vmem:[%s174 + $0x2d48] sm:$0xff]
                %903 = vst [vmem:[%s175 + $0xb58] sm:$0xff] %v902
                %v904 = vld [vmem:[%s174 + $0x2d80] sm:$0xff]
                %905 = vst [vmem:[%s175 + $0xb60] sm:$0xff] %v904
                %v906 = vld [vmem:[%s174 + $0x2d88] sm:$0xff]
                %907 = vst [vmem:[%s175 + $0xb68] sm:$0xff] %v906
                %v908 = vld [vmem:[%s174 + $0x2dc0] sm:$0xff]
                %909 = vst [vmem:[%s175 + $0xb70] sm:$0xff] %v908
                %v910 = vld [vmem:[%s174 + $0x2dc8] sm:$0xff]
                %911 = vst [vmem:[%s175 + $0xb78] sm:$0xff] %v910
                %v912 = vld [vmem:[%s174 + $0x2e00] sm:$0xff]
                %913 = vst [vmem:[%s175 + $0xb80] sm:$0xff] %v912
                %v914 = vld [vmem:[%s174 + $0x2e08] sm:$0xff]
                %915 = vst [vmem:[%s175 + $0xb88] sm:$0xff] %v914
                %v916 = vld [vmem:[%s174 + $0x2e40] sm:$0xff]
                %917 = vst [vmem:[%s175 + $0xb90] sm:$0xff] %v916
                %v918 = vld [vmem:[%s174 + $0x2e48] sm:$0xff]
                %919 = vst [vmem:[%s175 + $0xb98] sm:$0xff] %v918
                %v920 = vld [vmem:[%s174 + $0x2e80] sm:$0xff]
                %921 = vst [vmem:[%s175 + $0xba0] sm:$0xff] %v920
                %v922 = vld [vmem:[%s174 + $0x2e88] sm:$0xff]
                %923 = vst [vmem:[%s175 + $0xba8] sm:$0xff] %v922
                %v924 = vld [vmem:[%s174 + $0x2ec0] sm:$0xff]
                %925 = vst [vmem:[%s175 + $0xbb0] sm:$0xff] %v924
                %v926 = vld [vmem:[%s174 + $0x2ec8] sm:$0xff]
                %927 = vst [vmem:[%s175 + $0xbb8] sm:$0xff] %v926
                %v928 = vld [vmem:[%s174 + $0x2f00] sm:$0xff]
                %929 = vst [vmem:[%s175 + $0xbc0] sm:$0xff] %v928
                %v930 = vld [vmem:[%s174 + $0x2f08] sm:$0xff]
                %931 = vst [vmem:[%s175 + $0xbc8] sm:$0xff] %v930
                %v932 = vld [vmem:[%s174 + $0x2f40] sm:$0xff]
                %933 = vst [vmem:[%s175 + $0xbd0] sm:$0xff] %v932
                %v934 = vld [vmem:[%s174 + $0x2f48] sm:$0xff]
                %935 = vst [vmem:[%s175 + $0xbd8] sm:$0xff] %v934
                %v936 = vld [vmem:[%s174 + $0x2f80] sm:$0xff]
                %937 = vst [vmem:[%s175 + $0xbe0] sm:$0xff] %v936
                %v938 = vld [vmem:[%s174 + $0x2f88] sm:$0xff]
                %939 = vst [vmem:[%s175 + $0xbe8] sm:$0xff] %v938
                %v940 = vld [vmem:[%s174 + $0x2fc0] sm:$0xff]
                %941 = vst [vmem:[%s175 + $0xbf0] sm:$0xff] %v940
                %v942 = vld [vmem:[%s174 + $0x2fc8] sm:$0xff]
                %943 = vst [vmem:[%s175 + $0xbf8] sm:$0xff] %v942
                %v944 = vld [vmem:[%s174 + $0x3000] sm:$0xff]
                %945 = vst [vmem:[%s175 + $0xc00] sm:$0xff] %v944
                %v946 = vld [vmem:[%s174 + $0x3008] sm:$0xff]
                %947 = vst [vmem:[%s175 + $0xc08] sm:$0xff] %v946
                %v948 = vld [vmem:[%s174 + $0x3040] sm:$0xff]
                %949 = vst [vmem:[%s175 + $0xc10] sm:$0xff] %v948
                %v950 = vld [vmem:[%s174 + $0x3048] sm:$0xff]
                %951 = vst [vmem:[%s175 + $0xc18] sm:$0xff] %v950
                %v952 = vld [vmem:[%s174 + $0x3080] sm:$0xff]
                %953 = vst [vmem:[%s175 + $0xc20] sm:$0xff] %v952
                %v954 = vld [vmem:[%s174 + $0x3088] sm:$0xff]
                %955 = vst [vmem:[%s175 + $0xc28] sm:$0xff] %v954
                %v956 = vld [vmem:[%s174 + $0x30c0] sm:$0xff]
                %957 = vst [vmem:[%s175 + $0xc30] sm:$0xff] %v956
                %v958 = vld [vmem:[%s174 + $0x30c8] sm:$0xff]
                %959 = vst [vmem:[%s175 + $0xc38] sm:$0xff] %v958
                %v960 = vld [vmem:[%s174 + $0x3100] sm:$0xff]
                %961 = vst [vmem:[%s175 + $0xc40] sm:$0xff] %v960
                %v962 = vld [vmem:[%s174 + $0x3108] sm:$0xff]
                %963 = vst [vmem:[%s175 + $0xc48] sm:$0xff] %v962
                %v964 = vld [vmem:[%s174 + $0x3140] sm:$0xff]
                %965 = vst [vmem:[%s175 + $0xc50] sm:$0xff] %v964
                %v966 = vld [vmem:[%s174 + $0x3148] sm:$0xff]
                %967 = vst [vmem:[%s175 + $0xc58] sm:$0xff] %v966
                %v968 = vld [vmem:[%s174 + $0x3180] sm:$0xff]
                %969 = vst [vmem:[%s175 + $0xc60] sm:$0xff] %v968
                %v970 = vld [vmem:[%s174 + $0x3188] sm:$0xff]
                %971 = vst [vmem:[%s175 + $0xc68] sm:$0xff] %v970
                %v972 = vld [vmem:[%s174 + $0x31c0] sm:$0xff]
                %973 = vst [vmem:[%s175 + $0xc70] sm:$0xff] %v972
                %v974 = vld [vmem:[%s174 + $0x31c8] sm:$0xff]
                %975 = vst [vmem:[%s175 + $0xc78] sm:$0xff] %v974
                %v976 = vld [vmem:[%s174 + $0x3200] sm:$0xff]
                %977 = vst [vmem:[%s175 + $0xc80] sm:$0xff] %v976
                %v978 = vld [vmem:[%s174 + $0x3208] sm:$0xff]
                %979 = vst [vmem:[%s175 + $0xc88] sm:$0xff] %v978
                %v980 = vld [vmem:[%s174 + $0x3240] sm:$0xff]
                %981 = vst [vmem:[%s175 + $0xc90] sm:$0xff] %v980
                %v982 = vld [vmem:[%s174 + $0x3248] sm:$0xff]
                %983 = vst [vmem:[%s175 + $0xc98] sm:$0xff] %v982
                %v984 = vld [vmem:[%s174 + $0x3280] sm:$0xff]
                %985 = vst [vmem:[%s175 + $0xca0] sm:$0xff] %v984
                %v986 = vld [vmem:[%s174 + $0x3288] sm:$0xff]
                %987 = vst [vmem:[%s175 + $0xca8] sm:$0xff] %v986
                %v988 = vld [vmem:[%s174 + $0x32c0] sm:$0xff]
                %989 = vst [vmem:[%s175 + $0xcb0] sm:$0xff] %v988
                %v990 = vld [vmem:[%s174 + $0x32c8] sm:$0xff]
                %991 = vst [vmem:[%s175 + $0xcb8] sm:$0xff] %v990
                %v992 = vld [vmem:[%s174 + $0x3300] sm:$0xff]
                %993 = vst [vmem:[%s175 + $0xcc0] sm:$0xff] %v992
                %v994 = vld [vmem:[%s174 + $0x3308] sm:$0xff]
                %995 = vst [vmem:[%s175 + $0xcc8] sm:$0xff] %v994
                %v996 = vld [vmem:[%s174 + $0x3340] sm:$0xff]
                %997 = vst [vmem:[%s175 + $0xcd0] sm:$0xff] %v996
                %v998 = vld [vmem:[%s174 + $0x3348] sm:$0xff]
                %999 = vst [vmem:[%s175 + $0xcd8] sm:$0xff] %v998
                %v1000 = vld [vmem:[%s174 + $0x3380] sm:$0xff]
                %1001 = vst [vmem:[%s175 + $0xce0] sm:$0xff] %v1000
                %v1002 = vld [vmem:[%s174 + $0x3388] sm:$0xff]
                %1003 = vst [vmem:[%s175 + $0xce8] sm:$0xff] %v1002
                %v1004 = vld [vmem:[%s174 + $0x33c0] sm:$0xff]
                %1005 = vst [vmem:[%s175 + $0xcf0] sm:$0xff] %v1004
                %v1006 = vld [vmem:[%s174 + $0x33c8] sm:$0xff]
                %1007 = vst [vmem:[%s175 + $0xcf8] sm:$0xff] %v1006
                %v1008 = vld [vmem:[%s174 + $0x3400] sm:$0xff]
                %1009 = vst [vmem:[%s175 + $0xd00] sm:$0xff] %v1008
                %v1010 = vld [vmem:[%s174 + $0x3408] sm:$0xff]
                %1011 = vst [vmem:[%s175 + $0xd08] sm:$0xff] %v1010
                %v1012 = vld [vmem:[%s174 + $0x3440] sm:$0xff]
                %1013 = vst [vmem:[%s175 + $0xd10] sm:$0xff] %v1012
                %v1014 = vld [vmem:[%s174 + $0x3448] sm:$0xff]
                %1015 = vst [vmem:[%s175 + $0xd18] sm:$0xff] %v1014
                %v1016 = vld [vmem:[%s174 + $0x3480] sm:$0xff]
                %1017 = vst [vmem:[%s175 + $0xd20] sm:$0xff] %v1016
                %v1018 = vld [vmem:[%s174 + $0x3488] sm:$0xff]
                %1019 = vst [vmem:[%s175 + $0xd28] sm:$0xff] %v1018
                %v1020 = vld [vmem:[%s174 + $0x34c0] sm:$0xff]
                %1021 = vst [vmem:[%s175 + $0xd30] sm:$0xff] %v1020
                %v1022 = vld [vmem:[%s174 + $0x34c8] sm:$0xff]
                %1023 = vst [vmem:[%s175 + $0xd38] sm:$0xff] %v1022
                %v1024 = vld [vmem:[%s174 + $0x3500] sm:$0xff]
                %1025 = vst [vmem:[%s175 + $0xd40] sm:$0xff] %v1024
                %v1026 = vld [vmem:[%s174 + $0x3508] sm:$0xff]
                %1027 = vst [vmem:[%s175 + $0xd48] sm:$0xff] %v1026
                %v1028 = vld [vmem:[%s174 + $0x3540] sm:$0xff]
                %1029 = vst [vmem:[%s175 + $0xd50] sm:$0xff] %v1028
                %v1030 = vld [vmem:[%s174 + $0x3548] sm:$0xff]
                %1031 = vst [vmem:[%s175 + $0xd58] sm:$0xff] %v1030
                %v1032 = vld [vmem:[%s174 + $0x3580] sm:$0xff]
                %1033 = vst [vmem:[%s175 + $0xd60] sm:$0xff] %v1032
                %v1034 = vld [vmem:[%s174 + $0x3588] sm:$0xff]
                %1035 = vst [vmem:[%s175 + $0xd68] sm:$0xff] %v1034
                %v1036 = vld [vmem:[%s174 + $0x35c0] sm:$0xff]
                %1037 = vst [vmem:[%s175 + $0xd70] sm:$0xff] %v1036
                %v1038 = vld [vmem:[%s174 + $0x35c8] sm:$0xff]
                %1039 = vst [vmem:[%s175 + $0xd78] sm:$0xff] %v1038
                %v1040 = vld [vmem:[%s174 + $0x3600] sm:$0xff]
                %1041 = vst [vmem:[%s175 + $0xd80] sm:$0xff] %v1040
                %v1042 = vld [vmem:[%s174 + $0x3608] sm:$0xff]
                %1043 = vst [vmem:[%s175 + $0xd88] sm:$0xff] %v1042
                %v1044 = vld [vmem:[%s174 + $0x3640] sm:$0xff]
                %1045 = vst [vmem:[%s175 + $0xd90] sm:$0xff] %v1044
                %v1046 = vld [vmem:[%s174 + $0x3648] sm:$0xff]
                %1047 = vst [vmem:[%s175 + $0xd98] sm:$0xff] %v1046
                %v1048 = vld [vmem:[%s174 + $0x3680] sm:$0xff]
                %1049 = vst [vmem:[%s175 + $0xda0] sm:$0xff] %v1048
                %v1050 = vld [vmem:[%s174 + $0x3688] sm:$0xff]
                %1051 = vst [vmem:[%s175 + $0xda8] sm:$0xff] %v1050
                %v1052 = vld [vmem:[%s174 + $0x36c0] sm:$0xff]
                %1053 = vst [vmem:[%s175 + $0xdb0] sm:$0xff] %v1052
                %v1054 = vld [vmem:[%s174 + $0x36c8] sm:$0xff]
                %1055 = vst [vmem:[%s175 + $0xdb8] sm:$0xff] %v1054
                %v1056 = vld [vmem:[%s174 + $0x3700] sm:$0xff]
                %1057 = vst [vmem:[%s175 + $0xdc0] sm:$0xff] %v1056
                %v1058 = vld [vmem:[%s174 + $0x3708] sm:$0xff]
                %1059 = vst [vmem:[%s175 + $0xdc8] sm:$0xff] %v1058
                %v1060 = vld [vmem:[%s174 + $0x3740] sm:$0xff]
                %1061 = vst [vmem:[%s175 + $0xdd0] sm:$0xff] %v1060
                %v1062 = vld [vmem:[%s174 + $0x3748] sm:$0xff]
                %1063 = vst [vmem:[%s175 + $0xdd8] sm:$0xff] %v1062
                %v1064 = vld [vmem:[%s174 + $0x3780] sm:$0xff]
                %1065 = vst [vmem:[%s175 + $0xde0] sm:$0xff] %v1064
                %v1066 = vld [vmem:[%s174 + $0x3788] sm:$0xff]
                %1067 = vst [vmem:[%s175 + $0xde8] sm:$0xff] %v1066
                %v1068 = vld [vmem:[%s174 + $0x37c0] sm:$0xff]
                %1069 = vst [vmem:[%s175 + $0xdf0] sm:$0xff] %v1068
                %v1070 = vld [vmem:[%s174 + $0x37c8] sm:$0xff]
                %1071 = vst [vmem:[%s175 + $0xdf8] sm:$0xff] %v1070
                %v1072 = vld [vmem:[%s174 + $0x3800] sm:$0xff]
                %1073 = vst [vmem:[%s175 + $0xe00] sm:$0xff] %v1072
                %v1074 = vld [vmem:[%s174 + $0x3808] sm:$0xff]
                %1075 = vst [vmem:[%s175 + $0xe08] sm:$0xff] %v1074
                %v1076 = vld [vmem:[%s174 + $0x3840] sm:$0xff]
                %1077 = vst [vmem:[%s175 + $0xe10] sm:$0xff] %v1076
                %v1078 = vld [vmem:[%s174 + $0x3848] sm:$0xff]
                %1079 = vst [vmem:[%s175 + $0xe18] sm:$0xff] %v1078
                %v1080 = vld [vmem:[%s174 + $0x3880] sm:$0xff]
                %1081 = vst [vmem:[%s175 + $0xe20] sm:$0xff] %v1080
                %v1082 = vld [vmem:[%s174 + $0x3888] sm:$0xff]
                %1083 = vst [vmem:[%s175 + $0xe28] sm:$0xff] %v1082
                %v1084 = vld [vmem:[%s174 + $0x38c0] sm:$0xff]
                %1085 = vst [vmem:[%s175 + $0xe30] sm:$0xff] %v1084
                %v1086 = vld [vmem:[%s174 + $0x38c8] sm:$0xff]
                %1087 = vst [vmem:[%s175 + $0xe38] sm:$0xff] %v1086
                %v1088 = vld [vmem:[%s174 + $0x3900] sm:$0xff]
                %1089 = vst [vmem:[%s175 + $0xe40] sm:$0xff] %v1088
                %v1090 = vld [vmem:[%s174 + $0x3908] sm:$0xff]
                %1091 = vst [vmem:[%s175 + $0xe48] sm:$0xff] %v1090
                %v1092 = vld [vmem:[%s174 + $0x3940] sm:$0xff]
                %1093 = vst [vmem:[%s175 + $0xe50] sm:$0xff] %v1092
                %v1094 = vld [vmem:[%s174 + $0x3948] sm:$0xff]
                %1095 = vst [vmem:[%s175 + $0xe58] sm:$0xff] %v1094
                %v1096 = vld [vmem:[%s174 + $0x3980] sm:$0xff]
                %1097 = vst [vmem:[%s175 + $0xe60] sm:$0xff] %v1096
                %v1098 = vld [vmem:[%s174 + $0x3988] sm:$0xff]
                %1099 = vst [vmem:[%s175 + $0xe68] sm:$0xff] %v1098
                %v1100 = vld [vmem:[%s174 + $0x39c0] sm:$0xff]
                %1101 = vst [vmem:[%s175 + $0xe70] sm:$0xff] %v1100
                %v1102 = vld [vmem:[%s174 + $0x39c8] sm:$0xff]
                %1103 = vst [vmem:[%s175 + $0xe78] sm:$0xff] %v1102
                %v1104 = vld [vmem:[%s174 + $0x3a00] sm:$0xff]
                %1105 = vst [vmem:[%s175 + $0xe80] sm:$0xff] %v1104
                %v1106 = vld [vmem:[%s174 + $0x3a08] sm:$0xff]
                %1107 = vst [vmem:[%s175 + $0xe88] sm:$0xff] %v1106
                %v1108 = vld [vmem:[%s174 + $0x3a40] sm:$0xff]
                %1109 = vst [vmem:[%s175 + $0xe90] sm:$0xff] %v1108
                %v1110 = vld [vmem:[%s174 + $0x3a48] sm:$0xff]
                %1111 = vst [vmem:[%s175 + $0xe98] sm:$0xff] %v1110
                %v1112 = vld [vmem:[%s174 + $0x3a80] sm:$0xff]
                %1113 = vst [vmem:[%s175 + $0xea0] sm:$0xff] %v1112
                %v1114 = vld [vmem:[%s174 + $0x3a88] sm:$0xff]
                %1115 = vst [vmem:[%s175 + $0xea8] sm:$0xff] %v1114
                %v1116 = vld [vmem:[%s174 + $0x3ac0] sm:$0xff]
                %1117 = vst [vmem:[%s175 + $0xeb0] sm:$0xff] %v1116
                %v1118 = vld [vmem:[%s174 + $0x3ac8] sm:$0xff]
                %1119 = vst [vmem:[%s175 + $0xeb8] sm:$0xff] %v1118
                %v1120 = vld [vmem:[%s174 + $0x3b00] sm:$0xff]
                %1121 = vst [vmem:[%s175 + $0xec0] sm:$0xff] %v1120
                %v1122 = vld [vmem:[%s174 + $0x3b08] sm:$0xff]
                %1123 = vst [vmem:[%s175 + $0xec8] sm:$0xff] %v1122
                %v1124 = vld [vmem:[%s174 + $0x3b40] sm:$0xff]
                %1125 = vst [vmem:[%s175 + $0xed0] sm:$0xff] %v1124
                %v1126 = vld [vmem:[%s174 + $0x3b48] sm:$0xff]
                %1127 = vst [vmem:[%s175 + $0xed8] sm:$0xff] %v1126
                %v1128 = vld [vmem:[%s174 + $0x3b80] sm:$0xff]
                %1129 = vst [vmem:[%s175 + $0xee0] sm:$0xff] %v1128
                %v1130 = vld [vmem:[%s174 + $0x3b88] sm:$0xff]
                %1131 = vst [vmem:[%s175 + $0xee8] sm:$0xff] %v1130
                %v1132 = vld [vmem:[%s174 + $0x3bc0] sm:$0xff]
                %1133 = vst [vmem:[%s175 + $0xef0] sm:$0xff] %v1132
                %v1134 = vld [vmem:[%s174 + $0x3bc8] sm:$0xff]
                %1135 = vst [vmem:[%s175 + $0xef8] sm:$0xff] %v1134
                %v1136 = vld [vmem:[%s174 + $0x3c00] sm:$0xff]
                %1137 = vst [vmem:[%s175 + $0xf00] sm:$0xff] %v1136
                %v1138 = vld [vmem:[%s174 + $0x3c08] sm:$0xff]
                %1139 = vst [vmem:[%s175 + $0xf08] sm:$0xff] %v1138
                %v1140 = vld [vmem:[%s174 + $0x3c40] sm:$0xff]
                %1141 = vst [vmem:[%s175 + $0xf10] sm:$0xff] %v1140
                %v1142 = vld [vmem:[%s174 + $0x3c48] sm:$0xff]
                %1143 = vst [vmem:[%s175 + $0xf18] sm:$0xff] %v1142
                %v1144 = vld [vmem:[%s174 + $0x3c80] sm:$0xff]
                %1145 = vst [vmem:[%s175 + $0xf20] sm:$0xff] %v1144
                %v1146 = vld [vmem:[%s174 + $0x3c88] sm:$0xff]
                %1147 = vst [vmem:[%s175 + $0xf28] sm:$0xff] %v1146
                %v1148 = vld [vmem:[%s174 + $0x3cc0] sm:$0xff]
                %1149 = vst [vmem:[%s175 + $0xf30] sm:$0xff] %v1148
                %v1150 = vld [vmem:[%s174 + $0x3cc8] sm:$0xff]
                %1151 = vst [vmem:[%s175 + $0xf38] sm:$0xff] %v1150
                %v1152 = vld [vmem:[%s174 + $0x3d00] sm:$0xff]
                %1153 = vst [vmem:[%s175 + $0xf40] sm:$0xff] %v1152
                %v1154 = vld [vmem:[%s174 + $0x3d08] sm:$0xff]
                %1155 = vst [vmem:[%s175 + $0xf48] sm:$0xff] %v1154
                %v1156 = vld [vmem:[%s174 + $0x3d40] sm:$0xff]
                %1157 = vst [vmem:[%s175 + $0xf50] sm:$0xff] %v1156
                %v1158 = vld [vmem:[%s174 + $0x3d48] sm:$0xff]
                %1159 = vst [vmem:[%s175 + $0xf58] sm:$0xff] %v1158
                %v1160 = vld [vmem:[%s174 + $0x3d80] sm:$0xff]
                %1161 = vst [vmem:[%s175 + $0xf60] sm:$0xff] %v1160
                %v1162 = vld [vmem:[%s174 + $0x3d88] sm:$0xff]
                %1163 = vst [vmem:[%s175 + $0xf68] sm:$0xff] %v1162
                %v1164 = vld [vmem:[%s174 + $0x3dc0] sm:$0xff]
                %1165 = vst [vmem:[%s175 + $0xf70] sm:$0xff] %v1164
                %v1166 = vld [vmem:[%s174 + $0x3dc8] sm:$0xff]
                %1167 = vst [vmem:[%s175 + $0xf78] sm:$0xff] %v1166
                %v1168 = vld [vmem:[%s174 + $0x3e00] sm:$0xff]
                %1169 = vst [vmem:[%s175 + $0xf80] sm:$0xff] %v1168
                %v1170 = vld [vmem:[%s174 + $0x3e08] sm:$0xff]
                %1171 = vst [vmem:[%s175 + $0xf88] sm:$0xff] %v1170
                %v1172 = vld [vmem:[%s174 + $0x3e40] sm:$0xff]
                %1173 = vst [vmem:[%s175 + $0xf90] sm:$0xff] %v1172
                %v1174 = vld [vmem:[%s174 + $0x3e48] sm:$0xff]
                %1175 = vst [vmem:[%s175 + $0xf98] sm:$0xff] %v1174
                %v1176 = vld [vmem:[%s174 + $0x3e80] sm:$0xff]
                %1177 = vst [vmem:[%s175 + $0xfa0] sm:$0xff] %v1176
                %v1178 = vld [vmem:[%s174 + $0x3e88] sm:$0xff]
                %1179 = vst [vmem:[%s175 + $0xfa8] sm:$0xff] %v1178
                %v1180 = vld [vmem:[%s174 + $0x3ec0] sm:$0xff]
                %1181 = vst [vmem:[%s175 + $0xfb0] sm:$0xff] %v1180
                %v1182 = vld [vmem:[%s174 + $0x3ec8] sm:$0xff]
                %1183 = vst [vmem:[%s175 + $0xfb8] sm:$0xff] %v1182
                %v1184 = vld [vmem:[%s174 + $0x3f00] sm:$0xff]
                %1185 = vst [vmem:[%s175 + $0xfc0] sm:$0xff] %v1184
                %v1186 = vld [vmem:[%s174 + $0x3f08] sm:$0xff]
                %1187 = vst [vmem:[%s175 + $0xfc8] sm:$0xff] %v1186
                %v1188 = vld [vmem:[%s174 + $0x3f40] sm:$0xff]
                %1189 = vst [vmem:[%s175 + $0xfd0] sm:$0xff] %v1188
                %v1190 = vld [vmem:[%s174 + $0x3f48] sm:$0xff]
                %1191 = vst [vmem:[%s175 + $0xfd8] sm:$0xff] %v1190
                %v1192 = vld [vmem:[%s174 + $0x3f80] sm:$0xff]
                %1193 = vst [vmem:[%s175 + $0xfe0] sm:$0xff] %v1192
                %v1194 = vld [vmem:[%s174 + $0x3f88] sm:$0xff]
                %1195 = vst [vmem:[%s175 + $0xfe8] sm:$0xff] %v1194
                %v1196 = vld [vmem:[%s174 + $0x3fc0] sm:$0xff]
                %1197 = vst [vmem:[%s175 + $0xff0] sm:$0xff] %v1196
                %v1198 = vld [vmem:[%s174 + $0x3fc8] sm:$0xff]
                %1199 = vst [vmem:[%s175 + $0xff8] sm:$0xff] %v1198
              $region37: #{forward.4} parent=31 // loop_footer
                %s173 = sadd.s32 1, %s169
              $region38: #{forward.4} parent=31 // loop_footer_branch
                %168 = sbr.rel target = $region34
              $region39: #{forward.4} parent=31 // loop_exit
                _
            $region32: #{forward.4} parent=27 // pred_fallthru
              _
            // Predicated region
            $region40: #{forward.4} parent=27 // pred_check
              _
            $region41: #{forward.4} parent=27 // pred_check_branch
              %1201 = sbr.rel target = $region43
            $region42: #{forward.4} parent=27 // pred_region
              _
            $region43: #{forward.4} parent=27 // pred_fallthru
              _
          $region28: #{forward.4} parent=23 // pred_fallthru
            _
          %1202 = vnop
        $region24: #{forward.4} parent=19 // pred_fallthru
          _
        // Predicated region
        $region44: #{forward.4} parent=19 // pred_check
          %p1203 = pneg %p93
        $region45: #{forward.4} parent=19 // pred_check_branch
          %1205 = sbr.rel (%p1203) target = $region47
        $region46: #{forward.4} parent=19 // pred_region
          %s1206 = smul.u32 4, %s17
          %p1207 = scmp.lt.s32.totalorder %s1206, 15
          %s1208 = scalar_select %p1207, %s1206, 15
          %s1209 = scalar_lea.vmem %s2, %s1208
          %s1210 = smul.u32 4, %s17
        $region47: #{forward.4} parent=19 // pred_fallthru
          _
      $region20: #{forward.4} parent=5 // pred_fallthru
        _
      %p1211 = scmp.le.s32.totalorder 1, %s9
      %p1212 = scmp.lt.s32.totalorder %s9, 5
      %p1213 = pnand %p1211, %p1212
      %p1214 = pneg %p1213
      // Predicated region
      $region48: #{forward.4} parent=5 // pred_check
        _
      $region49: #{forward.4} parent=5 // pred_check_branch
        %1216 = sbr.rel (%p1213) target = $region51
      $region50: #{forward.4} parent=5 // pred_region
        %s1217 = ssub.s32 %s9, 1
        %s1218 = sand.u32 %s60, 1
        %s1219 = sand.u32 %s60, 1
        %s1220 = smul.addr %s1219, 4096
        %s1221 = scalar_lea.vmem [#allocation2], %s1220
        // Predicated region
        $region52: #{forward.4} parent=50 // pred_check
          %p1222 = pneg %p73
        $region53: #{forward.4} parent=50 // pred_check_branch
          %1224 = sbr.rel (%p1222) target = $region55
        $region54: #{forward.4} parent=50 // pred_region
          _
        $region55: #{forward.4} parent=50 // pred_fallthru
          _
        %p1225 = scmp.lt.s32.totalorder %s18, 0
        %s1226 = scalar_select %p1225, %s18, 0
        %s1227 = smul.addr %s1226, 16
        %s1228 = smul.addr %s1227, 4
        %s1229 = scalar_lea.vmem %s0, %s1228
        %p1230 = pneg %p47
        %p1231 = pneg %p44
        %s1232 = sand.u32 %s60, 1
        %s1233 = sand.u32 %s60, 1
        %s1234 = smul.addr %s1233, 4096
        %s1235 = scalar_lea.vmem [#allocation2], %s1234
        %p1236 = pneg %p73
        %p1237 = pneg %p70
        %s1238 = smul.u32 4, %s19
        %p1239 = scmp.lt.s32.totalorder %s1238, 15
        %s1240 = scalar_select %p1239, %s1238, 15
        %s1241 = scalar_lea.vmem %s2, %s1240
        %p1242 = pneg %p99
        %p1243 = pneg %p96
        %p1244 = pneg %p127
        %p1245 = pneg %p124
        %s1246 = smul.u32 4, %s19
        %p1247 = scmp.lt.s32.totalorder %s18, 0
        %s1248 = scalar_select %p1247, %s18, 0
        %p1249 = scmp.lt.s32.totalorder %s1246, 15
        %s1250 = scalar_select %p1249, %s1246, 15
        %s1251 = smul.addr %s1248, 16
        %s1252 = sadd.s32 %s1250, %s1251
        %s1253 = smul.addr %s1252, 4
        %s1254 = scalar_lea.vmem %s3, %s1253
        %p1255 = scmp.lt.s32.totalorder %s18, 0
        %s1256 = scalar_select %p1255, %s18, 0
        %s1257 = smul.addr %s1256, 16
        %s1258 = smul.addr %s1257, 4
        %s1259 = scalar_lea.vmem %s0, %s1258
        %s1260 = smul.u32 4, %s19
        %s1261 = smul.u32 4, %s19
        %p1262 = scmp.lt.s32.totalorder %s1261, 15
        %s1263 = scalar_select %p1262, %s1261, 15
        %s1264 = scalar_lea.vmem %s2, %s1263
        %s1265 = smul.u32 4, %s19
        %s1266 = smul.u32 4, %s19
        %p1267 = scmp.lt.s32.totalorder %s18, 0
        %s1268 = scalar_select %p1267, %s18, 0
        %p1269 = scmp.lt.s32.totalorder %s1266, 15
        %s1270 = scalar_select %p1269, %s1266, 15
        %s1271 = smul.addr %s1268, 16
        %s1272 = sadd.s32 %s1270, %s1271
        %s1273 = smul.addr %s1272, 4
        %s1274 = scalar_lea.vmem %s3, %s1273
        %s1275 = smul.u32 4, %s19
        %v1276 = vld [vmem:[%s1259] sm:$0xff]
        %v1277 = vld [vmem:[%s1259 + $0x8] sm:$0xff]
        %v1278 = vld [vmem:[%s1259 + $0x10] sm:$0xff]
        %v1279 = vld [vmem:[%s1259 + $0x18] sm:$0xff]
        %v1280 = vld [vmem:[%s1259 + $0x20] sm:$0xff]
        %v1281 = vld [vmem:[%s1259 + $0x28] sm:$0xff]
        %v1282 = vld [vmem:[%s1259 + $0x30] sm:$0xff]
        %v1283 = vld [vmem:[%s1259 + $0x38] sm:$0xff]
        %v1284 = vld [vmem:[%s1221] sm:$0xff]
        %v1285 = vld [vmem:[%s1221 + $0x8] sm:$0xff]
        %v1286 = vld [vmem:[%s1221 + $0x10] sm:$0xff]
        %v1287 = vld [vmem:[%s1221 + $0x18] sm:$0xff]
        %v1288 = vld [vmem:[%s1221 + $0x20] sm:$0xff]
        %v1289 = vld [vmem:[%s1221 + $0x28] sm:$0xff]
        %v1290 = vld [vmem:[%s1221 + $0x30] sm:$0xff]
        %v1291 = vld [vmem:[%s1221 + $0x38] sm:$0xff]
        %v1292 = vld [vmem:[%s1221 + $0x40] sm:$0xff]
        %v1293 = vld [vmem:[%s1221 + $0x48] sm:$0xff]
        %v1294 = vld [vmem:[%s1221 + $0x50] sm:$0xff]
        %v1295 = vld [vmem:[%s1221 + $0x58] sm:$0xff]
        %v1296 = vld [vmem:[%s1221 + $0x60] sm:$0xff]
        %v1297 = vld [vmem:[%s1221 + $0x68] sm:$0xff]
        %v1298 = vld [vmem:[%s1221 + $0x70] sm:$0xff]
        %v1299 = vld [vmem:[%s1221 + $0x78] sm:$0xff]
        %v1300 = vld [vmem:[%s1221 + $0x80] sm:$0xff]
        %v1301 = vld [vmem:[%s1221 + $0x88] sm:$0xff]
        %v1302 = vld [vmem:[%s1221 + $0x90] sm:$0xff]
        %v1303 = vld [vmem:[%s1221 + $0x98] sm:$0xff]
        %v1304 = vld [vmem:[%s1221 + $0xa0] sm:$0xff]
        %v1305 = vld [vmem:[%s1221 + $0xa8] sm:$0xff]
        %v1306 = vld [vmem:[%s1221 + $0xb0] sm:$0xff]
        %v1307 = vld [vmem:[%s1221 + $0xb8] sm:$0xff]
        %v1308 = vld [vmem:[%s1221 + $0xc0] sm:$0xff]
        %v1309 = vld [vmem:[%s1221 + $0xc8] sm:$0xff]
        %v1310 = vld [vmem:[%s1221 + $0xd0] sm:$0xff]
        %v1311 = vld [vmem:[%s1221 + $0xd8] sm:$0xff]
        %v1312 = vld [vmem:[%s1221 + $0xe0] sm:$0xff]
        %v1313 = vld [vmem:[%s1221 + $0xe8] sm:$0xff]
        %v1314 = vld [vmem:[%s1221 + $0xf0] sm:$0xff]
        %v1315 = vld [vmem:[%s1221 + $0xf8] sm:$0xff]
        %v1316 = vld [vmem:[%s1221 + $0x100] sm:$0xff]
        %v1317 = vld [vmem:[%s1221 + $0x108] sm:$0xff]
        %v1318 = vld [vmem:[%s1221 + $0x110] sm:$0xff]
        %v1319 = vld [vmem:[%s1221 + $0x118] sm:$0xff]
        %v1320 = vld [vmem:[%s1221 + $0x120] sm:$0xff]
        %v1321 = vld [vmem:[%s1221 + $0x128] sm:$0xff]
        %v1322 = vld [vmem:[%s1221 + $0x130] sm:$0xff]
        %v1323 = vld [vmem:[%s1221 + $0x138] sm:$0xff]
        %v1324 = vld [vmem:[%s1221 + $0x140] sm:$0xff]
        %v1325 = vld [vmem:[%s1221 + $0x148] sm:$0xff]
        %v1326 = vld [vmem:[%s1221 + $0x150] sm:$0xff]
        %v1327 = vld [vmem:[%s1221 + $0x158] sm:$0xff]
        %v1328 = vld [vmem:[%s1221 + $0x160] sm:$0xff]
        %v1329 = vld [vmem:[%s1221 + $0x168] sm:$0xff]
        %v1330 = vld [vmem:[%s1221 + $0x170] sm:$0xff]
        %v1331 = vld [vmem:[%s1221 + $0x178] sm:$0xff]
        %v1332 = vld [vmem:[%s1221 + $0x180] sm:$0xff]
        %v1333 = vld [vmem:[%s1221 + $0x188] sm:$0xff]
        %v1334 = vld [vmem:[%s1221 + $0x190] sm:$0xff]
        %v1335 = vld [vmem:[%s1221 + $0x198] sm:$0xff]
        %v1336 = vld [vmem:[%s1221 + $0x1a0] sm:$0xff]
        %v1337 = vld [vmem:[%s1221 + $0x1a8] sm:$0xff]
        %v1338 = vld [vmem:[%s1221 + $0x1b0] sm:$0xff]
        %v1339 = vld [vmem:[%s1221 + $0x1b8] sm:$0xff]
        %v1340 = vld [vmem:[%s1221 + $0x1c0] sm:$0xff]
        %v1341 = vld [vmem:[%s1221 + $0x1c8] sm:$0xff]
        %v1342 = vld [vmem:[%s1221 + $0x1d0] sm:$0xff]
        %v1343 = vld [vmem:[%s1221 + $0x1d8] sm:$0xff]
        %v1344 = vld [vmem:[%s1221 + $0x1e0] sm:$0xff]
        %v1345 = vld [vmem:[%s1221 + $0x1e8] sm:$0xff]
        %v1346 = vld [vmem:[%s1221 + $0x1f0] sm:$0xff]
        %v1347 = vld [vmem:[%s1221 + $0x1f8] sm:$0xff]
        %v1348 = vld [vmem:[%s1221 + $0x200] sm:$0xff]
        %v1349 = vld [vmem:[%s1221 + $0x208] sm:$0xff]
        %v1350 = vld [vmem:[%s1221 + $0x210] sm:$0xff]
        %v1351 = vld [vmem:[%s1221 + $0x218] sm:$0xff]
        %v1352 = vld [vmem:[%s1221 + $0x220] sm:$0xff]
        %v1353 = vld [vmem:[%s1221 + $0x228] sm:$0xff]
        %v1354 = vld [vmem:[%s1221 + $0x230] sm:$0xff]
        %v1355 = vld [vmem:[%s1221 + $0x238] sm:$0xff]
        %v1356 = vld [vmem:[%s1221 + $0x240] sm:$0xff]
        %v1357 = vld [vmem:[%s1221 + $0x248] sm:$0xff]
        %v1358 = vld [vmem:[%s1221 + $0x250] sm:$0xff]
        %v1359 = vld [vmem:[%s1221 + $0x258] sm:$0xff]
        %v1360 = vld [vmem:[%s1221 + $0x260] sm:$0xff]
        %v1361 = vld [vmem:[%s1221 + $0x268] sm:$0xff]
        %v1362 = vld [vmem:[%s1221 + $0x270] sm:$0xff]
        %v1363 = vld [vmem:[%s1221 + $0x278] sm:$0xff]
        %v1364 = vld [vmem:[%s1221 + $0x280] sm:$0xff]
        %v1365 = vld [vmem:[%s1221 + $0x288] sm:$0xff]
        %v1366 = vld [vmem:[%s1221 + $0x290] sm:$0xff]
        %v1367 = vld [vmem:[%s1221 + $0x298] sm:$0xff]
        %v1368 = vld [vmem:[%s1221 + $0x2a0] sm:$0xff]
        %v1369 = vld [vmem:[%s1221 + $0x2a8] sm:$0xff]
        %v1370 = vld [vmem:[%s1221 + $0x2b0] sm:$0xff]
        %v1371 = vld [vmem:[%s1221 + $0x2b8] sm:$0xff]
        %v1372 = vld [vmem:[%s1221 + $0x2c0] sm:$0xff]
        %v1373 = vld [vmem:[%s1221 + $0x2c8] sm:$0xff]
        %v1374 = vld [vmem:[%s1221 + $0x2d0] sm:$0xff]
        %v1375 = vld [vmem:[%s1221 + $0x2d8] sm:$0xff]
        %v1376 = vld [vmem:[%s1221 + $0x2e0] sm:$0xff]
        %v1377 = vld [vmem:[%s1221 + $0x2e8] sm:$0xff]
        %v1378 = vld [vmem:[%s1221 + $0x2f0] sm:$0xff]
        %v1379 = vld [vmem:[%s1221 + $0x2f8] sm:$0xff]
        %v1380 = vld [vmem:[%s1221 + $0x300] sm:$0xff]
        %v1381 = vld [vmem:[%s1221 + $0x308] sm:$0xff]
        %v1382 = vld [vmem:[%s1221 + $0x310] sm:$0xff]
        %v1383 = vld [vmem:[%s1221 + $0x318] sm:$0xff]
        %v1384 = vld [vmem:[%s1221 + $0x320] sm:$0xff]
        %v1385 = vld [vmem:[%s1221 + $0x328] sm:$0xff]
        %v1386 = vld [vmem:[%s1221 + $0x330] sm:$0xff]
        %v1387 = vld [vmem:[%s1221 + $0x338] sm:$0xff]
        %v1388 = vld [vmem:[%s1221 + $0x340] sm:$0xff]
        %v1389 = vld [vmem:[%s1221 + $0x348] sm:$0xff]
        %v1390 = vld [vmem:[%s1221 + $0x350] sm:$0xff]
        %v1391 = vld [vmem:[%s1221 + $0x358] sm:$0xff]
        %v1392 = vld [vmem:[%s1221 + $0x360] sm:$0xff]
        %v1393 = vld [vmem:[%s1221 + $0x368] sm:$0xff]
        %v1394 = vld [vmem:[%s1221 + $0x370] sm:$0xff]
        %v1395 = vld [vmem:[%s1221 + $0x378] sm:$0xff]
        %v1396 = vld [vmem:[%s1221 + $0x380] sm:$0xff]
        %v1397 = vld [vmem:[%s1221 + $0x388] sm:$0xff]
        %v1398 = vld [vmem:[%s1221 + $0x390] sm:$0xff]
        %v1399 = vld [vmem:[%s1221 + $0x398] sm:$0xff]
        %v1400 = vld [vmem:[%s1221 + $0x3a0] sm:$0xff]
        %v1401 = vld [vmem:[%s1221 + $0x3a8] sm:$0xff]
        %v1402 = vld [vmem:[%s1221 + $0x3b0] sm:$0xff]
        %v1403 = vld [vmem:[%s1221 + $0x3b8] sm:$0xff]
        %v1404 = vld [vmem:[%s1221 + $0x3c0] sm:$0xff]
        %v1405 = vld [vmem:[%s1221 + $0x3c8] sm:$0xff]
        %v1406 = vld [vmem:[%s1221 + $0x3d0] sm:$0xff]
        %v1407 = vld [vmem:[%s1221 + $0x3d8] sm:$0xff]
        %v1408 = vld [vmem:[%s1221 + $0x3e0] sm:$0xff]
        %v1409 = vld [vmem:[%s1221 + $0x3e8] sm:$0xff]
        %v1410 = vld [vmem:[%s1221 + $0x3f0] sm:$0xff]
        %v1411 = vld [vmem:[%s1221 + $0x3f8] sm:$0xff]
        %v1412 = vld [vmem:[%s1221 + $0x400] sm:$0xff]
        %v1413 = vld [vmem:[%s1221 + $0x408] sm:$0xff]
        %v1414 = vld [vmem:[%s1221 + $0x410] sm:$0xff]
        %v1415 = vld [vmem:[%s1221 + $0x418] sm:$0xff]
        %v1416 = vld [vmem:[%s1221 + $0x420] sm:$0xff]
        %v1417 = vld [vmem:[%s1221 + $0x428] sm:$0xff]
        %v1418 = vld [vmem:[%s1221 + $0x430] sm:$0xff]
        %v1419 = vld [vmem:[%s1221 + $0x438] sm:$0xff]
        %v1420 = vld [vmem:[%s1221 + $0x440] sm:$0xff]
        %v1421 = vld [vmem:[%s1221 + $0x448] sm:$0xff]
        %v1422 = vld [vmem:[%s1221 + $0x450] sm:$0xff]
        %v1423 = vld [vmem:[%s1221 + $0x458] sm:$0xff]
        %v1424 = vld [vmem:[%s1221 + $0x460] sm:$0xff]
        %v1425 = vld [vmem:[%s1221 + $0x468] sm:$0xff]
        %v1426 = vld [vmem:[%s1221 + $0x470] sm:$0xff]
        %v1427 = vld [vmem:[%s1221 + $0x478] sm:$0xff]
        %v1428 = vld [vmem:[%s1221 + $0x480] sm:$0xff]
        %v1429 = vld [vmem:[%s1221 + $0x488] sm:$0xff]
        %v1430 = vld [vmem:[%s1221 + $0x490] sm:$0xff]
        %v1431 = vld [vmem:[%s1221 + $0x498] sm:$0xff]
        %v1432 = vld [vmem:[%s1221 + $0x4a0] sm:$0xff]
        %v1433 = vld [vmem:[%s1221 + $0x4a8] sm:$0xff]
        %v1434 = vld [vmem:[%s1221 + $0x4b0] sm:$0xff]
        %v1435 = vld [vmem:[%s1221 + $0x4b8] sm:$0xff]
        %v1436 = vld [vmem:[%s1221 + $0x4c0] sm:$0xff]
        %v1437 = vld [vmem:[%s1221 + $0x4c8] sm:$0xff]
        %v1438 = vld [vmem:[%s1221 + $0x4d0] sm:$0xff]
        %v1439 = vld [vmem:[%s1221 + $0x4d8] sm:$0xff]
        %v1440 = vld [vmem:[%s1221 + $0x4e0] sm:$0xff]
        %v1441 = vld [vmem:[%s1221 + $0x4e8] sm:$0xff]
        %v1442 = vld [vmem:[%s1221 + $0x4f0] sm:$0xff]
        %v1443 = vld [vmem:[%s1221 + $0x4f8] sm:$0xff]
        %v1444 = vld [vmem:[%s1221 + $0x500] sm:$0xff]
        %v1445 = vld [vmem:[%s1221 + $0x508] sm:$0xff]
        %v1446 = vld [vmem:[%s1221 + $0x510] sm:$0xff]
        %v1447 = vld [vmem:[%s1221 + $0x518] sm:$0xff]
        %v1448 = vld [vmem:[%s1221 + $0x520] sm:$0xff]
        %v1449 = vld [vmem:[%s1221 + $0x528] sm:$0xff]
        %v1450 = vld [vmem:[%s1221 + $0x530] sm:$0xff]
        %v1451 = vld [vmem:[%s1221 + $0x538] sm:$0xff]
        %v1452 = vld [vmem:[%s1221 + $0x540] sm:$0xff]
        %v1453 = vld [vmem:[%s1221 + $0x548] sm:$0xff]
        %v1454 = vld [vmem:[%s1221 + $0x550] sm:$0xff]
        %v1455 = vld [vmem:[%s1221 + $0x558] sm:$0xff]
        %v1456 = vld [vmem:[%s1221 + $0x560] sm:$0xff]
        %v1457 = vld [vmem:[%s1221 + $0x568] sm:$0xff]
        %v1458 = vld [vmem:[%s1221 + $0x570] sm:$0xff]
        %v1459 = vld [vmem:[%s1221 + $0x578] sm:$0xff]
        %v1460 = vld [vmem:[%s1221 + $0x580] sm:$0xff]
        %v1461 = vld [vmem:[%s1221 + $0x588] sm:$0xff]
        %v1462 = vld [vmem:[%s1221 + $0x590] sm:$0xff]
        %v1463 = vld [vmem:[%s1221 + $0x598] sm:$0xff]
        %v1464 = vld [vmem:[%s1221 + $0x5a0] sm:$0xff]
        %v1465 = vld [vmem:[%s1221 + $0x5a8] sm:$0xff]
        %v1466 = vld [vmem:[%s1221 + $0x5b0] sm:$0xff]
        %v1467 = vld [vmem:[%s1221 + $0x5b8] sm:$0xff]
        %v1468 = vld [vmem:[%s1221 + $0x5c0] sm:$0xff]
        %v1469 = vld [vmem:[%s1221 + $0x5c8] sm:$0xff]
        %v1470 = vld [vmem:[%s1221 + $0x5d0] sm:$0xff]
        %v1471 = vld [vmem:[%s1221 + $0x5d8] sm:$0xff]
        %v1472 = vld [vmem:[%s1221 + $0x5e0] sm:$0xff]
        %v1473 = vld [vmem:[%s1221 + $0x5e8] sm:$0xff]
        %v1474 = vld [vmem:[%s1221 + $0x5f0] sm:$0xff]
        %v1475 = vld [vmem:[%s1221 + $0x5f8] sm:$0xff]
        %v1476 = vld [vmem:[%s1221 + $0x600] sm:$0xff]
        %v1477 = vld [vmem:[%s1221 + $0x608] sm:$0xff]
        %v1478 = vld [vmem:[%s1221 + $0x610] sm:$0xff]
        %v1479 = vld [vmem:[%s1221 + $0x618] sm:$0xff]
        %v1480 = vld [vmem:[%s1221 + $0x620] sm:$0xff]
        %v1481 = vld [vmem:[%s1221 + $0x628] sm:$0xff]
        %v1482 = vld [vmem:[%s1221 + $0x630] sm:$0xff]
        %v1483 = vld [vmem:[%s1221 + $0x638] sm:$0xff]
        %v1484 = vld [vmem:[%s1221 + $0x640] sm:$0xff]
        %v1485 = vld [vmem:[%s1221 + $0x648] sm:$0xff]
        %v1486 = vld [vmem:[%s1221 + $0x650] sm:$0xff]
        %v1487 = vld [vmem:[%s1221 + $0x658] sm:$0xff]
        %v1488 = vld [vmem:[%s1221 + $0x660] sm:$0xff]
        %v1489 = vld [vmem:[%s1221 + $0x668] sm:$0xff]
        %v1490 = vld [vmem:[%s1221 + $0x670] sm:$0xff]
        %v1491 = vld [vmem:[%s1221 + $0x678] sm:$0xff]
        %v1492 = vld [vmem:[%s1221 + $0x680] sm:$0xff]
        %v1493 = vld [vmem:[%s1221 + $0x688] sm:$0xff]
        %v1494 = vld [vmem:[%s1221 + $0x690] sm:$0xff]
        %v1495 = vld [vmem:[%s1221 + $0x698] sm:$0xff]
        %v1496 = vld [vmem:[%s1221 + $0x6a0] sm:$0xff]
        %v1497 = vld [vmem:[%s1221 + $0x6a8] sm:$0xff]
        %v1498 = vld [vmem:[%s1221 + $0x6b0] sm:$0xff]
        %v1499 = vld [vmem:[%s1221 + $0x6b8] sm:$0xff]
        %v1500 = vld [vmem:[%s1221 + $0x6c0] sm:$0xff]
        %v1501 = vld [vmem:[%s1221 + $0x6c8] sm:$0xff]
        %v1502 = vld [vmem:[%s1221 + $0x6d0] sm:$0xff]
        %v1503 = vld [vmem:[%s1221 + $0x6d8] sm:$0xff]
        %v1504 = vld [vmem:[%s1221 + $0x6e0] sm:$0xff]
        %v1505 = vld [vmem:[%s1221 + $0x6e8] sm:$0xff]
        %v1506 = vld [vmem:[%s1221 + $0x6f0] sm:$0xff]
        %v1507 = vld [vmem:[%s1221 + $0x6f8] sm:$0xff]
        %v1508 = vld [vmem:[%s1221 + $0x700] sm:$0xff]
        %v1509 = vld [vmem:[%s1221 + $0x708] sm:$0xff]
        %v1510 = vld [vmem:[%s1221 + $0x710] sm:$0xff]
        %v1511 = vld [vmem:[%s1221 + $0x718] sm:$0xff]
        %v1512 = vld [vmem:[%s1221 + $0x720] sm:$0xff]
        %v1513 = vld [vmem:[%s1221 + $0x728] sm:$0xff]
        %v1514 = vld [vmem:[%s1221 + $0x730] sm:$0xff]
        %v1515 = vld [vmem:[%s1221 + $0x738] sm:$0xff]
        %v1516 = vld [vmem:[%s1221 + $0x740] sm:$0xff]
        %v1517 = vld [vmem:[%s1221 + $0x748] sm:$0xff]
        %v1518 = vld [vmem:[%s1221 + $0x750] sm:$0xff]
        %v1519 = vld [vmem:[%s1221 + $0x758] sm:$0xff]
        %v1520 = vld [vmem:[%s1221 + $0x760] sm:$0xff]
        %v1521 = vld [vmem:[%s1221 + $0x768] sm:$0xff]
        %v1522 = vld [vmem:[%s1221 + $0x770] sm:$0xff]
        %v1523 = vld [vmem:[%s1221 + $0x778] sm:$0xff]
        %v1524 = vld [vmem:[%s1221 + $0x780] sm:$0xff]
        %v1525 = vld [vmem:[%s1221 + $0x788] sm:$0xff]
        %v1526 = vld [vmem:[%s1221 + $0x790] sm:$0xff]
        %v1527 = vld [vmem:[%s1221 + $0x798] sm:$0xff]
        %v1528 = vld [vmem:[%s1221 + $0x7a0] sm:$0xff]
        %v1529 = vld [vmem:[%s1221 + $0x7a8] sm:$0xff]
        %v1530 = vld [vmem:[%s1221 + $0x7b0] sm:$0xff]
        %v1531 = vld [vmem:[%s1221 + $0x7b8] sm:$0xff]
        %v1532 = vld [vmem:[%s1221 + $0x7c0] sm:$0xff]
        %v1533 = vld [vmem:[%s1221 + $0x7c8] sm:$0xff]
        %v1534 = vld [vmem:[%s1221 + $0x7d0] sm:$0xff]
        %v1535 = vld [vmem:[%s1221 + $0x7d8] sm:$0xff]
        %v1536 = vld [vmem:[%s1221 + $0x7e0] sm:$0xff]
        %v1537 = vld [vmem:[%s1221 + $0x7e8] sm:$0xff]
        %v1538 = vld [vmem:[%s1221 + $0x7f0] sm:$0xff]
        %v1539 = vld [vmem:[%s1221 + $0x7f8] sm:$0xff]
        %v1540 = vld [vmem:[%s1221 + $0x800] sm:$0xff]
        %v1541 = vld [vmem:[%s1221 + $0x808] sm:$0xff]
        %v1542 = vld [vmem:[%s1221 + $0x810] sm:$0xff]
        %v1543 = vld [vmem:[%s1221 + $0x818] sm:$0xff]
        %v1544 = vld [vmem:[%s1221 + $0x820] sm:$0xff]
        %v1545 = vld [vmem:[%s1221 + $0x828] sm:$0xff]
        %v1546 = vld [vmem:[%s1221 + $0x830] sm:$0xff]
        %v1547 = vld [vmem:[%s1221 + $0x838] sm:$0xff]
        %v1548 = vld [vmem:[%s1221 + $0x840] sm:$0xff]
        %v1549 = vld [vmem:[%s1221 + $0x848] sm:$0xff]
        %v1550 = vld [vmem:[%s1221 + $0x850] sm:$0xff]
        %v1551 = vld [vmem:[%s1221 + $0x858] sm:$0xff]
        %v1552 = vld [vmem:[%s1221 + $0x860] sm:$0xff]
        %v1553 = vld [vmem:[%s1221 + $0x868] sm:$0xff]
        %v1554 = vld [vmem:[%s1221 + $0x870] sm:$0xff]
        %v1555 = vld [vmem:[%s1221 + $0x878] sm:$0xff]
        %v1556 = vld [vmem:[%s1221 + $0x880] sm:$0xff]
        %v1557 = vld [vmem:[%s1221 + $0x888] sm:$0xff]
        %v1558 = vld [vmem:[%s1221 + $0x890] sm:$0xff]
        %v1559 = vld [vmem:[%s1221 + $0x898] sm:$0xff]
        %v1560 = vld [vmem:[%s1221 + $0x8a0] sm:$0xff]
        %v1561 = vld [vmem:[%s1221 + $0x8a8] sm:$0xff]
        %v1562 = vld [vmem:[%s1221 + $0x8b0] sm:$0xff]
        %v1563 = vld [vmem:[%s1221 + $0x8b8] sm:$0xff]
        %v1564 = vld [vmem:[%s1221 + $0x8c0] sm:$0xff]
        %v1565 = vld [vmem:[%s1221 + $0x8c8] sm:$0xff]
        %v1566 = vld [vmem:[%s1221 + $0x8d0] sm:$0xff]
        %v1567 = vld [vmem:[%s1221 + $0x8d8] sm:$0xff]
        %v1568 = vld [vmem:[%s1221 + $0x8e0] sm:$0xff]
        %v1569 = vld [vmem:[%s1221 + $0x8e8] sm:$0xff]
        %v1570 = vld [vmem:[%s1221 + $0x8f0] sm:$0xff]
        %v1571 = vld [vmem:[%s1221 + $0x8f8] sm:$0xff]
        %v1572 = vld [vmem:[%s1221 + $0x900] sm:$0xff]
        %v1573 = vld [vmem:[%s1221 + $0x908] sm:$0xff]
        %v1574 = vld [vmem:[%s1221 + $0x910] sm:$0xff]
        %v1575 = vld [vmem:[%s1221 + $0x918] sm:$0xff]
        %v1576 = vld [vmem:[%s1221 + $0x920] sm:$0xff]
        %v1577 = vld [vmem:[%s1221 + $0x928] sm:$0xff]
        %v1578 = vld [vmem:[%s1221 + $0x930] sm:$0xff]
        %v1579 = vld [vmem:[%s1221 + $0x938] sm:$0xff]
        %v1580 = vld [vmem:[%s1221 + $0x940] sm:$0xff]
        %v1581 = vld [vmem:[%s1221 + $0x948] sm:$0xff]
        %v1582 = vld [vmem:[%s1221 + $0x950] sm:$0xff]
        %v1583 = vld [vmem:[%s1221 + $0x958] sm:$0xff]
        %v1584 = vld [vmem:[%s1221 + $0x960] sm:$0xff]
        %v1585 = vld [vmem:[%s1221 + $0x968] sm:$0xff]
        %v1586 = vld [vmem:[%s1221 + $0x970] sm:$0xff]
        %v1587 = vld [vmem:[%s1221 + $0x978] sm:$0xff]
        %v1588 = vld [vmem:[%s1221 + $0x980] sm:$0xff]
        %v1589 = vld [vmem:[%s1221 + $0x988] sm:$0xff]
        %v1590 = vld [vmem:[%s1221 + $0x990] sm:$0xff]
        %v1591 = vld [vmem:[%s1221 + $0x998] sm:$0xff]
        %v1592 = vld [vmem:[%s1221 + $0x9a0] sm:$0xff]
        %v1593 = vld [vmem:[%s1221 + $0x9a8] sm:$0xff]
        %v1594 = vld [vmem:[%s1221 + $0x9b0] sm:$0xff]
        %v1595 = vld [vmem:[%s1221 + $0x9b8] sm:$0xff]
        %v1596 = vld [vmem:[%s1221 + $0x9c0] sm:$0xff]
        %v1597 = vld [vmem:[%s1221 + $0x9c8] sm:$0xff]
        %v1598 = vld [vmem:[%s1221 + $0x9d0] sm:$0xff]
        %v1599 = vld [vmem:[%s1221 + $0x9d8] sm:$0xff]
        %v1600 = vld [vmem:[%s1221 + $0x9e0] sm:$0xff]
        %v1601 = vld [vmem:[%s1221 + $0x9e8] sm:$0xff]
        %v1602 = vld [vmem:[%s1221 + $0x9f0] sm:$0xff]
        %v1603 = vld [vmem:[%s1221 + $0x9f8] sm:$0xff]
        %v1604 = vld [vmem:[%s1221 + $0xa00] sm:$0xff]
        %v1605 = vld [vmem:[%s1221 + $0xa08] sm:$0xff]
        %v1606 = vld [vmem:[%s1221 + $0xa10] sm:$0xff]
        %v1607 = vld [vmem:[%s1221 + $0xa18] sm:$0xff]
        %v1608 = vld [vmem:[%s1221 + $0xa20] sm:$0xff]
        %v1609 = vld [vmem:[%s1221 + $0xa28] sm:$0xff]
        %v1610 = vld [vmem:[%s1221 + $0xa30] sm:$0xff]
        %v1611 = vld [vmem:[%s1221 + $0xa38] sm:$0xff]
        %v1612 = vld [vmem:[%s1221 + $0xa40] sm:$0xff]
        %v1613 = vld [vmem:[%s1221 + $0xa48] sm:$0xff]
        %v1614 = vld [vmem:[%s1221 + $0xa50] sm:$0xff]
        %v1615 = vld [vmem:[%s1221 + $0xa58] sm:$0xff]
        %v1616 = vld [vmem:[%s1221 + $0xa60] sm:$0xff]
        %v1617 = vld [vmem:[%s1221 + $0xa68] sm:$0xff]
        %v1618 = vld [vmem:[%s1221 + $0xa70] sm:$0xff]
        %v1619 = vld [vmem:[%s1221 + $0xa78] sm:$0xff]
        %v1620 = vld [vmem:[%s1221 + $0xa80] sm:$0xff]
        %v1621 = vld [vmem:[%s1221 + $0xa88] sm:$0xff]
        %v1622 = vld [vmem:[%s1221 + $0xa90] sm:$0xff]
        %v1623 = vld [vmem:[%s1221 + $0xa98] sm:$0xff]
        %v1624 = vld [vmem:[%s1221 + $0xaa0] sm:$0xff]
        %v1625 = vld [vmem:[%s1221 + $0xaa8] sm:$0xff]
        %v1626 = vld [vmem:[%s1221 + $0xab0] sm:$0xff]
        %v1627 = vld [vmem:[%s1221 + $0xab8] sm:$0xff]
        %v1628 = vld [vmem:[%s1221 + $0xac0] sm:$0xff]
        %v1629 = vld [vmem:[%s1221 + $0xac8] sm:$0xff]
        %v1630 = vld [vmem:[%s1221 + $0xad0] sm:$0xff]
        %v1631 = vld [vmem:[%s1221 + $0xad8] sm:$0xff]
        %v1632 = vld [vmem:[%s1221 + $0xae0] sm:$0xff]
        %v1633 = vld [vmem:[%s1221 + $0xae8] sm:$0xff]
        %v1634 = vld [vmem:[%s1221 + $0xaf0] sm:$0xff]
        %v1635 = vld [vmem:[%s1221 + $0xaf8] sm:$0xff]
        %v1636 = vld [vmem:[%s1221 + $0xb00] sm:$0xff]
        %v1637 = vld [vmem:[%s1221 + $0xb08] sm:$0xff]
        %v1638 = vld [vmem:[%s1221 + $0xb10] sm:$0xff]
        %v1639 = vld [vmem:[%s1221 + $0xb18] sm:$0xff]
        %v1640 = vld [vmem:[%s1221 + $0xb20] sm:$0xff]
        %v1641 = vld [vmem:[%s1221 + $0xb28] sm:$0xff]
        %v1642 = vld [vmem:[%s1221 + $0xb30] sm:$0xff]
        %v1643 = vld [vmem:[%s1221 + $0xb38] sm:$0xff]
        %v1644 = vld [vmem:[%s1221 + $0xb40] sm:$0xff]
        %v1645 = vld [vmem:[%s1221 + $0xb48] sm:$0xff]
        %v1646 = vld [vmem:[%s1221 + $0xb50] sm:$0xff]
        %v1647 = vld [vmem:[%s1221 + $0xb58] sm:$0xff]
        %v1648 = vld [vmem:[%s1221 + $0xb60] sm:$0xff]
        %v1649 = vld [vmem:[%s1221 + $0xb68] sm:$0xff]
        %v1650 = vld [vmem:[%s1221 + $0xb70] sm:$0xff]
        %v1651 = vld [vmem:[%s1221 + $0xb78] sm:$0xff]
        %v1652 = vld [vmem:[%s1221 + $0xb80] sm:$0xff]
        %v1653 = vld [vmem:[%s1221 + $0xb88] sm:$0xff]
        %v1654 = vld [vmem:[%s1221 + $0xb90] sm:$0xff]
        %v1655 = vld [vmem:[%s1221 + $0xb98] sm:$0xff]
        %v1656 = vld [vmem:[%s1221 + $0xba0] sm:$0xff]
        %v1657 = vld [vmem:[%s1221 + $0xba8] sm:$0xff]
        %v1658 = vld [vmem:[%s1221 + $0xbb0] sm:$0xff]
        %v1659 = vld [vmem:[%s1221 + $0xbb8] sm:$0xff]
        %v1660 = vld [vmem:[%s1221 + $0xbc0] sm:$0xff]
        %v1661 = vld [vmem:[%s1221 + $0xbc8] sm:$0xff]
        %v1662 = vld [vmem:[%s1221 + $0xbd0] sm:$0xff]
        %v1663 = vld [vmem:[%s1221 + $0xbd8] sm:$0xff]
        %v1664 = vld [vmem:[%s1221 + $0xbe0] sm:$0xff]
        %v1665 = vld [vmem:[%s1221 + $0xbe8] sm:$0xff]
        %v1666 = vld [vmem:[%s1221 + $0xbf0] sm:$0xff]
        %v1667 = vld [vmem:[%s1221 + $0xbf8] sm:$0xff]
        %v1668 = vld [vmem:[%s1221 + $0xc00] sm:$0xff]
        %v1669 = vld [vmem:[%s1221 + $0xc08] sm:$0xff]
        %v1670 = vld [vmem:[%s1221 + $0xc10] sm:$0xff]
        %v1671 = vld [vmem:[%s1221 + $0xc18] sm:$0xff]
        %v1672 = vld [vmem:[%s1221 + $0xc20] sm:$0xff]
        %v1673 = vld [vmem:[%s1221 + $0xc28] sm:$0xff]
        %v1674 = vld [vmem:[%s1221 + $0xc30] sm:$0xff]
        %v1675 = vld [vmem:[%s1221 + $0xc38] sm:$0xff]
        %v1676 = vld [vmem:[%s1221 + $0xc40] sm:$0xff]
        %v1677 = vld [vmem:[%s1221 + $0xc48] sm:$0xff]
        %v1678 = vld [vmem:[%s1221 + $0xc50] sm:$0xff]
        %v1679 = vld [vmem:[%s1221 + $0xc58] sm:$0xff]
        %v1680 = vld [vmem:[%s1221 + $0xc60] sm:$0xff]
        %v1681 = vld [vmem:[%s1221 + $0xc68] sm:$0xff]
        %v1682 = vld [vmem:[%s1221 + $0xc70] sm:$0xff]
        %v1683 = vld [vmem:[%s1221 + $0xc78] sm:$0xff]
        %v1684 = vld [vmem:[%s1221 + $0xc80] sm:$0xff]
        %v1685 = vld [vmem:[%s1221 + $0xc88] sm:$0xff]
        %v1686 = vld [vmem:[%s1221 + $0xc90] sm:$0xff]
        %v1687 = vld [vmem:[%s1221 + $0xc98] sm:$0xff]
        %v1688 = vld [vmem:[%s1221 + $0xca0] sm:$0xff]
        %v1689 = vld [vmem:[%s1221 + $0xca8] sm:$0xff]
        %v1690 = vld [vmem:[%s1221 + $0xcb0] sm:$0xff]
        %v1691 = vld [vmem:[%s1221 + $0xcb8] sm:$0xff]
        %v1692 = vld [vmem:[%s1221 + $0xcc0] sm:$0xff]
        %v1693 = vld [vmem:[%s1221 + $0xcc8] sm:$0xff]
        %v1694 = vld [vmem:[%s1221 + $0xcd0] sm:$0xff]
        %v1695 = vld [vmem:[%s1221 + $0xcd8] sm:$0xff]
        %v1696 = vld [vmem:[%s1221 + $0xce0] sm:$0xff]
        %v1697 = vld [vmem:[%s1221 + $0xce8] sm:$0xff]
        %v1698 = vld [vmem:[%s1221 + $0xcf0] sm:$0xff]
        %v1699 = vld [vmem:[%s1221 + $0xcf8] sm:$0xff]
        %v1700 = vld [vmem:[%s1221 + $0xd00] sm:$0xff]
        %v1701 = vld [vmem:[%s1221 + $0xd08] sm:$0xff]
        %v1702 = vld [vmem:[%s1221 + $0xd10] sm:$0xff]
        %v1703 = vld [vmem:[%s1221 + $0xd18] sm:$0xff]
        %v1704 = vld [vmem:[%s1221 + $0xd20] sm:$0xff]
        %v1705 = vld [vmem:[%s1221 + $0xd28] sm:$0xff]
        %v1706 = vld [vmem:[%s1221 + $0xd30] sm:$0xff]
        %v1707 = vld [vmem:[%s1221 + $0xd38] sm:$0xff]
        %v1708 = vld [vmem:[%s1221 + $0xd40] sm:$0xff]
        %v1709 = vld [vmem:[%s1221 + $0xd48] sm:$0xff]
        %v1710 = vld [vmem:[%s1221 + $0xd50] sm:$0xff]
        %v1711 = vld [vmem:[%s1221 + $0xd58] sm:$0xff]
        %v1712 = vld [vmem:[%s1221 + $0xd60] sm:$0xff]
        %v1713 = vld [vmem:[%s1221 + $0xd68] sm:$0xff]
        %v1714 = vld [vmem:[%s1221 + $0xd70] sm:$0xff]
        %v1715 = vld [vmem:[%s1221 + $0xd78] sm:$0xff]
        %v1716 = vld [vmem:[%s1221 + $0xd80] sm:$0xff]
        %v1717 = vld [vmem:[%s1221 + $0xd88] sm:$0xff]
        %v1718 = vld [vmem:[%s1221 + $0xd90] sm:$0xff]
        %v1719 = vld [vmem:[%s1221 + $0xd98] sm:$0xff]
        %v1720 = vld [vmem:[%s1221 + $0xda0] sm:$0xff]
        %v1721 = vld [vmem:[%s1221 + $0xda8] sm:$0xff]
        %v1722 = vld [vmem:[%s1221 + $0xdb0] sm:$0xff]
        %v1723 = vld [vmem:[%s1221 + $0xdb8] sm:$0xff]
        %v1724 = vld [vmem:[%s1221 + $0xdc0] sm:$0xff]
        %v1725 = vld [vmem:[%s1221 + $0xdc8] sm:$0xff]
        %v1726 = vld [vmem:[%s1221 + $0xdd0] sm:$0xff]
        %v1727 = vld [vmem:[%s1221 + $0xdd8] sm:$0xff]
        %v1728 = vld [vmem:[%s1221 + $0xde0] sm:$0xff]
        %v1729 = vld [vmem:[%s1221 + $0xde8] sm:$0xff]
        %v1730 = vld [vmem:[%s1221 + $0xdf0] sm:$0xff]
        %v1731 = vld [vmem:[%s1221 + $0xdf8] sm:$0xff]
        %v1732 = vld [vmem:[%s1221 + $0xe00] sm:$0xff]
        %v1733 = vld [vmem:[%s1221 + $0xe08] sm:$0xff]
        %v1734 = vld [vmem:[%s1221 + $0xe10] sm:$0xff]
        %v1735 = vld [vmem:[%s1221 + $0xe18] sm:$0xff]
        %v1736 = vld [vmem:[%s1221 + $0xe20] sm:$0xff]
        %v1737 = vld [vmem:[%s1221 + $0xe28] sm:$0xff]
        %v1738 = vld [vmem:[%s1221 + $0xe30] sm:$0xff]
        %v1739 = vld [vmem:[%s1221 + $0xe38] sm:$0xff]
        %v1740 = vld [vmem:[%s1221 + $0xe40] sm:$0xff]
        %v1741 = vld [vmem:[%s1221 + $0xe48] sm:$0xff]
        %v1742 = vld [vmem:[%s1221 + $0xe50] sm:$0xff]
        %v1743 = vld [vmem:[%s1221 + $0xe58] sm:$0xff]
        %v1744 = vld [vmem:[%s1221 + $0xe60] sm:$0xff]
        %v1745 = vld [vmem:[%s1221 + $0xe68] sm:$0xff]
        %v1746 = vld [vmem:[%s1221 + $0xe70] sm:$0xff]
        %v1747 = vld [vmem:[%s1221 + $0xe78] sm:$0xff]
        %v1748 = vld [vmem:[%s1221 + $0xe80] sm:$0xff]
        %v1749 = vld [vmem:[%s1221 + $0xe88] sm:$0xff]
        %v1750 = vld [vmem:[%s1221 + $0xe90] sm:$0xff]
        %v1751 = vld [vmem:[%s1221 + $0xe98] sm:$0xff]
        %v1752 = vld [vmem:[%s1221 + $0xea0] sm:$0xff]
        %v1753 = vld [vmem:[%s1221 + $0xea8] sm:$0xff]
        %v1754 = vld [vmem:[%s1221 + $0xeb0] sm:$0xff]
        %v1755 = vld [vmem:[%s1221 + $0xeb8] sm:$0xff]
        %v1756 = vld [vmem:[%s1221 + $0xec0] sm:$0xff]
        %v1757 = vld [vmem:[%s1221 + $0xec8] sm:$0xff]
        %v1758 = vld [vmem:[%s1221 + $0xed0] sm:$0xff]
        %v1759 = vld [vmem:[%s1221 + $0xed8] sm:$0xff]
        %v1760 = vld [vmem:[%s1221 + $0xee0] sm:$0xff]
        %v1761 = vld [vmem:[%s1221 + $0xee8] sm:$0xff]
        %v1762 = vld [vmem:[%s1221 + $0xef0] sm:$0xff]
        %v1763 = vld [vmem:[%s1221 + $0xef8] sm:$0xff]
        %v1764 = vld [vmem:[%s1221 + $0xf00] sm:$0xff]
        %v1765 = vld [vmem:[%s1221 + $0xf08] sm:$0xff]
        %v1766 = vld [vmem:[%s1221 + $0xf10] sm:$0xff]
        %v1767 = vld [vmem:[%s1221 + $0xf18] sm:$0xff]
        %v1768 = vld [vmem:[%s1221 + $0xf20] sm:$0xff]
        %v1769 = vld [vmem:[%s1221 + $0xf28] sm:$0xff]
        %v1770 = vld [vmem:[%s1221 + $0xf30] sm:$0xff]
        %v1771 = vld [vmem:[%s1221 + $0xf38] sm:$0xff]
        %v1772 = vld [vmem:[%s1221 + $0xf40] sm:$0xff]
        %v1773 = vld [vmem:[%s1221 + $0xf48] sm:$0xff]
        %v1774 = vld [vmem:[%s1221 + $0xf50] sm:$0xff]
        %v1775 = vld [vmem:[%s1221 + $0xf58] sm:$0xff]
        %v1776 = vld [vmem:[%s1221 + $0xf60] sm:$0xff]
        %v1777 = vld [vmem:[%s1221 + $0xf68] sm:$0xff]
        %v1778 = vld [vmem:[%s1221 + $0xf70] sm:$0xff]
        %v1779 = vld [vmem:[%s1221 + $0xf78] sm:$0xff]
        %v1780 = vld [vmem:[%s1221 + $0xf80] sm:$0xff]
        %v1781 = vld [vmem:[%s1221 + $0xf88] sm:$0xff]
        %v1782 = vld [vmem:[%s1221 + $0xf90] sm:$0xff]
        %v1783 = vld [vmem:[%s1221 + $0xf98] sm:$0xff]
        %v1784 = vld [vmem:[%s1221 + $0xfa0] sm:$0xff]
        %v1785 = vld [vmem:[%s1221 + $0xfa8] sm:$0xff]
        %v1786 = vld [vmem:[%s1221 + $0xfb0] sm:$0xff]
        %v1787 = vld [vmem:[%s1221 + $0xfb8] sm:$0xff]
        %v1788 = vld [vmem:[%s1221 + $0xfc0] sm:$0xff]
        %v1789 = vld [vmem:[%s1221 + $0xfc8] sm:$0xff]
        %v1790 = vld [vmem:[%s1221 + $0xfd0] sm:$0xff]
        %v1791 = vld [vmem:[%s1221 + $0xfd8] sm:$0xff]
        %v1792 = vld [vmem:[%s1221 + $0xfe0] sm:$0xff]
        %v1793 = vld [vmem:[%s1221 + $0xfe8] sm:$0xff]
        %v1794 = vld [vmem:[%s1221 + $0xff0] sm:$0xff]
        %v1795 = vld [vmem:[%s1221 + $0xff8] sm:$0xff]
        %v1796 = vld [vmem:[%s1264] sm:$0xf]
        %v1798 = vlaneseq
        %v1799 = vshrl.u32 %v1798, 7
        %v1800 = vsub.s32 0, %v1799
        %v1801 = vrot.slane %v1796, %v1800
        %v1802 = vlaneseq
        %v1803 = vshrl.u32 %v1802, 7
        %v1804 = vsub.s32 1, %v1803
        %v1805 = vrot.slane %v1796, %v1804
        %v1806 = vlaneseq
        %v1807 = vshrl.u32 %v1806, 7
        %v1808 = vsub.s32 2, %v1807
        %v1809 = vrot.slane %v1796, %v1808
        %v1810 = vlaneseq
        %v1811 = vshrl.u32 %v1810, 7
        %v1812 = vsub.s32 3, %v1811
        %v1813 = vrot.slane %v1796, %v1812
        %v1826 = vunpack.c.l.b16 %v1276
        %v1827 = vunpack.c.h.b16 %v1276
        %v1828 = vunpack.c.l.b16 %v1277
        %v1829 = vunpack.c.h.b16 %v1277
        %v1830 = vunpack.c.l.b16 %v1278
        %v1831 = vunpack.c.h.b16 %v1278
        %v1832 = vunpack.c.l.b16 %v1279
        %v1833 = vunpack.c.h.b16 %v1279
        %v1834 = vunpack.c.l.b16 %v1280
        %v1835 = vunpack.c.h.b16 %v1280
        %v1836 = vunpack.c.l.b16 %v1281
        %v1837 = vunpack.c.h.b16 %v1281
        %v1838 = vunpack.c.l.b16 %v1282
        %v1839 = vunpack.c.h.b16 %v1282
        %v1840 = vunpack.c.l.b16 %v1283
        %v1841 = vunpack.c.h.b16 %v1283
        %v1842 = vpack.c.b16 %v1826, %v1826
        %v1843 = vpack.c.b16 %v1827, %v1827
        %v1844 = vpack.c.b16 %v1828, %v1828
        %v1845 = vpack.c.b16 %v1829, %v1829
        %v1846 = vpack.c.b16 %v1830, %v1830
        %v1847 = vpack.c.b16 %v1831, %v1831
        %v1848 = vpack.c.b16 %v1832, %v1832
        %v1849 = vpack.c.b16 %v1833, %v1833
        %v1850 = vpack.c.b16 %v1834, %v1834
        %v1851 = vpack.c.b16 %v1835, %v1835
        %v1852 = vpack.c.b16 %v1836, %v1836
        %v1853 = vpack.c.b16 %v1837, %v1837
        %v1854 = vpack.c.b16 %v1838, %v1838
        %v1855 = vpack.c.b16 %v1839, %v1839
        %v1856 = vpack.c.b16 %v1840, %v1840
        %v1857 = vpack.c.b16 %v1841, %v1841
        %v2386 = vunpack.c.l.b16 %v1284
        %v2387 = vunpack.c.h.b16 %v1284
        %v2388 = vunpack.c.l.b16 %v1285
        %v2389 = vunpack.c.h.b16 %v1285
        %v2390 = vunpack.c.l.b16 %v1286
        %v2391 = vunpack.c.h.b16 %v1286
        %v2392 = vunpack.c.l.b16 %v1287
        %v2393 = vunpack.c.h.b16 %v1287
        %v2394 = vunpack.c.l.b16 %v1288
        %v2395 = vunpack.c.h.b16 %v1288
        %v2396 = vunpack.c.l.b16 %v1289
        %v2397 = vunpack.c.h.b16 %v1289
        %v2398 = vunpack.c.l.b16 %v1290
        %v2399 = vunpack.c.h.b16 %v1290
        %v2400 = vunpack.c.l.b16 %v1291
        %v2401 = vunpack.c.h.b16 %v1291
        %v2402 = vunpack.c.l.b16 %v1292
        %v2403 = vunpack.c.h.b16 %v1292
        %v2404 = vunpack.c.l.b16 %v1293
        %v2405 = vunpack.c.h.b16 %v1293
        %v2406 = vunpack.c.l.b16 %v1294
        %v2407 = vunpack.c.h.b16 %v1294
        %v2408 = vunpack.c.l.b16 %v1295
        %v2409 = vunpack.c.h.b16 %v1295
        %v2410 = vunpack.c.l.b16 %v1296
        %v2411 = vunpack.c.h.b16 %v1296
        %v2412 = vunpack.c.l.b16 %v1297
        %v2413 = vunpack.c.h.b16 %v1297
        %v2414 = vunpack.c.l.b16 %v1298
        %v2415 = vunpack.c.h.b16 %v1298
        %v2416 = vunpack.c.l.b16 %v1299
        %v2417 = vunpack.c.h.b16 %v1299
        %v2418 = vunpack.c.l.b16 %v1300
        %v2419 = vunpack.c.h.b16 %v1300
        %v2420 = vunpack.c.l.b16 %v1301
        %v2421 = vunpack.c.h.b16 %v1301
        %v2422 = vunpack.c.l.b16 %v1302
        %v2423 = vunpack.c.h.b16 %v1302
        %v2424 = vunpack.c.l.b16 %v1303
        %v2425 = vunpack.c.h.b16 %v1303
        %v2426 = vunpack.c.l.b16 %v1304
        %v2427 = vunpack.c.h.b16 %v1304
        %v2428 = vunpack.c.l.b16 %v1305
        %v2429 = vunpack.c.h.b16 %v1305
        %v2430 = vunpack.c.l.b16 %v1306
        %v2431 = vunpack.c.h.b16 %v1306
        %v2432 = vunpack.c.l.b16 %v1307
        %v2433 = vunpack.c.h.b16 %v1307
        %v2434 = vunpack.c.l.b16 %v1308
        %v2435 = vunpack.c.h.b16 %v1308
        %v2436 = vunpack.c.l.b16 %v1309
        %v2437 = vunpack.c.h.b16 %v1309
        %v2438 = vunpack.c.l.b16 %v1310
        %v2439 = vunpack.c.h.b16 %v1310
        %v2440 = vunpack.c.l.b16 %v1311
        %v2441 = vunpack.c.h.b16 %v1311
        %v2442 = vunpack.c.l.b16 %v1312
        %v2443 = vunpack.c.h.b16 %v1312
        %v2444 = vunpack.c.l.b16 %v1313
        %v2445 = vunpack.c.h.b16 %v1313
        %v2446 = vunpack.c.l.b16 %v1314
        %v2447 = vunpack.c.h.b16 %v1314
        %v2448 = vunpack.c.l.b16 %v1315
        %v2449 = vunpack.c.h.b16 %v1315
        %v2450 = vunpack.c.l.b16 %v1316
        %v2451 = vunpack.c.h.b16 %v1316
        %v2452 = vunpack.c.l.b16 %v1317
        %v2453 = vunpack.c.h.b16 %v1317
        %v2454 = vunpack.c.l.b16 %v1318
        %v2455 = vunpack.c.h.b16 %v1318
        %v2456 = vunpack.c.l.b16 %v1319
        %v2457 = vunpack.c.h.b16 %v1319
        %v2458 = vunpack.c.l.b16 %v1320
        %v2459 = vunpack.c.h.b16 %v1320
        %v2460 = vunpack.c.l.b16 %v1321
        %v2461 = vunpack.c.h.b16 %v1321
        %v2462 = vunpack.c.l.b16 %v1322
        %v2463 = vunpack.c.h.b16 %v1322
        %v2464 = vunpack.c.l.b16 %v1323
        %v2465 = vunpack.c.h.b16 %v1323
        %v2466 = vunpack.c.l.b16 %v1324
        %v2467 = vunpack.c.h.b16 %v1324
        %v2468 = vunpack.c.l.b16 %v1325
        %v2469 = vunpack.c.h.b16 %v1325
        %v2470 = vunpack.c.l.b16 %v1326
        %v2471 = vunpack.c.h.b16 %v1326
        %v2472 = vunpack.c.l.b16 %v1327
        %v2473 = vunpack.c.h.b16 %v1327
        %v2474 = vunpack.c.l.b16 %v1328
        %v2475 = vunpack.c.h.b16 %v1328
        %v2476 = vunpack.c.l.b16 %v1329
        %v2477 = vunpack.c.h.b16 %v1329
        %v2478 = vunpack.c.l.b16 %v1330
        %v2479 = vunpack.c.h.b16 %v1330
        %v2480 = vunpack.c.l.b16 %v1331
        %v2481 = vunpack.c.h.b16 %v1331
        %v2482 = vunpack.c.l.b16 %v1332
        %v2483 = vunpack.c.h.b16 %v1332
        %v2484 = vunpack.c.l.b16 %v1333
        %v2485 = vunpack.c.h.b16 %v1333
        %v2486 = vunpack.c.l.b16 %v1334
        %v2487 = vunpack.c.h.b16 %v1334
        %v2488 = vunpack.c.l.b16 %v1335
        %v2489 = vunpack.c.h.b16 %v1335
        %v2490 = vunpack.c.l.b16 %v1336
        %v2491 = vunpack.c.h.b16 %v1336
        %v2492 = vunpack.c.l.b16 %v1337
        %v2493 = vunpack.c.h.b16 %v1337
        %v2494 = vunpack.c.l.b16 %v1338
        %v2495 = vunpack.c.h.b16 %v1338
        %v2496 = vunpack.c.l.b16 %v1339
        %v2497 = vunpack.c.h.b16 %v1339
        %v2498 = vunpack.c.l.b16 %v1340
        %v2499 = vunpack.c.h.b16 %v1340
        %v2500 = vunpack.c.l.b16 %v1341
        %v2501 = vunpack.c.h.b16 %v1341
        %v2502 = vunpack.c.l.b16 %v1342
        %v2503 = vunpack.c.h.b16 %v1342
        %v2504 = vunpack.c.l.b16 %v1343
        %v2505 = vunpack.c.h.b16 %v1343
        %v2506 = vunpack.c.l.b16 %v1344
        %v2507 = vunpack.c.h.b16 %v1344
        %v2508 = vunpack.c.l.b16 %v1345
        %v2509 = vunpack.c.h.b16 %v1345
        %v2510 = vunpack.c.l.b16 %v1346
        %v2511 = vunpack.c.h.b16 %v1346
        %v2512 = vunpack.c.l.b16 %v1347
        %v2513 = vunpack.c.h.b16 %v1347
        %v2514 = vunpack.c.l.b16 %v1348
        %v2515 = vunpack.c.h.b16 %v1348
        %v2516 = vunpack.c.l.b16 %v1349
        %v2517 = vunpack.c.h.b16 %v1349
        %v2518 = vunpack.c.l.b16 %v1350
        %v2519 = vunpack.c.h.b16 %v1350
        %v2520 = vunpack.c.l.b16 %v1351
        %v2521 = vunpack.c.h.b16 %v1351
        %v2522 = vunpack.c.l.b16 %v1352
        %v2523 = vunpack.c.h.b16 %v1352
        %v2524 = vunpack.c.l.b16 %v1353
        %v2525 = vunpack.c.h.b16 %v1353
        %v2526 = vunpack.c.l.b16 %v1354
        %v2527 = vunpack.c.h.b16 %v1354
        %v2528 = vunpack.c.l.b16 %v1355
        %v2529 = vunpack.c.h.b16 %v1355
        %v2530 = vunpack.c.l.b16 %v1356
        %v2531 = vunpack.c.h.b16 %v1356
        %v2532 = vunpack.c.l.b16 %v1357
        %v2533 = vunpack.c.h.b16 %v1357
        %v2534 = vunpack.c.l.b16 %v1358
        %v2535 = vunpack.c.h.b16 %v1358
        %v2536 = vunpack.c.l.b16 %v1359
        %v2537 = vunpack.c.h.b16 %v1359
        %v2538 = vunpack.c.l.b16 %v1360
        %v2539 = vunpack.c.h.b16 %v1360
        %v2540 = vunpack.c.l.b16 %v1361
        %v2541 = vunpack.c.h.b16 %v1361
        %v2542 = vunpack.c.l.b16 %v1362
        %v2543 = vunpack.c.h.b16 %v1362
        %v2544 = vunpack.c.l.b16 %v1363
        %v2545 = vunpack.c.h.b16 %v1363
        %v2546 = vunpack.c.l.b16 %v1364
        %v2547 = vunpack.c.h.b16 %v1364
        %v2548 = vunpack.c.l.b16 %v1365
        %v2549 = vunpack.c.h.b16 %v1365
        %v2550 = vunpack.c.l.b16 %v1366
        %v2551 = vunpack.c.h.b16 %v1366
        %v2552 = vunpack.c.l.b16 %v1367
        %v2553 = vunpack.c.h.b16 %v1367
        %v2554 = vunpack.c.l.b16 %v1368
        %v2555 = vunpack.c.h.b16 %v1368
        %v2556 = vunpack.c.l.b16 %v1369
        %v2557 = vunpack.c.h.b16 %v1369
        %v2558 = vunpack.c.l.b16 %v1370
        %v2559 = vunpack.c.h.b16 %v1370
        %v2560 = vunpack.c.l.b16 %v1371
        %v2561 = vunpack.c.h.b16 %v1371
        %v2562 = vunpack.c.l.b16 %v1372
        %v2563 = vunpack.c.h.b16 %v1372
        %v2564 = vunpack.c.l.b16 %v1373
        %v2565 = vunpack.c.h.b16 %v1373
        %v2566 = vunpack.c.l.b16 %v1374
        %v2567 = vunpack.c.h.b16 %v1374
        %v2568 = vunpack.c.l.b16 %v1375
        %v2569 = vunpack.c.h.b16 %v1375
        %v2570 = vunpack.c.l.b16 %v1376
        %v2571 = vunpack.c.h.b16 %v1376
        %v2572 = vunpack.c.l.b16 %v1377
        %v2573 = vunpack.c.h.b16 %v1377
        %v2574 = vunpack.c.l.b16 %v1378
        %v2575 = vunpack.c.h.b16 %v1378
        %v2576 = vunpack.c.l.b16 %v1379
        %v2577 = vunpack.c.h.b16 %v1379
        %v2578 = vunpack.c.l.b16 %v1380
        %v2579 = vunpack.c.h.b16 %v1380
        %v2580 = vunpack.c.l.b16 %v1381
        %v2581 = vunpack.c.h.b16 %v1381
        %v2582 = vunpack.c.l.b16 %v1382
        %v2583 = vunpack.c.h.b16 %v1382
        %v2584 = vunpack.c.l.b16 %v1383
        %v2585 = vunpack.c.h.b16 %v1383
        %v2586 = vunpack.c.l.b16 %v1384
        %v2587 = vunpack.c.h.b16 %v1384
        %v2588 = vunpack.c.l.b16 %v1385
        %v2589 = vunpack.c.h.b16 %v1385
        %v2590 = vunpack.c.l.b16 %v1386
        %v2591 = vunpack.c.h.b16 %v1386
        %v2592 = vunpack.c.l.b16 %v1387
        %v2593 = vunpack.c.h.b16 %v1387
        %v2594 = vunpack.c.l.b16 %v1388
        %v2595 = vunpack.c.h.b16 %v1388
        %v2596 = vunpack.c.l.b16 %v1389
        %v2597 = vunpack.c.h.b16 %v1389
        %v2598 = vunpack.c.l.b16 %v1390
        %v2599 = vunpack.c.h.b16 %v1390
        %v2600 = vunpack.c.l.b16 %v1391
        %v2601 = vunpack.c.h.b16 %v1391
        %v2602 = vunpack.c.l.b16 %v1392
        %v2603 = vunpack.c.h.b16 %v1392
        %v2604 = vunpack.c.l.b16 %v1393
        %v2605 = vunpack.c.h.b16 %v1393
        %v2606 = vunpack.c.l.b16 %v1394
        %v2607 = vunpack.c.h.b16 %v1394
        %v2608 = vunpack.c.l.b16 %v1395
        %v2609 = vunpack.c.h.b16 %v1395
        %v2610 = vunpack.c.l.b16 %v1396
        %v2611 = vunpack.c.h.b16 %v1396
        %v2612 = vunpack.c.l.b16 %v1397
        %v2613 = vunpack.c.h.b16 %v1397
        %v2614 = vunpack.c.l.b16 %v1398
        %v2615 = vunpack.c.h.b16 %v1398
        %v2616 = vunpack.c.l.b16 %v1399
        %v2617 = vunpack.c.h.b16 %v1399
        %v2618 = vunpack.c.l.b16 %v1400
        %v2619 = vunpack.c.h.b16 %v1400
        %v2620 = vunpack.c.l.b16 %v1401
        %v2621 = vunpack.c.h.b16 %v1401
        %v2622 = vunpack.c.l.b16 %v1402
        %v2623 = vunpack.c.h.b16 %v1402
        %v2624 = vunpack.c.l.b16 %v1403
        %v2625 = vunpack.c.h.b16 %v1403
        %v2626 = vunpack.c.l.b16 %v1404
        %v2627 = vunpack.c.h.b16 %v1404
        %v2628 = vunpack.c.l.b16 %v1405
        %v2629 = vunpack.c.h.b16 %v1405
        %v2630 = vunpack.c.l.b16 %v1406
        %v2631 = vunpack.c.h.b16 %v1406
        %v2632 = vunpack.c.l.b16 %v1407
        %v2633 = vunpack.c.h.b16 %v1407
        %v2634 = vunpack.c.l.b16 %v1408
        %v2635 = vunpack.c.h.b16 %v1408
        %v2636 = vunpack.c.l.b16 %v1409
        %v2637 = vunpack.c.h.b16 %v1409
        %v2638 = vunpack.c.l.b16 %v1410
        %v2639 = vunpack.c.h.b16 %v1410
        %v2640 = vunpack.c.l.b16 %v1411
        %v2641 = vunpack.c.h.b16 %v1411
        %v2642 = vunpack.c.l.b16 %v1412
        %v2643 = vunpack.c.h.b16 %v1412
        %v2644 = vunpack.c.l.b16 %v1413
        %v2645 = vunpack.c.h.b16 %v1413
        %v2646 = vunpack.c.l.b16 %v1414
        %v2647 = vunpack.c.h.b16 %v1414
        %v2648 = vunpack.c.l.b16 %v1415
        %v2649 = vunpack.c.h.b16 %v1415
        %v2650 = vunpack.c.l.b16 %v1416
        %v2651 = vunpack.c.h.b16 %v1416
        %v2652 = vunpack.c.l.b16 %v1417
        %v2653 = vunpack.c.h.b16 %v1417
        %v2654 = vunpack.c.l.b16 %v1418
        %v2655 = vunpack.c.h.b16 %v1418
        %v2656 = vunpack.c.l.b16 %v1419
        %v2657 = vunpack.c.h.b16 %v1419
        %v2658 = vunpack.c.l.b16 %v1420
        %v2659 = vunpack.c.h.b16 %v1420
        %v2660 = vunpack.c.l.b16 %v1421
        %v2661 = vunpack.c.h.b16 %v1421
        %v2662 = vunpack.c.l.b16 %v1422
        %v2663 = vunpack.c.h.b16 %v1422
        %v2664 = vunpack.c.l.b16 %v1423
        %v2665 = vunpack.c.h.b16 %v1423
        %v2666 = vunpack.c.l.b16 %v1424
        %v2667 = vunpack.c.h.b16 %v1424
        %v2668 = vunpack.c.l.b16 %v1425
        %v2669 = vunpack.c.h.b16 %v1425
        %v2670 = vunpack.c.l.b16 %v1426
        %v2671 = vunpack.c.h.b16 %v1426
        %v2672 = vunpack.c.l.b16 %v1427
        %v2673 = vunpack.c.h.b16 %v1427
        %v2674 = vunpack.c.l.b16 %v1428
        %v2675 = vunpack.c.h.b16 %v1428
        %v2676 = vunpack.c.l.b16 %v1429
        %v2677 = vunpack.c.h.b16 %v1429
        %v2678 = vunpack.c.l.b16 %v1430
        %v2679 = vunpack.c.h.b16 %v1430
        %v2680 = vunpack.c.l.b16 %v1431
        %v2681 = vunpack.c.h.b16 %v1431
        %v2682 = vunpack.c.l.b16 %v1432
        %v2683 = vunpack.c.h.b16 %v1432
        %v2684 = vunpack.c.l.b16 %v1433
        %v2685 = vunpack.c.h.b16 %v1433
        %v2686 = vunpack.c.l.b16 %v1434
        %v2687 = vunpack.c.h.b16 %v1434
        %v2688 = vunpack.c.l.b16 %v1435
        %v2689 = vunpack.c.h.b16 %v1435
        %v2690 = vunpack.c.l.b16 %v1436
        %v2691 = vunpack.c.h.b16 %v1436
        %v2692 = vunpack.c.l.b16 %v1437
        %v2693 = vunpack.c.h.b16 %v1437
        %v2694 = vunpack.c.l.b16 %v1438
        %v2695 = vunpack.c.h.b16 %v1438
        %v2696 = vunpack.c.l.b16 %v1439
        %v2697 = vunpack.c.h.b16 %v1439
        %v2698 = vunpack.c.l.b16 %v1440
        %v2699 = vunpack.c.h.b16 %v1440
        %v2700 = vunpack.c.l.b16 %v1441
        %v2701 = vunpack.c.h.b16 %v1441
        %v2702 = vunpack.c.l.b16 %v1442
        %v2703 = vunpack.c.h.b16 %v1442
        %v2704 = vunpack.c.l.b16 %v1443
        %v2705 = vunpack.c.h.b16 %v1443
        %v2706 = vunpack.c.l.b16 %v1444
        %v2707 = vunpack.c.h.b16 %v1444
        %v2708 = vunpack.c.l.b16 %v1445
        %v2709 = vunpack.c.h.b16 %v1445
        %v2710 = vunpack.c.l.b16 %v1446
        %v2711 = vunpack.c.h.b16 %v1446
        %v2712 = vunpack.c.l.b16 %v1447
        %v2713 = vunpack.c.h.b16 %v1447
        %v2714 = vunpack.c.l.b16 %v1448
        %v2715 = vunpack.c.h.b16 %v1448
        %v2716 = vunpack.c.l.b16 %v1449
        %v2717 = vunpack.c.h.b16 %v1449
        %v2718 = vunpack.c.l.b16 %v1450
        %v2719 = vunpack.c.h.b16 %v1450
        %v2720 = vunpack.c.l.b16 %v1451
        %v2721 = vunpack.c.h.b16 %v1451
        %v2722 = vunpack.c.l.b16 %v1452
        %v2723 = vunpack.c.h.b16 %v1452
        %v2724 = vunpack.c.l.b16 %v1453
        %v2725 = vunpack.c.h.b16 %v1453
        %v2726 = vunpack.c.l.b16 %v1454
        %v2727 = vunpack.c.h.b16 %v1454
        %v2728 = vunpack.c.l.b16 %v1455
        %v2729 = vunpack.c.h.b16 %v1455
        %v2730 = vunpack.c.l.b16 %v1456
        %v2731 = vunpack.c.h.b16 %v1456
        %v2732 = vunpack.c.l.b16 %v1457
        %v2733 = vunpack.c.h.b16 %v1457
        %v2734 = vunpack.c.l.b16 %v1458
        %v2735 = vunpack.c.h.b16 %v1458
        %v2736 = vunpack.c.l.b16 %v1459
        %v2737 = vunpack.c.h.b16 %v1459
        %v2738 = vunpack.c.l.b16 %v1460
        %v2739 = vunpack.c.h.b16 %v1460
        %v2740 = vunpack.c.l.b16 %v1461
        %v2741 = vunpack.c.h.b16 %v1461
        %v2742 = vunpack.c.l.b16 %v1462
        %v2743 = vunpack.c.h.b16 %v1462
        %v2744 = vunpack.c.l.b16 %v1463
        %v2745 = vunpack.c.h.b16 %v1463
        %v2746 = vunpack.c.l.b16 %v1464
        %v2747 = vunpack.c.h.b16 %v1464
        %v2748 = vunpack.c.l.b16 %v1465
        %v2749 = vunpack.c.h.b16 %v1465
        %v2750 = vunpack.c.l.b16 %v1466
        %v2751 = vunpack.c.h.b16 %v1466
        %v2752 = vunpack.c.l.b16 %v1467
        %v2753 = vunpack.c.h.b16 %v1467
        %v2754 = vunpack.c.l.b16 %v1468
        %v2755 = vunpack.c.h.b16 %v1468
        %v2756 = vunpack.c.l.b16 %v1469
        %v2757 = vunpack.c.h.b16 %v1469
        %v2758 = vunpack.c.l.b16 %v1470
        %v2759 = vunpack.c.h.b16 %v1470
        %v2760 = vunpack.c.l.b16 %v1471
        %v2761 = vunpack.c.h.b16 %v1471
        %v2762 = vunpack.c.l.b16 %v1472
        %v2763 = vunpack.c.h.b16 %v1472
        %v2764 = vunpack.c.l.b16 %v1473
        %v2765 = vunpack.c.h.b16 %v1473
        %v2766 = vunpack.c.l.b16 %v1474
        %v2767 = vunpack.c.h.b16 %v1474
        %v2768 = vunpack.c.l.b16 %v1475
        %v2769 = vunpack.c.h.b16 %v1475
        %v2770 = vunpack.c.l.b16 %v1476
        %v2771 = vunpack.c.h.b16 %v1476
        %v2772 = vunpack.c.l.b16 %v1477
        %v2773 = vunpack.c.h.b16 %v1477
        %v2774 = vunpack.c.l.b16 %v1478
        %v2775 = vunpack.c.h.b16 %v1478
        %v2776 = vunpack.c.l.b16 %v1479
        %v2777 = vunpack.c.h.b16 %v1479
        %v2778 = vunpack.c.l.b16 %v1480
        %v2779 = vunpack.c.h.b16 %v1480
        %v2780 = vunpack.c.l.b16 %v1481
        %v2781 = vunpack.c.h.b16 %v1481
        %v2782 = vunpack.c.l.b16 %v1482
        %v2783 = vunpack.c.h.b16 %v1482
        %v2784 = vunpack.c.l.b16 %v1483
        %v2785 = vunpack.c.h.b16 %v1483
        %v2786 = vunpack.c.l.b16 %v1484
        %v2787 = vunpack.c.h.b16 %v1484
        %v2788 = vunpack.c.l.b16 %v1485
        %v2789 = vunpack.c.h.b16 %v1485
        %v2790 = vunpack.c.l.b16 %v1486
        %v2791 = vunpack.c.h.b16 %v1486
        %v2792 = vunpack.c.l.b16 %v1487
        %v2793 = vunpack.c.h.b16 %v1487
        %v2794 = vunpack.c.l.b16 %v1488
        %v2795 = vunpack.c.h.b16 %v1488
        %v2796 = vunpack.c.l.b16 %v1489
        %v2797 = vunpack.c.h.b16 %v1489
        %v2798 = vunpack.c.l.b16 %v1490
        %v2799 = vunpack.c.h.b16 %v1490
        %v2800 = vunpack.c.l.b16 %v1491
        %v2801 = vunpack.c.h.b16 %v1491
        %v2802 = vunpack.c.l.b16 %v1492
        %v2803 = vunpack.c.h.b16 %v1492
        %v2804 = vunpack.c.l.b16 %v1493
        %v2805 = vunpack.c.h.b16 %v1493
        %v2806 = vunpack.c.l.b16 %v1494
        %v2807 = vunpack.c.h.b16 %v1494
        %v2808 = vunpack.c.l.b16 %v1495
        %v2809 = vunpack.c.h.b16 %v1495
        %v2810 = vunpack.c.l.b16 %v1496
        %v2811 = vunpack.c.h.b16 %v1496
        %v2812 = vunpack.c.l.b16 %v1497
        %v2813 = vunpack.c.h.b16 %v1497
        %v2814 = vunpack.c.l.b16 %v1498
        %v2815 = vunpack.c.h.b16 %v1498
        %v2816 = vunpack.c.l.b16 %v1499
        %v2817 = vunpack.c.h.b16 %v1499
        %v2818 = vunpack.c.l.b16 %v1500
        %v2819 = vunpack.c.h.b16 %v1500
        %v2820 = vunpack.c.l.b16 %v1501
        %v2821 = vunpack.c.h.b16 %v1501
        %v2822 = vunpack.c.l.b16 %v1502
        %v2823 = vunpack.c.h.b16 %v1502
        %v2824 = vunpack.c.l.b16 %v1503
        %v2825 = vunpack.c.h.b16 %v1503
        %v2826 = vunpack.c.l.b16 %v1504
        %v2827 = vunpack.c.h.b16 %v1504
        %v2828 = vunpack.c.l.b16 %v1505
        %v2829 = vunpack.c.h.b16 %v1505
        %v2830 = vunpack.c.l.b16 %v1506
        %v2831 = vunpack.c.h.b16 %v1506
        %v2832 = vunpack.c.l.b16 %v1507
        %v2833 = vunpack.c.h.b16 %v1507
        %v2834 = vunpack.c.l.b16 %v1508
        %v2835 = vunpack.c.h.b16 %v1508
        %v2836 = vunpack.c.l.b16 %v1509
        %v2837 = vunpack.c.h.b16 %v1509
        %v2838 = vunpack.c.l.b16 %v1510
        %v2839 = vunpack.c.h.b16 %v1510
        %v2840 = vunpack.c.l.b16 %v1511
        %v2841 = vunpack.c.h.b16 %v1511
        %v2842 = vunpack.c.l.b16 %v1512
        %v2843 = vunpack.c.h.b16 %v1512
        %v2844 = vunpack.c.l.b16 %v1513
        %v2845 = vunpack.c.h.b16 %v1513
        %v2846 = vunpack.c.l.b16 %v1514
        %v2847 = vunpack.c.h.b16 %v1514
        %v2848 = vunpack.c.l.b16 %v1515
        %v2849 = vunpack.c.h.b16 %v1515
        %v2850 = vunpack.c.l.b16 %v1516
        %v2851 = vunpack.c.h.b16 %v1516
        %v2852 = vunpack.c.l.b16 %v1517
        %v2853 = vunpack.c.h.b16 %v1517
        %v2854 = vunpack.c.l.b16 %v1518
        %v2855 = vunpack.c.h.b16 %v1518
        %v2856 = vunpack.c.l.b16 %v1519
        %v2857 = vunpack.c.h.b16 %v1519
        %v2858 = vunpack.c.l.b16 %v1520
        %v2859 = vunpack.c.h.b16 %v1520
        %v2860 = vunpack.c.l.b16 %v1521
        %v2861 = vunpack.c.h.b16 %v1521
        %v2862 = vunpack.c.l.b16 %v1522
        %v2863 = vunpack.c.h.b16 %v1522
        %v2864 = vunpack.c.l.b16 %v1523
        %v2865 = vunpack.c.h.b16 %v1523
        %v2866 = vunpack.c.l.b16 %v1524
        %v2867 = vunpack.c.h.b16 %v1524
        %v2868 = vunpack.c.l.b16 %v1525
        %v2869 = vunpack.c.h.b16 %v1525
        %v2870 = vunpack.c.l.b16 %v1526
        %v2871 = vunpack.c.h.b16 %v1526
        %v2872 = vunpack.c.l.b16 %v1527
        %v2873 = vunpack.c.h.b16 %v1527
        %v2874 = vunpack.c.l.b16 %v1528
        %v2875 = vunpack.c.h.b16 %v1528
        %v2876 = vunpack.c.l.b16 %v1529
        %v2877 = vunpack.c.h.b16 %v1529
        %v2878 = vunpack.c.l.b16 %v1530
        %v2879 = vunpack.c.h.b16 %v1530
        %v2880 = vunpack.c.l.b16 %v1531
        %v2881 = vunpack.c.h.b16 %v1531
        %v2882 = vunpack.c.l.b16 %v1532
        %v2883 = vunpack.c.h.b16 %v1532
        %v2884 = vunpack.c.l.b16 %v1533
        %v2885 = vunpack.c.h.b16 %v1533
        %v2886 = vunpack.c.l.b16 %v1534
        %v2887 = vunpack.c.h.b16 %v1534
        %v2888 = vunpack.c.l.b16 %v1535
        %v2889 = vunpack.c.h.b16 %v1535
        %v2890 = vunpack.c.l.b16 %v1536
        %v2891 = vunpack.c.h.b16 %v1536
        %v2892 = vunpack.c.l.b16 %v1537
        %v2893 = vunpack.c.h.b16 %v1537
        %v2894 = vunpack.c.l.b16 %v1538
        %v2895 = vunpack.c.h.b16 %v1538
        %v2896 = vunpack.c.l.b16 %v1539
        %v2897 = vunpack.c.h.b16 %v1539
        %v2898 = vunpack.c.l.b16 %v1540
        %v2899 = vunpack.c.h.b16 %v1540
        %v2900 = vunpack.c.l.b16 %v1541
        %v2901 = vunpack.c.h.b16 %v1541
        %v2902 = vunpack.c.l.b16 %v1542
        %v2903 = vunpack.c.h.b16 %v1542
        %v2904 = vunpack.c.l.b16 %v1543
        %v2905 = vunpack.c.h.b16 %v1543
        %v2906 = vunpack.c.l.b16 %v1544
        %v2907 = vunpack.c.h.b16 %v1544
        %v2908 = vunpack.c.l.b16 %v1545
        %v2909 = vunpack.c.h.b16 %v1545
        %v2910 = vunpack.c.l.b16 %v1546
        %v2911 = vunpack.c.h.b16 %v1546
        %v2912 = vunpack.c.l.b16 %v1547
        %v2913 = vunpack.c.h.b16 %v1547
        %v2914 = vunpack.c.l.b16 %v1548
        %v2915 = vunpack.c.h.b16 %v1548
        %v2916 = vunpack.c.l.b16 %v1549
        %v2917 = vunpack.c.h.b16 %v1549
        %v2918 = vunpack.c.l.b16 %v1550
        %v2919 = vunpack.c.h.b16 %v1550
        %v2920 = vunpack.c.l.b16 %v1551
        %v2921 = vunpack.c.h.b16 %v1551
        %v2922 = vunpack.c.l.b16 %v1552
        %v2923 = vunpack.c.h.b16 %v1552
        %v2924 = vunpack.c.l.b16 %v1553
        %v2925 = vunpack.c.h.b16 %v1553
        %v2926 = vunpack.c.l.b16 %v1554
        %v2927 = vunpack.c.h.b16 %v1554
        %v2928 = vunpack.c.l.b16 %v1555
        %v2929 = vunpack.c.h.b16 %v1555
        %v2930 = vunpack.c.l.b16 %v1556
        %v2931 = vunpack.c.h.b16 %v1556
        %v2932 = vunpack.c.l.b16 %v1557
        %v2933 = vunpack.c.h.b16 %v1557
        %v2934 = vunpack.c.l.b16 %v1558
        %v2935 = vunpack.c.h.b16 %v1558
        %v2936 = vunpack.c.l.b16 %v1559
        %v2937 = vunpack.c.h.b16 %v1559
        %v2938 = vunpack.c.l.b16 %v1560
        %v2939 = vunpack.c.h.b16 %v1560
        %v2940 = vunpack.c.l.b16 %v1561
        %v2941 = vunpack.c.h.b16 %v1561
        %v2942 = vunpack.c.l.b16 %v1562
        %v2943 = vunpack.c.h.b16 %v1562
        %v2944 = vunpack.c.l.b16 %v1563
        %v2945 = vunpack.c.h.b16 %v1563
        %v2946 = vunpack.c.l.b16 %v1564
        %v2947 = vunpack.c.h.b16 %v1564
        %v2948 = vunpack.c.l.b16 %v1565
        %v2949 = vunpack.c.h.b16 %v1565
        %v2950 = vunpack.c.l.b16 %v1566
        %v2951 = vunpack.c.h.b16 %v1566
        %v2952 = vunpack.c.l.b16 %v1567
        %v2953 = vunpack.c.h.b16 %v1567
        %v2954 = vunpack.c.l.b16 %v1568
        %v2955 = vunpack.c.h.b16 %v1568
        %v2956 = vunpack.c.l.b16 %v1569
        %v2957 = vunpack.c.h.b16 %v1569
        %v2958 = vunpack.c.l.b16 %v1570
        %v2959 = vunpack.c.h.b16 %v1570
        %v2960 = vunpack.c.l.b16 %v1571
        %v2961 = vunpack.c.h.b16 %v1571
        %v2962 = vunpack.c.l.b16 %v1572
        %v2963 = vunpack.c.h.b16 %v1572
        %v2964 = vunpack.c.l.b16 %v1573
        %v2965 = vunpack.c.h.b16 %v1573
        %v2966 = vunpack.c.l.b16 %v1574
        %v2967 = vunpack.c.h.b16 %v1574
        %v2968 = vunpack.c.l.b16 %v1575
        %v2969 = vunpack.c.h.b16 %v1575
        %v2970 = vunpack.c.l.b16 %v1576
        %v2971 = vunpack.c.h.b16 %v1576
        %v2972 = vunpack.c.l.b16 %v1577
        %v2973 = vunpack.c.h.b16 %v1577
        %v2974 = vunpack.c.l.b16 %v1578
        %v2975 = vunpack.c.h.b16 %v1578
        %v2976 = vunpack.c.l.b16 %v1579
        %v2977 = vunpack.c.h.b16 %v1579
        %v2978 = vunpack.c.l.b16 %v1580
        %v2979 = vunpack.c.h.b16 %v1580
        %v2980 = vunpack.c.l.b16 %v1581
        %v2981 = vunpack.c.h.b16 %v1581
        %v2982 = vunpack.c.l.b16 %v1582
        %v2983 = vunpack.c.h.b16 %v1582
        %v2984 = vunpack.c.l.b16 %v1583
        %v2985 = vunpack.c.h.b16 %v1583
        %v2986 = vunpack.c.l.b16 %v1584
        %v2987 = vunpack.c.h.b16 %v1584
        %v2988 = vunpack.c.l.b16 %v1585
        %v2989 = vunpack.c.h.b16 %v1585
        %v2990 = vunpack.c.l.b16 %v1586
        %v2991 = vunpack.c.h.b16 %v1586
        %v2992 = vunpack.c.l.b16 %v1587
        %v2993 = vunpack.c.h.b16 %v1587
        %v2994 = vunpack.c.l.b16 %v1588
        %v2995 = vunpack.c.h.b16 %v1588
        %v2996 = vunpack.c.l.b16 %v1589
        %v2997 = vunpack.c.h.b16 %v1589
        %v2998 = vunpack.c.l.b16 %v1590
        %v2999 = vunpack.c.h.b16 %v1590
        %v3000 = vunpack.c.l.b16 %v1591
        %v3001 = vunpack.c.h.b16 %v1591
        %v3002 = vunpack.c.l.b16 %v1592
        %v3003 = vunpack.c.h.b16 %v1592
        %v3004 = vunpack.c.l.b16 %v1593
        %v3005 = vunpack.c.h.b16 %v1593
        %v3006 = vunpack.c.l.b16 %v1594
        %v3007 = vunpack.c.h.b16 %v1594
        %v3008 = vunpack.c.l.b16 %v1595
        %v3009 = vunpack.c.h.b16 %v1595
        %v3010 = vunpack.c.l.b16 %v1596
        %v3011 = vunpack.c.h.b16 %v1596
        %v3012 = vunpack.c.l.b16 %v1597
        %v3013 = vunpack.c.h.b16 %v1597
        %v3014 = vunpack.c.l.b16 %v1598
        %v3015 = vunpack.c.h.b16 %v1598
        %v3016 = vunpack.c.l.b16 %v1599
        %v3017 = vunpack.c.h.b16 %v1599
        %v3018 = vunpack.c.l.b16 %v1600
        %v3019 = vunpack.c.h.b16 %v1600
        %v3020 = vunpack.c.l.b16 %v1601
        %v3021 = vunpack.c.h.b16 %v1601
        %v3022 = vunpack.c.l.b16 %v1602
        %v3023 = vunpack.c.h.b16 %v1602
        %v3024 = vunpack.c.l.b16 %v1603
        %v3025 = vunpack.c.h.b16 %v1603
        %v3026 = vunpack.c.l.b16 %v1604
        %v3027 = vunpack.c.h.b16 %v1604
        %v3028 = vunpack.c.l.b16 %v1605
        %v3029 = vunpack.c.h.b16 %v1605
        %v3030 = vunpack.c.l.b16 %v1606
        %v3031 = vunpack.c.h.b16 %v1606
        %v3032 = vunpack.c.l.b16 %v1607
        %v3033 = vunpack.c.h.b16 %v1607
        %v3034 = vunpack.c.l.b16 %v1608
        %v3035 = vunpack.c.h.b16 %v1608
        %v3036 = vunpack.c.l.b16 %v1609
        %v3037 = vunpack.c.h.b16 %v1609
        %v3038 = vunpack.c.l.b16 %v1610
        %v3039 = vunpack.c.h.b16 %v1610
        %v3040 = vunpack.c.l.b16 %v1611
        %v3041 = vunpack.c.h.b16 %v1611
        %v3042 = vunpack.c.l.b16 %v1612
        %v3043 = vunpack.c.h.b16 %v1612
        %v3044 = vunpack.c.l.b16 %v1613
        %v3045 = vunpack.c.h.b16 %v1613
        %v3046 = vunpack.c.l.b16 %v1614
        %v3047 = vunpack.c.h.b16 %v1614
        %v3048 = vunpack.c.l.b16 %v1615
        %v3049 = vunpack.c.h.b16 %v1615
        %v3050 = vunpack.c.l.b16 %v1616
        %v3051 = vunpack.c.h.b16 %v1616
        %v3052 = vunpack.c.l.b16 %v1617
        %v3053 = vunpack.c.h.b16 %v1617
        %v3054 = vunpack.c.l.b16 %v1618
        %v3055 = vunpack.c.h.b16 %v1618
        %v3056 = vunpack.c.l.b16 %v1619
        %v3057 = vunpack.c.h.b16 %v1619
        %v3058 = vunpack.c.l.b16 %v1620
        %v3059 = vunpack.c.h.b16 %v1620
        %v3060 = vunpack.c.l.b16 %v1621
        %v3061 = vunpack.c.h.b16 %v1621
        %v3062 = vunpack.c.l.b16 %v1622
        %v3063 = vunpack.c.h.b16 %v1622
        %v3064 = vunpack.c.l.b16 %v1623
        %v3065 = vunpack.c.h.b16 %v1623
        %v3066 = vunpack.c.l.b16 %v1624
        %v3067 = vunpack.c.h.b16 %v1624
        %v3068 = vunpack.c.l.b16 %v1625
        %v3069 = vunpack.c.h.b16 %v1625
        %v3070 = vunpack.c.l.b16 %v1626
        %v3071 = vunpack.c.h.b16 %v1626
        %v3072 = vunpack.c.l.b16 %v1627
        %v3073 = vunpack.c.h.b16 %v1627
        %v3074 = vunpack.c.l.b16 %v1628
        %v3075 = vunpack.c.h.b16 %v1628
        %v3076 = vunpack.c.l.b16 %v1629
        %v3077 = vunpack.c.h.b16 %v1629
        %v3078 = vunpack.c.l.b16 %v1630
        %v3079 = vunpack.c.h.b16 %v1630
        %v3080 = vunpack.c.l.b16 %v1631
        %v3081 = vunpack.c.h.b16 %v1631
        %v3082 = vunpack.c.l.b16 %v1632
        %v3083 = vunpack.c.h.b16 %v1632
        %v3084 = vunpack.c.l.b16 %v1633
        %v3085 = vunpack.c.h.b16 %v1633
        %v3086 = vunpack.c.l.b16 %v1634
        %v3087 = vunpack.c.h.b16 %v1634
        %v3088 = vunpack.c.l.b16 %v1635
        %v3089 = vunpack.c.h.b16 %v1635
        %v3090 = vunpack.c.l.b16 %v1636
        %v3091 = vunpack.c.h.b16 %v1636
        %v3092 = vunpack.c.l.b16 %v1637
        %v3093 = vunpack.c.h.b16 %v1637
        %v3094 = vunpack.c.l.b16 %v1638
        %v3095 = vunpack.c.h.b16 %v1638
        %v3096 = vunpack.c.l.b16 %v1639
        %v3097 = vunpack.c.h.b16 %v1639
        %v3098 = vunpack.c.l.b16 %v1640
        %v3099 = vunpack.c.h.b16 %v1640
        %v3100 = vunpack.c.l.b16 %v1641
        %v3101 = vunpack.c.h.b16 %v1641
        %v3102 = vunpack.c.l.b16 %v1642
        %v3103 = vunpack.c.h.b16 %v1642
        %v3104 = vunpack.c.l.b16 %v1643
        %v3105 = vunpack.c.h.b16 %v1643
        %v3106 = vunpack.c.l.b16 %v1644
        %v3107 = vunpack.c.h.b16 %v1644
        %v3108 = vunpack.c.l.b16 %v1645
        %v3109 = vunpack.c.h.b16 %v1645
        %v3110 = vunpack.c.l.b16 %v1646
        %v3111 = vunpack.c.h.b16 %v1646
        %v3112 = vunpack.c.l.b16 %v1647
        %v3113 = vunpack.c.h.b16 %v1647
        %v3114 = vunpack.c.l.b16 %v1648
        %v3115 = vunpack.c.h.b16 %v1648
        %v3116 = vunpack.c.l.b16 %v1649
        %v3117 = vunpack.c.h.b16 %v1649
        %v3118 = vunpack.c.l.b16 %v1650
        %v3119 = vunpack.c.h.b16 %v1650
        %v3120 = vunpack.c.l.b16 %v1651
        %v3121 = vunpack.c.h.b16 %v1651
        %v3122 = vunpack.c.l.b16 %v1652
        %v3123 = vunpack.c.h.b16 %v1652
        %v3124 = vunpack.c.l.b16 %v1653
        %v3125 = vunpack.c.h.b16 %v1653
        %v3126 = vunpack.c.l.b16 %v1654
        %v3127 = vunpack.c.h.b16 %v1654
        %v3128 = vunpack.c.l.b16 %v1655
        %v3129 = vunpack.c.h.b16 %v1655
        %v3130 = vunpack.c.l.b16 %v1656
        %v3131 = vunpack.c.h.b16 %v1656
        %v3132 = vunpack.c.l.b16 %v1657
        %v3133 = vunpack.c.h.b16 %v1657
        %v3134 = vunpack.c.l.b16 %v1658
        %v3135 = vunpack.c.h.b16 %v1658
        %v3136 = vunpack.c.l.b16 %v1659
        %v3137 = vunpack.c.h.b16 %v1659
        %v3138 = vunpack.c.l.b16 %v1660
        %v3139 = vunpack.c.h.b16 %v1660
        %v3140 = vunpack.c.l.b16 %v1661
        %v3141 = vunpack.c.h.b16 %v1661
        %v3142 = vunpack.c.l.b16 %v1662
        %v3143 = vunpack.c.h.b16 %v1662
        %v3144 = vunpack.c.l.b16 %v1663
        %v3145 = vunpack.c.h.b16 %v1663
        %v3146 = vunpack.c.l.b16 %v1664
        %v3147 = vunpack.c.h.b16 %v1664
        %v3148 = vunpack.c.l.b16 %v1665
        %v3149 = vunpack.c.h.b16 %v1665
        %v3150 = vunpack.c.l.b16 %v1666
        %v3151 = vunpack.c.h.b16 %v1666
        %v3152 = vunpack.c.l.b16 %v1667
        %v3153 = vunpack.c.h.b16 %v1667
        %v3154 = vunpack.c.l.b16 %v1668
        %v3155 = vunpack.c.h.b16 %v1668
        %v3156 = vunpack.c.l.b16 %v1669
        %v3157 = vunpack.c.h.b16 %v1669
        %v3158 = vunpack.c.l.b16 %v1670
        %v3159 = vunpack.c.h.b16 %v1670
        %v3160 = vunpack.c.l.b16 %v1671
        %v3161 = vunpack.c.h.b16 %v1671
        %v3162 = vunpack.c.l.b16 %v1672
        %v3163 = vunpack.c.h.b16 %v1672
        %v3164 = vunpack.c.l.b16 %v1673
        %v3165 = vunpack.c.h.b16 %v1673
        %v3166 = vunpack.c.l.b16 %v1674
        %v3167 = vunpack.c.h.b16 %v1674
        %v3168 = vunpack.c.l.b16 %v1675
        %v3169 = vunpack.c.h.b16 %v1675
        %v3170 = vunpack.c.l.b16 %v1676
        %v3171 = vunpack.c.h.b16 %v1676
        %v3172 = vunpack.c.l.b16 %v1677
        %v3173 = vunpack.c.h.b16 %v1677
        %v3174 = vunpack.c.l.b16 %v1678
        %v3175 = vunpack.c.h.b16 %v1678
        %v3176 = vunpack.c.l.b16 %v1679
        %v3177 = vunpack.c.h.b16 %v1679
        %v3178 = vunpack.c.l.b16 %v1680
        %v3179 = vunpack.c.h.b16 %v1680
        %v3180 = vunpack.c.l.b16 %v1681
        %v3181 = vunpack.c.h.b16 %v1681
        %v3182 = vunpack.c.l.b16 %v1682
        %v3183 = vunpack.c.h.b16 %v1682
        %v3184 = vunpack.c.l.b16 %v1683
        %v3185 = vunpack.c.h.b16 %v1683
        %v3186 = vunpack.c.l.b16 %v1684
        %v3187 = vunpack.c.h.b16 %v1684
        %v3188 = vunpack.c.l.b16 %v1685
        %v3189 = vunpack.c.h.b16 %v1685
        %v3190 = vunpack.c.l.b16 %v1686
        %v3191 = vunpack.c.h.b16 %v1686
        %v3192 = vunpack.c.l.b16 %v1687
        %v3193 = vunpack.c.h.b16 %v1687
        %v3194 = vunpack.c.l.b16 %v1688
        %v3195 = vunpack.c.h.b16 %v1688
        %v3196 = vunpack.c.l.b16 %v1689
        %v3197 = vunpack.c.h.b16 %v1689
        %v3198 = vunpack.c.l.b16 %v1690
        %v3199 = vunpack.c.h.b16 %v1690
        %v3200 = vunpack.c.l.b16 %v1691
        %v3201 = vunpack.c.h.b16 %v1691
        %v3202 = vunpack.c.l.b16 %v1692
        %v3203 = vunpack.c.h.b16 %v1692
        %v3204 = vunpack.c.l.b16 %v1693
        %v3205 = vunpack.c.h.b16 %v1693
        %v3206 = vunpack.c.l.b16 %v1694
        %v3207 = vunpack.c.h.b16 %v1694
        %v3208 = vunpack.c.l.b16 %v1695
        %v3209 = vunpack.c.h.b16 %v1695
        %v3210 = vunpack.c.l.b16 %v1696
        %v3211 = vunpack.c.h.b16 %v1696
        %v3212 = vunpack.c.l.b16 %v1697
        %v3213 = vunpack.c.h.b16 %v1697
        %v3214 = vunpack.c.l.b16 %v1698
        %v3215 = vunpack.c.h.b16 %v1698
        %v3216 = vunpack.c.l.b16 %v1699
        %v3217 = vunpack.c.h.b16 %v1699
        %v3218 = vunpack.c.l.b16 %v1700
        %v3219 = vunpack.c.h.b16 %v1700
        %v3220 = vunpack.c.l.b16 %v1701
        %v3221 = vunpack.c.h.b16 %v1701
        %v3222 = vunpack.c.l.b16 %v1702
        %v3223 = vunpack.c.h.b16 %v1702
        %v3224 = vunpack.c.l.b16 %v1703
        %v3225 = vunpack.c.h.b16 %v1703
        %v3226 = vunpack.c.l.b16 %v1704
        %v3227 = vunpack.c.h.b16 %v1704
        %v3228 = vunpack.c.l.b16 %v1705
        %v3229 = vunpack.c.h.b16 %v1705
        %v3230 = vunpack.c.l.b16 %v1706
        %v3231 = vunpack.c.h.b16 %v1706
        %v3232 = vunpack.c.l.b16 %v1707
        %v3233 = vunpack.c.h.b16 %v1707
        %v3234 = vunpack.c.l.b16 %v1708
        %v3235 = vunpack.c.h.b16 %v1708
        %v3236 = vunpack.c.l.b16 %v1709
        %v3237 = vunpack.c.h.b16 %v1709
        %v3238 = vunpack.c.l.b16 %v1710
        %v3239 = vunpack.c.h.b16 %v1710
        %v3240 = vunpack.c.l.b16 %v1711
        %v3241 = vunpack.c.h.b16 %v1711
        %v3242 = vunpack.c.l.b16 %v1712
        %v3243 = vunpack.c.h.b16 %v1712
        %v3244 = vunpack.c.l.b16 %v1713
        %v3245 = vunpack.c.h.b16 %v1713
        %v3246 = vunpack.c.l.b16 %v1714
        %v3247 = vunpack.c.h.b16 %v1714
        %v3248 = vunpack.c.l.b16 %v1715
        %v3249 = vunpack.c.h.b16 %v1715
        %v3250 = vunpack.c.l.b16 %v1716
        %v3251 = vunpack.c.h.b16 %v1716
        %v3252 = vunpack.c.l.b16 %v1717
        %v3253 = vunpack.c.h.b16 %v1717
        %v3254 = vunpack.c.l.b16 %v1718
        %v3255 = vunpack.c.h.b16 %v1718
        %v3256 = vunpack.c.l.b16 %v1719
        %v3257 = vunpack.c.h.b16 %v1719
        %v3258 = vunpack.c.l.b16 %v1720
        %v3259 = vunpack.c.h.b16 %v1720
        %v3260 = vunpack.c.l.b16 %v1721
        %v3261 = vunpack.c.h.b16 %v1721
        %v3262 = vunpack.c.l.b16 %v1722
        %v3263 = vunpack.c.h.b16 %v1722
        %v3264 = vunpack.c.l.b16 %v1723
        %v3265 = vunpack.c.h.b16 %v1723
        %v3266 = vunpack.c.l.b16 %v1724
        %v3267 = vunpack.c.h.b16 %v1724
        %v3268 = vunpack.c.l.b16 %v1725
        %v3269 = vunpack.c.h.b16 %v1725
        %v3270 = vunpack.c.l.b16 %v1726
        %v3271 = vunpack.c.h.b16 %v1726
        %v3272 = vunpack.c.l.b16 %v1727
        %v3273 = vunpack.c.h.b16 %v1727
        %v3274 = vunpack.c.l.b16 %v1728
        %v3275 = vunpack.c.h.b16 %v1728
        %v3276 = vunpack.c.l.b16 %v1729
        %v3277 = vunpack.c.h.b16 %v1729
        %v3278 = vunpack.c.l.b16 %v1730
        %v3279 = vunpack.c.h.b16 %v1730
        %v3280 = vunpack.c.l.b16 %v1731
        %v3281 = vunpack.c.h.b16 %v1731
        %v3282 = vunpack.c.l.b16 %v1732
        %v3283 = vunpack.c.h.b16 %v1732
        %v3284 = vunpack.c.l.b16 %v1733
        %v3285 = vunpack.c.h.b16 %v1733
        %v3286 = vunpack.c.l.b16 %v1734
        %v3287 = vunpack.c.h.b16 %v1734
        %v3288 = vunpack.c.l.b16 %v1735
        %v3289 = vunpack.c.h.b16 %v1735
        %v3290 = vunpack.c.l.b16 %v1736
        %v3291 = vunpack.c.h.b16 %v1736
        %v3292 = vunpack.c.l.b16 %v1737
        %v3293 = vunpack.c.h.b16 %v1737
        %v3294 = vunpack.c.l.b16 %v1738
        %v3295 = vunpack.c.h.b16 %v1738
        %v3296 = vunpack.c.l.b16 %v1739
        %v3297 = vunpack.c.h.b16 %v1739
        %v3298 = vunpack.c.l.b16 %v1740
        %v3299 = vunpack.c.h.b16 %v1740
        %v3300 = vunpack.c.l.b16 %v1741
        %v3301 = vunpack.c.h.b16 %v1741
        %v3302 = vunpack.c.l.b16 %v1742
        %v3303 = vunpack.c.h.b16 %v1742
        %v3304 = vunpack.c.l.b16 %v1743
        %v3305 = vunpack.c.h.b16 %v1743
        %v3306 = vunpack.c.l.b16 %v1744
        %v3307 = vunpack.c.h.b16 %v1744
        %v3308 = vunpack.c.l.b16 %v1745
        %v3309 = vunpack.c.h.b16 %v1745
        %v3310 = vunpack.c.l.b16 %v1746
        %v3311 = vunpack.c.h.b16 %v1746
        %v3312 = vunpack.c.l.b16 %v1747
        %v3313 = vunpack.c.h.b16 %v1747
        %v3314 = vunpack.c.l.b16 %v1748
        %v3315 = vunpack.c.h.b16 %v1748
        %v3316 = vunpack.c.l.b16 %v1749
        %v3317 = vunpack.c.h.b16 %v1749
        %v3318 = vunpack.c.l.b16 %v1750
        %v3319 = vunpack.c.h.b16 %v1750
        %v3320 = vunpack.c.l.b16 %v1751
        %v3321 = vunpack.c.h.b16 %v1751
        %v3322 = vunpack.c.l.b16 %v1752
        %v3323 = vunpack.c.h.b16 %v1752
        %v3324 = vunpack.c.l.b16 %v1753
        %v3325 = vunpack.c.h.b16 %v1753
        %v3326 = vunpack.c.l.b16 %v1754
        %v3327 = vunpack.c.h.b16 %v1754
        %v3328 = vunpack.c.l.b16 %v1755
        %v3329 = vunpack.c.h.b16 %v1755
        %v3330 = vunpack.c.l.b16 %v1756
        %v3331 = vunpack.c.h.b16 %v1756
        %v3332 = vunpack.c.l.b16 %v1757
        %v3333 = vunpack.c.h.b16 %v1757
        %v3334 = vunpack.c.l.b16 %v1758
        %v3335 = vunpack.c.h.b16 %v1758
        %v3336 = vunpack.c.l.b16 %v1759
        %v3337 = vunpack.c.h.b16 %v1759
        %v3338 = vunpack.c.l.b16 %v1760
        %v3339 = vunpack.c.h.b16 %v1760
        %v3340 = vunpack.c.l.b16 %v1761
        %v3341 = vunpack.c.h.b16 %v1761
        %v3342 = vunpack.c.l.b16 %v1762
        %v3343 = vunpack.c.h.b16 %v1762
        %v3344 = vunpack.c.l.b16 %v1763
        %v3345 = vunpack.c.h.b16 %v1763
        %v3346 = vunpack.c.l.b16 %v1764
        %v3347 = vunpack.c.h.b16 %v1764
        %v3348 = vunpack.c.l.b16 %v1765
        %v3349 = vunpack.c.h.b16 %v1765
        %v3350 = vunpack.c.l.b16 %v1766
        %v3351 = vunpack.c.h.b16 %v1766
        %v3352 = vunpack.c.l.b16 %v1767
        %v3353 = vunpack.c.h.b16 %v1767
        %v3354 = vunpack.c.l.b16 %v1768
        %v3355 = vunpack.c.h.b16 %v1768
        %v3356 = vunpack.c.l.b16 %v1769
        %v3357 = vunpack.c.h.b16 %v1769
        %v3358 = vunpack.c.l.b16 %v1770
        %v3359 = vunpack.c.h.b16 %v1770
        %v3360 = vunpack.c.l.b16 %v1771
        %v3361 = vunpack.c.h.b16 %v1771
        %v3362 = vunpack.c.l.b16 %v1772
        %v3363 = vunpack.c.h.b16 %v1772
        %v3364 = vunpack.c.l.b16 %v1773
        %v3365 = vunpack.c.h.b16 %v1773
        %v3366 = vunpack.c.l.b16 %v1774
        %v3367 = vunpack.c.h.b16 %v1774
        %v3368 = vunpack.c.l.b16 %v1775
        %v3369 = vunpack.c.h.b16 %v1775
        %v3370 = vunpack.c.l.b16 %v1776
        %v3371 = vunpack.c.h.b16 %v1776
        %v3372 = vunpack.c.l.b16 %v1777
        %v3373 = vunpack.c.h.b16 %v1777
        %v3374 = vunpack.c.l.b16 %v1778
        %v3375 = vunpack.c.h.b16 %v1778
        %v3376 = vunpack.c.l.b16 %v1779
        %v3377 = vunpack.c.h.b16 %v1779
        %v3378 = vunpack.c.l.b16 %v1780
        %v3379 = vunpack.c.h.b16 %v1780
        %v3380 = vunpack.c.l.b16 %v1781
        %v3381 = vunpack.c.h.b16 %v1781
        %v3382 = vunpack.c.l.b16 %v1782
        %v3383 = vunpack.c.h.b16 %v1782
        %v3384 = vunpack.c.l.b16 %v1783
        %v3385 = vunpack.c.h.b16 %v1783
        %v3386 = vunpack.c.l.b16 %v1784
        %v3387 = vunpack.c.h.b16 %v1784
        %v3388 = vunpack.c.l.b16 %v1785
        %v3389 = vunpack.c.h.b16 %v1785
        %v3390 = vunpack.c.l.b16 %v1786
        %v3391 = vunpack.c.h.b16 %v1786
        %v3392 = vunpack.c.l.b16 %v1787
        %v3393 = vunpack.c.h.b16 %v1787
        %v3394 = vunpack.c.l.b16 %v1788
        %v3395 = vunpack.c.h.b16 %v1788
        %v3396 = vunpack.c.l.b16 %v1789
        %v3397 = vunpack.c.h.b16 %v1789
        %v3398 = vunpack.c.l.b16 %v1790
        %v3399 = vunpack.c.h.b16 %v1790
        %v3400 = vunpack.c.l.b16 %v1791
        %v3401 = vunpack.c.h.b16 %v1791
        %v3402 = vunpack.c.l.b16 %v1792
        %v3403 = vunpack.c.h.b16 %v1792
        %v3404 = vunpack.c.l.b16 %v1793
        %v3405 = vunpack.c.h.b16 %v1793
        %v3406 = vunpack.c.l.b16 %v1794
        %v3407 = vunpack.c.h.b16 %v1794
        %v3408 = vunpack.c.l.b16 %v1795
        %v3409 = vunpack.c.h.b16 %v1795
        %v3410 = vpack.c.b16 %v2390, %v2386
        %v3411 = vpack.c.b16 %v2391, %v2387
        %v3412 = vpack.c.b16 %v2392, %v2388
        %v3413 = vpack.c.b16 %v2393, %v2389
        %v3414 = vpack.c.b16 %v2398, %v2394
        %v3415 = vpack.c.b16 %v2399, %v2395
        %v3416 = vpack.c.b16 %v2400, %v2396
        %v3417 = vpack.c.b16 %v2401, %v2397
        %v3418 = vpack.c.b16 %v2406, %v2402
        %v3419 = vpack.c.b16 %v2407, %v2403
        %v3420 = vpack.c.b16 %v2408, %v2404
        %v3421 = vpack.c.b16 %v2409, %v2405
        %v3422 = vpack.c.b16 %v2414, %v2410
        %v3423 = vpack.c.b16 %v2415, %v2411
        %v3424 = vpack.c.b16 %v2416, %v2412
        %v3425 = vpack.c.b16 %v2417, %v2413
        %v3426 = vpack.c.b16 %v2422, %v2418
        %v3427 = vpack.c.b16 %v2423, %v2419
        %v3428 = vpack.c.b16 %v2424, %v2420
        %v3429 = vpack.c.b16 %v2425, %v2421
        %v3430 = vpack.c.b16 %v2430, %v2426
        %v3431 = vpack.c.b16 %v2431, %v2427
        %v3432 = vpack.c.b16 %v2432, %v2428
        %v3433 = vpack.c.b16 %v2433, %v2429
        %v3434 = vpack.c.b16 %v2438, %v2434
        %v3435 = vpack.c.b16 %v2439, %v2435
        %v3436 = vpack.c.b16 %v2440, %v2436
        %v3437 = vpack.c.b16 %v2441, %v2437
        %v3438 = vpack.c.b16 %v2446, %v2442
        %v3439 = vpack.c.b16 %v2447, %v2443
        %v3440 = vpack.c.b16 %v2448, %v2444
        %v3441 = vpack.c.b16 %v2449, %v2445
        %v3442 = vpack.c.b16 %v2454, %v2450
        %v3443 = vpack.c.b16 %v2455, %v2451
        %v3444 = vpack.c.b16 %v2456, %v2452
        %v3445 = vpack.c.b16 %v2457, %v2453
        %v3446 = vpack.c.b16 %v2462, %v2458
        %v3447 = vpack.c.b16 %v2463, %v2459
        %v3448 = vpack.c.b16 %v2464, %v2460
        %v3449 = vpack.c.b16 %v2465, %v2461
        %v3450 = vpack.c.b16 %v2470, %v2466
        %v3451 = vpack.c.b16 %v2471, %v2467
        %v3452 = vpack.c.b16 %v2472, %v2468
        %v3453 = vpack.c.b16 %v2473, %v2469
        %v3454 = vpack.c.b16 %v2478, %v2474
        %v3455 = vpack.c.b16 %v2479, %v2475
        %v3456 = vpack.c.b16 %v2480, %v2476
        %v3457 = vpack.c.b16 %v2481, %v2477
        %v3458 = vpack.c.b16 %v2486, %v2482
        %v3459 = vpack.c.b16 %v2487, %v2483
        %v3460 = vpack.c.b16 %v2488, %v2484
        %v3461 = vpack.c.b16 %v2489, %v2485
        %v3462 = vpack.c.b16 %v2494, %v2490
        %v3463 = vpack.c.b16 %v2495, %v2491
        %v3464 = vpack.c.b16 %v2496, %v2492
        %v3465 = vpack.c.b16 %v2497, %v2493
        %v3466 = vpack.c.b16 %v2502, %v2498
        %v3467 = vpack.c.b16 %v2503, %v2499
        %v3468 = vpack.c.b16 %v2504, %v2500
        %v3469 = vpack.c.b16 %v2505, %v2501
        %v3470 = vpack.c.b16 %v2510, %v2506
        %v3471 = vpack.c.b16 %v2511, %v2507
        %v3472 = vpack.c.b16 %v2512, %v2508
        %v3473 = vpack.c.b16 %v2513, %v2509
        %v3474 = vpack.c.b16 %v2518, %v2514
        %v3475 = vpack.c.b16 %v2519, %v2515
        %v3476 = vpack.c.b16 %v2520, %v2516
        %v3477 = vpack.c.b16 %v2521, %v2517
        %v3478 = vpack.c.b16 %v2526, %v2522
        %v3479 = vpack.c.b16 %v2527, %v2523
        %v3480 = vpack.c.b16 %v2528, %v2524
        %v3481 = vpack.c.b16 %v2529, %v2525
        %v3482 = vpack.c.b16 %v2534, %v2530
        %v3483 = vpack.c.b16 %v2535, %v2531
        %v3484 = vpack.c.b16 %v2536, %v2532
        %v3485 = vpack.c.b16 %v2537, %v2533
        %v3486 = vpack.c.b16 %v2542, %v2538
        %v3487 = vpack.c.b16 %v2543, %v2539
        %v3488 = vpack.c.b16 %v2544, %v2540
        %v3489 = vpack.c.b16 %v2545, %v2541
        %v3490 = vpack.c.b16 %v2550, %v2546
        %v3491 = vpack.c.b16 %v2551, %v2547
        %v3492 = vpack.c.b16 %v2552, %v2548
        %v3493 = vpack.c.b16 %v2553, %v2549
        %v3494 = vpack.c.b16 %v2558, %v2554
        %v3495 = vpack.c.b16 %v2559, %v2555
        %v3496 = vpack.c.b16 %v2560, %v2556
        %v3497 = vpack.c.b16 %v2561, %v2557
        %v3498 = vpack.c.b16 %v2566, %v2562
        %v3499 = vpack.c.b16 %v2567, %v2563
        %v3500 = vpack.c.b16 %v2568, %v2564
        %v3501 = vpack.c.b16 %v2569, %v2565
        %v3502 = vpack.c.b16 %v2574, %v2570
        %v3503 = vpack.c.b16 %v2575, %v2571
        %v3504 = vpack.c.b16 %v2576, %v2572
        %v3505 = vpack.c.b16 %v2577, %v2573
        %v3506 = vpack.c.b16 %v2582, %v2578
        %v3507 = vpack.c.b16 %v2583, %v2579
        %v3508 = vpack.c.b16 %v2584, %v2580
        %v3509 = vpack.c.b16 %v2585, %v2581
        %v3510 = vpack.c.b16 %v2590, %v2586
        %v3511 = vpack.c.b16 %v2591, %v2587
        %v3512 = vpack.c.b16 %v2592, %v2588
        %v3513 = vpack.c.b16 %v2593, %v2589
        %v3514 = vpack.c.b16 %v2598, %v2594
        %v3515 = vpack.c.b16 %v2599, %v2595
        %v3516 = vpack.c.b16 %v2600, %v2596
        %v3517 = vpack.c.b16 %v2601, %v2597
        %v3518 = vpack.c.b16 %v2606, %v2602
        %v3519 = vpack.c.b16 %v2607, %v2603
        %v3520 = vpack.c.b16 %v2608, %v2604
        %v3521 = vpack.c.b16 %v2609, %v2605
        %v3522 = vpack.c.b16 %v2614, %v2610
        %v3523 = vpack.c.b16 %v2615, %v2611
        %v3524 = vpack.c.b16 %v2616, %v2612
        %v3525 = vpack.c.b16 %v2617, %v2613
        %v3526 = vpack.c.b16 %v2622, %v2618
        %v3527 = vpack.c.b16 %v2623, %v2619
        %v3528 = vpack.c.b16 %v2624, %v2620
        %v3529 = vpack.c.b16 %v2625, %v2621
        %v3530 = vpack.c.b16 %v2630, %v2626
        %v3531 = vpack.c.b16 %v2631, %v2627
        %v3532 = vpack.c.b16 %v2632, %v2628
        %v3533 = vpack.c.b16 %v2633, %v2629
        %v3534 = vpack.c.b16 %v2638, %v2634
        %v3535 = vpack.c.b16 %v2639, %v2635
        %v3536 = vpack.c.b16 %v2640, %v2636
        %v3537 = vpack.c.b16 %v2641, %v2637
        %v3538 = vpack.c.b16 %v2646, %v2642
        %v3539 = vpack.c.b16 %v2647, %v2643
        %v3540 = vpack.c.b16 %v2648, %v2644
        %v3541 = vpack.c.b16 %v2649, %v2645
        %v3542 = vpack.c.b16 %v2654, %v2650
        %v3543 = vpack.c.b16 %v2655, %v2651
        %v3544 = vpack.c.b16 %v2656, %v2652
        %v3545 = vpack.c.b16 %v2657, %v2653
        %v3546 = vpack.c.b16 %v2662, %v2658
        %v3547 = vpack.c.b16 %v2663, %v2659
        %v3548 = vpack.c.b16 %v2664, %v2660
        %v3549 = vpack.c.b16 %v2665, %v2661
        %v3550 = vpack.c.b16 %v2670, %v2666
        %v3551 = vpack.c.b16 %v2671, %v2667
        %v3552 = vpack.c.b16 %v2672, %v2668
        %v3553 = vpack.c.b16 %v2673, %v2669
        %v3554 = vpack.c.b16 %v2678, %v2674
        %v3555 = vpack.c.b16 %v2679, %v2675
        %v3556 = vpack.c.b16 %v2680, %v2676
        %v3557 = vpack.c.b16 %v2681, %v2677
        %v3558 = vpack.c.b16 %v2686, %v2682
        %v3559 = vpack.c.b16 %v2687, %v2683
        %v3560 = vpack.c.b16 %v2688, %v2684
        %v3561 = vpack.c.b16 %v2689, %v2685
        %v3562 = vpack.c.b16 %v2694, %v2690
        %v3563 = vpack.c.b16 %v2695, %v2691
        %v3564 = vpack.c.b16 %v2696, %v2692
        %v3565 = vpack.c.b16 %v2697, %v2693
        %v3566 = vpack.c.b16 %v2702, %v2698
        %v3567 = vpack.c.b16 %v2703, %v2699
        %v3568 = vpack.c.b16 %v2704, %v2700
        %v3569 = vpack.c.b16 %v2705, %v2701
        %v3570 = vpack.c.b16 %v2710, %v2706
        %v3571 = vpack.c.b16 %v2711, %v2707
        %v3572 = vpack.c.b16 %v2712, %v2708
        %v3573 = vpack.c.b16 %v2713, %v2709
        %v3574 = vpack.c.b16 %v2718, %v2714
        %v3575 = vpack.c.b16 %v2719, %v2715
        %v3576 = vpack.c.b16 %v2720, %v2716
        %v3577 = vpack.c.b16 %v2721, %v2717
        %v3578 = vpack.c.b16 %v2726, %v2722
        %v3579 = vpack.c.b16 %v2727, %v2723
        %v3580 = vpack.c.b16 %v2728, %v2724
        %v3581 = vpack.c.b16 %v2729, %v2725
        %v3582 = vpack.c.b16 %v2734, %v2730
        %v3583 = vpack.c.b16 %v2735, %v2731
        %v3584 = vpack.c.b16 %v2736, %v2732
        %v3585 = vpack.c.b16 %v2737, %v2733
        %v3586 = vpack.c.b16 %v2742, %v2738
        %v3587 = vpack.c.b16 %v2743, %v2739
        %v3588 = vpack.c.b16 %v2744, %v2740
        %v3589 = vpack.c.b16 %v2745, %v2741
        %v3590 = vpack.c.b16 %v2750, %v2746
        %v3591 = vpack.c.b16 %v2751, %v2747
        %v3592 = vpack.c.b16 %v2752, %v2748
        %v3593 = vpack.c.b16 %v2753, %v2749
        %v3594 = vpack.c.b16 %v2758, %v2754
        %v3595 = vpack.c.b16 %v2759, %v2755
        %v3596 = vpack.c.b16 %v2760, %v2756
        %v3597 = vpack.c.b16 %v2761, %v2757
        %v3598 = vpack.c.b16 %v2766, %v2762
        %v3599 = vpack.c.b16 %v2767, %v2763
        %v3600 = vpack.c.b16 %v2768, %v2764
        %v3601 = vpack.c.b16 %v2769, %v2765
        %v3602 = vpack.c.b16 %v2774, %v2770
        %v3603 = vpack.c.b16 %v2775, %v2771
        %v3604 = vpack.c.b16 %v2776, %v2772
        %v3605 = vpack.c.b16 %v2777, %v2773
        %v3606 = vpack.c.b16 %v2782, %v2778
        %v3607 = vpack.c.b16 %v2783, %v2779
        %v3608 = vpack.c.b16 %v2784, %v2780
        %v3609 = vpack.c.b16 %v2785, %v2781
        %v3610 = vpack.c.b16 %v2790, %v2786
        %v3611 = vpack.c.b16 %v2791, %v2787
        %v3612 = vpack.c.b16 %v2792, %v2788
        %v3613 = vpack.c.b16 %v2793, %v2789
        %v3614 = vpack.c.b16 %v2798, %v2794
        %v3615 = vpack.c.b16 %v2799, %v2795
        %v3616 = vpack.c.b16 %v2800, %v2796
        %v3617 = vpack.c.b16 %v2801, %v2797
        %v3618 = vpack.c.b16 %v2806, %v2802
        %v3619 = vpack.c.b16 %v2807, %v2803
        %v3620 = vpack.c.b16 %v2808, %v2804
        %v3621 = vpack.c.b16 %v2809, %v2805
        %v3622 = vpack.c.b16 %v2814, %v2810
        %v3623 = vpack.c.b16 %v2815, %v2811
        %v3624 = vpack.c.b16 %v2816, %v2812
        %v3625 = vpack.c.b16 %v2817, %v2813
        %v3626 = vpack.c.b16 %v2822, %v2818
        %v3627 = vpack.c.b16 %v2823, %v2819
        %v3628 = vpack.c.b16 %v2824, %v2820
        %v3629 = vpack.c.b16 %v2825, %v2821
        %v3630 = vpack.c.b16 %v2830, %v2826
        %v3631 = vpack.c.b16 %v2831, %v2827
        %v3632 = vpack.c.b16 %v2832, %v2828
        %v3633 = vpack.c.b16 %v2833, %v2829
        %v3634 = vpack.c.b16 %v2838, %v2834
        %v3635 = vpack.c.b16 %v2839, %v2835
        %v3636 = vpack.c.b16 %v2840, %v2836
        %v3637 = vpack.c.b16 %v2841, %v2837
        %v3638 = vpack.c.b16 %v2846, %v2842
        %v3639 = vpack.c.b16 %v2847, %v2843
        %v3640 = vpack.c.b16 %v2848, %v2844
        %v3641 = vpack.c.b16 %v2849, %v2845
        %v3642 = vpack.c.b16 %v2854, %v2850
        %v3643 = vpack.c.b16 %v2855, %v2851
        %v3644 = vpack.c.b16 %v2856, %v2852
        %v3645 = vpack.c.b16 %v2857, %v2853
        %v3646 = vpack.c.b16 %v2862, %v2858
        %v3647 = vpack.c.b16 %v2863, %v2859
        %v3648 = vpack.c.b16 %v2864, %v2860
        %v3649 = vpack.c.b16 %v2865, %v2861
        %v3650 = vpack.c.b16 %v2870, %v2866
        %v3651 = vpack.c.b16 %v2871, %v2867
        %v3652 = vpack.c.b16 %v2872, %v2868
        %v3653 = vpack.c.b16 %v2873, %v2869
        %v3654 = vpack.c.b16 %v2878, %v2874
        %v3655 = vpack.c.b16 %v2879, %v2875
        %v3656 = vpack.c.b16 %v2880, %v2876
        %v3657 = vpack.c.b16 %v2881, %v2877
        %v3658 = vpack.c.b16 %v2886, %v2882
        %v3659 = vpack.c.b16 %v2887, %v2883
        %v3660 = vpack.c.b16 %v2888, %v2884
        %v3661 = vpack.c.b16 %v2889, %v2885
        %v3662 = vpack.c.b16 %v2894, %v2890
        %v3663 = vpack.c.b16 %v2895, %v2891
        %v3664 = vpack.c.b16 %v2896, %v2892
        %v3665 = vpack.c.b16 %v2897, %v2893
        %v3666 = vpack.c.b16 %v2902, %v2898
        %v3667 = vpack.c.b16 %v2903, %v2899
        %v3668 = vpack.c.b16 %v2904, %v2900
        %v3669 = vpack.c.b16 %v2905, %v2901
        %v3670 = vpack.c.b16 %v2910, %v2906
        %v3671 = vpack.c.b16 %v2911, %v2907
        %v3672 = vpack.c.b16 %v2912, %v2908
        %v3673 = vpack.c.b16 %v2913, %v2909
        %v3674 = vpack.c.b16 %v2918, %v2914
        %v3675 = vpack.c.b16 %v2919, %v2915
        %v3676 = vpack.c.b16 %v2920, %v2916
        %v3677 = vpack.c.b16 %v2921, %v2917
        %v3678 = vpack.c.b16 %v2926, %v2922
        %v3679 = vpack.c.b16 %v2927, %v2923
        %v3680 = vpack.c.b16 %v2928, %v2924
        %v3681 = vpack.c.b16 %v2929, %v2925
        %v3682 = vpack.c.b16 %v2934, %v2930
        %v3683 = vpack.c.b16 %v2935, %v2931
        %v3684 = vpack.c.b16 %v2936, %v2932
        %v3685 = vpack.c.b16 %v2937, %v2933
        %v3686 = vpack.c.b16 %v2942, %v2938
        %v3687 = vpack.c.b16 %v2943, %v2939
        %v3688 = vpack.c.b16 %v2944, %v2940
        %v3689 = vpack.c.b16 %v2945, %v2941
        %v3690 = vpack.c.b16 %v2950, %v2946
        %v3691 = vpack.c.b16 %v2951, %v2947
        %v3692 = vpack.c.b16 %v2952, %v2948
        %v3693 = vpack.c.b16 %v2953, %v2949
        %v3694 = vpack.c.b16 %v2958, %v2954
        %v3695 = vpack.c.b16 %v2959, %v2955
        %v3696 = vpack.c.b16 %v2960, %v2956
        %v3697 = vpack.c.b16 %v2961, %v2957
        %v3698 = vpack.c.b16 %v2966, %v2962
        %v3699 = vpack.c.b16 %v2967, %v2963
        %v3700 = vpack.c.b16 %v2968, %v2964
        %v3701 = vpack.c.b16 %v2969, %v2965
        %v3702 = vpack.c.b16 %v2974, %v2970
        %v3703 = vpack.c.b16 %v2975, %v2971
        %v3704 = vpack.c.b16 %v2976, %v2972
        %v3705 = vpack.c.b16 %v2977, %v2973
        %v3706 = vpack.c.b16 %v2982, %v2978
        %v3707 = vpack.c.b16 %v2983, %v2979
        %v3708 = vpack.c.b16 %v2984, %v2980
        %v3709 = vpack.c.b16 %v2985, %v2981
        %v3710 = vpack.c.b16 %v2990, %v2986
        %v3711 = vpack.c.b16 %v2991, %v2987
        %v3712 = vpack.c.b16 %v2992, %v2988
        %v3713 = vpack.c.b16 %v2993, %v2989
        %v3714 = vpack.c.b16 %v2998, %v2994
        %v3715 = vpack.c.b16 %v2999, %v2995
        %v3716 = vpack.c.b16 %v3000, %v2996
        %v3717 = vpack.c.b16 %v3001, %v2997
        %v3718 = vpack.c.b16 %v3006, %v3002
        %v3719 = vpack.c.b16 %v3007, %v3003
        %v3720 = vpack.c.b16 %v3008, %v3004
        %v3721 = vpack.c.b16 %v3009, %v3005
        %v3722 = vpack.c.b16 %v3014, %v3010
        %v3723 = vpack.c.b16 %v3015, %v3011
        %v3724 = vpack.c.b16 %v3016, %v3012
        %v3725 = vpack.c.b16 %v3017, %v3013
        %v3726 = vpack.c.b16 %v3022, %v3018
        %v3727 = vpack.c.b16 %v3023, %v3019
        %v3728 = vpack.c.b16 %v3024, %v3020
        %v3729 = vpack.c.b16 %v3025, %v3021
        %v3730 = vpack.c.b16 %v3030, %v3026
        %v3731 = vpack.c.b16 %v3031, %v3027
        %v3732 = vpack.c.b16 %v3032, %v3028
        %v3733 = vpack.c.b16 %v3033, %v3029
        %v3734 = vpack.c.b16 %v3038, %v3034
        %v3735 = vpack.c.b16 %v3039, %v3035
        %v3736 = vpack.c.b16 %v3040, %v3036
        %v3737 = vpack.c.b16 %v3041, %v3037
        %v3738 = vpack.c.b16 %v3046, %v3042
        %v3739 = vpack.c.b16 %v3047, %v3043
        %v3740 = vpack.c.b16 %v3048, %v3044
        %v3741 = vpack.c.b16 %v3049, %v3045
        %v3742 = vpack.c.b16 %v3054, %v3050
        %v3743 = vpack.c.b16 %v3055, %v3051
        %v3744 = vpack.c.b16 %v3056, %v3052
        %v3745 = vpack.c.b16 %v3057, %v3053
        %v3746 = vpack.c.b16 %v3062, %v3058
        %v3747 = vpack.c.b16 %v3063, %v3059
        %v3748 = vpack.c.b16 %v3064, %v3060
        %v3749 = vpack.c.b16 %v3065, %v3061
        %v3750 = vpack.c.b16 %v3070, %v3066
        %v3751 = vpack.c.b16 %v3071, %v3067
        %v3752 = vpack.c.b16 %v3072, %v3068
        %v3753 = vpack.c.b16 %v3073, %v3069
        %v3754 = vpack.c.b16 %v3078, %v3074
        %v3755 = vpack.c.b16 %v3079, %v3075
        %v3756 = vpack.c.b16 %v3080, %v3076
        %v3757 = vpack.c.b16 %v3081, %v3077
        %v3758 = vpack.c.b16 %v3086, %v3082
        %v3759 = vpack.c.b16 %v3087, %v3083
        %v3760 = vpack.c.b16 %v3088, %v3084
        %v3761 = vpack.c.b16 %v3089, %v3085
        %v3762 = vpack.c.b16 %v3094, %v3090
        %v3763 = vpack.c.b16 %v3095, %v3091
        %v3764 = vpack.c.b16 %v3096, %v3092
        %v3765 = vpack.c.b16 %v3097, %v3093
        %v3766 = vpack.c.b16 %v3102, %v3098
        %v3767 = vpack.c.b16 %v3103, %v3099
        %v3768 = vpack.c.b16 %v3104, %v3100
        %v3769 = vpack.c.b16 %v3105, %v3101
        %v3770 = vpack.c.b16 %v3110, %v3106
        %v3771 = vpack.c.b16 %v3111, %v3107
        %v3772 = vpack.c.b16 %v3112, %v3108
        %v3773 = vpack.c.b16 %v3113, %v3109
        %v3774 = vpack.c.b16 %v3118, %v3114
        %v3775 = vpack.c.b16 %v3119, %v3115
        %v3776 = vpack.c.b16 %v3120, %v3116
        %v3777 = vpack.c.b16 %v3121, %v3117
        %v3778 = vpack.c.b16 %v3126, %v3122
        %v3779 = vpack.c.b16 %v3127, %v3123
        %v3780 = vpack.c.b16 %v3128, %v3124
        %v3781 = vpack.c.b16 %v3129, %v3125
        %v3782 = vpack.c.b16 %v3134, %v3130
        %v3783 = vpack.c.b16 %v3135, %v3131
        %v3784 = vpack.c.b16 %v3136, %v3132
        %v3785 = vpack.c.b16 %v3137, %v3133
        %v3786 = vpack.c.b16 %v3142, %v3138
        %v3787 = vpack.c.b16 %v3143, %v3139
        %v3788 = vpack.c.b16 %v3144, %v3140
        %v3789 = vpack.c.b16 %v3145, %v3141
        %v3790 = vpack.c.b16 %v3150, %v3146
        %v3791 = vpack.c.b16 %v3151, %v3147
        %v3792 = vpack.c.b16 %v3152, %v3148
        %v3793 = vpack.c.b16 %v3153, %v3149
        %v3794 = vpack.c.b16 %v3158, %v3154
        %v3795 = vpack.c.b16 %v3159, %v3155
        %v3796 = vpack.c.b16 %v3160, %v3156
        %v3797 = vpack.c.b16 %v3161, %v3157
        %v3798 = vpack.c.b16 %v3166, %v3162
        %v3799 = vpack.c.b16 %v3167, %v3163
        %v3800 = vpack.c.b16 %v3168, %v3164
        %v3801 = vpack.c.b16 %v3169, %v3165
        %v3802 = vpack.c.b16 %v3174, %v3170
        %v3803 = vpack.c.b16 %v3175, %v3171
        %v3804 = vpack.c.b16 %v3176, %v3172
        %v3805 = vpack.c.b16 %v3177, %v3173
        %v3806 = vpack.c.b16 %v3182, %v3178
        %v3807 = vpack.c.b16 %v3183, %v3179
        %v3808 = vpack.c.b16 %v3184, %v3180
        %v3809 = vpack.c.b16 %v3185, %v3181
        %v3810 = vpack.c.b16 %v3190, %v3186
        %v3811 = vpack.c.b16 %v3191, %v3187
        %v3812 = vpack.c.b16 %v3192, %v3188
        %v3813 = vpack.c.b16 %v3193, %v3189
        %v3814 = vpack.c.b16 %v3198, %v3194
        %v3815 = vpack.c.b16 %v3199, %v3195
        %v3816 = vpack.c.b16 %v3200, %v3196
        %v3817 = vpack.c.b16 %v3201, %v3197
        %v3818 = vpack.c.b16 %v3206, %v3202
        %v3819 = vpack.c.b16 %v3207, %v3203
        %v3820 = vpack.c.b16 %v3208, %v3204
        %v3821 = vpack.c.b16 %v3209, %v3205
        %v3822 = vpack.c.b16 %v3214, %v3210
        %v3823 = vpack.c.b16 %v3215, %v3211
        %v3824 = vpack.c.b16 %v3216, %v3212
        %v3825 = vpack.c.b16 %v3217, %v3213
        %v3826 = vpack.c.b16 %v3222, %v3218
        %v3827 = vpack.c.b16 %v3223, %v3219
        %v3828 = vpack.c.b16 %v3224, %v3220
        %v3829 = vpack.c.b16 %v3225, %v3221
        %v3830 = vpack.c.b16 %v3230, %v3226
        %v3831 = vpack.c.b16 %v3231, %v3227
        %v3832 = vpack.c.b16 %v3232, %v3228
        %v3833 = vpack.c.b16 %v3233, %v3229
        %v3834 = vpack.c.b16 %v3238, %v3234
        %v3835 = vpack.c.b16 %v3239, %v3235
        %v3836 = vpack.c.b16 %v3240, %v3236
        %v3837 = vpack.c.b16 %v3241, %v3237
        %v3838 = vpack.c.b16 %v3246, %v3242
        %v3839 = vpack.c.b16 %v3247, %v3243
        %v3840 = vpack.c.b16 %v3248, %v3244
        %v3841 = vpack.c.b16 %v3249, %v3245
        %v3842 = vpack.c.b16 %v3254, %v3250
        %v3843 = vpack.c.b16 %v3255, %v3251
        %v3844 = vpack.c.b16 %v3256, %v3252
        %v3845 = vpack.c.b16 %v3257, %v3253
        %v3846 = vpack.c.b16 %v3262, %v3258
        %v3847 = vpack.c.b16 %v3263, %v3259
        %v3848 = vpack.c.b16 %v3264, %v3260
        %v3849 = vpack.c.b16 %v3265, %v3261
        %v3850 = vpack.c.b16 %v3270, %v3266
        %v3851 = vpack.c.b16 %v3271, %v3267
        %v3852 = vpack.c.b16 %v3272, %v3268
        %v3853 = vpack.c.b16 %v3273, %v3269
        %v3854 = vpack.c.b16 %v3278, %v3274
        %v3855 = vpack.c.b16 %v3279, %v3275
        %v3856 = vpack.c.b16 %v3280, %v3276
        %v3857 = vpack.c.b16 %v3281, %v3277
        %v3858 = vpack.c.b16 %v3286, %v3282
        %v3859 = vpack.c.b16 %v3287, %v3283
        %v3860 = vpack.c.b16 %v3288, %v3284
        %v3861 = vpack.c.b16 %v3289, %v3285
        %v3862 = vpack.c.b16 %v3294, %v3290
        %v3863 = vpack.c.b16 %v3295, %v3291
        %v3864 = vpack.c.b16 %v3296, %v3292
        %v3865 = vpack.c.b16 %v3297, %v3293
        %v3866 = vpack.c.b16 %v3302, %v3298
        %v3867 = vpack.c.b16 %v3303, %v3299
        %v3868 = vpack.c.b16 %v3304, %v3300
        %v3869 = vpack.c.b16 %v3305, %v3301
        %v3870 = vpack.c.b16 %v3310, %v3306
        %v3871 = vpack.c.b16 %v3311, %v3307
        %v3872 = vpack.c.b16 %v3312, %v3308
        %v3873 = vpack.c.b16 %v3313, %v3309
        %v3874 = vpack.c.b16 %v3318, %v3314
        %v3875 = vpack.c.b16 %v3319, %v3315
        %v3876 = vpack.c.b16 %v3320, %v3316
        %v3877 = vpack.c.b16 %v3321, %v3317
        %v3878 = vpack.c.b16 %v3326, %v3322
        %v3879 = vpack.c.b16 %v3327, %v3323
        %v3880 = vpack.c.b16 %v3328, %v3324
        %v3881 = vpack.c.b16 %v3329, %v3325
        %v3882 = vpack.c.b16 %v3334, %v3330
        %v3883 = vpack.c.b16 %v3335, %v3331
        %v3884 = vpack.c.b16 %v3336, %v3332
        %v3885 = vpack.c.b16 %v3337, %v3333
        %v3886 = vpack.c.b16 %v3342, %v3338
        %v3887 = vpack.c.b16 %v3343, %v3339
        %v3888 = vpack.c.b16 %v3344, %v3340
        %v3889 = vpack.c.b16 %v3345, %v3341
        %v3890 = vpack.c.b16 %v3350, %v3346
        %v3891 = vpack.c.b16 %v3351, %v3347
        %v3892 = vpack.c.b16 %v3352, %v3348
        %v3893 = vpack.c.b16 %v3353, %v3349
        %v3894 = vpack.c.b16 %v3358, %v3354
        %v3895 = vpack.c.b16 %v3359, %v3355
        %v3896 = vpack.c.b16 %v3360, %v3356
        %v3897 = vpack.c.b16 %v3361, %v3357
        %v3898 = vpack.c.b16 %v3366, %v3362
        %v3899 = vpack.c.b16 %v3367, %v3363
        %v3900 = vpack.c.b16 %v3368, %v3364
        %v3901 = vpack.c.b16 %v3369, %v3365
        %v3902 = vpack.c.b16 %v3374, %v3370
        %v3903 = vpack.c.b16 %v3375, %v3371
        %v3904 = vpack.c.b16 %v3376, %v3372
        %v3905 = vpack.c.b16 %v3377, %v3373
        %v3906 = vpack.c.b16 %v3382, %v3378
        %v3907 = vpack.c.b16 %v3383, %v3379
        %v3908 = vpack.c.b16 %v3384, %v3380
        %v3909 = vpack.c.b16 %v3385, %v3381
        %v3910 = vpack.c.b16 %v3390, %v3386
        %v3911 = vpack.c.b16 %v3391, %v3387
        %v3912 = vpack.c.b16 %v3392, %v3388
        %v3913 = vpack.c.b16 %v3393, %v3389
        %v3914 = vpack.c.b16 %v3398, %v3394
        %v3915 = vpack.c.b16 %v3399, %v3395
        %v3916 = vpack.c.b16 %v3400, %v3396
        %v3917 = vpack.c.b16 %v3401, %v3397
        %v3918 = vpack.c.b16 %v3406, %v3402
        %v3919 = vpack.c.b16 %v3407, %v3403
        %v3920 = vpack.c.b16 %v3408, %v3404
        %v3921 = vpack.c.b16 %v3409, %v3405
        %4434 = vmatprep.subr.bf16.mxu0 %v3411
        %4435 = vmatpush1.bf16.msra.mxu0 %v3410
        %4436 = vmatprep.subr.bf16.mxu0 %v3415
        %4437 = vmatpush1.bf16.msra.mxu0 %v3414
        %4438 = vmatprep.subr.bf16.mxu0 %v3419
        %4439 = vmatpush1.bf16.msra.mxu0 %v3418
        %4440 = vmatprep.subr.bf16.mxu0 %v3423
        %4441 = vmatpush1.bf16.msra.mxu0 %v3422
        %4442 = vmatprep.subr.bf16.mxu0 %v3427
        %4443 = vmatpush1.bf16.msra.mxu0 %v3426
        %4444 = vmatprep.subr.bf16.mxu0 %v3431
        %4445 = vmatpush1.bf16.msra.mxu0 %v3430
        %4446 = vmatprep.subr.bf16.mxu0 %v3435
        %4447 = vmatpush1.bf16.msra.mxu0 %v3434
        %4448 = vmatprep.subr.bf16.mxu0 %v3439
        %4449 = vmatpush1.bf16.msra.mxu0 %v3438
        %4450 = vmatprep.subr.bf16.mxu0 %v3443
        %4451 = vmatpush1.bf16.msra.mxu0 %v3442
        %4452 = vmatprep.subr.bf16.mxu0 %v3447
        %4453 = vmatpush1.bf16.msra.mxu0 %v3446
        %4454 = vmatprep.subr.bf16.mxu0 %v3451
        %4455 = vmatpush1.bf16.msra.mxu0 %v3450
        %4456 = vmatprep.subr.bf16.mxu0 %v3455
        %4457 = vmatpush1.bf16.msra.mxu0 %v3454
        %4458 = vmatprep.subr.bf16.mxu0 %v3459
        %4459 = vmatpush1.bf16.msra.mxu0 %v3458
        %4460 = vmatprep.subr.bf16.mxu0 %v3463
        %4461 = vmatpush1.bf16.msra.mxu0 %v3462
        %4462 = vmatprep.subr.bf16.mxu0 %v3467
        %4463 = vmatpush1.bf16.msra.mxu0 %v3466
        %4464 = vmatprep.subr.bf16.mxu0 %v3471
        %4465 = vmatpush1.bf16.msra.mxu0 %v3470
        %4466 = vmatprep.mubr.bf16.mxu0 %v1843
        %4467 = vmatmul.mubr.bf16.gmra.mrb[0].mxu0 %v1842
        %v4468 = vpop.f32.mrb[0].mxu0
        %v4469 = vadd.f32 %v1801, %v4468
        %v4470 = vpop.f32.mrb[0].mxu0
        %v4471 = vadd.f32 %v1805, %v4470
        %v4472 = vpop.f32.mrb[0].mxu0
        %v4473 = vpop.f32.mrb[0].mxu0
        %4474 = vdwg.mxu0
        %4475 = vmatprep.subr.bf16.mxu0 %v3475
        %4476 = vmatpush1.bf16.msra.mxu0 %v3474
        %4477 = vmatprep.subr.bf16.mxu0 %v3479
        %4478 = vmatpush1.bf16.msra.mxu0 %v3478
        %4479 = vmatprep.subr.bf16.mxu0 %v3483
        %4480 = vmatpush1.bf16.msra.mxu0 %v3482
        %4481 = vmatprep.subr.bf16.mxu0 %v3487
        %4482 = vmatpush1.bf16.msra.mxu0 %v3486
        %4483 = vmatprep.subr.bf16.mxu0 %v3491
        %4484 = vmatpush1.bf16.msra.mxu0 %v3490
        %4485 = vmatprep.subr.bf16.mxu0 %v3495
        %4486 = vmatpush1.bf16.msra.mxu0 %v3494
        %4487 = vmatprep.subr.bf16.mxu0 %v3499
        %4488 = vmatpush1.bf16.msra.mxu0 %v3498
        %4489 = vmatprep.subr.bf16.mxu0 %v3503
        %4490 = vmatpush1.bf16.msra.mxu0 %v3502
        %4491 = vmatprep.subr.bf16.mxu0 %v3507
        %4492 = vmatpush1.bf16.msra.mxu0 %v3506
        %4493 = vmatprep.subr.bf16.mxu0 %v3511
        %4494 = vmatpush1.bf16.msra.mxu0 %v3510
        %4495 = vmatprep.subr.bf16.mxu0 %v3515
        %4496 = vmatpush1.bf16.msra.mxu0 %v3514
        %4497 = vmatprep.subr.bf16.mxu0 %v3519
        %4498 = vmatpush1.bf16.msra.mxu0 %v3518
        %4499 = vmatprep.subr.bf16.mxu0 %v3523
        %4500 = vmatpush1.bf16.msra.mxu0 %v3522
        %4501 = vmatprep.subr.bf16.mxu0 %v3527
        %4502 = vmatpush1.bf16.msra.mxu0 %v3526
        %4503 = vmatprep.subr.bf16.mxu0 %v3531
        %4504 = vmatpush1.bf16.msra.mxu0 %v3530
        %4505 = vmatprep.subr.bf16.mxu0 %v3535
        %4506 = vmatpush1.bf16.msra.mxu0 %v3534
        %4507 = vmatprep.mubr.bf16.mxu0 %v1845
        %4508 = vmatmul.mubr.bf16.gmra.mrb[0].mxu0 %v1844
        %v4509 = vpop.f32.mrb[0].mxu0
        %v4510 = vadd.f32 %v4469, %v4509
        %v4511 = vpop.f32.mrb[0].mxu0
        %v4512 = vadd.f32 %v4471, %v4511
        %v4513 = vpop.f32.mrb[0].mxu0
        %v4514 = vpop.f32.mrb[0].mxu0
        %4515 = vdwg.mxu0
        %4516 = vmatprep.subr.bf16.mxu0 %v3539
        %4517 = vmatpush1.bf16.msra.mxu0 %v3538
        %4518 = vmatprep.subr.bf16.mxu0 %v3543
        %4519 = vmatpush1.bf16.msra.mxu0 %v3542
        %4520 = vmatprep.subr.bf16.mxu0 %v3547
        %4521 = vmatpush1.bf16.msra.mxu0 %v3546
        %4522 = vmatprep.subr.bf16.mxu0 %v3551
        %4523 = vmatpush1.bf16.msra.mxu0 %v3550
        %4524 = vmatprep.subr.bf16.mxu0 %v3555
        %4525 = vmatpush1.bf16.msra.mxu0 %v3554
        %4526 = vmatprep.subr.bf16.mxu0 %v3559
        %4527 = vmatpush1.bf16.msra.mxu0 %v3558
        %4528 = vmatprep.subr.bf16.mxu0 %v3563
        %4529 = vmatpush1.bf16.msra.mxu0 %v3562
        %4530 = vmatprep.subr.bf16.mxu0 %v3567
        %4531 = vmatpush1.bf16.msra.mxu0 %v3566
        %4532 = vmatprep.subr.bf16.mxu0 %v3571
        %4533 = vmatpush1.bf16.msra.mxu0 %v3570
        %4534 = vmatprep.subr.bf16.mxu0 %v3575
        %4535 = vmatpush1.bf16.msra.mxu0 %v3574
        %4536 = vmatprep.subr.bf16.mxu0 %v3579
        %4537 = vmatpush1.bf16.msra.mxu0 %v3578
        %4538 = vmatprep.subr.bf16.mxu0 %v3583
        %4539 = vmatpush1.bf16.msra.mxu0 %v3582
        %4540 = vmatprep.subr.bf16.mxu0 %v3587
        %4541 = vmatpush1.bf16.msra.mxu0 %v3586
        %4542 = vmatprep.subr.bf16.mxu0 %v3591
        %4543 = vmatpush1.bf16.msra.mxu0 %v3590
        %4544 = vmatprep.subr.bf16.mxu0 %v3595
        %4545 = vmatpush1.bf16.msra.mxu0 %v3594
        %4546 = vmatprep.subr.bf16.mxu0 %v3599
        %4547 = vmatpush1.bf16.msra.mxu0 %v3598
        %4548 = vmatprep.mubr.bf16.mxu0 %v1847
        %4549 = vmatmul.mubr.bf16.gmra.mrb[0].mxu0 %v1846
        %v4550 = vpop.f32.mrb[0].mxu0
        %v4551 = vadd.f32 %v4510, %v4550
        %v4552 = vpop.f32.mrb[0].mxu0
        %v4553 = vadd.f32 %v4512, %v4552
        %v4554 = vpop.f32.mrb[0].mxu0
        %v4555 = vpop.f32.mrb[0].mxu0
        %4556 = vdwg.mxu0
        %4557 = vmatprep.subr.bf16.mxu0 %v3603
        %4558 = vmatpush1.bf16.msra.mxu0 %v3602
        %4559 = vmatprep.subr.bf16.mxu0 %v3607
        %4560 = vmatpush1.bf16.msra.mxu0 %v3606
        %4561 = vmatprep.subr.bf16.mxu0 %v3611
        %4562 = vmatpush1.bf16.msra.mxu0 %v3610
        %4563 = vmatprep.subr.bf16.mxu0 %v3615
        %4564 = vmatpush1.bf16.msra.mxu0 %v3614
        %4565 = vmatprep.subr.bf16.mxu0 %v3619
        %4566 = vmatpush1.bf16.msra.mxu0 %v3618
        %4567 = vmatprep.subr.bf16.mxu0 %v3623
        %4568 = vmatpush1.bf16.msra.mxu0 %v3622
        %4569 = vmatprep.subr.bf16.mxu0 %v3627
        %4570 = vmatpush1.bf16.msra.mxu0 %v3626
        %4571 = vmatprep.subr.bf16.mxu0 %v3631
        %4572 = vmatpush1.bf16.msra.mxu0 %v3630
        %4573 = vmatprep.subr.bf16.mxu0 %v3635
        %4574 = vmatpush1.bf16.msra.mxu0 %v3634
        %4575 = vmatprep.subr.bf16.mxu0 %v3639
        %4576 = vmatpush1.bf16.msra.mxu0 %v3638
        %4577 = vmatprep.subr.bf16.mxu0 %v3643
        %4578 = vmatpush1.bf16.msra.mxu0 %v3642
        %4579 = vmatprep.subr.bf16.mxu0 %v3647
        %4580 = vmatpush1.bf16.msra.mxu0 %v3646
        %4581 = vmatprep.subr.bf16.mxu0 %v3651
        %4582 = vmatpush1.bf16.msra.mxu0 %v3650
        %4583 = vmatprep.subr.bf16.mxu0 %v3655
        %4584 = vmatpush1.bf16.msra.mxu0 %v3654
        %4585 = vmatprep.subr.bf16.mxu0 %v3659
        %4586 = vmatpush1.bf16.msra.mxu0 %v3658
        %4587 = vmatprep.subr.bf16.mxu0 %v3663
        %4588 = vmatpush1.bf16.msra.mxu0 %v3662
        %4589 = vmatprep.mubr.bf16.mxu0 %v1849
        %4590 = vmatmul.mubr.bf16.gmra.mrb[0].mxu0 %v1848
        %v4591 = vpop.f32.mrb[0].mxu0
        %v4592 = vadd.f32 %v4551, %v4591
        %v4593 = vpop.f32.mrb[0].mxu0
        %v4594 = vadd.f32 %v4553, %v4593
        %v4595 = vpop.f32.mrb[0].mxu0
        %v4596 = vpop.f32.mrb[0].mxu0
        %4597 = vdwg.mxu0
        %4598 = vmatprep.subr.bf16.mxu0 %v3667
        %4599 = vmatpush1.bf16.msra.mxu0 %v3666
        %4600 = vmatprep.subr.bf16.mxu0 %v3671
        %4601 = vmatpush1.bf16.msra.mxu0 %v3670
        %4602 = vmatprep.subr.bf16.mxu0 %v3675
        %4603 = vmatpush1.bf16.msra.mxu0 %v3674
        %4604 = vmatprep.subr.bf16.mxu0 %v3679
        %4605 = vmatpush1.bf16.msra.mxu0 %v3678
        %4606 = vmatprep.subr.bf16.mxu0 %v3683
        %4607 = vmatpush1.bf16.msra.mxu0 %v3682
        %4608 = vmatprep.subr.bf16.mxu0 %v3687
        %4609 = vmatpush1.bf16.msra.mxu0 %v3686
        %4610 = vmatprep.subr.bf16.mxu0 %v3691
        %4611 = vmatpush1.bf16.msra.mxu0 %v3690
        %4612 = vmatprep.subr.bf16.mxu0 %v3695
        %4613 = vmatpush1.bf16.msra.mxu0 %v3694
        %4614 = vmatprep.subr.bf16.mxu0 %v3699
        %4615 = vmatpush1.bf16.msra.mxu0 %v3698
        %4616 = vmatprep.subr.bf16.mxu0 %v3703
        %4617 = vmatpush1.bf16.msra.mxu0 %v3702
        %4618 = vmatprep.subr.bf16.mxu0 %v3707
        %4619 = vmatpush1.bf16.msra.mxu0 %v3706
        %4620 = vmatprep.subr.bf16.mxu0 %v3711
        %4621 = vmatpush1.bf16.msra.mxu0 %v3710
        %4622 = vmatprep.subr.bf16.mxu0 %v3715
        %4623 = vmatpush1.bf16.msra.mxu0 %v3714
        %4624 = vmatprep.subr.bf16.mxu0 %v3719
        %4625 = vmatpush1.bf16.msra.mxu0 %v3718
        %4626 = vmatprep.subr.bf16.mxu0 %v3723
        %4627 = vmatpush1.bf16.msra.mxu0 %v3722
        %4628 = vmatprep.subr.bf16.mxu0 %v3727
        %4629 = vmatpush1.bf16.msra.mxu0 %v3726
        %4630 = vmatprep.mubr.bf16.mxu0 %v1851
        %4631 = vmatmul.mubr.bf16.gmra.mrb[0].mxu0 %v1850
        %v4632 = vpop.f32.mrb[0].mxu0
        %v4633 = vadd.f32 %v4592, %v4632
        %v4634 = vpop.f32.mrb[0].mxu0
        %v4635 = vadd.f32 %v4594, %v4634
        %v4636 = vpop.f32.mrb[0].mxu0
        %v4637 = vpop.f32.mrb[0].mxu0
        %4638 = vdwg.mxu0
        %4639 = vmatprep.subr.bf16.mxu0 %v3731
        %4640 = vmatpush1.bf16.msra.mxu0 %v3730
        %4641 = vmatprep.subr.bf16.mxu0 %v3735
        %4642 = vmatpush1.bf16.msra.mxu0 %v3734
        %4643 = vmatprep.subr.bf16.mxu0 %v3739
        %4644 = vmatpush1.bf16.msra.mxu0 %v3738
        %4645 = vmatprep.subr.bf16.mxu0 %v3743
        %4646 = vmatpush1.bf16.msra.mxu0 %v3742
        %4647 = vmatprep.subr.bf16.mxu0 %v3747
        %4648 = vmatpush1.bf16.msra.mxu0 %v3746
        %4649 = vmatprep.subr.bf16.mxu0 %v3751
        %4650 = vmatpush1.bf16.msra.mxu0 %v3750
        %4651 = vmatprep.subr.bf16.mxu0 %v3755
        %4652 = vmatpush1.bf16.msra.mxu0 %v3754
        %4653 = vmatprep.subr.bf16.mxu0 %v3759
        %4654 = vmatpush1.bf16.msra.mxu0 %v3758
        %4655 = vmatprep.subr.bf16.mxu0 %v3763
        %4656 = vmatpush1.bf16.msra.mxu0 %v3762
        %4657 = vmatprep.subr.bf16.mxu0 %v3767
        %4658 = vmatpush1.bf16.msra.mxu0 %v3766
        %4659 = vmatprep.subr.bf16.mxu0 %v3771
        %4660 = vmatpush1.bf16.msra.mxu0 %v3770
        %4661 = vmatprep.subr.bf16.mxu0 %v3775
        %4662 = vmatpush1.bf16.msra.mxu0 %v3774
        %4663 = vmatprep.subr.bf16.mxu0 %v3779
        %4664 = vmatpush1.bf16.msra.mxu0 %v3778
        %4665 = vmatprep.subr.bf16.mxu0 %v3783
        %4666 = vmatpush1.bf16.msra.mxu0 %v3782
        %4667 = vmatprep.subr.bf16.mxu0 %v3787
        %4668 = vmatpush1.bf16.msra.mxu0 %v3786
        %4669 = vmatprep.subr.bf16.mxu0 %v3791
        %4670 = vmatpush1.bf16.msra.mxu0 %v3790
        %4671 = vmatprep.mubr.bf16.mxu0 %v1853
        %4672 = vmatmul.mubr.bf16.gmra.mrb[0].mxu0 %v1852
        %v4673 = vpop.f32.mrb[0].mxu0
        %v4674 = vadd.f32 %v4633, %v4673
        %v4675 = vpop.f32.mrb[0].mxu0
        %v4676 = vadd.f32 %v4635, %v4675
        %v4677 = vpop.f32.mrb[0].mxu0
        %v4678 = vpop.f32.mrb[0].mxu0
        %4679 = vdwg.mxu0
        %4680 = vmatprep.subr.bf16.mxu0 %v3795
        %4681 = vmatpush1.bf16.msra.mxu0 %v3794
        %4682 = vmatprep.subr.bf16.mxu0 %v3799
        %4683 = vmatpush1.bf16.msra.mxu0 %v3798
        %4684 = vmatprep.subr.bf16.mxu0 %v3803
        %4685 = vmatpush1.bf16.msra.mxu0 %v3802
        %4686 = vmatprep.subr.bf16.mxu0 %v3807
        %4687 = vmatpush1.bf16.msra.mxu0 %v3806
        %4688 = vmatprep.subr.bf16.mxu0 %v3811
        %4689 = vmatpush1.bf16.msra.mxu0 %v3810
        %4690 = vmatprep.subr.bf16.mxu0 %v3815
        %4691 = vmatpush1.bf16.msra.mxu0 %v3814
        %4692 = vmatprep.subr.bf16.mxu0 %v3819
        %4693 = vmatpush1.bf16.msra.mxu0 %v3818
        %4694 = vmatprep.subr.bf16.mxu0 %v3823
        %4695 = vmatpush1.bf16.msra.mxu0 %v3822
        %4696 = vmatprep.subr.bf16.mxu0 %v3827
        %4697 = vmatpush1.bf16.msra.mxu0 %v3826
        %4698 = vmatprep.subr.bf16.mxu0 %v3831
        %4699 = vmatpush1.bf16.msra.mxu0 %v3830
        %4700 = vmatprep.subr.bf16.mxu0 %v3835
        %4701 = vmatpush1.bf16.msra.mxu0 %v3834
        %4702 = vmatprep.subr.bf16.mxu0 %v3839
        %4703 = vmatpush1.bf16.msra.mxu0 %v3838
        %4704 = vmatprep.subr.bf16.mxu0 %v3843
        %4705 = vmatpush1.bf16.msra.mxu0 %v3842
        %4706 = vmatprep.subr.bf16.mxu0 %v3847
        %4707 = vmatpush1.bf16.msra.mxu0 %v3846
        %4708 = vmatprep.subr.bf16.mxu0 %v3851
        %4709 = vmatpush1.bf16.msra.mxu0 %v3850
        %4710 = vmatprep.subr.bf16.mxu0 %v3855
        %4711 = vmatpush1.bf16.msra.mxu0 %v3854
        %4712 = vmatprep.mubr.bf16.mxu0 %v1855
        %4713 = vmatmul.mubr.bf16.gmra.mrb[0].mxu0 %v1854
        %v4714 = vpop.f32.mrb[0].mxu0
        %v4715 = vadd.f32 %v4674, %v4714
        %v4716 = vpop.f32.mrb[0].mxu0
        %v4717 = vadd.f32 %v4676, %v4716
        %v4718 = vpop.f32.mrb[0].mxu0
        %v4719 = vpop.f32.mrb[0].mxu0
        %4720 = vdwg.mxu0
        %4721 = vmatprep.subr.bf16.mxu0 %v3859
        %4722 = vmatpush1.bf16.msra.mxu0 %v3858
        %4723 = vmatprep.subr.bf16.mxu0 %v3863
        %4724 = vmatpush1.bf16.msra.mxu0 %v3862
        %4725 = vmatprep.subr.bf16.mxu0 %v3867
        %4726 = vmatpush1.bf16.msra.mxu0 %v3866
        %4727 = vmatprep.subr.bf16.mxu0 %v3871
        %4728 = vmatpush1.bf16.msra.mxu0 %v3870
        %4729 = vmatprep.subr.bf16.mxu0 %v3875
        %4730 = vmatpush1.bf16.msra.mxu0 %v3874
        %4731 = vmatprep.subr.bf16.mxu0 %v3879
        %4732 = vmatpush1.bf16.msra.mxu0 %v3878
        %4733 = vmatprep.subr.bf16.mxu0 %v3883
        %4734 = vmatpush1.bf16.msra.mxu0 %v3882
        %4735 = vmatprep.subr.bf16.mxu0 %v3887
        %4736 = vmatpush1.bf16.msra.mxu0 %v3886
        %4737 = vmatprep.subr.bf16.mxu0 %v3891
        %4738 = vmatpush1.bf16.msra.mxu0 %v3890
        %4739 = vmatprep.subr.bf16.mxu0 %v3895
        %4740 = vmatpush1.bf16.msra.mxu0 %v3894
        %4741 = vmatprep.subr.bf16.mxu0 %v3899
        %4742 = vmatpush1.bf16.msra.mxu0 %v3898
        %4743 = vmatprep.subr.bf16.mxu0 %v3903
        %4744 = vmatpush1.bf16.msra.mxu0 %v3902
        %4745 = vmatprep.subr.bf16.mxu0 %v3907
        %4746 = vmatpush1.bf16.msra.mxu0 %v3906
        %4747 = vmatprep.subr.bf16.mxu0 %v3911
        %4748 = vmatpush1.bf16.msra.mxu0 %v3910
        %4749 = vmatprep.subr.bf16.mxu0 %v3915
        %4750 = vmatpush1.bf16.msra.mxu0 %v3914
        %4751 = vmatprep.subr.bf16.mxu0 %v3919
        %4752 = vmatpush1.bf16.msra.mxu0 %v3918
        %4753 = vmatprep.mubr.bf16.mxu0 %v1857
        %4754 = vmatmul.mubr.bf16.gmra.mrb[0].mxu0 %v1856
        %v4755 = vpop.f32.mrb[0].mxu0
        %v4756 = vadd.f32 %v4715, %v4755
        %v4757 = vpop.f32.mrb[0].mxu0
        %v4758 = vadd.f32 %v4717, %v4757
        %v4759 = vpop.f32.mrb[0].mxu0
        %v4760 = vpop.f32.mrb[0].mxu0
        %4761 = vdwg.mxu0
        %4762 = vmatprep.subr.bf16.mxu0 %v3413
        %4763 = vmatpush1.bf16.msra.mxu0 %v3412
        %4764 = vmatprep.subr.bf16.mxu0 %v3417
        %4765 = vmatpush1.bf16.msra.mxu0 %v3416
        %4766 = vmatprep.subr.bf16.mxu0 %v3421
        %4767 = vmatpush1.bf16.msra.mxu0 %v3420
        %4768 = vmatprep.subr.bf16.mxu0 %v3425
        %4769 = vmatpush1.bf16.msra.mxu0 %v3424
        %4770 = vmatprep.subr.bf16.mxu0 %v3429
        %4771 = vmatpush1.bf16.msra.mxu0 %v3428
        %4772 = vmatprep.subr.bf16.mxu0 %v3433
        %4773 = vmatpush1.bf16.msra.mxu0 %v3432
        %4774 = vmatprep.subr.bf16.mxu0 %v3437
        %4775 = vmatpush1.bf16.msra.mxu0 %v3436
        %4776 = vmatprep.subr.bf16.mxu0 %v3441
        %4777 = vmatpush1.bf16.msra.mxu0 %v3440
        %4778 = vmatprep.subr.bf16.mxu0 %v3445
        %4779 = vmatpush1.bf16.msra.mxu0 %v3444
        %4780 = vmatprep.subr.bf16.mxu0 %v3449
        %4781 = vmatpush1.bf16.msra.mxu0 %v3448
        %4782 = vmatprep.subr.bf16.mxu0 %v3453
        %4783 = vmatpush1.bf16.msra.mxu0 %v3452
        %4784 = vmatprep.subr.bf16.mxu0 %v3457
        %4785 = vmatpush1.bf16.msra.mxu0 %v3456
        %4786 = vmatprep.subr.bf16.mxu0 %v3461
        %4787 = vmatpush1.bf16.msra.mxu0 %v3460
        %4788 = vmatprep.subr.bf16.mxu0 %v3465
        %4789 = vmatpush1.bf16.msra.mxu0 %v3464
        %4790 = vmatprep.subr.bf16.mxu0 %v3469
        %4791 = vmatpush1.bf16.msra.mxu0 %v3468
        %4792 = vmatprep.subr.bf16.mxu0 %v3473
        %4793 = vmatpush1.bf16.msra.mxu0 %v3472
        %4794 = vmatprep.mubr.bf16.mxu0 %v1843
        %4795 = vmatmul.mubr.bf16.gmra.mrb[0].mxu0 %v1842
        %v4796 = vpop.f32.mrb[0].mxu0
        %v4797 = vadd.f32 %v1809, %v4796
        %v4798 = vpop.f32.mrb[0].mxu0
        %v4799 = vadd.f32 %v1813, %v4798
        %v4800 = vpop.f32.mrb[0].mxu0
        %v4801 = vpop.f32.mrb[0].mxu0
        %4802 = vdwg.mxu0
        %4803 = vmatprep.subr.bf16.mxu0 %v3477
        %4804 = vmatpush1.bf16.msra.mxu0 %v3476
        %4805 = vmatprep.subr.bf16.mxu0 %v3481
        %4806 = vmatpush1.bf16.msra.mxu0 %v3480
        %4807 = vmatprep.subr.bf16.mxu0 %v3485
        %4808 = vmatpush1.bf16.msra.mxu0 %v3484
        %4809 = vmatprep.subr.bf16.mxu0 %v3489
        %4810 = vmatpush1.bf16.msra.mxu0 %v3488
        %4811 = vmatprep.subr.bf16.mxu0 %v3493
        %4812 = vmatpush1.bf16.msra.mxu0 %v3492
        %4813 = vmatprep.subr.bf16.mxu0 %v3497
        %4814 = vmatpush1.bf16.msra.mxu0 %v3496
        %4815 = vmatprep.subr.bf16.mxu0 %v3501
        %4816 = vmatpush1.bf16.msra.mxu0 %v3500
        %4817 = vmatprep.subr.bf16.mxu0 %v3505
        %4818 = vmatpush1.bf16.msra.mxu0 %v3504
        %4819 = vmatprep.subr.bf16.mxu0 %v3509
        %4820 = vmatpush1.bf16.msra.mxu0 %v3508
        %4821 = vmatprep.subr.bf16.mxu0 %v3513
        %4822 = vmatpush1.bf16.msra.mxu0 %v3512
        %4823 = vmatprep.subr.bf16.mxu0 %v3517
        %4824 = vmatpush1.bf16.msra.mxu0 %v3516
        %4825 = vmatprep.subr.bf16.mxu0 %v3521
        %4826 = vmatpush1.bf16.msra.mxu0 %v3520
        %4827 = vmatprep.subr.bf16.mxu0 %v3525
        %4828 = vmatpush1.bf16.msra.mxu0 %v3524
        %4829 = vmatprep.subr.bf16.mxu0 %v3529
        %4830 = vmatpush1.bf16.msra.mxu0 %v3528
        %4831 = vmatprep.subr.bf16.mxu0 %v3533
        %4832 = vmatpush1.bf16.msra.mxu0 %v3532
        %4833 = vmatprep.subr.bf16.mxu0 %v3537
        %4834 = vmatpush1.bf16.msra.mxu0 %v3536
        %4835 = vmatprep.mubr.bf16.mxu0 %v1845
        %4836 = vmatmul.mubr.bf16.gmra.mrb[0].mxu0 %v1844
        %v4837 = vpop.f32.mrb[0].mxu0
        %v4838 = vadd.f32 %v4797, %v4837
        %v4839 = vpop.f32.mrb[0].mxu0
        %v4840 = vadd.f32 %v4799, %v4839
        %v4841 = vpop.f32.mrb[0].mxu0
        %v4842 = vpop.f32.mrb[0].mxu0
        %4843 = vdwg.mxu0
        %4844 = vmatprep.subr.bf16.mxu0 %v3541
        %4845 = vmatpush1.bf16.msra.mxu0 %v3540
        %4846 = vmatprep.subr.bf16.mxu0 %v3545
        %4847 = vmatpush1.bf16.msra.mxu0 %v3544
        %4848 = vmatprep.subr.bf16.mxu0 %v3549
        %4849 = vmatpush1.bf16.msra.mxu0 %v3548
        %4850 = vmatprep.subr.bf16.mxu0 %v3553
        %4851 = vmatpush1.bf16.msra.mxu0 %v3552
        %4852 = vmatprep.subr.bf16.mxu0 %v3557
        %4853 = vmatpush1.bf16.msra.mxu0 %v3556
        %4854 = vmatprep.subr.bf16.mxu0 %v3561
        %4855 = vmatpush1.bf16.msra.mxu0 %v3560
        %4856 = vmatprep.subr.bf16.mxu0 %v3565
        %4857 = vmatpush1.bf16.msra.mxu0 %v3564
        %4858 = vmatprep.subr.bf16.mxu0 %v3569
        %4859 = vmatpush1.bf16.msra.mxu0 %v3568
        %4860 = vmatprep.subr.bf16.mxu0 %v3573
        %4861 = vmatpush1.bf16.msra.mxu0 %v3572
        %4862 = vmatprep.subr.bf16.mxu0 %v3577
        %4863 = vmatpush1.bf16.msra.mxu0 %v3576
        %4864 = vmatprep.subr.bf16.mxu0 %v3581
        %4865 = vmatpush1.bf16.msra.mxu0 %v3580
        %4866 = vmatprep.subr.bf16.mxu0 %v3585
        %4867 = vmatpush1.bf16.msra.mxu0 %v3584
        %4868 = vmatprep.subr.bf16.mxu0 %v3589
        %4869 = vmatpush1.bf16.msra.mxu0 %v3588
        %4870 = vmatprep.subr.bf16.mxu0 %v3593
        %4871 = vmatpush1.bf16.msra.mxu0 %v3592
        %4872 = vmatprep.subr.bf16.mxu0 %v3597
        %4873 = vmatpush1.bf16.msra.mxu0 %v3596
        %4874 = vmatprep.subr.bf16.mxu0 %v3601
        %4875 = vmatpush1.bf16.msra.mxu0 %v3600
        %4876 = vmatprep.mubr.bf16.mxu0 %v1847
        %4877 = vmatmul.mubr.bf16.gmra.mrb[0].mxu0 %v1846
        %v4878 = vpop.f32.mrb[0].mxu0
        %v4879 = vadd.f32 %v4838, %v4878
        %v4880 = vpop.f32.mrb[0].mxu0
        %v4881 = vadd.f32 %v4840, %v4880
        %v4882 = vpop.f32.mrb[0].mxu0
        %v4883 = vpop.f32.mrb[0].mxu0
        %4884 = vdwg.mxu0
        %4885 = vmatprep.subr.bf16.mxu0 %v3605
        %4886 = vmatpush1.bf16.msra.mxu0 %v3604
        %4887 = vmatprep.subr.bf16.mxu0 %v3609
        %4888 = vmatpush1.bf16.msra.mxu0 %v3608
        %4889 = vmatprep.subr.bf16.mxu0 %v3613
        %4890 = vmatpush1.bf16.msra.mxu0 %v3612
        %4891 = vmatprep.subr.bf16.mxu0 %v3617
        %4892 = vmatpush1.bf16.msra.mxu0 %v3616
        %4893 = vmatprep.subr.bf16.mxu0 %v3621
        %4894 = vmatpush1.bf16.msra.mxu0 %v3620
        %4895 = vmatprep.subr.bf16.mxu0 %v3625
        %4896 = vmatpush1.bf16.msra.mxu0 %v3624
        %4897 = vmatprep.subr.bf16.mxu0 %v3629
        %4898 = vmatpush1.bf16.msra.mxu0 %v3628
        %4899 = vmatprep.subr.bf16.mxu0 %v3633
        %4900 = vmatpush1.bf16.msra.mxu0 %v3632
        %4901 = vmatprep.subr.bf16.mxu0 %v3637
        %4902 = vmatpush1.bf16.msra.mxu0 %v3636
        %4903 = vmatprep.subr.bf16.mxu0 %v3641
        %4904 = vmatpush1.bf16.msra.mxu0 %v3640
        %4905 = vmatprep.subr.bf16.mxu0 %v3645
        %4906 = vmatpush1.bf16.msra.mxu0 %v3644
        %4907 = vmatprep.subr.bf16.mxu0 %v3649
        %4908 = vmatpush1.bf16.msra.mxu0 %v3648
        %4909 = vmatprep.subr.bf16.mxu0 %v3653
        %4910 = vmatpush1.bf16.msra.mxu0 %v3652
        %4911 = vmatprep.subr.bf16.mxu0 %v3657
        %4912 = vmatpush1.bf16.msra.mxu0 %v3656
        %4913 = vmatprep.subr.bf16.mxu0 %v3661
        %4914 = vmatpush1.bf16.msra.mxu0 %v3660
        %4915 = vmatprep.subr.bf16.mxu0 %v3665
        %4916 = vmatpush1.bf16.msra.mxu0 %v3664
        %4917 = vmatprep.mubr.bf16.mxu0 %v1849
        %4918 = vmatmul.mubr.bf16.gmra.mrb[0].mxu0 %v1848
        %v4919 = vpop.f32.mrb[0].mxu0
        %v4920 = vadd.f32 %v4879, %v4919
        %v4921 = vpop.f32.mrb[0].mxu0
        %v4922 = vadd.f32 %v4881, %v4921
        %v4923 = vpop.f32.mrb[0].mxu0
        %v4924 = vpop.f32.mrb[0].mxu0
        %4925 = vdwg.mxu0
        %4926 = vmatprep.subr.bf16.mxu0 %v3669
        %4927 = vmatpush1.bf16.msra.mxu0 %v3668
        %4928 = vmatprep.subr.bf16.mxu0 %v3673
        %4929 = vmatpush1.bf16.msra.mxu0 %v3672
        %4930 = vmatprep.subr.bf16.mxu0 %v3677
        %4931 = vmatpush1.bf16.msra.mxu0 %v3676
        %4932 = vmatprep.subr.bf16.mxu0 %v3681
        %4933 = vmatpush1.bf16.msra.mxu0 %v3680
        %4934 = vmatprep.subr.bf16.mxu0 %v3685
        %4935 = vmatpush1.bf16.msra.mxu0 %v3684
        %4936 = vmatprep.subr.bf16.mxu0 %v3689
        %4937 = vmatpush1.bf16.msra.mxu0 %v3688
        %4938 = vmatprep.subr.bf16.mxu0 %v3693
        %4939 = vmatpush1.bf16.msra.mxu0 %v3692
        %4940 = vmatprep.subr.bf16.mxu0 %v3697
        %4941 = vmatpush1.bf16.msra.mxu0 %v3696
        %4942 = vmatprep.subr.bf16.mxu0 %v3701
        %4943 = vmatpush1.bf16.msra.mxu0 %v3700
        %4944 = vmatprep.subr.bf16.mxu0 %v3705
        %4945 = vmatpush1.bf16.msra.mxu0 %v3704
        %4946 = vmatprep.subr.bf16.mxu0 %v3709
        %4947 = vmatpush1.bf16.msra.mxu0 %v3708
        %4948 = vmatprep.subr.bf16.mxu0 %v3713
        %4949 = vmatpush1.bf16.msra.mxu0 %v3712
        %4950 = vmatprep.subr.bf16.mxu0 %v3717
        %4951 = vmatpush1.bf16.msra.mxu0 %v3716
        %4952 = vmatprep.subr.bf16.mxu0 %v3721
        %4953 = vmatpush1.bf16.msra.mxu0 %v3720
        %4954 = vmatprep.subr.bf16.mxu0 %v3725
        %4955 = vmatpush1.bf16.msra.mxu0 %v3724
        %4956 = vmatprep.subr.bf16.mxu0 %v3729
        %4957 = vmatpush1.bf16.msra.mxu0 %v3728
        %4958 = vmatprep.mubr.bf16.mxu0 %v1851
        %4959 = vmatmul.mubr.bf16.gmra.mrb[0].mxu0 %v1850
        %v4960 = vpop.f32.mrb[0].mxu0
        %v4961 = vadd.f32 %v4920, %v4960
        %v4962 = vpop.f32.mrb[0].mxu0
        %v4963 = vadd.f32 %v4922, %v4962
        %v4964 = vpop.f32.mrb[0].mxu0
        %v4965 = vpop.f32.mrb[0].mxu0
        %4966 = vdwg.mxu0
        %4967 = vmatprep.subr.bf16.mxu0 %v3733
        %4968 = vmatpush1.bf16.msra.mxu0 %v3732
        %4969 = vmatprep.subr.bf16.mxu0 %v3737
        %4970 = vmatpush1.bf16.msra.mxu0 %v3736
        %4971 = vmatprep.subr.bf16.mxu0 %v3741
        %4972 = vmatpush1.bf16.msra.mxu0 %v3740
        %4973 = vmatprep.subr.bf16.mxu0 %v3745
        %4974 = vmatpush1.bf16.msra.mxu0 %v3744
        %4975 = vmatprep.subr.bf16.mxu0 %v3749
        %4976 = vmatpush1.bf16.msra.mxu0 %v3748
        %4977 = vmatprep.subr.bf16.mxu0 %v3753
        %4978 = vmatpush1.bf16.msra.mxu0 %v3752
        %4979 = vmatprep.subr.bf16.mxu0 %v3757
        %4980 = vmatpush1.bf16.msra.mxu0 %v3756
        %4981 = vmatprep.subr.bf16.mxu0 %v3761
        %4982 = vmatpush1.bf16.msra.mxu0 %v3760
        %4983 = vmatprep.subr.bf16.mxu0 %v3765
        %4984 = vmatpush1.bf16.msra.mxu0 %v3764
        %4985 = vmatprep.subr.bf16.mxu0 %v3769
        %4986 = vmatpush1.bf16.msra.mxu0 %v3768
        %4987 = vmatprep.subr.bf16.mxu0 %v3773
        %4988 = vmatpush1.bf16.msra.mxu0 %v3772
        %4989 = vmatprep.subr.bf16.mxu0 %v3777
        %4990 = vmatpush1.bf16.msra.mxu0 %v3776
        %4991 = vmatprep.subr.bf16.mxu0 %v3781
        %4992 = vmatpush1.bf16.msra.mxu0 %v3780
        %4993 = vmatprep.subr.bf16.mxu0 %v3785
        %4994 = vmatpush1.bf16.msra.mxu0 %v3784
        %4995 = vmatprep.subr.bf16.mxu0 %v3789
        %4996 = vmatpush1.bf16.msra.mxu0 %v3788
        %4997 = vmatprep.subr.bf16.mxu0 %v3793
        %4998 = vmatpush1.bf16.msra.mxu0 %v3792
        %4999 = vmatprep.mubr.bf16.mxu0 %v1853
        %5000 = vmatmul.mubr.bf16.gmra.mrb[0].mxu0 %v1852
        %v5001 = vpop.f32.mrb[0].mxu0
        %v5002 = vadd.f32 %v4961, %v5001
        %v5003 = vpop.f32.mrb[0].mxu0
        %v5004 = vadd.f32 %v4963, %v5003
        %v5005 = vpop.f32.mrb[0].mxu0
        %v5006 = vpop.f32.mrb[0].mxu0
        %5007 = vdwg.mxu0
        %5008 = vmatprep.subr.bf16.mxu0 %v3797
        %5009 = vmatpush1.bf16.msra.mxu0 %v3796
        %5010 = vmatprep.subr.bf16.mxu0 %v3801
        %5011 = vmatpush1.bf16.msra.mxu0 %v3800
        %5012 = vmatprep.subr.bf16.mxu0 %v3805
        %5013 = vmatpush1.bf16.msra.mxu0 %v3804
        %5014 = vmatprep.subr.bf16.mxu0 %v3809
        %5015 = vmatpush1.bf16.msra.mxu0 %v3808
        %5016 = vmatprep.subr.bf16.mxu0 %v3813
        %5017 = vmatpush1.bf16.msra.mxu0 %v3812
        %5018 = vmatprep.subr.bf16.mxu0 %v3817
        %5019 = vmatpush1.bf16.msra.mxu0 %v3816
        %5020 = vmatprep.subr.bf16.mxu0 %v3821
        %5021 = vmatpush1.bf16.msra.mxu0 %v3820
        %5022 = vmatprep.subr.bf16.mxu0 %v3825
        %5023 = vmatpush1.bf16.msra.mxu0 %v3824
        %5024 = vmatprep.subr.bf16.mxu0 %v3829
        %5025 = vmatpush1.bf16.msra.mxu0 %v3828
        %5026 = vmatprep.subr.bf16.mxu0 %v3833
        %5027 = vmatpush1.bf16.msra.mxu0 %v3832
        %5028 = vmatprep.subr.bf16.mxu0 %v3837
        %5029 = vmatpush1.bf16.msra.mxu0 %v3836
        %5030 = vmatprep.subr.bf16.mxu0 %v3841
        %5031 = vmatpush1.bf16.msra.mxu0 %v3840
        %5032 = vmatprep.subr.bf16.mxu0 %v3845
        %5033 = vmatpush1.bf16.msra.mxu0 %v3844
        %5034 = vmatprep.subr.bf16.mxu0 %v3849
        %5035 = vmatpush1.bf16.msra.mxu0 %v3848
        %5036 = vmatprep.subr.bf16.mxu0 %v3853
        %5037 = vmatpush1.bf16.msra.mxu0 %v3852
        %5038 = vmatprep.subr.bf16.mxu0 %v3857
        %5039 = vmatpush1.bf16.msra.mxu0 %v3856
        %5040 = vmatprep.mubr.bf16.mxu0 %v1855
        %5041 = vmatmul.mubr.bf16.gmra.mrb[0].mxu0 %v1854
        %v5042 = vpop.f32.mrb[0].mxu0
        %v5043 = vadd.f32 %v5002, %v5042
        %v5044 = vpop.f32.mrb[0].mxu0
        %v5045 = vadd.f32 %v5004, %v5044
        %v5046 = vpop.f32.mrb[0].mxu0
        %v5047 = vpop.f32.mrb[0].mxu0
        %5048 = vdwg.mxu0
        %5049 = vmatprep.subr.bf16.mxu0 %v3861
        %5050 = vmatpush1.bf16.msra.mxu0 %v3860
        %5051 = vmatprep.subr.bf16.mxu0 %v3865
        %5052 = vmatpush1.bf16.msra.mxu0 %v3864
        %5053 = vmatprep.subr.bf16.mxu0 %v3869
        %5054 = vmatpush1.bf16.msra.mxu0 %v3868
        %5055 = vmatprep.subr.bf16.mxu0 %v3873
        %5056 = vmatpush1.bf16.msra.mxu0 %v3872
        %5057 = vmatprep.subr.bf16.mxu0 %v3877
        %5058 = vmatpush1.bf16.msra.mxu0 %v3876
        %5059 = vmatprep.subr.bf16.mxu0 %v3881
        %5060 = vmatpush1.bf16.msra.mxu0 %v3880
        %5061 = vmatprep.subr.bf16.mxu0 %v3885
        %5062 = vmatpush1.bf16.msra.mxu0 %v3884
        %5063 = vmatprep.subr.bf16.mxu0 %v3889
        %5064 = vmatpush1.bf16.msra.mxu0 %v3888
        %5065 = vmatprep.subr.bf16.mxu0 %v3893
        %5066 = vmatpush1.bf16.msra.mxu0 %v3892
        %5067 = vmatprep.subr.bf16.mxu0 %v3897
        %5068 = vmatpush1.bf16.msra.mxu0 %v3896
        %5069 = vmatprep.subr.bf16.mxu0 %v3901
        %5070 = vmatpush1.bf16.msra.mxu0 %v3900
        %5071 = vmatprep.subr.bf16.mxu0 %v3905
        %5072 = vmatpush1.bf16.msra.mxu0 %v3904
        %5073 = vmatprep.subr.bf16.mxu0 %v3909
        %5074 = vmatpush1.bf16.msra.mxu0 %v3908
        %5075 = vmatprep.subr.bf16.mxu0 %v3913
        %5076 = vmatpush1.bf16.msra.mxu0 %v3912
        %5077 = vmatprep.subr.bf16.mxu0 %v3917
        %5078 = vmatpush1.bf16.msra.mxu0 %v3916
        %5079 = vmatprep.subr.bf16.mxu0 %v3921
        %5080 = vmatpush1.bf16.msra.mxu0 %v3920
        %5081 = vmatprep.mubr.bf16.mxu0 %v1857
        %5082 = vmatmul.mubr.bf16.gmra.mrb[0].mxu0 %v1856
        %v5083 = vpop.f32.mrb[0].mxu0
        %v5084 = vadd.f32 %v5043, %v5083
        %v5085 = vpop.f32.mrb[0].mxu0
        %v5086 = vadd.f32 %v5045, %v5085
        %v5087 = vpop.f32.mrb[0].mxu0
        %v5088 = vpop.f32.mrb[0].mxu0
        %5089 = vdwg.mxu0
        %v5090 = vmax.f32 %v4756, 0.0
        %v5091 = vmax.f32 %v4758, 0.0
        %v5092 = vmax.f32 %v5084, 0.0
        %v5093 = vmax.f32 %v5086, 0.0
        %v5094 = vpack.c.bf16 %v5090, %v5090
        %v5095 = vpack.c.bf16 %v5091, %v5091
        %v5096 = vpack.c.bf16 %v5092, %v5092
        %v5097 = vpack.c.bf16 %v5093, %v5093
        %v5102 = vunpack.c.l.b16 %v5094
        %v5103 = vunpack.c.l.b16 %v5095
        %v5104 = vunpack.c.l.b16 %v5096
        %v5105 = vunpack.c.l.b16 %v5097
        %v5106 = vpack.c.b16 %v5103, %v5102
        %v5107 = vpack.c.b16 %v5105, %v5104
        %5110 = vst [vmem:[%s1274] sm:$0xff] %v5106
        %5111 = vst [vmem:[%s1274 + $0x8] sm:$0xff] %v5107
        %s5112 = smul.u32 4, %s19
        %p5113 = scmp.lt.s32.totalorder %s18, 0
        %s5114 = scalar_select %p5113, %s18, 0
        %p5115 = scmp.lt.s32.totalorder %s5112, 15
        %s5116 = scalar_select %p5115, %s5112, 15
        %s5117 = smul.addr %s5114, 16
        %s5118 = sadd.s32 %s5116, %s5117
        %s5119 = smul.addr %s5118, 4
        %s5120 = scalar_lea.vmem %s3, %s5119
        // Predicated region
        $region56: #{forward.4} parent=50 // pred_check
          %p5121 = pneg %p124
        $region57: #{forward.4} parent=50 // pred_check_branch
          %5123 = sbr.rel (%p5121) target = $region59
        $region58: #{forward.4} parent=50 // pred_region
          %s5124 = smul.u32 4, %s19
        $region59: #{forward.4} parent=50 // pred_fallthru
          _
      $region51: #{forward.4} parent=5 // pred_fallthru
        _
      %p5125 = scmp.le.s32.totalorder 2, %s9
      // Predicated region
      $region60: #{forward.4} parent=5 // pred_check
        %p5126 = pneg %p5125
      $region61: #{forward.4} parent=5 // pred_check_branch
        %5128 = sbr.rel (%p5126) target = $region63
      $region62: #{forward.4} parent=5 // pred_region
        %s5129 = ssub.s32 %s9, 2
        // Predicated region
        $region64: #{forward.4} parent=62 // pred_check
          %p5130 = pneg %p130
        $region65: #{forward.4} parent=62 // pred_check_branch
          %5132 = sbr.rel (%p5130) target = $region67
        $region66: #{forward.4} parent=62 // pred_region
          %s5133 = smul.u32 4, %s21
          %p5134 = scmp.lt.s32.totalorder %s20, 0
          %s5135 = scalar_select %p5134, %s20, 0
          %p5136 = scmp.lt.s32.totalorder %s5133, 15
          %s5137 = scalar_select %p5136, %s5133, 15
          %s5138 = smul.addr %s5135, 16
          %s5139 = sadd.s32 %s5137, %s5138
          %s5140 = smul.addr %s5139, 4
          %s5141 = scalar_lea.vmem %s3, %s5140
        $region67: #{forward.4} parent=62 // pred_fallthru
          _
      $region63: #{forward.4} parent=5 // pred_fallthru
        _
    $region6: #{forward.4} parent=1 // loop_footer
      %s13 = sadd.s32 1, %s9
    $region7: #{forward.4} parent=1 // loop_footer_branch
      %8 = sbr.rel target = $region3
    $region8: #{forward.4} parent=1 // loop_exit
      _

</llo_original>
